<compile_context>
chip_gen: v5e
topology: v5e:2x2
jax: 0.10.0
libtpu: 0.0.40
codegen_flags: <defaults>
</compile_context>

<pallas_src>
import math

import jax
import jax.numpy as jnp
from jax.experimental import pallas as pl
from jax.experimental.pallas import tpu as pltpu


def _ln_linear_gelu_kernel(x_ref, gamma_ref, beta_ref, w_ref, b_ref, o_ref, xn_ref):
    # x_ref:     (M, C)   f32, resident across all grid steps
    # gamma/beta:(1, C)   f32, resident
    # w_ref:     (C, TN)  bf16, one output-column tile of the weight
    # b_ref:     (1, TN)  f32
    # o_ref:     (M, TN)
    # xn_ref:    (M, C)   bf16 VMEM scratch holding the LayerNorm output

    # LayerNorm over the feature axis, eps = 1e-6, elementwise affine.
    # Computed once per core (first step of the arbitrary axis) and cached.
    @pl.when(pl.program_id(1) == 0)
    def _():
        x = x_ref[...].astype(jnp.float32)
        mean = jnp.mean(x, axis=-1, keepdims=True)
        xc = x - mean
        var = jnp.mean(xc * xc, axis=-1, keepdims=True)
        inv = jax.lax.rsqrt(var + jnp.float32(1e-6))
        xn = xc * inv * gamma_ref[...].astype(jnp.float32) + beta_ref[...].astype(jnp.float32)
        xn_ref[...] = xn.astype(xn_ref.dtype)

    # Linear: bf16 x bf16 on the MXU with f32 accumulation, f32 bias add.
    y = jnp.dot(xn_ref[...], w_ref[...], preferred_element_type=jnp.float32)
    y = y + b_ref[...].astype(jnp.float32)

    # Exact (erf-based) GELU, matching torch.nn.GELU(approximate='none').
    inv_sqrt2 = jnp.float32(1.0 / math.sqrt(2.0))
    g = 0.5 * y * (1.0 + jax.lax.erf(y * inv_sqrt2))

    o_ref[...] = g.astype(o_ref.dtype)


def layernorm_linear_gelu(x_nhwc, gamma, beta, w, b, *, tn=512, n_parallel=2):
    """x_nhwc: (N, H, W, C); w: (C, N_OUT); b: (N_OUT,); gamma/beta: (C,)."""
    N, H, W, C = x_nhwc.shape
    n_out = w.shape[1]
    assert n_out % tn == 0
    n_tiles = n_out // tn
    p = n_parallel if (n_tiles % n_parallel == 0 and n_tiles >= n_parallel) else 1
    j_tiles = n_tiles // p

    M = N * H * W
    x2d = x_nhwc.reshape(M, C)
    gamma2d = gamma.reshape(1, C)
    beta2d = beta.reshape(1, C)
    b2d = b.reshape(1, n_out).astype(jnp.float32)
    # Stream the weight in bf16: halves the dominant HBM traffic and uses the
    # MXU's native bf16 mode (in a real model this cast is done once at load).
    w_lo = w.astype(jnp.bfloat16)

    out2d = pl.pallas_call(
        _ln_linear_gelu_kernel,
        out_shape=jax.ShapeDtypeStruct((M, n_out), x_nhwc.dtype),
        grid_spec=pltpu.PrefetchScalarGridSpec(
            num_scalar_prefetch=0,
            grid=(p, j_tiles),
            in_specs=[
                pl.BlockSpec((M, C), lambda pi, ji: (0, 0)),                    # x (resident)
                pl.BlockSpec((1, C), lambda pi, ji: (0, 0)),                    # gamma
                pl.BlockSpec((1, C), lambda pi, ji: (0, 0)),                    # beta
                pl.BlockSpec((C, tn), lambda pi, ji: (0, pi * j_tiles + ji)),   # weight tile
                pl.BlockSpec((1, tn), lambda pi, ji: (0, pi * j_tiles + ji)),   # bias tile
            ],
            out_specs=pl.BlockSpec((M, tn), lambda pi, ji: (0, pi * j_tiles + ji)),
            scratch_shapes=[pltpu.VMEM((M, C), jnp.bfloat16)],
        ),
        compiler_params=pltpu.CompilerParams(
            dimension_semantics=("parallel", "arbitrary"),
        ),
    )(x2d, gamma2d, beta2d, w_lo, b2d)

    return out2d.reshape(N, H, W, n_out)


def _reference(x_nhwc, gamma, beta, w, b):
    x = x_nhwc.astype(jnp.float32)
    mean = jnp.mean(x, axis=-1, keepdims=True)
    var = jnp.mean((x - mean) ** 2, axis=-1, keepdims=True)
    xn = (x - mean) * jax.lax.rsqrt(var + 1e-6) * gamma + beta
    y = xn @ w + b
    return jax.nn.gelu(y, approximate=False)


if __name__ == "__main__":
    C_IN, C_OUT = 512, 2048
    N, H, W = 1, 14, 14

    key = jax.random.PRNGKey(0)
    kx, kg, kb, kw, kbias = jax.random.split(key, 5)

    x = jax.random.normal(kx, (N, H, W, C_IN), dtype=jnp.float32)
    # Deterministic synthetic parameters (module shapes: LN(512), Linear(512->2048)).
    gamma = 1.0 + 0.02 * jax.random.normal(kg, (C_IN,), dtype=jnp.float32)
    beta = 0.02 * jax.random.normal(kb, (C_IN,), dtype=jnp.float32)
    w = jax.random.normal(kw, (C_IN, C_OUT), dtype=jnp.float32) * (1.0 / math.sqrt(C_IN))
    b = 0.02 * jax.random.normal(kbias, (C_OUT,), dtype=jnp.float32)

    out = layernorm_linear_gelu(x, gamma, beta, w, b)
    out = jax.block_until_ready(out)

    ref = jax.block_until_ready(_reference(x, gamma, beta, w, b))
    assert out.shape == (N, H, W, C_OUT), out.shape
    # bf16 weight stream with f32 accumulation: worst-case abs error ~1e-2.
    assert jnp.allclose(out, ref, atol=3e-2, rtol=3e-2), float(jnp.max(jnp.abs(out - ref)))

    print("KERNEL_OK")
</pallas_src>

<mosaic_0001>
module attributes {stable_mosaic.version = 11 : i64} {
  func.func @_ln_linear_gelu_kernel(%arg0: i32, %arg1: i32, %arg2: memref<196x512xf32, #tpu.memory_space<vmem>>, %arg3: memref<1x512xf32, #tpu.memory_space<vmem>>, %arg4: memref<1x512xf32, #tpu.memory_space<vmem>>, %arg5: memref<512x512xbf16, #tpu.memory_space<vmem>>, %arg6: memref<1x512xf32, #tpu.memory_space<vmem>>, %arg7: memref<196x512xf32, #tpu.memory_space<vmem>>, %arg8: memref<196x512xbf16, #tpu.memory_space<vmem>>) attributes {dimension_semantics = [#tpu.dimension_semantics<parallel>, #tpu.dimension_semantics<arbitrary>], iteration_bounds = array<i64: 2, 2>, scalar_prefetch = 0 : i64, scratch_operands = 1 : i64, tpu.core_type = #tpu.core_type<tc>, window_params = [{pipeline_mode = #tpu.pipeline_mode<synchronous>, transform_indices = @transform_0, window_bounds = array<i64: 196, 512>}, {pipeline_mode = #tpu.pipeline_mode<synchronous>, transform_indices = @transform_1, window_bounds = array<i64: 1, 512>}, {pipeline_mode = #tpu.pipeline_mode<synchronous>, transform_indices = @transform_2, window_bounds = array<i64: 1, 512>}, {transform_indices = @transform_3, window_bounds = array<i64: 512, 512>}, {transform_indices = @transform_4, window_bounds = array<i64: 1, 512>}, {transform_indices = @transform_5, window_bounds = array<i64: 196, 512>}]} {
    %c0_i32 = arith.constant 0 : i32
    %0 = arith.cmpi eq, %arg1, %c0_i32 : i32
    %1 = arith.extui %0 : i1 to i32
    %c0_i32_0 = arith.constant 0 : i32
    %2 = arith.cmpi ne, %1, %c0_i32_0 : i32
    scf.if %2 {
      %c0_11 = arith.constant 0 : index
      %c0_12 = arith.constant 0 : index
      %18 = vector.load %arg2[%c0_11, %c0_12] : memref<196x512xf32, #tpu.memory_space<vmem>>, vector<196x512xf32>
      %cst_13 = arith.constant dense<0.000000e+00> : vector<196xf32>
      %19 = vector.multi_reduction <add>, %18, %cst_13 [1] : vector<196x512xf32> to vector<196xf32>
      %20 = vector.shape_cast %19 : vector<196xf32> to vector<196x1xf32>
      %cst_14 = arith.constant 5.120000e+02 : f32
      %21 = vector.broadcast %cst_14 : f32 to vector<196x1xf32>
      %22 = arith.divf %20, %21 : vector<196x1xf32>
      %23 = vector.broadcast %22 : vector<196x1xf32> to vector<196x512xf32>
      %24 = arith.subf %18, %23 : vector<196x512xf32>
      %25 = arith.mulf %24, %24 : vector<196x512xf32>
      %cst_15 = arith.constant dense<0.000000e+00> : vector<196xf32>
      %26 = vector.multi_reduction <add>, %25, %cst_15 [1] : vector<196x512xf32> to vector<196xf32>
      %27 = vector.shape_cast %26 : vector<196xf32> to vector<196x1xf32>
      %cst_16 = arith.constant 5.120000e+02 : f32
      %28 = vector.broadcast %cst_16 : f32 to vector<196x1xf32>
      %29 = arith.divf %27, %28 : vector<196x1xf32>
      %cst_17 = arith.constant 9.99999997E-7 : f32
      %30 = vector.broadcast %cst_17 : f32 to vector<196x1xf32>
      %31 = arith.addf %29, %30 : vector<196x1xf32>
      %32 = math.rsqrt %31 : vector<196x1xf32>
      %33 = vector.broadcast %32 : vector<196x1xf32> to vector<196x512xf32>
      %34 = arith.mulf %24, %33 : vector<196x512xf32>
      %c0_18 = arith.constant 0 : index
      %c0_19 = arith.constant 0 : index
      %35 = vector.load %arg3[%c0_18, %c0_19] : memref<1x512xf32, #tpu.memory_space<vmem>>, vector<1x512xf32>
      %36 = vector.broadcast %35 : vector<1x512xf32> to vector<196x512xf32>
      %37 = arith.mulf %34, %36 : vector<196x512xf32>
      %c0_20 = arith.constant 0 : index
      %c0_21 = arith.constant 0 : index
      %38 = vector.load %arg4[%c0_20, %c0_21] : memref<1x512xf32, #tpu.memory_space<vmem>>, vector<1x512xf32>
      %39 = vector.broadcast %38 : vector<1x512xf32> to vector<196x512xf32>
      %40 = arith.addf %37, %39 : vector<196x512xf32>
      %41 = arith.truncf %40 : vector<196x512xf32> to vector<196x512xbf16>
      %c0_22 = arith.constant 0 : index
      %c0_23 = arith.constant 0 : index
      %42 = vector.load %arg8[%c0_22, %c0_23] : memref<196x512xbf16, #tpu.memory_space<vmem>>, vector<196x512xbf16>
      tpu.vector_store %arg8[%c0_22, %c0_23], %41 {strides = array<i32>} : memref<196x512xbf16, #tpu.memory_space<vmem>>, vector<196x512xbf16>,
    } else {
    }
    %c0 = arith.constant 0 : index
    %c0_1 = arith.constant 0 : index
    %3 = vector.load %arg8[%c0, %c0_1] : memref<196x512xbf16, #tpu.memory_space<vmem>>, vector<196x512xbf16>
    %c0_2 = arith.constant 0 : index
    %c0_3 = arith.constant 0 : index
    %4 = vector.load %arg5[%c0_2, %c0_3] : memref<512x512xbf16, #tpu.memory_space<vmem>>, vector<512x512xbf16>
    %cst = arith.constant dense<0.000000e+00> : vector<196x512xf32>
    %5 = tpu.matmul %3, %4, %cst {dimension_numbers = #tpu.dot_dimension_numbers<[1], [0], [0], [1], [0, 0, 1, 1], [], []>} : vector<196x512xbf16>, vector<512x512xbf16>, vector<196x512xf32> -> vector<196x512xf32>
    %c0_4 = arith.constant 0 : index
    %c0_5 = arith.constant 0 : index
    %6 = vector.load %arg6[%c0_4, %c0_5] : memref<1x512xf32, #tpu.memory_space<vmem>>, vector<1x512xf32>
    %7 = vector.broadcast %6 : vector<1x512xf32> to vector<196x512xf32>
    %8 = arith.addf %5, %7 : vector<196x512xf32>
    %cst_6 = arith.constant 5.000000e-01 : f32
    %9 = vector.broadcast %cst_6 : f32 to vector<196x512xf32>
    %10 = arith.mulf %9, %8 : vector<196x512xf32>
    %cst_7 = arith.constant 0.707106769 : f32
    %11 = vector.broadcast %cst_7 : f32 to vector<196x512xf32>
    %12 = arith.mulf %8, %11 : vector<196x512xf32>
    %13 = math.erf %12 : vector<196x512xf32>
    %cst_8 = arith.constant 1.000000e+00 : f32
    %14 = vector.broadcast %cst_8 : f32 to vector<196x512xf32>
    %15 = arith.addf %14, %13 : vector<196x512xf32>
    %16 = arith.mulf %10, %15 : vector<196x512xf32>
    %c0_9 = arith.constant 0 : index
    %c0_10 = arith.constant 0 : index
    %17 = vector.load %arg7[%c0_9, %c0_10] : memref<196x512xf32, #tpu.memory_space<vmem>>, vector<196x512xf32>
    tpu.vector_store %arg7[%c0_9, %c0_10], %16 {strides = array<i32>} : memref<196x512xf32, #tpu.memory_space<vmem>>, vector<196x512xf32>,
    return
  }
  func.func @transform_0(%arg0: i32, %arg1: i32) -> (i32, i32) {
    %c0_i32 = arith.constant 0 : i32
    %c0_i32_0 = arith.constant 0 : i32
    %c0_i32_1 = arith.constant 0 : i32
    return %c0_i32, %c0_i32_0 : i32, i32
  }
  func.func @transform_1(%arg0: i32, %arg1: i32) -> (i32, i32) {
    %c0_i32 = arith.constant 0 : i32
    %c0_i32_0 = arith.constant 0 : i32
    %c0_i32_1 = arith.constant 0 : i32
    return %c0_i32, %c0_i32_0 : i32, i32
  }
  func.func @transform_2(%arg0: i32, %arg1: i32) -> (i32, i32) {
    %c0_i32 = arith.constant 0 : i32
    %c0_i32_0 = arith.constant 0 : i32
    %c0_i32_1 = arith.constant 0 : i32
    return %c0_i32, %c0_i32_0 : i32, i32
  }
  func.func @transform_3(%arg0: i32, %arg1: i32) -> (i32, i32) {
    %c2_i32 = arith.constant 2 : i32
    %0 = arith.muli %arg0, %c2_i32 : i32
    %1 = arith.addi %0, %arg1 : i32
    %c0_i32 = arith.constant 0 : i32
    %c0_i32_0 = arith.constant 0 : i32
    return %c0_i32, %1 : i32, i32
  }
  func.func @transform_4(%arg0: i32, %arg1: i32) -> (i32, i32) {
    %c2_i32 = arith.constant 2 : i32
    %0 = arith.muli %arg0, %c2_i32 : i32
    %1 = arith.addi %0, %arg1 : i32
    %c0_i32 = arith.constant 0 : i32
    %c0_i32_0 = arith.constant 0 : i32
    return %c0_i32, %1 : i32, i32
  }
  func.func @transform_5(%arg0: i32, %arg1: i32) -> (i32, i32) {
    %c2_i32 = arith.constant 2 : i32
    %0 = arith.muli %arg0, %c2_i32 : i32
    %1 = arith.addi %0, %arg1 : i32
    %c0_i32 = arith.constant 0 : i32
    %c0_i32_0 = arith.constant 0 : i32
    return %c0_i32, %1 : i32, i32
  }
}

</mosaic_0001>

<llo_original>
// kernel: tpu_custom_call.1
$region0: #{tpu_custom_call.1}
  #allocation0 [shape = 'u32[]', space=smem, size = 0x4, offset = 0x4, fixed_abs, tag = 'smem constant byte address 0x4 - core index']
  #allocation1 [shape = 'u32[72,128]{1,0:T(1,128)}', space=vmem, size = 0x9000, scoped, tag = 'internal scratch']
  #allocation2 [shape = 'bf16[196,512]{1,0:T(8,128)(2,1)}', space=vmem, size = 0x32000, scoped, tag = 'scratch operand']
  %s0 = inlined_call_operand.hbm [shape: f32[196,512], index: 0, kind: input, shape index: {}]
  %s1 = inlined_call_operand.hbm [shape: f32[1,512], index: 1, kind: input, shape index: {}]
  %s2 = inlined_call_operand.hbm [shape: f32[1,512], index: 2, kind: input, shape index: {}]
  %s3 = inlined_call_operand.hbm [shape: bf16[512,2048], index: 3, kind: input, shape index: {}]
  %s4 = inlined_call_operand.hbm [shape: f32[1,2048], index: 4, kind: input, shape index: {}]
  %s5 = inlined_call_operand.hbm [shape: f32[196,2048], index: 5, kind: output, shape index: {}]
  %s6 = sld [smem:[#allocation0]]
  $region77: #{tpu_custom_call.1} parent=0
    _
  %s8 = ssub.s32 1, %s6
  %s9 = scalar_select 0, %s8, %s6
  $region1: #{tpu_custom_call.1} parent=0
    #allocation3 [shape = 'u8[409600]{0}', space=vmem, size = 0x64000, scoped, tag = 'input window, operand 0, single buffered']
    #allocation4 [shape = 's32[2]{0}', space=sflag, size = 0x8, scoped, tag = 'scoped memory for tpu_custom_call.1']
    #allocation5 [shape = 's32[2]{0}', space=sflag, size = 0x8, scoped, tag = 'scoped memory for tpu_custom_call.1']
    #allocation6 [shape = 'u8[2048]{0}', space=vmem, size = 0x800, scoped, tag = 'input window, operand 1, single buffered']
    #allocation7 [shape = 's32[1]{0}', space=sflag, size = 0x4, scoped, tag = 'scoped memory for tpu_custom_call.1']
    #allocation8 [shape = 'u8[2048]{0}', space=vmem, size = 0x800, scoped, tag = 'input window, operand 2, single buffered']
    #allocation9 [shape = 'u8[1048576]{0}', space=vmem, size = 0x100000, scoped, tag = 'input window, operand 3']
    #allocation10 [shape = 's32[2]{0}', space=sflag, size = 0x8, scoped, tag = 'scoped memory for tpu_custom_call.1']
    #allocation11 [shape = 'u8[4096]{0}', space=vmem, size = 0x1000, scoped, tag = 'input window, operand 4']
    #allocation12 [shape = 'u8[819200]{0}', space=vmem, size = 0xc8000, scoped, tag = 'output window, operand 0']
    %10 = vsyncpa [#allocation4], 0
    %11 = vsyncpa [#allocation7], 0
    %12 = vsyncpa [#allocation10], 0
    %s13 = scalar_lea.sflag [#allocation10], 1
    %14 = vsyncpa %s13, 0
    %15 = vsyncpa [#allocation5], 0
    %s16 = scalar_lea.sflag [#allocation5], 1
    %17 = vsyncpa %s16, 0
    loop: start=0, step=1, limit=6
    $region2: #{tpu_custom_call.1} parent=1 // loop_pre_header
      _
    $region3: #{tpu_custom_call.1} parent=1 // loop_header
      %s19 = sphi 0, %s23
      %p20 = scmp.ge.s32.totalorder %s19, 6
      %s26 = sphi 0, %s38
      %s27 = sphi 0, %s34
      %s28 = sphi 0, %s26
      %s29 = sphi 0, %s27
      %s30 = sphi 0, %s28
      %s31 = sphi 0, %s29
      %s39 = sphi 0, %s39
      %s41 = sphi 0, %s39
      %s42 = sphi 0, %s41
      %s56 = sphi 0, %s42
      %s60 = sphi 0, %s60
      %s62 = sphi 0, %s60
      %s63 = sphi 0, %s62
      %s77 = sphi 0, %s63
      %s81 = sphi 0, %s81
      %s83 = sphi 0, %s81
      %s84 = sphi 0, %s83
      %s98 = sphi 0, %s84
      %s108 = sphi 0, %s110
      %s111 = sphi 0, %s108
      %s112 = sphi 0, %s111
      %s128 = sphi 0, %s112
      %s138 = sphi 0, %s140
      %s141 = sphi 0, %s138
      %s142 = sphi 0, %s141
      %s158 = sphi 0, %s142
      %s168 = sphi 0, %s170
      %s171 = sphi 0, %s168
      %s172 = sphi 0, %s171
      %s188 = sphi 0, %s172
    $region4: #{tpu_custom_call.1} parent=1 // loop_header_branch
      %22 = sbr.rel (%p20) target = $region8
    $region5: #{tpu_custom_call.1} parent=1 // loop_body
      %s24 = ssub.s32 %s19, 1
      %s25 = ssub.s32 %s19, 2
      %s32 = sadd.s32 1, %s27
      %p33 = scmp.ge.s32.totalorder %s32, 2
      %s34 = scalar_select %p33, 0, %s32
      %s35 = sadd.s32 1, %s26
      %s36 = scalar_select %p33, %s35, %s26
      %p37 = scmp.ge.s32.totalorder %s36, 2
      %s38 = scalar_select %p37, 0, %s36
      %s40 = sadd.s32 %s39, 1
      %p43 = scmp.eq.s32.totalorder %s19, 3
      %p44 = scmp.ne.s32.totalorder %s39, %s41
      %p45 = scmp.eq.s32.totalorder %s19, 0
      %p46 = por %p44, %p45
      %p47 = scmp.ne.s32.totalorder %s39, %s41
      %p48 = scmp.eq.s32.totalorder %s24, 3
      %p49 = por %p47, %p48
      %p50 = scmp.ne.s32.totalorder %s41, %s42
      %p51 = scmp.eq.s32.totalorder %s24, 0
      %p52 = por %p50, %p51
      %p53 = scmp.ne.s32.totalorder %s41, %s42
      %p54 = scmp.eq.s32.totalorder %s25, 3
      %p55 = por %p53, %p54
      %p57 = scmp.ne.s32.totalorder %s42, %s56
      %p58 = scmp.eq.s32.totalorder %s25, 0
      %p59 = por %p57, %p58
      %s61 = sadd.s32 %s60, 1
      %p64 = scmp.eq.s32.totalorder %s19, 3
      %p65 = scmp.ne.s32.totalorder %s60, %s62
      %p66 = scmp.eq.s32.totalorder %s19, 0
      %p67 = por %p65, %p66
      %p68 = scmp.ne.s32.totalorder %s60, %s62
      %p69 = scmp.eq.s32.totalorder %s24, 3
      %p70 = por %p68, %p69
      %p71 = scmp.ne.s32.totalorder %s62, %s63
      %p72 = scmp.eq.s32.totalorder %s24, 0
      %p73 = por %p71, %p72
      %p74 = scmp.ne.s32.totalorder %s62, %s63
      %p75 = scmp.eq.s32.totalorder %s25, 3
      %p76 = por %p74, %p75
      %p78 = scmp.ne.s32.totalorder %s63, %s77
      %p79 = scmp.eq.s32.totalorder %s25, 0
      %p80 = por %p78, %p79
      %s82 = sadd.s32 %s81, 1
      %p85 = scmp.eq.s32.totalorder %s19, 3
      %p86 = scmp.ne.s32.totalorder %s81, %s83
      %p87 = scmp.eq.s32.totalorder %s19, 0
      %p88 = por %p86, %p87
      %p89 = scmp.ne.s32.totalorder %s81, %s83
      %p90 = scmp.eq.s32.totalorder %s24, 3
      %p91 = por %p89, %p90
      %p92 = scmp.ne.s32.totalorder %s83, %s84
      %p93 = scmp.eq.s32.totalorder %s24, 0
      %p94 = por %p92, %p93
      %p95 = scmp.ne.s32.totalorder %s83, %s84
      %p96 = scmp.eq.s32.totalorder %s25, 3
      %p97 = por %p95, %p96
      %p99 = scmp.ne.s32.totalorder %s84, %s98
      %p100 = scmp.eq.s32.totalorder %s25, 0
      %p101 = por %p99, %p100
      %s102 = smul.u32 %s26, 2
      %s103 = sadd.s32 %s102, %s27
      %s104 = smul.u32 %s38, 2
      %s105 = sadd.s32 %s104, %s34
      %s106 = ssub.s32 %s103, %s105
      %p107 = scmp.eq.s32.totalorder %s106, 0
      %s109 = sadd.s32 %s108, 1
      %s110 = scalar_select %p107, %s108, %s109
      %p113 = pneg %p107
      %p114 = scmp.eq.s32.totalorder %s19, 3
      %p115 = por %p113, %p114
      %p116 = scmp.ne.s32.totalorder %s108, %s111
      %p117 = scmp.eq.s32.totalorder %s19, 0
      %p118 = por %p116, %p117
      %p119 = scmp.ne.s32.totalorder %s108, %s111
      %p120 = scmp.eq.s32.totalorder %s24, 3
      %p121 = por %p119, %p120
      %p122 = scmp.ne.s32.totalorder %s111, %s112
      %p123 = scmp.eq.s32.totalorder %s24, 0
      %p124 = por %p122, %p123
      %p125 = scmp.ne.s32.totalorder %s111, %s112
      %p126 = scmp.eq.s32.totalorder %s25, 3
      %p127 = por %p125, %p126
      %p129 = scmp.ne.s32.totalorder %s112, %s128
      %p130 = scmp.eq.s32.totalorder %s25, 0
      %p131 = por %p129, %p130
      %s132 = smul.u32 %s26, 2
      %s133 = sadd.s32 %s132, %s27
      %s134 = smul.u32 %s38, 2
      %s135 = sadd.s32 %s134, %s34
      %s136 = ssub.s32 %s133, %s135
      %p137 = scmp.eq.s32.totalorder %s136, 0
      %s139 = sadd.s32 %s138, 1
      %s140 = scalar_select %p137, %s138, %s139
      %p143 = pneg %p137
      %p144 = scmp.eq.s32.totalorder %s19, 3
      %p145 = por %p143, %p144
      %p146 = scmp.ne.s32.totalorder %s138, %s141
      %p147 = scmp.eq.s32.totalorder %s19, 0
      %p148 = por %p146, %p147
      %p149 = scmp.ne.s32.totalorder %s138, %s141
      %p150 = scmp.eq.s32.totalorder %s24, 3
      %p151 = por %p149, %p150
      %p152 = scmp.ne.s32.totalorder %s141, %s142
      %p153 = scmp.eq.s32.totalorder %s24, 0
      %p154 = por %p152, %p153
      %p155 = scmp.ne.s32.totalorder %s141, %s142
      %p156 = scmp.eq.s32.totalorder %s25, 3
      %p157 = por %p155, %p156
      %p159 = scmp.ne.s32.totalorder %s142, %s158
      %p160 = scmp.eq.s32.totalorder %s25, 0
      %p161 = por %p159, %p160
      %s162 = smul.u32 %s26, 2
      %s163 = sadd.s32 %s162, %s27
      %s164 = smul.u32 %s38, 2
      %s165 = sadd.s32 %s164, %s34
      %s166 = ssub.s32 %s163, %s165
      %p167 = scmp.eq.s32.totalorder %s166, 0
      %s169 = sadd.s32 %s168, 1
      %s170 = scalar_select %p167, %s168, %s169
      %p173 = pneg %p167
      %p174 = scmp.eq.s32.totalorder %s19, 3
      %p175 = por %p173, %p174
      %p176 = scmp.ne.s32.totalorder %s168, %s171
      %p177 = scmp.eq.s32.totalorder %s19, 0
      %p178 = por %p176, %p177
      %p179 = scmp.ne.s32.totalorder %s168, %s171
      %p180 = scmp.eq.s32.totalorder %s24, 3
      %p181 = por %p179, %p180
      %p182 = scmp.ne.s32.totalorder %s171, %s172
      %p183 = scmp.eq.s32.totalorder %s24, 0
      %p184 = por %p182, %p183
      %p185 = scmp.ne.s32.totalorder %s171, %s172
      %p186 = scmp.eq.s32.totalorder %s25, 3
      %p187 = por %p185, %p186
      %p189 = scmp.ne.s32.totalorder %s172, %s188
      %p190 = scmp.eq.s32.totalorder %s25, 0
      %p191 = por %p189, %p190
      %p192 = scmp.le.s32.totalorder 1, %s19
      %p193 = scmp.lt.s32.totalorder %s19, 5
      %p194 = pnand %p192, %p193
      %p195 = pneg %p194
      // Predicated region
      $region9: #{tpu_custom_call.1} parent=5 // pred_check
        _
      $region10: #{tpu_custom_call.1} parent=5 // pred_check_branch
        %197 = sbr.rel (%p194) target = $region12
      $region11: #{tpu_custom_call.1} parent=5 // pred_region
        %s198 = ssub.s32 %s19, 1
        // Predicated region
        $region13: #{tpu_custom_call.1} parent=11 // pred_check
          %p199 = pneg %p52
        $region14: #{tpu_custom_call.1} parent=11 // pred_check_branch
          %201 = sbr.rel (%p199) target = $region16
        $region15: #{tpu_custom_call.1} parent=11 // pred_region
          %203 = vsyncadd [#allocation4], 0
          %s204 = sshll.u32 %s0, 4
          %s205 = int_to_ptr.hbm [resolvable:$true] %s204
          %s206 = sshll.u32 [#allocation3], 4
          %s207 = int_to_ptr.vmem [resolvable:$true] %s206
          %212 = dma.hbm_to_vmem [thread:$0]  %s205, 12800, %s207, [#allocation4], 512, 512, 32
        $region16: #{tpu_custom_call.1} parent=11 // pred_fallthru
          _
        // Predicated region
        $region17: #{tpu_custom_call.1} parent=11 // pred_check
          %p213 = pneg %p73
        $region18: #{tpu_custom_call.1} parent=11 // pred_check_branch
          %215 = sbr.rel (%p213) target = $region20
        $region19: #{tpu_custom_call.1} parent=11 // pred_region
          %217 = vsyncadd [#allocation7], 0
          %s219 = sshll.u32 %s1, 4
          %s220 = int_to_ptr.hbm [resolvable:$true] %s219
          %s221 = sshll.u32 [#allocation6], 4
          %s222 = int_to_ptr.vmem [resolvable:$true] %s221
          %224 = dma.hbm_to_vmem [thread:$0]  %s220, 64, %s222, [#allocation7]
        $region20: #{tpu_custom_call.1} parent=11 // pred_fallthru
          _
        // Predicated region
        $region21: #{tpu_custom_call.1} parent=11 // pred_check
          %p225 = pneg %p94
        $region22: #{tpu_custom_call.1} parent=11 // pred_check_branch
          %227 = sbr.rel (%p225) target = $region24
        $region23: #{tpu_custom_call.1} parent=11 // pred_region
          %229 = vsyncadd [#allocation7], 0
          %s231 = sshll.u32 %s2, 4
          %s232 = int_to_ptr.hbm [resolvable:$true] %s231
          %s233 = sshll.u32 [#allocation8], 4
          %s234 = int_to_ptr.vmem [resolvable:$true] %s233
          %236 = dma.hbm_to_vmem [thread:$0]  %s232, 64, %s234, [#allocation7]
        $region24: #{tpu_custom_call.1} parent=11 // pred_fallthru
          _
      $region12: #{tpu_custom_call.1} parent=5 // pred_fallthru
        _
      %p237 = scmp.lt.s32.totalorder %s19, 4
      // Predicated region
      $region25: #{tpu_custom_call.1} parent=5 // pred_check
        %p238 = pneg %p237
      $region26: #{tpu_custom_call.1} parent=5 // pred_check_branch
        %240 = sbr.rel (%p238) target = $region28
      $region27: #{tpu_custom_call.1} parent=5 // pred_region
        // Predicated region
        $region29: #{tpu_custom_call.1} parent=27 // pred_check
          %p241 = pneg %p118
        $region30: #{tpu_custom_call.1} parent=27 // pred_check_branch
          %243 = sbr.rel (%p241) target = $region32
        $region31: #{tpu_custom_call.1} parent=27 // pred_region
          %s244 = sand.u32 %s19, 1
          %s245 = scalar_lea.sflag [#allocation10], %s244
          %s246 = sand.u32 %s108, 1
          %s247 = smul.addr %s246, 1024
          %s248 = scalar_lea.vmem [#allocation9], %s247
          %s249 = smul.u32 %s26, 2
          %s250 = sadd.s32 %s249, %s27
          %s251 = smul.u32 4, %s250
          %253 = vsyncadd %s245, 0
          %s254 = smul.addr %s251, 4
          %s255 = scalar_lea.hbm %s3, %s254
          %s256 = sshll.u32 %s255, 4
          %s257 = int_to_ptr.hbm [resolvable:$true] %s256
          %s258 = sshll.u32 %s248, 4
          %s259 = int_to_ptr.vmem [resolvable:$true] %s258
          %264 = dma.hbm_to_vmem [thread:$0]  %s257, 16384, %s259, %s245, 1024, 256, 16
        $region32: #{tpu_custom_call.1} parent=27 // pred_fallthru
          _
        // Predicated region
        $region33: #{tpu_custom_call.1} parent=27 // pred_check
          %p265 = pneg %p148
        $region34: #{tpu_custom_call.1} parent=27 // pred_check_branch
          %267 = sbr.rel (%p265) target = $region36
        $region35: #{tpu_custom_call.1} parent=27 // pred_region
          %s268 = sand.u32 %s19, 1
          %s269 = scalar_lea.sflag [#allocation10], %s268
          %s270 = sand.u32 %s138, 1
          %s271 = smul.addr %s270, 4
          %s272 = scalar_lea.vmem [#allocation11], %s271
          %s273 = smul.u32 %s26, 2
          %s274 = sadd.s32 %s273, %s27
          %s275 = smul.u32 4, %s274
          %277 = vsyncadd %s269, 0
          %s278 = scalar_lea.hbm %s4, %s275
          %s280 = sshll.u32 %s278, 4
          %s281 = int_to_ptr.hbm [resolvable:$true] %s280
          %s282 = sshll.u32 %s272, 4
          %s283 = int_to_ptr.vmem [resolvable:$true] %s282
          %285 = dma.hbm_to_vmem [thread:$0]  %s281, 64, %s283, %s269
        $region36: #{tpu_custom_call.1} parent=27 // pred_fallthru
          _
      $region28: #{tpu_custom_call.1} parent=5 // pred_fallthru
        _
      %p286 = scmp.le.s32.totalorder 1, %s19
      %p287 = scmp.lt.s32.totalorder %s19, 5
      %p288 = pnand %p286, %p287
      %p289 = pneg %p288
      // Predicated region
      $region37: #{tpu_custom_call.1} parent=5 // pred_check
        _
      $region38: #{tpu_custom_call.1} parent=5 // pred_check_branch
        %291 = sbr.rel (%p288) target = $region40
      $region39: #{tpu_custom_call.1} parent=5 // pred_region
        %s292 = ssub.s32 %s19, 1
        // Predicated region
        $region41: #{tpu_custom_call.1} parent=39 // pred_check
          %p293 = pneg %p52
        $region42: #{tpu_custom_call.1} parent=39 // pred_check_branch
          %295 = sbr.rel (%p293) target = $region44
        $region43: #{tpu_custom_call.1} parent=39 // pred_region
          %297 = dma.done [#allocation4], 12800
        $region44: #{tpu_custom_call.1} parent=39 // pred_fallthru
          _
        // Predicated region
        $region45: #{tpu_custom_call.1} parent=39 // pred_check
          %p298 = pneg %p73
        $region46: #{tpu_custom_call.1} parent=39 // pred_check_branch
          %300 = sbr.rel (%p298) target = $region48
        $region47: #{tpu_custom_call.1} parent=39 // pred_region
          %302 = dma.done [#allocation7], 64
        $region48: #{tpu_custom_call.1} parent=39 // pred_fallthru
          _
        // Predicated region
        $region49: #{tpu_custom_call.1} parent=39 // pred_check
          %p303 = pneg %p94
        $region50: #{tpu_custom_call.1} parent=39 // pred_check_branch
          %305 = sbr.rel (%p303) target = $region52
        $region51: #{tpu_custom_call.1} parent=39 // pred_region
          %307 = dma.done [#allocation7], 64
        $region52: #{tpu_custom_call.1} parent=39 // pred_fallthru
          _
        %s308 = sand.u32 %s24, 1
        %s309 = scalar_lea.sflag [#allocation10], %s308
        %s310 = sand.u32 %s111, 1
        %s311 = smul.addr %s310, 1024
        %s312 = scalar_lea.vmem [#allocation9], %s311
        // Predicated region
        $region53: #{tpu_custom_call.1} parent=39 // pred_check
          %p313 = pneg %p124
        $region54: #{tpu_custom_call.1} parent=39 // pred_check_branch
          %315 = sbr.rel (%p313) target = $region56
        $region55: #{tpu_custom_call.1} parent=39 // pred_region
          %317 = dma.done %s309, 16384
        $region56: #{tpu_custom_call.1} parent=39 // pred_fallthru
          _
        %s318 = sand.u32 %s24, 1
        %s319 = scalar_lea.sflag [#allocation10], %s318
        %s320 = sand.u32 %s141, 1
        %s321 = smul.addr %s320, 4
        %s322 = scalar_lea.vmem [#allocation11], %s321
        // Predicated region
        $region57: #{tpu_custom_call.1} parent=39 // pred_check
          %p323 = pneg %p154
        $region58: #{tpu_custom_call.1} parent=39 // pred_check_branch
          %325 = sbr.rel (%p323) target = $region60
        $region59: #{tpu_custom_call.1} parent=39 // pred_region
          %327 = dma.done %s319, 64
        $region60: #{tpu_custom_call.1} parent=39 // pred_fallthru
          _
        %p328 = pneg %p52
        %p329 = pneg %p49
        %p330 = pneg %p73
        %p331 = pneg %p70
        %p332 = pneg %p94
        %p333 = pneg %p91
        %s334 = sand.u32 %s24, 1
        %s335 = scalar_lea.sflag [#allocation10], %s334
        %s336 = sand.u32 %s111, 1
        %s337 = smul.addr %s336, 1024
        %s338 = scalar_lea.vmem [#allocation9], %s337
        %p339 = pneg %p124
        %p340 = pneg %p121
        %s341 = sand.u32 %s24, 1
        %s342 = scalar_lea.sflag [#allocation10], %s341
        %s343 = sand.u32 %s141, 1
        %s344 = smul.addr %s343, 4
        %s345 = scalar_lea.vmem [#allocation11], %s344
        %p346 = pneg %p154
        %p347 = pneg %p151
        %p348 = pneg %p184
        %p349 = pneg %p181
        %s350 = sand.u32 %s171, 1
        %s351 = scalar_lea.sflag [#allocation5], %s350
        %s352 = sand.u32 %s171, 1
        %s353 = smul.addr %s352, 800
        %s354 = scalar_lea.vmem [#allocation12], %s353
        %s355 = smul.u32 %s28, 2
        %s356 = sadd.s32 %s355, %s29
        %s357 = smul.u32 4, %s356
        %s358 = smul.u32 %s28, 2
        %s359 = sadd.s32 %s358, %s29
        %s360 = smul.u32 4, %s359
        %s361 = smul.u32 %s28, 2
        %s362 = sadd.s32 %s361, %s29
        %s363 = smul.u32 4, %s362
        %p364 = scmp.eq.s32.totalorder %s29, 0
        // Predicated region
        $region61: #{tpu_custom_call.1} parent=39 // pred_check
          %p365 = pneg %p364
        $region62: #{tpu_custom_call.1} parent=39 // pred_check_branch
          %367 = sbr.rel (%p365) target = $region64
        $region63: #{tpu_custom_call.1} parent=39 // pred_region
          %v368 = vld [vmem:[#allocation3] sm:$0xff]
          %v369 = vld [vmem:[#allocation3 + $0x8] sm:$0xff]
          %v370 = vld [vmem:[#allocation3 + $0x10] sm:$0xff]
          %v371 = vld [vmem:[#allocation3 + $0x18] sm:$0xff]
          %v372 = vld [vmem:[#allocation3 + $0x20] sm:$0xff]
          %v373 = vld [vmem:[#allocation3 + $0x28] sm:$0xff]
          %v374 = vld [vmem:[#allocation3 + $0x30] sm:$0xff]
          %v375 = vld [vmem:[#allocation3 + $0x38] sm:$0xff]
          %v376 = vld [vmem:[#allocation3 + $0x40] sm:$0xff]
          %v377 = vld [vmem:[#allocation3 + $0x48] sm:$0xff]
          %v378 = vld [vmem:[#allocation3 + $0x50] sm:$0xff]
          %v379 = vld [vmem:[#allocation3 + $0x58] sm:$0xff]
          %v380 = vld [vmem:[#allocation3 + $0x60] sm:$0xff]
          %v381 = vld [vmem:[#allocation3 + $0x68] sm:$0xff]
          %v382 = vld [vmem:[#allocation3 + $0x70] sm:$0xff]
          %v383 = vld [vmem:[#allocation3 + $0x78] sm:$0xff]
          %v384 = vld [vmem:[#allocation3 + $0x80] sm:$0xff]
          %v385 = vld [vmem:[#allocation3 + $0x88] sm:$0xff]
          %v386 = vld [vmem:[#allocation3 + $0x90] sm:$0xff]
          %v387 = vld [vmem:[#allocation3 + $0x98] sm:$0xff]
          %v388 = vld [vmem:[#allocation3 + $0xa0] sm:$0xff]
          %v389 = vld [vmem:[#allocation3 + $0xa8] sm:$0xff]
          %v390 = vld [vmem:[#allocation3 + $0xb0] sm:$0xff]
          %v391 = vld [vmem:[#allocation3 + $0xb8] sm:$0xff]
          %v392 = vld [vmem:[#allocation3 + $0xc0] sm:$0xff]
          %v393 = vld [vmem:[#allocation3 + $0xc8] sm:$0xff]
          %v394 = vld [vmem:[#allocation3 + $0xd0] sm:$0xff]
          %v395 = vld [vmem:[#allocation3 + $0xd8] sm:$0xff]
          %v396 = vld [vmem:[#allocation3 + $0xe0] sm:$0xff]
          %v397 = vld [vmem:[#allocation3 + $0xe8] sm:$0xff]
          %v398 = vld [vmem:[#allocation3 + $0xf0] sm:$0xff]
          %v399 = vld [vmem:[#allocation3 + $0xf8] sm:$0xff]
          %v400 = vld [vmem:[#allocation3 + $0x100] sm:$0xff]
          %v401 = vld [vmem:[#allocation3 + $0x108] sm:$0xff]
          %v402 = vld [vmem:[#allocation3 + $0x110] sm:$0xff]
          %v403 = vld [vmem:[#allocation3 + $0x118] sm:$0xff]
          %v404 = vld [vmem:[#allocation3 + $0x120] sm:$0xff]
          %v405 = vld [vmem:[#allocation3 + $0x128] sm:$0xff]
          %v406 = vld [vmem:[#allocation3 + $0x130] sm:$0xff]
          %v407 = vld [vmem:[#allocation3 + $0x138] sm:$0xff]
          %v408 = vld [vmem:[#allocation3 + $0x140] sm:$0xff]
          %v409 = vld [vmem:[#allocation3 + $0x148] sm:$0xff]
          %v410 = vld [vmem:[#allocation3 + $0x150] sm:$0xff]
          %v411 = vld [vmem:[#allocation3 + $0x158] sm:$0xff]
          %v412 = vld [vmem:[#allocation3 + $0x160] sm:$0xff]
          %v413 = vld [vmem:[#allocation3 + $0x168] sm:$0xff]
          %v414 = vld [vmem:[#allocation3 + $0x170] sm:$0xff]
          %v415 = vld [vmem:[#allocation3 + $0x178] sm:$0xff]
          %v416 = vld [vmem:[#allocation3 + $0x180] sm:$0xff]
          %v417 = vld [vmem:[#allocation3 + $0x188] sm:$0xff]
          %v418 = vld [vmem:[#allocation3 + $0x190] sm:$0xff]
          %v419 = vld [vmem:[#allocation3 + $0x198] sm:$0xff]
          %v420 = vld [vmem:[#allocation3 + $0x1a0] sm:$0xff]
          %v421 = vld [vmem:[#allocation3 + $0x1a8] sm:$0xff]
          %v422 = vld [vmem:[#allocation3 + $0x1b0] sm:$0xff]
          %v423 = vld [vmem:[#allocation3 + $0x1b8] sm:$0xff]
          %v424 = vld [vmem:[#allocation3 + $0x1c0] sm:$0xff]
          %v425 = vld [vmem:[#allocation3 + $0x1c8] sm:$0xff]
          %v426 = vld [vmem:[#allocation3 + $0x1d0] sm:$0xff]
          %v427 = vld [vmem:[#allocation3 + $0x1d8] sm:$0xff]
          %v428 = vld [vmem:[#allocation3 + $0x1e0] sm:$0xff]
          %v429 = vld [vmem:[#allocation3 + $0x1e8] sm:$0xff]
          %v430 = vld [vmem:[#allocation3 + $0x1f0] sm:$0xff]
          %v431 = vld [vmem:[#allocation3 + $0x1f8] sm:$0xff]
          %v432 = vld [vmem:[#allocation3 + $0x200] sm:$0xff]
          %v433 = vld [vmem:[#allocation3 + $0x208] sm:$0xff]
          %v434 = vld [vmem:[#allocation3 + $0x210] sm:$0xff]
          %v435 = vld [vmem:[#allocation3 + $0x218] sm:$0xff]
          %v436 = vld [vmem:[#allocation3 + $0x220] sm:$0xff]
          %v437 = vld [vmem:[#allocation3 + $0x228] sm:$0xff]
          %v438 = vld [vmem:[#allocation3 + $0x230] sm:$0xff]
          %v439 = vld [vmem:[#allocation3 + $0x238] sm:$0xff]
          %v440 = vld [vmem:[#allocation3 + $0x240] sm:$0xff]
          %v441 = vld [vmem:[#allocation3 + $0x248] sm:$0xff]
          %v442 = vld [vmem:[#allocation3 + $0x250] sm:$0xff]
          %v443 = vld [vmem:[#allocation3 + $0x258] sm:$0xff]
          %v444 = vld [vmem:[#allocation3 + $0x260] sm:$0xff]
          %v445 = vld [vmem:[#allocation3 + $0x268] sm:$0xff]
          %v446 = vld [vmem:[#allocation3 + $0x270] sm:$0xff]
          %v447 = vld [vmem:[#allocation3 + $0x278] sm:$0xff]
          %v448 = vld [vmem:[#allocation3 + $0x280] sm:$0xff]
          %v449 = vld [vmem:[#allocation3 + $0x288] sm:$0xff]
          %v450 = vld [vmem:[#allocation3 + $0x290] sm:$0xff]
          %v451 = vld [vmem:[#allocation3 + $0x298] sm:$0xff]
          %v452 = vld [vmem:[#allocation3 + $0x2a0] sm:$0xff]
          %v453 = vld [vmem:[#allocation3 + $0x2a8] sm:$0xff]
          %v454 = vld [vmem:[#allocation3 + $0x2b0] sm:$0xff]
          %v455 = vld [vmem:[#allocation3 + $0x2b8] sm:$0xff]
          %v456 = vld [vmem:[#allocation3 + $0x2c0] sm:$0xff]
          %v457 = vld [vmem:[#allocation3 + $0x2c8] sm:$0xff]
          %v458 = vld [vmem:[#allocation3 + $0x2d0] sm:$0xff]
          %v459 = vld [vmem:[#allocation3 + $0x2d8] sm:$0xff]
          %v460 = vld [vmem:[#allocation3 + $0x2e0] sm:$0xff]
          %v461 = vld [vmem:[#allocation3 + $0x2e8] sm:$0xff]
          %v462 = vld [vmem:[#allocation3 + $0x2f0] sm:$0xff]
          %v463 = vld [vmem:[#allocation3 + $0x2f8] sm:$0xff]
          %v464 = vld [vmem:[#allocation3 + $0x300] sm:$0xf]
          %v465 = vld [vmem:[#allocation3 + $0x308] sm:$0xf]
          %v466 = vld [vmem:[#allocation3 + $0x310] sm:$0xf]
          %v467 = vld [vmem:[#allocation3 + $0x318] sm:$0xf]
          %v468 = vadd.f32 %v368, %v369
          %v469 = vadd.f32 %v468, %v370
          %v470 = vadd.f32 %v469, %v371
          %471 = vadd.xlane.f32.xlu0 %v470
          %v472 = vpop.xlane.xlu0 %471
          %v473 = vadd.f32 %v372, %v373
          %v474 = vadd.f32 %v473, %v374
          %v475 = vadd.f32 %v474, %v375
          %476 = vadd.xlane.f32.xlu0 %v475
          %v477 = vpop.xlane.xlu0 %476
          %v478 = vadd.f32 %v376, %v377
          %v479 = vadd.f32 %v478, %v378
          %v480 = vadd.f32 %v479, %v379
          %481 = vadd.xlane.f32.xlu0 %v480
          %v482 = vpop.xlane.xlu0 %481
          %v483 = vadd.f32 %v380, %v381
          %v484 = vadd.f32 %v483, %v382
          %v485 = vadd.f32 %v484, %v383
          %486 = vadd.xlane.f32.xlu0 %v485
          %v487 = vpop.xlane.xlu0 %486
          %v488 = vadd.f32 %v384, %v385
          %v489 = vadd.f32 %v488, %v386
          %v490 = vadd.f32 %v489, %v387
          %491 = vadd.xlane.f32.xlu0 %v490
          %v492 = vpop.xlane.xlu0 %491
          %v493 = vadd.f32 %v388, %v389
          %v494 = vadd.f32 %v493, %v390
          %v495 = vadd.f32 %v494, %v391
          %496 = vadd.xlane.f32.xlu0 %v495
          %v497 = vpop.xlane.xlu0 %496
          %v498 = vadd.f32 %v392, %v393
          %v499 = vadd.f32 %v498, %v394
          %v500 = vadd.f32 %v499, %v395
          %501 = vadd.xlane.f32.xlu0 %v500
          %v502 = vpop.xlane.xlu0 %501
          %v503 = vadd.f32 %v396, %v397
          %v504 = vadd.f32 %v503, %v398
          %v505 = vadd.f32 %v504, %v399
          %506 = vadd.xlane.f32.xlu0 %v505
          %v507 = vpop.xlane.xlu0 %506
          %v508 = vadd.f32 %v400, %v401
          %v509 = vadd.f32 %v508, %v402
          %v510 = vadd.f32 %v509, %v403
          %511 = vadd.xlane.f32.xlu0 %v510
          %v512 = vpop.xlane.xlu0 %511
          %v513 = vadd.f32 %v404, %v405
          %v514 = vadd.f32 %v513, %v406
          %v515 = vadd.f32 %v514, %v407
          %516 = vadd.xlane.f32.xlu0 %v515
          %v517 = vpop.xlane.xlu0 %516
          %v518 = vadd.f32 %v408, %v409
          %v519 = vadd.f32 %v518, %v410
          %v520 = vadd.f32 %v519, %v411
          %521 = vadd.xlane.f32.xlu0 %v520
          %v522 = vpop.xlane.xlu0 %521
          %v523 = vadd.f32 %v412, %v413
          %v524 = vadd.f32 %v523, %v414
          %v525 = vadd.f32 %v524, %v415
          %526 = vadd.xlane.f32.xlu0 %v525
          %v527 = vpop.xlane.xlu0 %526
          %v528 = vadd.f32 %v416, %v417
          %v529 = vadd.f32 %v528, %v418
          %v530 = vadd.f32 %v529, %v419
          %531 = vadd.xlane.f32.xlu0 %v530
          %v532 = vpop.xlane.xlu0 %531
          %v533 = vadd.f32 %v420, %v421
          %v534 = vadd.f32 %v533, %v422
          %v535 = vadd.f32 %v534, %v423
          %536 = vadd.xlane.f32.xlu0 %v535
          %v537 = vpop.xlane.xlu0 %536
          %v538 = vadd.f32 %v424, %v425
          %v539 = vadd.f32 %v538, %v426
          %v540 = vadd.f32 %v539, %v427
          %541 = vadd.xlane.f32.xlu0 %v540
          %v542 = vpop.xlane.xlu0 %541
          %v543 = vadd.f32 %v428, %v429
          %v544 = vadd.f32 %v543, %v430
          %v545 = vadd.f32 %v544, %v431
          %546 = vadd.xlane.f32.xlu0 %v545
          %v547 = vpop.xlane.xlu0 %546
          %v548 = vadd.f32 %v432, %v433
          %v549 = vadd.f32 %v548, %v434
          %v550 = vadd.f32 %v549, %v435
          %551 = vadd.xlane.f32.xlu0 %v550
          %v552 = vpop.xlane.xlu0 %551
          %v553 = vadd.f32 %v436, %v437
          %v554 = vadd.f32 %v553, %v438
          %v555 = vadd.f32 %v554, %v439
          %556 = vadd.xlane.f32.xlu0 %v555
          %v557 = vpop.xlane.xlu0 %556
          %v558 = vadd.f32 %v440, %v441
          %v559 = vadd.f32 %v558, %v442
          %v560 = vadd.f32 %v559, %v443
          %561 = vadd.xlane.f32.xlu0 %v560
          %v562 = vpop.xlane.xlu0 %561
          %v563 = vadd.f32 %v444, %v445
          %v564 = vadd.f32 %v563, %v446
          %v565 = vadd.f32 %v564, %v447
          %566 = vadd.xlane.f32.xlu0 %v565
          %v567 = vpop.xlane.xlu0 %566
          %v568 = vadd.f32 %v448, %v449
          %v569 = vadd.f32 %v568, %v450
          %v570 = vadd.f32 %v569, %v451
          %571 = vadd.xlane.f32.xlu0 %v570
          %v572 = vpop.xlane.xlu0 %571
          %v573 = vadd.f32 %v452, %v453
          %v574 = vadd.f32 %v573, %v454
          %v575 = vadd.f32 %v574, %v455
          %576 = vadd.xlane.f32.xlu0 %v575
          %v577 = vpop.xlane.xlu0 %576
          %v578 = vadd.f32 %v456, %v457
          %v579 = vadd.f32 %v578, %v458
          %v580 = vadd.f32 %v579, %v459
          %581 = vadd.xlane.f32.xlu0 %v580
          %v582 = vpop.xlane.xlu0 %581
          %v583 = vadd.f32 %v460, %v461
          %v584 = vadd.f32 %v583, %v462
          %v585 = vadd.f32 %v584, %v463
          %586 = vadd.xlane.f32.xlu0 %v585
          %v587 = vpop.xlane.xlu0 %586
          %vm588 = vcmask 1043456
          %v589 = vsel %vm588, %v464, 0.0
          %v590 = vsel %vm588, %v465, 0.0
          %v591 = vadd.f32 %v589, %v590
          %v592 = vsel %vm588, %v466, 0.0
          %v593 = vadd.f32 %v591, %v592
          %v594 = vsel %vm588, %v467, 0.0
          %v595 = vadd.f32 %v593, %v594
          %596 = vadd.xlane.f32.xlu0 %v595
          %v597 = vpop.xlane.xlu0 %596
          %v598 = vrcp.pop 512.0
          %v599 = vmul.f32 512.0, %v598
          %v600 = vsub.f32 1.0, %v599
          %v601 = vmul.f32 %v598, %v600
          %v602 = vadd.f32 %v598, %v601
          %vm603 = vweird.f32 %v598
          %v604 = vsel %vm603, %v598, %v602
          %v605 = vmul.f32 %v472, %v604
          %v606 = vmul.f32 %v477, %v604
          %v607 = vmul.f32 %v482, %v604
          %v608 = vmul.f32 %v487, %v604
          %v609 = vmul.f32 %v492, %v604
          %v610 = vmul.f32 %v497, %v604
          %v611 = vmul.f32 %v502, %v604
          %v612 = vmul.f32 %v507, %v604
          %v613 = vmul.f32 %v512, %v604
          %v614 = vmul.f32 %v517, %v604
          %v615 = vmul.f32 %v522, %v604
          %v616 = vmul.f32 %v527, %v604
          %v617 = vmul.f32 %v532, %v604
          %v618 = vmul.f32 %v537, %v604
          %v619 = vmul.f32 %v542, %v604
          %v620 = vmul.f32 %v547, %v604
          %v621 = vmul.f32 %v552, %v604
          %v622 = vmul.f32 %v557, %v604
          %v623 = vmul.f32 %v562, %v604
          %v624 = vmul.f32 %v567, %v604
          %v625 = vmul.f32 %v572, %v604
          %v626 = vmul.f32 %v577, %v604
          %v627 = vmul.f32 %v582, %v604
          %v628 = vmul.f32 %v587, %v604
          %v629 = vmul.f32 %v597, %v604
          %v630 = vsub.f32 %v368, %v605
          %v631 = vsub.f32 %v369, %v605
          %v632 = vsub.f32 %v370, %v605
          %v633 = vsub.f32 %v371, %v605
          %v634 = vsub.f32 %v372, %v606
          %v635 = vsub.f32 %v373, %v606
          %v636 = vsub.f32 %v374, %v606
          %v637 = vsub.f32 %v375, %v606
          %v638 = vsub.f32 %v376, %v607
          %v639 = vsub.f32 %v377, %v607
          %v640 = vsub.f32 %v378, %v607
          %v641 = vsub.f32 %v379, %v607
          %v642 = vsub.f32 %v380, %v608
          %v643 = vsub.f32 %v381, %v608
          %v644 = vsub.f32 %v382, %v608
          %v645 = vsub.f32 %v383, %v608
          %v646 = vsub.f32 %v384, %v609
          %v647 = vsub.f32 %v385, %v609
          %v648 = vsub.f32 %v386, %v609
          %v649 = vsub.f32 %v387, %v609
          %v650 = vsub.f32 %v388, %v610
          %v651 = vsub.f32 %v389, %v610
          %v652 = vsub.f32 %v390, %v610
          %v653 = vsub.f32 %v391, %v610
          %v654 = vsub.f32 %v392, %v611
          %v655 = vsub.f32 %v393, %v611
          %v656 = vsub.f32 %v394, %v611
          %v657 = vsub.f32 %v395, %v611
          %v658 = vsub.f32 %v396, %v612
          %v659 = vsub.f32 %v397, %v612
          %v660 = vsub.f32 %v398, %v612
          %v661 = vsub.f32 %v399, %v612
          %v662 = vsub.f32 %v400, %v613
          %v663 = vsub.f32 %v401, %v613
          %v664 = vsub.f32 %v402, %v613
          %v665 = vsub.f32 %v403, %v613
          %v666 = vsub.f32 %v404, %v614
          %v667 = vsub.f32 %v405, %v614
          %v668 = vsub.f32 %v406, %v614
          %v669 = vsub.f32 %v407, %v614
          %v670 = vsub.f32 %v408, %v615
          %v671 = vsub.f32 %v409, %v615
          %v672 = vsub.f32 %v410, %v615
          %v673 = vsub.f32 %v411, %v615
          %v674 = vsub.f32 %v412, %v616
          %v675 = vsub.f32 %v413, %v616
          %v676 = vsub.f32 %v414, %v616
          %v677 = vsub.f32 %v415, %v616
          %v678 = vsub.f32 %v416, %v617
          %v679 = vsub.f32 %v417, %v617
          %v680 = vsub.f32 %v418, %v617
          %v681 = vsub.f32 %v419, %v617
          %v682 = vsub.f32 %v420, %v618
          %v683 = vsub.f32 %v421, %v618
          %v684 = vsub.f32 %v422, %v618
          %v685 = vsub.f32 %v423, %v618
          %v686 = vsub.f32 %v424, %v619
          %v687 = vsub.f32 %v425, %v619
          %v688 = vsub.f32 %v426, %v619
          %v689 = vsub.f32 %v427, %v619
          %v690 = vsub.f32 %v428, %v620
          %v691 = vsub.f32 %v429, %v620
          %v692 = vsub.f32 %v430, %v620
          %v693 = vsub.f32 %v431, %v620
          %v694 = vsub.f32 %v432, %v621
          %v695 = vsub.f32 %v433, %v621
          %v696 = vsub.f32 %v434, %v621
          %v697 = vsub.f32 %v435, %v621
          %v698 = vsub.f32 %v436, %v622
          %v699 = vsub.f32 %v437, %v622
          %v700 = vsub.f32 %v438, %v622
          %v701 = vsub.f32 %v439, %v622
          %v702 = vsub.f32 %v440, %v623
          %v703 = vsub.f32 %v441, %v623
          %v704 = vsub.f32 %v442, %v623
          %v705 = vsub.f32 %v443, %v623
          %v706 = vsub.f32 %v444, %v624
          %v707 = vsub.f32 %v445, %v624
          %v708 = vsub.f32 %v446, %v624
          %v709 = vsub.f32 %v447, %v624
          %v710 = vsub.f32 %v448, %v625
          %v711 = vsub.f32 %v449, %v625
          %v712 = vsub.f32 %v450, %v625
          %v713 = vsub.f32 %v451, %v625
          %v714 = vsub.f32 %v452, %v626
          %v715 = vsub.f32 %v453, %v626
          %v716 = vsub.f32 %v454, %v626
          %v717 = vsub.f32 %v455, %v626
          %v718 = vsub.f32 %v456, %v627
          %v719 = vsub.f32 %v457, %v627
          %v720 = vsub.f32 %v458, %v627
          %v721 = vsub.f32 %v459, %v627
          %v722 = vsub.f32 %v460, %v628
          %v723 = vsub.f32 %v461, %v628
          %v724 = vsub.f32 %v462, %v628
          %v725 = vsub.f32 %v463, %v628
          %v726 = vsub.f32 %v464, %v629
          %v727 = vsub.f32 %v465, %v629
          %v728 = vsub.f32 %v466, %v629
          %v729 = vsub.f32 %v467, %v629
          %v730 = vmul.f32 %v630, %v630
          %v731 = vmul.f32 %v631, %v631
          %v732 = vmul.f32 %v632, %v632
          %v733 = vmul.f32 %v633, %v633
          %v734 = vmul.f32 %v634, %v634
          %v735 = vmul.f32 %v635, %v635
          %v736 = vmul.f32 %v636, %v636
          %v737 = vmul.f32 %v637, %v637
          %v738 = vmul.f32 %v638, %v638
          %v739 = vmul.f32 %v639, %v639
          %v740 = vmul.f32 %v640, %v640
          %v741 = vmul.f32 %v641, %v641
          %v742 = vmul.f32 %v642, %v642
          %v743 = vmul.f32 %v643, %v643
          %v744 = vmul.f32 %v644, %v644
          %v745 = vmul.f32 %v645, %v645
          %v746 = vmul.f32 %v646, %v646
          %v747 = vmul.f32 %v647, %v647
          %v748 = vmul.f32 %v648, %v648
          %v749 = vmul.f32 %v649, %v649
          %v750 = vmul.f32 %v650, %v650
          %v751 = vmul.f32 %v651, %v651
          %v752 = vmul.f32 %v652, %v652
          %v753 = vmul.f32 %v653, %v653
          %v754 = vmul.f32 %v654, %v654
          %v755 = vmul.f32 %v655, %v655
          %v756 = vmul.f32 %v656, %v656
          %v757 = vmul.f32 %v657, %v657
          %v758 = vmul.f32 %v658, %v658
          %v759 = vmul.f32 %v659, %v659
          %v760 = vmul.f32 %v660, %v660
          %v761 = vmul.f32 %v661, %v661
          %v762 = vmul.f32 %v662, %v662
          %v763 = vmul.f32 %v663, %v663
          %v764 = vmul.f32 %v664, %v664
          %v765 = vmul.f32 %v665, %v665
          %v766 = vmul.f32 %v666, %v666
          %v767 = vmul.f32 %v667, %v667
          %v768 = vmul.f32 %v668, %v668
          %v769 = vmul.f32 %v669, %v669
          %v770 = vmul.f32 %v670, %v670
          %v771 = vmul.f32 %v671, %v671
          %v772 = vmul.f32 %v672, %v672
          %v773 = vmul.f32 %v673, %v673
          %v774 = vmul.f32 %v674, %v674
          %v775 = vmul.f32 %v675, %v675
          %v776 = vmul.f32 %v676, %v676
          %v777 = vmul.f32 %v677, %v677
          %v778 = vmul.f32 %v678, %v678
          %v779 = vmul.f32 %v679, %v679
          %v780 = vmul.f32 %v680, %v680
          %v781 = vmul.f32 %v681, %v681
          %v782 = vmul.f32 %v682, %v682
          %v783 = vmul.f32 %v683, %v683
          %v784 = vmul.f32 %v684, %v684
          %v785 = vmul.f32 %v685, %v685
          %v786 = vmul.f32 %v686, %v686
          %v787 = vmul.f32 %v687, %v687
          %v788 = vmul.f32 %v688, %v688
          %v789 = vmul.f32 %v689, %v689
          %v790 = vmul.f32 %v690, %v690
          %v791 = vmul.f32 %v691, %v691
          %v792 = vmul.f32 %v692, %v692
          %v793 = vmul.f32 %v693, %v693
          %v794 = vmul.f32 %v694, %v694
          %v795 = vmul.f32 %v695, %v695
          %v796 = vmul.f32 %v696, %v696
          %v797 = vmul.f32 %v697, %v697
          %v798 = vmul.f32 %v698, %v698
          %v799 = vmul.f32 %v699, %v699
          %v800 = vmul.f32 %v700, %v700
          %v801 = vmul.f32 %v701, %v701
          %v802 = vmul.f32 %v702, %v702
          %v803 = vmul.f32 %v703, %v703
          %v804 = vmul.f32 %v704, %v704
          %v805 = vmul.f32 %v705, %v705
          %v806 = vmul.f32 %v706, %v706
          %v807 = vmul.f32 %v707, %v707
          %v808 = vmul.f32 %v708, %v708
          %v809 = vmul.f32 %v709, %v709
          %v810 = vmul.f32 %v710, %v710
          %v811 = vmul.f32 %v711, %v711
          %v812 = vmul.f32 %v712, %v712
          %v813 = vmul.f32 %v713, %v713
          %v814 = vmul.f32 %v714, %v714
          %v815 = vmul.f32 %v715, %v715
          %v816 = vmul.f32 %v716, %v716
          %v817 = vmul.f32 %v717, %v717
          %v818 = vmul.f32 %v718, %v718
          %v819 = vmul.f32 %v719, %v719
          %v820 = vmul.f32 %v720, %v720
          %v821 = vmul.f32 %v721, %v721
          %v822 = vmul.f32 %v722, %v722
          %v823 = vmul.f32 %v723, %v723
          %v824 = vmul.f32 %v724, %v724
          %v825 = vmul.f32 %v725, %v725
          %v826 = vmul.f32 %v726, %v726
          %v827 = vmul.f32 %v727, %v727
          %v828 = vmul.f32 %v728, %v728
          %v829 = vmul.f32 %v729, %v729
          %v830 = vadd.f32 %v730, %v731
          %v831 = vadd.f32 %v830, %v732
          %v832 = vadd.f32 %v831, %v733
          %833 = vadd.xlane.f32.xlu0 %v832
          %v834 = vpop.xlane.xlu0 %833
          %v835 = vadd.f32 %v734, %v735
          %v836 = vadd.f32 %v835, %v736
          %v837 = vadd.f32 %v836, %v737
          %838 = vadd.xlane.f32.xlu0 %v837
          %v839 = vpop.xlane.xlu0 %838
          %v840 = vadd.f32 %v738, %v739
          %v841 = vadd.f32 %v840, %v740
          %v842 = vadd.f32 %v841, %v741
          %843 = vadd.xlane.f32.xlu0 %v842
          %v844 = vpop.xlane.xlu0 %843
          %v845 = vadd.f32 %v742, %v743
          %v846 = vadd.f32 %v845, %v744
          %v847 = vadd.f32 %v846, %v745
          %848 = vadd.xlane.f32.xlu0 %v847
          %v849 = vpop.xlane.xlu0 %848
          %v850 = vadd.f32 %v746, %v747
          %v851 = vadd.f32 %v850, %v748
          %v852 = vadd.f32 %v851, %v749
          %853 = vadd.xlane.f32.xlu0 %v852
          %v854 = vpop.xlane.xlu0 %853
          %v855 = vadd.f32 %v750, %v751
          %v856 = vadd.f32 %v855, %v752
          %v857 = vadd.f32 %v856, %v753
          %858 = vadd.xlane.f32.xlu0 %v857
          %v859 = vpop.xlane.xlu0 %858
          %v860 = vadd.f32 %v754, %v755
          %v861 = vadd.f32 %v860, %v756
          %v862 = vadd.f32 %v861, %v757
          %863 = vadd.xlane.f32.xlu0 %v862
          %v864 = vpop.xlane.xlu0 %863
          %v865 = vadd.f32 %v758, %v759
          %v866 = vadd.f32 %v865, %v760
          %v867 = vadd.f32 %v866, %v761
          %868 = vadd.xlane.f32.xlu0 %v867
          %v869 = vpop.xlane.xlu0 %868
          %v870 = vadd.f32 %v762, %v763
          %v871 = vadd.f32 %v870, %v764
          %v872 = vadd.f32 %v871, %v765
          %873 = vadd.xlane.f32.xlu0 %v872
          %v874 = vpop.xlane.xlu0 %873
          %v875 = vadd.f32 %v766, %v767
          %v876 = vadd.f32 %v875, %v768
          %v877 = vadd.f32 %v876, %v769
          %878 = vadd.xlane.f32.xlu0 %v877
          %v879 = vpop.xlane.xlu0 %878
          %v880 = vadd.f32 %v770, %v771
          %v881 = vadd.f32 %v880, %v772
          %v882 = vadd.f32 %v881, %v773
          %883 = vadd.xlane.f32.xlu0 %v882
          %v884 = vpop.xlane.xlu0 %883
          %v885 = vadd.f32 %v774, %v775
          %v886 = vadd.f32 %v885, %v776
          %v887 = vadd.f32 %v886, %v777
          %888 = vadd.xlane.f32.xlu0 %v887
          %v889 = vpop.xlane.xlu0 %888
          %v890 = vadd.f32 %v778, %v779
          %v891 = vadd.f32 %v890, %v780
          %v892 = vadd.f32 %v891, %v781
          %893 = vadd.xlane.f32.xlu0 %v892
          %v894 = vpop.xlane.xlu0 %893
          %v895 = vadd.f32 %v782, %v783
          %v896 = vadd.f32 %v895, %v784
          %v897 = vadd.f32 %v896, %v785
          %898 = vadd.xlane.f32.xlu0 %v897
          %v899 = vpop.xlane.xlu0 %898
          %v900 = vadd.f32 %v786, %v787
          %v901 = vadd.f32 %v900, %v788
          %v902 = vadd.f32 %v901, %v789
          %903 = vadd.xlane.f32.xlu0 %v902
          %v904 = vpop.xlane.xlu0 %903
          %v905 = vadd.f32 %v790, %v791
          %v906 = vadd.f32 %v905, %v792
          %v907 = vadd.f32 %v906, %v793
          %908 = vadd.xlane.f32.xlu0 %v907
          %v909 = vpop.xlane.xlu0 %908
          %v910 = vadd.f32 %v794, %v795
          %v911 = vadd.f32 %v910, %v796
          %v912 = vadd.f32 %v911, %v797
          %913 = vadd.xlane.f32.xlu0 %v912
          %v914 = vpop.xlane.xlu0 %913
          %v915 = vadd.f32 %v798, %v799
          %v916 = vadd.f32 %v915, %v800
          %v917 = vadd.f32 %v916, %v801
          %918 = vadd.xlane.f32.xlu0 %v917
          %v919 = vpop.xlane.xlu0 %918
          %v920 = vadd.f32 %v802, %v803
          %v921 = vadd.f32 %v920, %v804
          %v922 = vadd.f32 %v921, %v805
          %923 = vadd.xlane.f32.xlu0 %v922
          %v924 = vpop.xlane.xlu0 %923
          %v925 = vadd.f32 %v806, %v807
          %v926 = vadd.f32 %v925, %v808
          %v927 = vadd.f32 %v926, %v809
          %928 = vadd.xlane.f32.xlu0 %v927
          %v929 = vpop.xlane.xlu0 %928
          %v930 = vadd.f32 %v810, %v811
          %v931 = vadd.f32 %v930, %v812
          %v932 = vadd.f32 %v931, %v813
          %933 = vadd.xlane.f32.xlu0 %v932
          %v934 = vpop.xlane.xlu0 %933
          %v935 = vadd.f32 %v814, %v815
          %v936 = vadd.f32 %v935, %v816
          %v937 = vadd.f32 %v936, %v817
          %938 = vadd.xlane.f32.xlu0 %v937
          %v939 = vpop.xlane.xlu0 %938
          %v940 = vadd.f32 %v818, %v819
          %v941 = vadd.f32 %v940, %v820
          %v942 = vadd.f32 %v941, %v821
          %943 = vadd.xlane.f32.xlu0 %v942
          %v944 = vpop.xlane.xlu0 %943
          %v945 = vadd.f32 %v822, %v823
          %v946 = vadd.f32 %v945, %v824
          %v947 = vadd.f32 %v946, %v825
          %948 = vadd.xlane.f32.xlu0 %v947
          %v949 = vpop.xlane.xlu0 %948
          %v950 = vsel %vm588, %v826, 0.0
          %v951 = vsel %vm588, %v827, 0.0
          %v952 = vadd.f32 %v950, %v951
          %v953 = vsel %vm588, %v828, 0.0
          %v954 = vadd.f32 %v952, %v953
          %v955 = vsel %vm588, %v829, 0.0
          %v956 = vadd.f32 %v954, %v955
          %957 = vadd.xlane.f32.xlu0 %v956
          %v958 = vpop.xlane.xlu0 %957
          %v959 = vmul.f32 %v834, %v604
          %v960 = vmul.f32 %v839, %v604
          %v961 = vmul.f32 %v844, %v604
          %v962 = vmul.f32 %v849, %v604
          %v963 = vmul.f32 %v854, %v604
          %v964 = vmul.f32 %v859, %v604
          %v965 = vmul.f32 %v864, %v604
          %v966 = vmul.f32 %v869, %v604
          %v967 = vmul.f32 %v874, %v604
          %v968 = vmul.f32 %v879, %v604
          %v969 = vmul.f32 %v884, %v604
          %v970 = vmul.f32 %v889, %v604
          %v971 = vmul.f32 %v894, %v604
          %v972 = vmul.f32 %v899, %v604
          %v973 = vmul.f32 %v904, %v604
          %v974 = vmul.f32 %v909, %v604
          %v975 = vmul.f32 %v914, %v604
          %v976 = vmul.f32 %v919, %v604
          %v977 = vmul.f32 %v924, %v604
          %v978 = vmul.f32 %v929, %v604
          %v979 = vmul.f32 %v934, %v604
          %v980 = vmul.f32 %v939, %v604
          %v981 = vmul.f32 %v944, %v604
          %v982 = vmul.f32 %v949, %v604
          %v983 = vmul.f32 %v958, %v604
          %v984 = vadd.f32 %v959, 1e-06
          %v985 = vadd.f32 %v960, 1e-06
          %v986 = vadd.f32 %v961, 1e-06
          %v987 = vadd.f32 %v962, 1e-06
          %v988 = vadd.f32 %v963, 1e-06
          %v989 = vadd.f32 %v964, 1e-06
          %v990 = vadd.f32 %v965, 1e-06
          %v991 = vadd.f32 %v966, 1e-06
          %v992 = vadd.f32 %v967, 1e-06
          %v993 = vadd.f32 %v968, 1e-06
          %v994 = vadd.f32 %v969, 1e-06
          %v995 = vadd.f32 %v970, 1e-06
          %v996 = vadd.f32 %v971, 1e-06
          %v997 = vadd.f32 %v972, 1e-06
          %v998 = vadd.f32 %v973, 1e-06
          %v999 = vadd.f32 %v974, 1e-06
          %v1000 = vadd.f32 %v975, 1e-06
          %v1001 = vadd.f32 %v976, 1e-06
          %v1002 = vadd.f32 %v977, 1e-06
          %v1003 = vadd.f32 %v978, 1e-06
          %v1004 = vadd.f32 %v979, 1e-06
          %v1005 = vadd.f32 %v980, 1e-06
          %v1006 = vadd.f32 %v981, 1e-06
          %v1007 = vadd.f32 %v982, 1e-06
          %v1008 = vadd.f32 %v983, 1e-06
          %v1009 = vrsqrt.pop %v984
          %v1010 = vmul.f32 %v1009, %v984
          %v1011 = vmul.f32 %v1010, %v1009
          %v1012 = vmul.f32 0.5, %v1011
          %v1013 = vsub.f32 1.5, %v1012
          %v1014 = vmul.f32 %v1009, %v1013
          %vm1015 = vweird.f32 %v984
          %vm1016 = vweird.f32 %v1009
          %vm1017 = vmor %vm1015, %vm1016
          %v1018 = vsel %vm1017, %v1009, %v1014
          %v1019 = vrsqrt.pop %v985
          %v1020 = vmul.f32 %v1019, %v985
          %v1021 = vmul.f32 %v1020, %v1019
          %v1022 = vmul.f32 0.5, %v1021
          %v1023 = vsub.f32 1.5, %v1022
          %v1024 = vmul.f32 %v1019, %v1023
          %vm1025 = vweird.f32 %v985
          %vm1026 = vweird.f32 %v1019
          %vm1027 = vmor %vm1025, %vm1026
          %v1028 = vsel %vm1027, %v1019, %v1024
          %v1029 = vrsqrt.pop %v986
          %v1030 = vmul.f32 %v1029, %v986
          %v1031 = vmul.f32 %v1030, %v1029
          %v1032 = vmul.f32 0.5, %v1031
          %v1033 = vsub.f32 1.5, %v1032
          %v1034 = vmul.f32 %v1029, %v1033
          %vm1035 = vweird.f32 %v986
          %vm1036 = vweird.f32 %v1029
          %vm1037 = vmor %vm1035, %vm1036
          %v1038 = vsel %vm1037, %v1029, %v1034
          %v1039 = vrsqrt.pop %v987
          %v1040 = vmul.f32 %v1039, %v987
          %v1041 = vmul.f32 %v1040, %v1039
          %v1042 = vmul.f32 0.5, %v1041
          %v1043 = vsub.f32 1.5, %v1042
          %v1044 = vmul.f32 %v1039, %v1043
          %vm1045 = vweird.f32 %v987
          %vm1046 = vweird.f32 %v1039
          %vm1047 = vmor %vm1045, %vm1046
          %v1048 = vsel %vm1047, %v1039, %v1044
          %v1049 = vrsqrt.pop %v988
          %v1050 = vmul.f32 %v1049, %v988
          %v1051 = vmul.f32 %v1050, %v1049
          %v1052 = vmul.f32 0.5, %v1051
          %v1053 = vsub.f32 1.5, %v1052
          %v1054 = vmul.f32 %v1049, %v1053
          %vm1055 = vweird.f32 %v988
          %vm1056 = vweird.f32 %v1049
          %vm1057 = vmor %vm1055, %vm1056
          %v1058 = vsel %vm1057, %v1049, %v1054
          %v1059 = vrsqrt.pop %v989
          %v1060 = vmul.f32 %v1059, %v989
          %v1061 = vmul.f32 %v1060, %v1059
          %v1062 = vmul.f32 0.5, %v1061
          %v1063 = vsub.f32 1.5, %v1062
          %v1064 = vmul.f32 %v1059, %v1063
          %vm1065 = vweird.f32 %v989
          %vm1066 = vweird.f32 %v1059
          %vm1067 = vmor %vm1065, %vm1066
          %v1068 = vsel %vm1067, %v1059, %v1064
          %v1069 = vrsqrt.pop %v990
          %v1070 = vmul.f32 %v1069, %v990
          %v1071 = vmul.f32 %v1070, %v1069
          %v1072 = vmul.f32 0.5, %v1071
          %v1073 = vsub.f32 1.5, %v1072
          %v1074 = vmul.f32 %v1069, %v1073
          %vm1075 = vweird.f32 %v990
          %vm1076 = vweird.f32 %v1069
          %vm1077 = vmor %vm1075, %vm1076
          %v1078 = vsel %vm1077, %v1069, %v1074
          %v1079 = vrsqrt.pop %v991
          %v1080 = vmul.f32 %v1079, %v991
          %v1081 = vmul.f32 %v1080, %v1079
          %v1082 = vmul.f32 0.5, %v1081
          %v1083 = vsub.f32 1.5, %v1082
          %v1084 = vmul.f32 %v1079, %v1083
          %vm1085 = vweird.f32 %v991
          %vm1086 = vweird.f32 %v1079
          %vm1087 = vmor %vm1085, %vm1086
          %v1088 = vsel %vm1087, %v1079, %v1084
          %v1089 = vrsqrt.pop %v992
          %v1090 = vmul.f32 %v1089, %v992
          %v1091 = vmul.f32 %v1090, %v1089
          %v1092 = vmul.f32 0.5, %v1091
          %v1093 = vsub.f32 1.5, %v1092
          %v1094 = vmul.f32 %v1089, %v1093
          %vm1095 = vweird.f32 %v992
          %vm1096 = vweird.f32 %v1089
          %vm1097 = vmor %vm1095, %vm1096
          %v1098 = vsel %vm1097, %v1089, %v1094
          %v1099 = vrsqrt.pop %v993
          %v1100 = vmul.f32 %v1099, %v993
          %v1101 = vmul.f32 %v1100, %v1099
          %v1102 = vmul.f32 0.5, %v1101
          %v1103 = vsub.f32 1.5, %v1102
          %v1104 = vmul.f32 %v1099, %v1103
          %vm1105 = vweird.f32 %v993
          %vm1106 = vweird.f32 %v1099
          %vm1107 = vmor %vm1105, %vm1106
          %v1108 = vsel %vm1107, %v1099, %v1104
          %v1109 = vrsqrt.pop %v994
          %v1110 = vmul.f32 %v1109, %v994
          %v1111 = vmul.f32 %v1110, %v1109
          %v1112 = vmul.f32 0.5, %v1111
          %v1113 = vsub.f32 1.5, %v1112
          %v1114 = vmul.f32 %v1109, %v1113
          %vm1115 = vweird.f32 %v994
          %vm1116 = vweird.f32 %v1109
          %vm1117 = vmor %vm1115, %vm1116
          %v1118 = vsel %vm1117, %v1109, %v1114
          %v1119 = vrsqrt.pop %v995
          %v1120 = vmul.f32 %v1119, %v995
          %v1121 = vmul.f32 %v1120, %v1119
          %v1122 = vmul.f32 0.5, %v1121
          %v1123 = vsub.f32 1.5, %v1122
          %v1124 = vmul.f32 %v1119, %v1123
          %vm1125 = vweird.f32 %v995
          %vm1126 = vweird.f32 %v1119
          %vm1127 = vmor %vm1125, %vm1126
          %v1128 = vsel %vm1127, %v1119, %v1124
          %v1129 = vrsqrt.pop %v996
          %v1130 = vmul.f32 %v1129, %v996
          %v1131 = vmul.f32 %v1130, %v1129
          %v1132 = vmul.f32 0.5, %v1131
          %v1133 = vsub.f32 1.5, %v1132
          %v1134 = vmul.f32 %v1129, %v1133
          %vm1135 = vweird.f32 %v996
          %vm1136 = vweird.f32 %v1129
          %vm1137 = vmor %vm1135, %vm1136
          %v1138 = vsel %vm1137, %v1129, %v1134
          %v1139 = vrsqrt.pop %v997
          %v1140 = vmul.f32 %v1139, %v997
          %v1141 = vmul.f32 %v1140, %v1139
          %v1142 = vmul.f32 0.5, %v1141
          %v1143 = vsub.f32 1.5, %v1142
          %v1144 = vmul.f32 %v1139, %v1143
          %vm1145 = vweird.f32 %v997
          %vm1146 = vweird.f32 %v1139
          %vm1147 = vmor %vm1145, %vm1146
          %v1148 = vsel %vm1147, %v1139, %v1144
          %v1149 = vrsqrt.pop %v998
          %v1150 = vmul.f32 %v1149, %v998
          %v1151 = vmul.f32 %v1150, %v1149
          %v1152 = vmul.f32 0.5, %v1151
          %v1153 = vsub.f32 1.5, %v1152
          %v1154 = vmul.f32 %v1149, %v1153
          %vm1155 = vweird.f32 %v998
          %vm1156 = vweird.f32 %v1149
          %vm1157 = vmor %vm1155, %vm1156
          %v1158 = vsel %vm1157, %v1149, %v1154
          %v1159 = vrsqrt.pop %v999
          %v1160 = vmul.f32 %v1159, %v999
          %v1161 = vmul.f32 %v1160, %v1159
          %v1162 = vmul.f32 0.5, %v1161
          %v1163 = vsub.f32 1.5, %v1162
          %v1164 = vmul.f32 %v1159, %v1163
          %vm1165 = vweird.f32 %v999
          %vm1166 = vweird.f32 %v1159
          %vm1167 = vmor %vm1165, %vm1166
          %v1168 = vsel %vm1167, %v1159, %v1164
          %v1169 = vrsqrt.pop %v1000
          %v1170 = vmul.f32 %v1169, %v1000
          %v1171 = vmul.f32 %v1170, %v1169
          %v1172 = vmul.f32 0.5, %v1171
          %v1173 = vsub.f32 1.5, %v1172
          %v1174 = vmul.f32 %v1169, %v1173
          %vm1175 = vweird.f32 %v1000
          %vm1176 = vweird.f32 %v1169
          %vm1177 = vmor %vm1175, %vm1176
          %v1178 = vsel %vm1177, %v1169, %v1174
          %v1179 = vrsqrt.pop %v1001
          %v1180 = vmul.f32 %v1179, %v1001
          %v1181 = vmul.f32 %v1180, %v1179
          %v1182 = vmul.f32 0.5, %v1181
          %v1183 = vsub.f32 1.5, %v1182
          %v1184 = vmul.f32 %v1179, %v1183
          %vm1185 = vweird.f32 %v1001
          %vm1186 = vweird.f32 %v1179
          %vm1187 = vmor %vm1185, %vm1186
          %v1188 = vsel %vm1187, %v1179, %v1184
          %v1189 = vrsqrt.pop %v1002
          %v1190 = vmul.f32 %v1189, %v1002
          %v1191 = vmul.f32 %v1190, %v1189
          %v1192 = vmul.f32 0.5, %v1191
          %v1193 = vsub.f32 1.5, %v1192
          %v1194 = vmul.f32 %v1189, %v1193
          %vm1195 = vweird.f32 %v1002
          %vm1196 = vweird.f32 %v1189
          %vm1197 = vmor %vm1195, %vm1196
          %v1198 = vsel %vm1197, %v1189, %v1194
          %v1199 = vrsqrt.pop %v1003
          %v1200 = vmul.f32 %v1199, %v1003
          %v1201 = vmul.f32 %v1200, %v1199
          %v1202 = vmul.f32 0.5, %v1201
          %v1203 = vsub.f32 1.5, %v1202
          %v1204 = vmul.f32 %v1199, %v1203
          %vm1205 = vweird.f32 %v1003
          %vm1206 = vweird.f32 %v1199
          %vm1207 = vmor %vm1205, %vm1206
          %v1208 = vsel %vm1207, %v1199, %v1204
          %v1209 = vrsqrt.pop %v1004
          %v1210 = vmul.f32 %v1209, %v1004
          %v1211 = vmul.f32 %v1210, %v1209
          %v1212 = vmul.f32 0.5, %v1211
          %v1213 = vsub.f32 1.5, %v1212
          %v1214 = vmul.f32 %v1209, %v1213
          %vm1215 = vweird.f32 %v1004
          %vm1216 = vweird.f32 %v1209
          %vm1217 = vmor %vm1215, %vm1216
          %v1218 = vsel %vm1217, %v1209, %v1214
          %v1219 = vrsqrt.pop %v1005
          %v1220 = vmul.f32 %v1219, %v1005
          %v1221 = vmul.f32 %v1220, %v1219
          %v1222 = vmul.f32 0.5, %v1221
          %v1223 = vsub.f32 1.5, %v1222
          %v1224 = vmul.f32 %v1219, %v1223
          %vm1225 = vweird.f32 %v1005
          %vm1226 = vweird.f32 %v1219
          %vm1227 = vmor %vm1225, %vm1226
          %v1228 = vsel %vm1227, %v1219, %v1224
          %v1229 = vrsqrt.pop %v1006
          %v1230 = vmul.f32 %v1229, %v1006
          %v1231 = vmul.f32 %v1230, %v1229
          %v1232 = vmul.f32 0.5, %v1231
          %v1233 = vsub.f32 1.5, %v1232
          %v1234 = vmul.f32 %v1229, %v1233
          %vm1235 = vweird.f32 %v1006
          %vm1236 = vweird.f32 %v1229
          %vm1237 = vmor %vm1235, %vm1236
          %v1238 = vsel %vm1237, %v1229, %v1234
          %v1239 = vrsqrt.pop %v1007
          %v1240 = vmul.f32 %v1239, %v1007
          %v1241 = vmul.f32 %v1240, %v1239
          %v1242 = vmul.f32 0.5, %v1241
          %v1243 = vsub.f32 1.5, %v1242
          %v1244 = vmul.f32 %v1239, %v1243
          %vm1245 = vweird.f32 %v1007
          %vm1246 = vweird.f32 %v1239
          %vm1247 = vmor %vm1245, %vm1246
          %v1248 = vsel %vm1247, %v1239, %v1244
          %v1249 = vrsqrt.pop %v1008
          %v1250 = vmul.f32 %v1249, %v1008
          %v1251 = vmul.f32 %v1250, %v1249
          %v1252 = vmul.f32 0.5, %v1251
          %v1253 = vsub.f32 1.5, %v1252
          %v1254 = vmul.f32 %v1249, %v1253
          %vm1255 = vweird.f32 %v1008
          %vm1256 = vweird.f32 %v1249
          %vm1257 = vmor %vm1255, %vm1256
          %v1258 = vsel %vm1257, %v1249, %v1254
          %v1259 = vmul.f32 %v630, %v1018
          %v1260 = vmul.f32 %v631, %v1018
          %v1261 = vmul.f32 %v632, %v1018
          %v1262 = vmul.f32 %v633, %v1018
          %v1263 = vmul.f32 %v634, %v1028
          %v1264 = vmul.f32 %v635, %v1028
          %v1265 = vmul.f32 %v636, %v1028
          %v1266 = vmul.f32 %v637, %v1028
          %v1267 = vmul.f32 %v638, %v1038
          %v1268 = vmul.f32 %v639, %v1038
          %v1269 = vmul.f32 %v640, %v1038
          %v1270 = vmul.f32 %v641, %v1038
          %v1271 = vmul.f32 %v642, %v1048
          %v1272 = vmul.f32 %v643, %v1048
          %v1273 = vmul.f32 %v644, %v1048
          %v1274 = vmul.f32 %v645, %v1048
          %v1275 = vmul.f32 %v646, %v1058
          %v1276 = vmul.f32 %v647, %v1058
          %v1277 = vmul.f32 %v648, %v1058
          %v1278 = vmul.f32 %v649, %v1058
          %v1279 = vmul.f32 %v650, %v1068
          %v1280 = vmul.f32 %v651, %v1068
          %v1281 = vmul.f32 %v652, %v1068
          %v1282 = vmul.f32 %v653, %v1068
          %v1283 = vmul.f32 %v654, %v1078
          %v1284 = vmul.f32 %v655, %v1078
          %v1285 = vmul.f32 %v656, %v1078
          %v1286 = vmul.f32 %v657, %v1078
          %v1287 = vmul.f32 %v658, %v1088
          %v1288 = vmul.f32 %v659, %v1088
          %v1289 = vmul.f32 %v660, %v1088
          %v1290 = vmul.f32 %v661, %v1088
          %v1291 = vmul.f32 %v662, %v1098
          %v1292 = vmul.f32 %v663, %v1098
          %v1293 = vmul.f32 %v664, %v1098
          %v1294 = vmul.f32 %v665, %v1098
          %v1295 = vmul.f32 %v666, %v1108
          %v1296 = vmul.f32 %v667, %v1108
          %v1297 = vmul.f32 %v668, %v1108
          %v1298 = vmul.f32 %v669, %v1108
          %v1299 = vmul.f32 %v670, %v1118
          %v1300 = vmul.f32 %v671, %v1118
          %v1301 = vmul.f32 %v672, %v1118
          %v1302 = vmul.f32 %v673, %v1118
          %v1303 = vmul.f32 %v674, %v1128
          %v1304 = vmul.f32 %v675, %v1128
          %v1305 = vmul.f32 %v676, %v1128
          %v1306 = vmul.f32 %v677, %v1128
          %v1307 = vmul.f32 %v678, %v1138
          %v1308 = vmul.f32 %v679, %v1138
          %v1309 = vmul.f32 %v680, %v1138
          %v1310 = vmul.f32 %v681, %v1138
          %v1311 = vmul.f32 %v682, %v1148
          %v1312 = vmul.f32 %v683, %v1148
          %v1313 = vmul.f32 %v684, %v1148
          %v1314 = vmul.f32 %v685, %v1148
          %v1315 = vmul.f32 %v686, %v1158
          %v1316 = vmul.f32 %v687, %v1158
          %v1317 = vmul.f32 %v688, %v1158
          %v1318 = vmul.f32 %v689, %v1158
          %v1319 = vmul.f32 %v690, %v1168
          %v1320 = vmul.f32 %v691, %v1168
          %v1321 = vmul.f32 %v692, %v1168
          %v1322 = vmul.f32 %v693, %v1168
          %v1323 = vmul.f32 %v694, %v1178
          %v1324 = vmul.f32 %v695, %v1178
          %v1325 = vmul.f32 %v696, %v1178
          %v1326 = vmul.f32 %v697, %v1178
          %v1327 = vmul.f32 %v698, %v1188
          %v1328 = vmul.f32 %v699, %v1188
          %v1329 = vmul.f32 %v700, %v1188
          %v1330 = vmul.f32 %v701, %v1188
          %v1331 = vmul.f32 %v702, %v1198
          %v1332 = vmul.f32 %v703, %v1198
          %v1333 = vmul.f32 %v704, %v1198
          %v1334 = vmul.f32 %v705, %v1198
          %v1335 = vmul.f32 %v706, %v1208
          %v1336 = vmul.f32 %v707, %v1208
          %v1337 = vmul.f32 %v708, %v1208
          %v1338 = vmul.f32 %v709, %v1208
          %v1339 = vmul.f32 %v710, %v1218
          %v1340 = vmul.f32 %v711, %v1218
          %v1341 = vmul.f32 %v712, %v1218
          %v1342 = vmul.f32 %v713, %v1218
          %v1343 = vmul.f32 %v714, %v1228
          %v1344 = vmul.f32 %v715, %v1228
          %v1345 = vmul.f32 %v716, %v1228
          %v1346 = vmul.f32 %v717, %v1228
          %v1347 = vmul.f32 %v718, %v1238
          %v1348 = vmul.f32 %v719, %v1238
          %v1349 = vmul.f32 %v720, %v1238
          %v1350 = vmul.f32 %v721, %v1238
          %v1351 = vmul.f32 %v722, %v1248
          %v1352 = vmul.f32 %v723, %v1248
          %v1353 = vmul.f32 %v724, %v1248
          %v1354 = vmul.f32 %v725, %v1248
          %v1355 = vmul.f32 %v726, %v1258
          %v1356 = vmul.f32 %v727, %v1258
          %v1357 = vmul.f32 %v728, %v1258
          %v1358 = vmul.f32 %v729, %v1258
          %v1359 = vld [vmem:[#allocation6] sm:$0xf]
          %v1361 = vperm.slane %v1359, 0
          %v1362 = vperm.slane %v1359, 1
          %v1363 = vperm.slane %v1359, 2
          %v1364 = vperm.slane %v1359, 3
          %v1369 = vmul.f32 %v1259, %v1361
          %v1370 = vmul.f32 %v1260, %v1362
          %v1371 = vmul.f32 %v1261, %v1363
          %v1372 = vmul.f32 %v1262, %v1364
          %v1373 = vmul.f32 %v1263, %v1361
          %v1374 = vmul.f32 %v1264, %v1362
          %v1375 = vmul.f32 %v1265, %v1363
          %v1376 = vmul.f32 %v1266, %v1364
          %v1377 = vmul.f32 %v1267, %v1361
          %v1378 = vmul.f32 %v1268, %v1362
          %v1379 = vmul.f32 %v1269, %v1363
          %v1380 = vmul.f32 %v1270, %v1364
          %v1381 = vmul.f32 %v1271, %v1361
          %v1382 = vmul.f32 %v1272, %v1362
          %v1383 = vmul.f32 %v1273, %v1363
          %v1384 = vmul.f32 %v1274, %v1364
          %v1385 = vmul.f32 %v1275, %v1361
          %v1386 = vmul.f32 %v1276, %v1362
          %v1387 = vmul.f32 %v1277, %v1363
          %v1388 = vmul.f32 %v1278, %v1364
          %v1389 = vmul.f32 %v1279, %v1361
          %v1390 = vmul.f32 %v1280, %v1362
          %v1391 = vmul.f32 %v1281, %v1363
          %v1392 = vmul.f32 %v1282, %v1364
          %v1393 = vmul.f32 %v1283, %v1361
          %v1394 = vmul.f32 %v1284, %v1362
          %v1395 = vmul.f32 %v1285, %v1363
          %v1396 = vmul.f32 %v1286, %v1364
          %v1397 = vmul.f32 %v1287, %v1361
          %v1398 = vmul.f32 %v1288, %v1362
          %v1399 = vmul.f32 %v1289, %v1363
          %v1400 = vmul.f32 %v1290, %v1364
          %v1401 = vmul.f32 %v1291, %v1361
          %v1402 = vmul.f32 %v1292, %v1362
          %v1403 = vmul.f32 %v1293, %v1363
          %v1404 = vmul.f32 %v1294, %v1364
          %v1405 = vmul.f32 %v1295, %v1361
          %v1406 = vmul.f32 %v1296, %v1362
          %v1407 = vmul.f32 %v1297, %v1363
          %v1408 = vmul.f32 %v1298, %v1364
          %v1409 = vmul.f32 %v1299, %v1361
          %v1410 = vmul.f32 %v1300, %v1362
          %v1411 = vmul.f32 %v1301, %v1363
          %v1412 = vmul.f32 %v1302, %v1364
          %v1413 = vmul.f32 %v1303, %v1361
          %v1414 = vmul.f32 %v1304, %v1362
          %v1415 = vmul.f32 %v1305, %v1363
          %v1416 = vmul.f32 %v1306, %v1364
          %v1417 = vmul.f32 %v1307, %v1361
          %v1418 = vmul.f32 %v1308, %v1362
          %v1419 = vmul.f32 %v1309, %v1363
          %v1420 = vmul.f32 %v1310, %v1364
          %v1421 = vmul.f32 %v1311, %v1361
          %v1422 = vmul.f32 %v1312, %v1362
          %v1423 = vmul.f32 %v1313, %v1363
          %v1424 = vmul.f32 %v1314, %v1364
          %v1425 = vmul.f32 %v1315, %v1361
          %v1426 = vmul.f32 %v1316, %v1362
          %v1427 = vmul.f32 %v1317, %v1363
          %v1428 = vmul.f32 %v1318, %v1364
          %v1429 = vmul.f32 %v1319, %v1361
          %v1430 = vmul.f32 %v1320, %v1362
          %v1431 = vmul.f32 %v1321, %v1363
          %v1432 = vmul.f32 %v1322, %v1364
          %v1433 = vmul.f32 %v1323, %v1361
          %v1434 = vmul.f32 %v1324, %v1362
          %v1435 = vmul.f32 %v1325, %v1363
          %v1436 = vmul.f32 %v1326, %v1364
          %v1437 = vmul.f32 %v1327, %v1361
          %v1438 = vmul.f32 %v1328, %v1362
          %v1439 = vmul.f32 %v1329, %v1363
          %v1440 = vmul.f32 %v1330, %v1364
          %v1441 = vmul.f32 %v1331, %v1361
          %v1442 = vmul.f32 %v1332, %v1362
          %v1443 = vmul.f32 %v1333, %v1363
          %v1444 = vmul.f32 %v1334, %v1364
          %v1445 = vmul.f32 %v1335, %v1361
          %v1446 = vmul.f32 %v1336, %v1362
          %v1447 = vmul.f32 %v1337, %v1363
          %v1448 = vmul.f32 %v1338, %v1364
          %v1449 = vmul.f32 %v1339, %v1361
          %v1450 = vmul.f32 %v1340, %v1362
          %v1451 = vmul.f32 %v1341, %v1363
          %v1452 = vmul.f32 %v1342, %v1364
          %v1453 = vmul.f32 %v1343, %v1361
          %v1454 = vmul.f32 %v1344, %v1362
          %v1455 = vmul.f32 %v1345, %v1363
          %v1456 = vmul.f32 %v1346, %v1364
          %v1457 = vmul.f32 %v1347, %v1361
          %v1458 = vmul.f32 %v1348, %v1362
          %v1459 = vmul.f32 %v1349, %v1363
          %v1460 = vmul.f32 %v1350, %v1364
          %v1461 = vmul.f32 %v1351, %v1361
          %v1462 = vmul.f32 %v1352, %v1362
          %v1463 = vmul.f32 %v1353, %v1363
          %v1464 = vmul.f32 %v1354, %v1364
          %v1465 = vmul.f32 %v1355, %v1361
          %v1466 = vmul.f32 %v1356, %v1362
          %v1467 = vmul.f32 %v1357, %v1363
          %v1468 = vmul.f32 %v1358, %v1364
          %v1469 = vld [vmem:[#allocation8] sm:$0xf]
          %v1471 = vperm.slane %v1469, 0
          %v1472 = vperm.slane %v1469, 1
          %v1473 = vperm.slane %v1469, 2
          %v1474 = vperm.slane %v1469, 3
          %v1479 = vadd.f32 %v1369, %v1471
          %v1480 = vadd.f32 %v1370, %v1472
          %v1481 = vadd.f32 %v1371, %v1473
          %v1482 = vadd.f32 %v1372, %v1474
          %v1483 = vadd.f32 %v1373, %v1471
          %v1484 = vadd.f32 %v1374, %v1472
          %v1485 = vadd.f32 %v1375, %v1473
          %v1486 = vadd.f32 %v1376, %v1474
          %v1487 = vadd.f32 %v1377, %v1471
          %v1488 = vadd.f32 %v1378, %v1472
          %v1489 = vadd.f32 %v1379, %v1473
          %v1490 = vadd.f32 %v1380, %v1474
          %v1491 = vadd.f32 %v1381, %v1471
          %v1492 = vadd.f32 %v1382, %v1472
          %v1493 = vadd.f32 %v1383, %v1473
          %v1494 = vadd.f32 %v1384, %v1474
          %v1495 = vadd.f32 %v1385, %v1471
          %v1496 = vadd.f32 %v1386, %v1472
          %v1497 = vadd.f32 %v1387, %v1473
          %v1498 = vadd.f32 %v1388, %v1474
          %v1499 = vadd.f32 %v1389, %v1471
          %v1500 = vadd.f32 %v1390, %v1472
          %v1501 = vadd.f32 %v1391, %v1473
          %v1502 = vadd.f32 %v1392, %v1474
          %v1503 = vadd.f32 %v1393, %v1471
          %v1504 = vadd.f32 %v1394, %v1472
          %v1505 = vadd.f32 %v1395, %v1473
          %v1506 = vadd.f32 %v1396, %v1474
          %v1507 = vadd.f32 %v1397, %v1471
          %v1508 = vadd.f32 %v1398, %v1472
          %v1509 = vadd.f32 %v1399, %v1473
          %v1510 = vadd.f32 %v1400, %v1474
          %v1511 = vadd.f32 %v1401, %v1471
          %v1512 = vadd.f32 %v1402, %v1472
          %v1513 = vadd.f32 %v1403, %v1473
          %v1514 = vadd.f32 %v1404, %v1474
          %v1515 = vadd.f32 %v1405, %v1471
          %v1516 = vadd.f32 %v1406, %v1472
          %v1517 = vadd.f32 %v1407, %v1473
          %v1518 = vadd.f32 %v1408, %v1474
          %v1519 = vadd.f32 %v1409, %v1471
          %v1520 = vadd.f32 %v1410, %v1472
          %v1521 = vadd.f32 %v1411, %v1473
          %v1522 = vadd.f32 %v1412, %v1474
          %v1523 = vadd.f32 %v1413, %v1471
          %v1524 = vadd.f32 %v1414, %v1472
          %v1525 = vadd.f32 %v1415, %v1473
          %v1526 = vadd.f32 %v1416, %v1474
          %v1527 = vadd.f32 %v1417, %v1471
          %v1528 = vadd.f32 %v1418, %v1472
          %v1529 = vadd.f32 %v1419, %v1473
          %v1530 = vadd.f32 %v1420, %v1474
          %v1531 = vadd.f32 %v1421, %v1471
          %v1532 = vadd.f32 %v1422, %v1472
          %v1533 = vadd.f32 %v1423, %v1473
          %v1534 = vadd.f32 %v1424, %v1474
          %v1535 = vadd.f32 %v1425, %v1471
          %v1536 = vadd.f32 %v1426, %v1472
          %v1537 = vadd.f32 %v1427, %v1473
          %v1538 = vadd.f32 %v1428, %v1474
          %v1539 = vadd.f32 %v1429, %v1471
          %v1540 = vadd.f32 %v1430, %v1472
          %v1541 = vadd.f32 %v1431, %v1473
          %v1542 = vadd.f32 %v1432, %v1474
          %v1543 = vadd.f32 %v1433, %v1471
          %v1544 = vadd.f32 %v1434, %v1472
          %v1545 = vadd.f32 %v1435, %v1473
          %v1546 = vadd.f32 %v1436, %v1474
          %v1547 = vadd.f32 %v1437, %v1471
          %v1548 = vadd.f32 %v1438, %v1472
          %v1549 = vadd.f32 %v1439, %v1473
          %v1550 = vadd.f32 %v1440, %v1474
          %v1551 = vadd.f32 %v1441, %v1471
          %v1552 = vadd.f32 %v1442, %v1472
          %v1553 = vadd.f32 %v1443, %v1473
          %v1554 = vadd.f32 %v1444, %v1474
          %v1555 = vadd.f32 %v1445, %v1471
          %v1556 = vadd.f32 %v1446, %v1472
          %v1557 = vadd.f32 %v1447, %v1473
          %v1558 = vadd.f32 %v1448, %v1474
          %v1559 = vadd.f32 %v1449, %v1471
          %v1560 = vadd.f32 %v1450, %v1472
          %v1561 = vadd.f32 %v1451, %v1473
          %v1562 = vadd.f32 %v1452, %v1474
          %v1563 = vadd.f32 %v1453, %v1471
          %v1564 = vadd.f32 %v1454, %v1472
          %v1565 = vadd.f32 %v1455, %v1473
          %v1566 = vadd.f32 %v1456, %v1474
          %v1567 = vadd.f32 %v1457, %v1471
          %v1568 = vadd.f32 %v1458, %v1472
          %v1569 = vadd.f32 %v1459, %v1473
          %v1570 = vadd.f32 %v1460, %v1474
          %v1571 = vadd.f32 %v1461, %v1471
          %v1572 = vadd.f32 %v1462, %v1472
          %v1573 = vadd.f32 %v1463, %v1473
          %v1574 = vadd.f32 %v1464, %v1474
          %v1575 = vadd.f32 %v1465, %v1471
          %v1576 = vadd.f32 %v1466, %v1472
          %v1577 = vadd.f32 %v1467, %v1473
          %v1578 = vadd.f32 %v1468, %v1474
          %v1579 = vpack.c.bf16 %v1480, %v1479
          %v1580 = vpack.c.bf16 %v1482, %v1481
          %v1581 = vpack.c.bf16 %v1484, %v1483
          %v1582 = vpack.c.bf16 %v1486, %v1485
          %v1583 = vpack.c.bf16 %v1488, %v1487
          %v1584 = vpack.c.bf16 %v1490, %v1489
          %v1585 = vpack.c.bf16 %v1492, %v1491
          %v1586 = vpack.c.bf16 %v1494, %v1493
          %v1587 = vpack.c.bf16 %v1496, %v1495
          %v1588 = vpack.c.bf16 %v1498, %v1497
          %v1589 = vpack.c.bf16 %v1500, %v1499
          %v1590 = vpack.c.bf16 %v1502, %v1501
          %v1591 = vpack.c.bf16 %v1504, %v1503
          %v1592 = vpack.c.bf16 %v1506, %v1505
          %v1593 = vpack.c.bf16 %v1508, %v1507
          %v1594 = vpack.c.bf16 %v1510, %v1509
          %v1595 = vpack.c.bf16 %v1512, %v1511
          %v1596 = vpack.c.bf16 %v1514, %v1513
          %v1597 = vpack.c.bf16 %v1516, %v1515
          %v1598 = vpack.c.bf16 %v1518, %v1517
          %v1599 = vpack.c.bf16 %v1520, %v1519
          %v1600 = vpack.c.bf16 %v1522, %v1521
          %v1601 = vpack.c.bf16 %v1524, %v1523
          %v1602 = vpack.c.bf16 %v1526, %v1525
          %v1603 = vpack.c.bf16 %v1528, %v1527
          %v1604 = vpack.c.bf16 %v1530, %v1529
          %v1605 = vpack.c.bf16 %v1532, %v1531
          %v1606 = vpack.c.bf16 %v1534, %v1533
          %v1607 = vpack.c.bf16 %v1536, %v1535
          %v1608 = vpack.c.bf16 %v1538, %v1537
          %v1609 = vpack.c.bf16 %v1540, %v1539
          %v1610 = vpack.c.bf16 %v1542, %v1541
          %v1611 = vpack.c.bf16 %v1544, %v1543
          %v1612 = vpack.c.bf16 %v1546, %v1545
          %v1613 = vpack.c.bf16 %v1548, %v1547
          %v1614 = vpack.c.bf16 %v1550, %v1549
          %v1615 = vpack.c.bf16 %v1552, %v1551
          %v1616 = vpack.c.bf16 %v1554, %v1553
          %v1617 = vpack.c.bf16 %v1556, %v1555
          %v1618 = vpack.c.bf16 %v1558, %v1557
          %v1619 = vpack.c.bf16 %v1560, %v1559
          %v1620 = vpack.c.bf16 %v1562, %v1561
          %v1621 = vpack.c.bf16 %v1564, %v1563
          %v1622 = vpack.c.bf16 %v1566, %v1565
          %v1623 = vpack.c.bf16 %v1568, %v1567
          %v1624 = vpack.c.bf16 %v1570, %v1569
          %v1625 = vpack.c.bf16 %v1572, %v1571
          %v1626 = vpack.c.bf16 %v1574, %v1573
          %v1627 = vpack.c.bf16 %v1576, %v1575
          %v1628 = vpack.c.bf16 %v1578, %v1577
          %1629 = vst [vmem:[#allocation2] sm:$0xff] %v1579
          %1630 = vst [vmem:[#allocation2 + $0x8] sm:$0xff] %v1580
          %1631 = vst [vmem:[#allocation2 + $0x10] sm:$0xff] %v1581
          %1632 = vst [vmem:[#allocation2 + $0x18] sm:$0xff] %v1582
          %1633 = vst [vmem:[#allocation2 + $0x20] sm:$0xff] %v1583
          %1634 = vst [vmem:[#allocation2 + $0x28] sm:$0xff] %v1584
          %1635 = vst [vmem:[#allocation2 + $0x30] sm:$0xff] %v1585
          %1636 = vst [vmem:[#allocation2 + $0x38] sm:$0xff] %v1586
          %1637 = vst [vmem:[#allocation2 + $0x40] sm:$0xff] %v1587
          %1638 = vst [vmem:[#allocation2 + $0x48] sm:$0xff] %v1588
          %1639 = vst [vmem:[#allocation2 + $0x50] sm:$0xff] %v1589
          %1640 = vst [vmem:[#allocation2 + $0x58] sm:$0xff] %v1590
          %1641 = vst [vmem:[#allocation2 + $0x60] sm:$0xff] %v1591
          %1642 = vst [vmem:[#allocation2 + $0x68] sm:$0xff] %v1592
          %1643 = vst [vmem:[#allocation2 + $0x70] sm:$0xff] %v1593
          %1644 = vst [vmem:[#allocation2 + $0x78] sm:$0xff] %v1594
          %1645 = vst [vmem:[#allocation2 + $0x80] sm:$0xff] %v1595
          %1646 = vst [vmem:[#allocation2 + $0x88] sm:$0xff] %v1596
          %1647 = vst [vmem:[#allocation2 + $0x90] sm:$0xff] %v1597
          %1648 = vst [vmem:[#allocation2 + $0x98] sm:$0xff] %v1598
          %1649 = vst [vmem:[#allocation2 + $0xa0] sm:$0xff] %v1599
          %1650 = vst [vmem:[#allocation2 + $0xa8] sm:$0xff] %v1600
          %1651 = vst [vmem:[#allocation2 + $0xb0] sm:$0xff] %v1601
          %1652 = vst [vmem:[#allocation2 + $0xb8] sm:$0xff] %v1602
          %1653 = vst [vmem:[#allocation2 + $0xc0] sm:$0xff] %v1603
          %1654 = vst [vmem:[#allocation2 + $0xc8] sm:$0xff] %v1604
          %1655 = vst [vmem:[#allocation2 + $0xd0] sm:$0xff] %v1605
          %1656 = vst [vmem:[#allocation2 + $0xd8] sm:$0xff] %v1606
          %1657 = vst [vmem:[#allocation2 + $0xe0] sm:$0xff] %v1607
          %1658 = vst [vmem:[#allocation2 + $0xe8] sm:$0xff] %v1608
          %1659 = vst [vmem:[#allocation2 + $0xf0] sm:$0xff] %v1609
          %1660 = vst [vmem:[#allocation2 + $0xf8] sm:$0xff] %v1610
          %1661 = vst [vmem:[#allocation2 + $0x100] sm:$0xff] %v1611
          %1662 = vst [vmem:[#allocation2 + $0x108] sm:$0xff] %v1612
          %1663 = vst [vmem:[#allocation2 + $0x110] sm:$0xff] %v1613
          %1664 = vst [vmem:[#allocation2 + $0x118] sm:$0xff] %v1614
          %1665 = vst [vmem:[#allocation2 + $0x120] sm:$0xff] %v1615
          %1666 = vst [vmem:[#allocation2 + $0x128] sm:$0xff] %v1616
          %1667 = vst [vmem:[#allocation2 + $0x130] sm:$0xff] %v1617
          %1668 = vst [vmem:[#allocation2 + $0x138] sm:$0xff] %v1618
          %1669 = vst [vmem:[#allocation2 + $0x140] sm:$0xff] %v1619
          %1670 = vst [vmem:[#allocation2 + $0x148] sm:$0xff] %v1620
          %1671 = vst [vmem:[#allocation2 + $0x150] sm:$0xff] %v1621
          %1672 = vst [vmem:[#allocation2 + $0x158] sm:$0xff] %v1622
          %1673 = vst [vmem:[#allocation2 + $0x160] sm:$0xff] %v1623
          %1674 = vst [vmem:[#allocation2 + $0x168] sm:$0xff] %v1624
          %1675 = vst [vmem:[#allocation2 + $0x170] sm:$0xff] %v1625
          %1676 = vst [vmem:[#allocation2 + $0x178] sm:$0xff] %v1626
          %1677 = vst [vmem:[#allocation2 + $0x180] sm:$0x33] %v1627
          %1678 = vst [vmem:[#allocation2 + $0x188] sm:$0x33] %v1628
        $region64: #{tpu_custom_call.1} parent=39 // pred_fallthru
          _
        %v1679 = vld [vmem:[#allocation2] sm:$0xff]
        %v1680 = vld [vmem:[#allocation2 + $0x8] sm:$0xff]
        %v1681 = vld [vmem:[#allocation2 + $0x10] sm:$0xff]
        %v1682 = vld [vmem:[#allocation2 + $0x18] sm:$0xff]
        %v1683 = vld [vmem:[#allocation2 + $0x20] sm:$0xff]
        %v1684 = vld [vmem:[#allocation2 + $0x28] sm:$0xff]
        %v1685 = vld [vmem:[#allocation2 + $0x30] sm:$0xff]
        %v1686 = vld [vmem:[#allocation2 + $0x38] sm:$0xff]
        %v1687 = vld [vmem:[#allocation2 + $0x40] sm:$0xff]
        %v1688 = vld [vmem:[#allocation2 + $0x48] sm:$0xff]
        %v1689 = vld [vmem:[#allocation2 + $0x50] sm:$0xff]
        %v1690 = vld [vmem:[#allocation2 + $0x58] sm:$0xff]
        %v1691 = vld [vmem:[#allocation2 + $0x60] sm:$0xff]
        %v1692 = vld [vmem:[#allocation2 + $0x68] sm:$0xff]
        %v1693 = vld [vmem:[#allocation2 + $0x70] sm:$0xff]
        %v1694 = vld [vmem:[#allocation2 + $0x78] sm:$0xff]
        %v1695 = vld [vmem:[#allocation2 + $0x80] sm:$0xff]
        %v1696 = vld [vmem:[#allocation2 + $0x88] sm:$0xff]
        %v1697 = vld [vmem:[#allocation2 + $0x90] sm:$0xff]
        %v1698 = vld [vmem:[#allocation2 + $0x98] sm:$0xff]
        %v1699 = vld [vmem:[#allocation2 + $0xa0] sm:$0xff]
        %v1700 = vld [vmem:[#allocation2 + $0xa8] sm:$0xff]
        %v1701 = vld [vmem:[#allocation2 + $0xb0] sm:$0xff]
        %v1702 = vld [vmem:[#allocation2 + $0xb8] sm:$0xff]
        %v1703 = vld [vmem:[#allocation2 + $0xc0] sm:$0xff]
        %v1704 = vld [vmem:[#allocation2 + $0xc8] sm:$0xff]
        %v1705 = vld [vmem:[#allocation2 + $0xd0] sm:$0xff]
        %v1706 = vld [vmem:[#allocation2 + $0xd8] sm:$0xff]
        %v1707 = vld [vmem:[#allocation2 + $0xe0] sm:$0xff]
        %v1708 = vld [vmem:[#allocation2 + $0xe8] sm:$0xff]
        %v1709 = vld [vmem:[#allocation2 + $0xf0] sm:$0xff]
        %v1710 = vld [vmem:[#allocation2 + $0xf8] sm:$0xff]
        %v1711 = vld [vmem:[#allocation2 + $0x100] sm:$0xff]
        %v1712 = vld [vmem:[#allocation2 + $0x108] sm:$0xff]
        %v1713 = vld [vmem:[#allocation2 + $0x110] sm:$0xff]
        %v1714 = vld [vmem:[#allocation2 + $0x118] sm:$0xff]
        %v1715 = vld [vmem:[#allocation2 + $0x120] sm:$0xff]
        %v1716 = vld [vmem:[#allocation2 + $0x128] sm:$0xff]
        %v1717 = vld [vmem:[#allocation2 + $0x130] sm:$0xff]
        %v1718 = vld [vmem:[#allocation2 + $0x138] sm:$0xff]
        %v1719 = vld [vmem:[#allocation2 + $0x140] sm:$0xff]
        %v1720 = vld [vmem:[#allocation2 + $0x148] sm:$0xff]
        %v1721 = vld [vmem:[#allocation2 + $0x150] sm:$0xff]
        %v1722 = vld [vmem:[#allocation2 + $0x158] sm:$0xff]
        %v1723 = vld [vmem:[#allocation2 + $0x160] sm:$0xff]
        %v1724 = vld [vmem:[#allocation2 + $0x168] sm:$0xff]
        %v1725 = vld [vmem:[#allocation2 + $0x170] sm:$0xff]
        %v1726 = vld [vmem:[#allocation2 + $0x178] sm:$0xff]
        %v1727 = vld [vmem:[#allocation2 + $0x180] sm:$0x33]
        %v1728 = vld [vmem:[#allocation2 + $0x188] sm:$0x33]
        %v1729 = vld [vmem:[%s312] sm:$0xff]
        %v1730 = vld [vmem:[%s312 + $0x8] sm:$0xff]
        %v1731 = vld [vmem:[%s312 + $0x10] sm:$0xff]
        %v1732 = vld [vmem:[%s312 + $0x18] sm:$0xff]
        %v1733 = vld [vmem:[%s312 + $0x20] sm:$0xff]
        %v1734 = vld [vmem:[%s312 + $0x28] sm:$0xff]
        %v1735 = vld [vmem:[%s312 + $0x30] sm:$0xff]
        %v1736 = vld [vmem:[%s312 + $0x38] sm:$0xff]
        %v1737 = vld [vmem:[%s312 + $0x40] sm:$0xff]
        %v1738 = vld [vmem:[%s312 + $0x48] sm:$0xff]
        %v1739 = vld [vmem:[%s312 + $0x50] sm:$0xff]
        %v1740 = vld [vmem:[%s312 + $0x58] sm:$0xff]
        %v1741 = vld [vmem:[%s312 + $0x60] sm:$0xff]
        %v1742 = vld [vmem:[%s312 + $0x68] sm:$0xff]
        %v1743 = vld [vmem:[%s312 + $0x70] sm:$0xff]
        %v1744 = vld [vmem:[%s312 + $0x78] sm:$0xff]
        %v1745 = vld [vmem:[%s312 + $0x80] sm:$0xff]
        %v1746 = vld [vmem:[%s312 + $0x88] sm:$0xff]
        %v1747 = vld [vmem:[%s312 + $0x90] sm:$0xff]
        %v1748 = vld [vmem:[%s312 + $0x98] sm:$0xff]
        %v1749 = vld [vmem:[%s312 + $0xa0] sm:$0xff]
        %v1750 = vld [vmem:[%s312 + $0xa8] sm:$0xff]
        %v1751 = vld [vmem:[%s312 + $0xb0] sm:$0xff]
        %v1752 = vld [vmem:[%s312 + $0xb8] sm:$0xff]
        %v1753 = vld [vmem:[%s312 + $0xc0] sm:$0xff]
        %v1754 = vld [vmem:[%s312 + $0xc8] sm:$0xff]
        %v1755 = vld [vmem:[%s312 + $0xd0] sm:$0xff]
        %v1756 = vld [vmem:[%s312 + $0xd8] sm:$0xff]
        %v1757 = vld [vmem:[%s312 + $0xe0] sm:$0xff]
        %v1758 = vld [vmem:[%s312 + $0xe8] sm:$0xff]
        %v1759 = vld [vmem:[%s312 + $0xf0] sm:$0xff]
        %v1760 = vld [vmem:[%s312 + $0xf8] sm:$0xff]
        %v1761 = vld [vmem:[%s312 + $0x100] sm:$0xff]
        %v1762 = vld [vmem:[%s312 + $0x108] sm:$0xff]
        %v1763 = vld [vmem:[%s312 + $0x110] sm:$0xff]
        %v1764 = vld [vmem:[%s312 + $0x118] sm:$0xff]
        %v1765 = vld [vmem:[%s312 + $0x120] sm:$0xff]
        %v1766 = vld [vmem:[%s312 + $0x128] sm:$0xff]
        %v1767 = vld [vmem:[%s312 + $0x130] sm:$0xff]
        %v1768 = vld [vmem:[%s312 + $0x138] sm:$0xff]
        %v1769 = vld [vmem:[%s312 + $0x140] sm:$0xff]
        %v1770 = vld [vmem:[%s312 + $0x148] sm:$0xff]
        %v1771 = vld [vmem:[%s312 + $0x150] sm:$0xff]
        %v1772 = vld [vmem:[%s312 + $0x158] sm:$0xff]
        %v1773 = vld [vmem:[%s312 + $0x160] sm:$0xff]
        %v1774 = vld [vmem:[%s312 + $0x168] sm:$0xff]
        %v1775 = vld [vmem:[%s312 + $0x170] sm:$0xff]
        %v1776 = vld [vmem:[%s312 + $0x178] sm:$0xff]
        %v1777 = vld [vmem:[%s312 + $0x180] sm:$0xff]
        %v1778 = vld [vmem:[%s312 + $0x188] sm:$0xff]
        %v1779 = vld [vmem:[%s312 + $0x190] sm:$0xff]
        %v1780 = vld [vmem:[%s312 + $0x198] sm:$0xff]
        %v1781 = vld [vmem:[%s312 + $0x1a0] sm:$0xff]
        %v1782 = vld [vmem:[%s312 + $0x1a8] sm:$0xff]
        %v1783 = vld [vmem:[%s312 + $0x1b0] sm:$0xff]
        %v1784 = vld [vmem:[%s312 + $0x1b8] sm:$0xff]
        %v1785 = vld [vmem:[%s312 + $0x1c0] sm:$0xff]
        %v1786 = vld [vmem:[%s312 + $0x1c8] sm:$0xff]
        %v1787 = vld [vmem:[%s312 + $0x1d0] sm:$0xff]
        %v1788 = vld [vmem:[%s312 + $0x1d8] sm:$0xff]
        %v1789 = vld [vmem:[%s312 + $0x1e0] sm:$0xff]
        %v1790 = vld [vmem:[%s312 + $0x1e8] sm:$0xff]
        %v1791 = vld [vmem:[%s312 + $0x1f0] sm:$0xff]
        %v1792 = vld [vmem:[%s312 + $0x1f8] sm:$0xff]
        %v1793 = vld [vmem:[%s312 + $0x200] sm:$0xff]
        %v1794 = vld [vmem:[%s312 + $0x208] sm:$0xff]
        %v1795 = vld [vmem:[%s312 + $0x210] sm:$0xff]
        %v1796 = vld [vmem:[%s312 + $0x218] sm:$0xff]
        %v1797 = vld [vmem:[%s312 + $0x220] sm:$0xff]
        %v1798 = vld [vmem:[%s312 + $0x228] sm:$0xff]
        %v1799 = vld [vmem:[%s312 + $0x230] sm:$0xff]
        %v1800 = vld [vmem:[%s312 + $0x238] sm:$0xff]
        %v1801 = vld [vmem:[%s312 + $0x240] sm:$0xff]
        %v1802 = vld [vmem:[%s312 + $0x248] sm:$0xff]
        %v1803 = vld [vmem:[%s312 + $0x250] sm:$0xff]
        %v1804 = vld [vmem:[%s312 + $0x258] sm:$0xff]
        %v1805 = vld [vmem:[%s312 + $0x260] sm:$0xff]
        %v1806 = vld [vmem:[%s312 + $0x268] sm:$0xff]
        %v1807 = vld [vmem:[%s312 + $0x270] sm:$0xff]
        %v1808 = vld [vmem:[%s312 + $0x278] sm:$0xff]
        %v1809 = vld [vmem:[%s312 + $0x280] sm:$0xff]
        %v1810 = vld [vmem:[%s312 + $0x288] sm:$0xff]
        %v1811 = vld [vmem:[%s312 + $0x290] sm:$0xff]
        %v1812 = vld [vmem:[%s312 + $0x298] sm:$0xff]
        %v1813 = vld [vmem:[%s312 + $0x2a0] sm:$0xff]
        %v1814 = vld [vmem:[%s312 + $0x2a8] sm:$0xff]
        %v1815 = vld [vmem:[%s312 + $0x2b0] sm:$0xff]
        %v1816 = vld [vmem:[%s312 + $0x2b8] sm:$0xff]
        %v1817 = vld [vmem:[%s312 + $0x2c0] sm:$0xff]
        %v1818 = vld [vmem:[%s312 + $0x2c8] sm:$0xff]
        %v1819 = vld [vmem:[%s312 + $0x2d0] sm:$0xff]
        %v1820 = vld [vmem:[%s312 + $0x2d8] sm:$0xff]
        %v1821 = vld [vmem:[%s312 + $0x2e0] sm:$0xff]
        %v1822 = vld [vmem:[%s312 + $0x2e8] sm:$0xff]
        %v1823 = vld [vmem:[%s312 + $0x2f0] sm:$0xff]
        %v1824 = vld [vmem:[%s312 + $0x2f8] sm:$0xff]
        %v1825 = vld [vmem:[%s312 + $0x300] sm:$0xff]
        %v1826 = vld [vmem:[%s312 + $0x308] sm:$0xff]
        %v1827 = vld [vmem:[%s312 + $0x310] sm:$0xff]
        %v1828 = vld [vmem:[%s312 + $0x318] sm:$0xff]
        %v1829 = vld [vmem:[%s312 + $0x320] sm:$0xff]
        %v1830 = vld [vmem:[%s312 + $0x328] sm:$0xff]
        %v1831 = vld [vmem:[%s312 + $0x330] sm:$0xff]
        %v1832 = vld [vmem:[%s312 + $0x338] sm:$0xff]
        %v1833 = vld [vmem:[%s312 + $0x340] sm:$0xff]
        %v1834 = vld [vmem:[%s312 + $0x348] sm:$0xff]
        %v1835 = vld [vmem:[%s312 + $0x350] sm:$0xff]
        %v1836 = vld [vmem:[%s312 + $0x358] sm:$0xff]
        %v1837 = vld [vmem:[%s312 + $0x360] sm:$0xff]
        %v1838 = vld [vmem:[%s312 + $0x368] sm:$0xff]
        %v1839 = vld [vmem:[%s312 + $0x370] sm:$0xff]
        %v1840 = vld [vmem:[%s312 + $0x378] sm:$0xff]
        %v1841 = vld [vmem:[%s312 + $0x380] sm:$0xff]
        %v1842 = vld [vmem:[%s312 + $0x388] sm:$0xff]
        %v1843 = vld [vmem:[%s312 + $0x390] sm:$0xff]
        %v1844 = vld [vmem:[%s312 + $0x398] sm:$0xff]
        %v1845 = vld [vmem:[%s312 + $0x3a0] sm:$0xff]
        %v1846 = vld [vmem:[%s312 + $0x3a8] sm:$0xff]
        %v1847 = vld [vmem:[%s312 + $0x3b0] sm:$0xff]
        %v1848 = vld [vmem:[%s312 + $0x3b8] sm:$0xff]
        %v1849 = vld [vmem:[%s312 + $0x3c0] sm:$0xff]
        %v1850 = vld [vmem:[%s312 + $0x3c8] sm:$0xff]
        %v1851 = vld [vmem:[%s312 + $0x3d0] sm:$0xff]
        %v1852 = vld [vmem:[%s312 + $0x3d8] sm:$0xff]
        %v1853 = vld [vmem:[%s312 + $0x3e0] sm:$0xff]
        %v1854 = vld [vmem:[%s312 + $0x3e8] sm:$0xff]
        %v1855 = vld [vmem:[%s312 + $0x3f0] sm:$0xff]
        %v1856 = vld [vmem:[%s312 + $0x3f8] sm:$0xff]
        %v1857 = vld [vmem:[%s322] sm:$0xf]
        %v1859 = vperm.slane %v1857, 0
        %v1860 = vperm.slane %v1857, 1
        %v1861 = vperm.slane %v1857, 2
        %v1862 = vperm.slane %v1857, 3
        %v1917 = vunpack.c.l.b16 %v1679
        %v1918 = vunpack.c.h.b16 %v1679
        %v1919 = vunpack.c.l.b16 %v1680
        %v1920 = vunpack.c.h.b16 %v1680
        %v1921 = vunpack.c.l.b16 %v1681
        %v1922 = vunpack.c.h.b16 %v1681
        %v1923 = vunpack.c.l.b16 %v1682
        %v1924 = vunpack.c.h.b16 %v1682
        %v1925 = vunpack.c.l.b16 %v1683
        %v1926 = vunpack.c.h.b16 %v1683
        %v1927 = vunpack.c.l.b16 %v1684
        %v1928 = vunpack.c.h.b16 %v1684
        %v1929 = vunpack.c.l.b16 %v1685
        %v1930 = vunpack.c.h.b16 %v1685
        %v1931 = vunpack.c.l.b16 %v1686
        %v1932 = vunpack.c.h.b16 %v1686
        %v1933 = vunpack.c.l.b16 %v1687
        %v1934 = vunpack.c.h.b16 %v1687
        %v1935 = vunpack.c.l.b16 %v1688
        %v1936 = vunpack.c.h.b16 %v1688
        %v1937 = vunpack.c.l.b16 %v1689
        %v1938 = vunpack.c.h.b16 %v1689
        %v1939 = vunpack.c.l.b16 %v1690
        %v1940 = vunpack.c.h.b16 %v1690
        %v1941 = vunpack.c.l.b16 %v1691
        %v1942 = vunpack.c.h.b16 %v1691
        %v1943 = vunpack.c.l.b16 %v1692
        %v1944 = vunpack.c.h.b16 %v1692
        %v1945 = vunpack.c.l.b16 %v1693
        %v1946 = vunpack.c.h.b16 %v1693
        %v1947 = vunpack.c.l.b16 %v1694
        %v1948 = vunpack.c.h.b16 %v1694
        %v1949 = vunpack.c.l.b16 %v1695
        %v1950 = vunpack.c.h.b16 %v1695
        %v1951 = vunpack.c.l.b16 %v1696
        %v1952 = vunpack.c.h.b16 %v1696
        %v1953 = vunpack.c.l.b16 %v1697
        %v1954 = vunpack.c.h.b16 %v1697
        %v1955 = vunpack.c.l.b16 %v1698
        %v1956 = vunpack.c.h.b16 %v1698
        %v1957 = vunpack.c.l.b16 %v1699
        %v1958 = vunpack.c.h.b16 %v1699
        %v1959 = vunpack.c.l.b16 %v1700
        %v1960 = vunpack.c.h.b16 %v1700
        %v1961 = vunpack.c.l.b16 %v1701
        %v1962 = vunpack.c.h.b16 %v1701
        %v1963 = vunpack.c.l.b16 %v1702
        %v1964 = vunpack.c.h.b16 %v1702
        %v1965 = vunpack.c.l.b16 %v1703
        %v1966 = vunpack.c.h.b16 %v1703
        %v1967 = vunpack.c.l.b16 %v1704
        %v1968 = vunpack.c.h.b16 %v1704
        %v1969 = vunpack.c.l.b16 %v1705
        %v1970 = vunpack.c.h.b16 %v1705
        %v1971 = vunpack.c.l.b16 %v1706
        %v1972 = vunpack.c.h.b16 %v1706
        %v1973 = vunpack.c.l.b16 %v1707
        %v1974 = vunpack.c.h.b16 %v1707
        %v1975 = vunpack.c.l.b16 %v1708
        %v1976 = vunpack.c.h.b16 %v1708
        %v1977 = vunpack.c.l.b16 %v1709
        %v1978 = vunpack.c.h.b16 %v1709
        %v1979 = vunpack.c.l.b16 %v1710
        %v1980 = vunpack.c.h.b16 %v1710
        %v1981 = vunpack.c.l.b16 %v1711
        %v1982 = vunpack.c.h.b16 %v1711
        %v1983 = vunpack.c.l.b16 %v1712
        %v1984 = vunpack.c.h.b16 %v1712
        %v1985 = vunpack.c.l.b16 %v1713
        %v1986 = vunpack.c.h.b16 %v1713
        %v1987 = vunpack.c.l.b16 %v1714
        %v1988 = vunpack.c.h.b16 %v1714
        %v1989 = vunpack.c.l.b16 %v1715
        %v1990 = vunpack.c.h.b16 %v1715
        %v1991 = vunpack.c.l.b16 %v1716
        %v1992 = vunpack.c.h.b16 %v1716
        %v1993 = vunpack.c.l.b16 %v1717
        %v1994 = vunpack.c.h.b16 %v1717
        %v1995 = vunpack.c.l.b16 %v1718
        %v1996 = vunpack.c.h.b16 %v1718
        %v1997 = vunpack.c.l.b16 %v1719
        %v1998 = vunpack.c.h.b16 %v1719
        %v1999 = vunpack.c.l.b16 %v1720
        %v2000 = vunpack.c.h.b16 %v1720
        %v2001 = vunpack.c.l.b16 %v1721
        %v2002 = vunpack.c.h.b16 %v1721
        %v2003 = vunpack.c.l.b16 %v1722
        %v2004 = vunpack.c.h.b16 %v1722
        %v2005 = vunpack.c.l.b16 %v1723
        %v2006 = vunpack.c.h.b16 %v1723
        %v2007 = vunpack.c.l.b16 %v1724
        %v2008 = vunpack.c.h.b16 %v1724
        %v2009 = vunpack.c.l.b16 %v1725
        %v2010 = vunpack.c.h.b16 %v1725
        %v2011 = vunpack.c.l.b16 %v1726
        %v2012 = vunpack.c.h.b16 %v1726
        %v2013 = vunpack.c.l.b16 %v1727
        %v2014 = vunpack.c.h.b16 %v1727
        %v2015 = vunpack.c.l.b16 %v1728
        %v2016 = vunpack.c.h.b16 %v1728
        %v2017 = vpack.c.b16 %v1921, %v1917
        %v2018 = vpack.c.b16 %v1922, %v1918
        %v2019 = vpack.c.b16 %v1923, %v1919
        %v2020 = vpack.c.b16 %v1924, %v1920
        %v2021 = vpack.c.b16 %v1929, %v1925
        %v2022 = vpack.c.b16 %v1930, %v1926
        %v2023 = vpack.c.b16 %v1931, %v1927
        %v2024 = vpack.c.b16 %v1932, %v1928
        %v2025 = vpack.c.b16 %v1937, %v1933
        %v2026 = vpack.c.b16 %v1938, %v1934
        %v2027 = vpack.c.b16 %v1939, %v1935
        %v2028 = vpack.c.b16 %v1940, %v1936
        %v2029 = vpack.c.b16 %v1945, %v1941
        %v2030 = vpack.c.b16 %v1946, %v1942
        %v2031 = vpack.c.b16 %v1947, %v1943
        %v2032 = vpack.c.b16 %v1948, %v1944
        %v2033 = vpack.c.b16 %v1953, %v1949
        %v2034 = vpack.c.b16 %v1954, %v1950
        %v2035 = vpack.c.b16 %v1955, %v1951
        %v2036 = vpack.c.b16 %v1956, %v1952
        %v2037 = vpack.c.b16 %v1961, %v1957
        %v2038 = vpack.c.b16 %v1962, %v1958
        %v2039 = vpack.c.b16 %v1963, %v1959
        %v2040 = vpack.c.b16 %v1964, %v1960
        %v2041 = vpack.c.b16 %v1969, %v1965
        %v2042 = vpack.c.b16 %v1970, %v1966
        %v2043 = vpack.c.b16 %v1971, %v1967
        %v2044 = vpack.c.b16 %v1972, %v1968
        %v2045 = vpack.c.b16 %v1977, %v1973
        %v2046 = vpack.c.b16 %v1978, %v1974
        %v2047 = vpack.c.b16 %v1979, %v1975
        %v2048 = vpack.c.b16 %v1980, %v1976
        %v2049 = vpack.c.b16 %v1985, %v1981
        %v2050 = vpack.c.b16 %v1986, %v1982
        %v2051 = vpack.c.b16 %v1987, %v1983
        %v2052 = vpack.c.b16 %v1988, %v1984
        %v2053 = vpack.c.b16 %v1993, %v1989
        %v2054 = vpack.c.b16 %v1994, %v1990
        %v2055 = vpack.c.b16 %v1995, %v1991
        %v2056 = vpack.c.b16 %v1996, %v1992
        %v2057 = vpack.c.b16 %v2001, %v1997
        %v2058 = vpack.c.b16 %v2002, %v1998
        %v2059 = vpack.c.b16 %v2003, %v1999
        %v2060 = vpack.c.b16 %v2004, %v2000
        %v2061 = vpack.c.b16 %v2009, %v2005
        %v2062 = vpack.c.b16 %v2010, %v2006
        %v2063 = vpack.c.b16 %v2011, %v2007
        %v2064 = vpack.c.b16 %v2012, %v2008
        %v2065 = vpack.c.b16 %v2013, %v2013
        %v2066 = vpack.c.b16 %v2014, %v2014
        %v2067 = vpack.c.b16 %v2015, %v2015
        %v2068 = vpack.c.b16 %v2016, %v2016
        %v2249 = vunpack.c.l.b16 %v1729
        %v2250 = vunpack.c.h.b16 %v1729
        %v2251 = vunpack.c.l.b16 %v1730
        %v2252 = vunpack.c.h.b16 %v1730
        %v2253 = vunpack.c.l.b16 %v1731
        %v2254 = vunpack.c.h.b16 %v1731
        %v2255 = vunpack.c.l.b16 %v1732
        %v2256 = vunpack.c.h.b16 %v1732
        %v2257 = vunpack.c.l.b16 %v1733
        %v2258 = vunpack.c.h.b16 %v1733
        %v2259 = vunpack.c.l.b16 %v1734
        %v2260 = vunpack.c.h.b16 %v1734
        %v2261 = vunpack.c.l.b16 %v1735
        %v2262 = vunpack.c.h.b16 %v1735
        %v2263 = vunpack.c.l.b16 %v1736
        %v2264 = vunpack.c.h.b16 %v1736
        %v2265 = vunpack.c.l.b16 %v1737
        %v2266 = vunpack.c.h.b16 %v1737
        %v2267 = vunpack.c.l.b16 %v1738
        %v2268 = vunpack.c.h.b16 %v1738
        %v2269 = vunpack.c.l.b16 %v1739
        %v2270 = vunpack.c.h.b16 %v1739
        %v2271 = vunpack.c.l.b16 %v1740
        %v2272 = vunpack.c.h.b16 %v1740
        %v2273 = vunpack.c.l.b16 %v1741
        %v2274 = vunpack.c.h.b16 %v1741
        %v2275 = vunpack.c.l.b16 %v1742
        %v2276 = vunpack.c.h.b16 %v1742
        %v2277 = vunpack.c.l.b16 %v1743
        %v2278 = vunpack.c.h.b16 %v1743
        %v2279 = vunpack.c.l.b16 %v1744
        %v2280 = vunpack.c.h.b16 %v1744
        %v2281 = vunpack.c.l.b16 %v1745
        %v2282 = vunpack.c.h.b16 %v1745
        %v2283 = vunpack.c.l.b16 %v1746
        %v2284 = vunpack.c.h.b16 %v1746
        %v2285 = vunpack.c.l.b16 %v1747
        %v2286 = vunpack.c.h.b16 %v1747
        %v2287 = vunpack.c.l.b16 %v1748
        %v2288 = vunpack.c.h.b16 %v1748
        %v2289 = vunpack.c.l.b16 %v1749
        %v2290 = vunpack.c.h.b16 %v1749
        %v2291 = vunpack.c.l.b16 %v1750
        %v2292 = vunpack.c.h.b16 %v1750
        %v2293 = vunpack.c.l.b16 %v1751
        %v2294 = vunpack.c.h.b16 %v1751
        %v2295 = vunpack.c.l.b16 %v1752
        %v2296 = vunpack.c.h.b16 %v1752
        %v2297 = vunpack.c.l.b16 %v1753
        %v2298 = vunpack.c.h.b16 %v1753
        %v2299 = vunpack.c.l.b16 %v1754
        %v2300 = vunpack.c.h.b16 %v1754
        %v2301 = vunpack.c.l.b16 %v1755
        %v2302 = vunpack.c.h.b16 %v1755
        %v2303 = vunpack.c.l.b16 %v1756
        %v2304 = vunpack.c.h.b16 %v1756
        %v2305 = vunpack.c.l.b16 %v1757
        %v2306 = vunpack.c.h.b16 %v1757
        %v2307 = vunpack.c.l.b16 %v1758
        %v2308 = vunpack.c.h.b16 %v1758
        %v2309 = vunpack.c.l.b16 %v1759
        %v2310 = vunpack.c.h.b16 %v1759
        %v2311 = vunpack.c.l.b16 %v1760
        %v2312 = vunpack.c.h.b16 %v1760
        %v2313 = vunpack.c.l.b16 %v1761
        %v2314 = vunpack.c.h.b16 %v1761
        %v2315 = vunpack.c.l.b16 %v1762
        %v2316 = vunpack.c.h.b16 %v1762
        %v2317 = vunpack.c.l.b16 %v1763
        %v2318 = vunpack.c.h.b16 %v1763
        %v2319 = vunpack.c.l.b16 %v1764
        %v2320 = vunpack.c.h.b16 %v1764
        %v2321 = vunpack.c.l.b16 %v1765
        %v2322 = vunpack.c.h.b16 %v1765
        %v2323 = vunpack.c.l.b16 %v1766
        %v2324 = vunpack.c.h.b16 %v1766
        %v2325 = vunpack.c.l.b16 %v1767
        %v2326 = vunpack.c.h.b16 %v1767
        %v2327 = vunpack.c.l.b16 %v1768
        %v2328 = vunpack.c.h.b16 %v1768
        %v2329 = vunpack.c.l.b16 %v1769
        %v2330 = vunpack.c.h.b16 %v1769
        %v2331 = vunpack.c.l.b16 %v1770
        %v2332 = vunpack.c.h.b16 %v1770
        %v2333 = vunpack.c.l.b16 %v1771
        %v2334 = vunpack.c.h.b16 %v1771
        %v2335 = vunpack.c.l.b16 %v1772
        %v2336 = vunpack.c.h.b16 %v1772
        %v2337 = vunpack.c.l.b16 %v1773
        %v2338 = vunpack.c.h.b16 %v1773
        %v2339 = vunpack.c.l.b16 %v1774
        %v2340 = vunpack.c.h.b16 %v1774
        %v2341 = vunpack.c.l.b16 %v1775
        %v2342 = vunpack.c.h.b16 %v1775
        %v2343 = vunpack.c.l.b16 %v1776
        %v2344 = vunpack.c.h.b16 %v1776
        %v2345 = vunpack.c.l.b16 %v1777
        %v2346 = vunpack.c.h.b16 %v1777
        %v2347 = vunpack.c.l.b16 %v1778
        %v2348 = vunpack.c.h.b16 %v1778
        %v2349 = vunpack.c.l.b16 %v1779
        %v2350 = vunpack.c.h.b16 %v1779
        %v2351 = vunpack.c.l.b16 %v1780
        %v2352 = vunpack.c.h.b16 %v1780
        %v2353 = vunpack.c.l.b16 %v1781
        %v2354 = vunpack.c.h.b16 %v1781
        %v2355 = vunpack.c.l.b16 %v1782
        %v2356 = vunpack.c.h.b16 %v1782
        %v2357 = vunpack.c.l.b16 %v1783
        %v2358 = vunpack.c.h.b16 %v1783
        %v2359 = vunpack.c.l.b16 %v1784
        %v2360 = vunpack.c.h.b16 %v1784
        %v2361 = vunpack.c.l.b16 %v1785
        %v2362 = vunpack.c.h.b16 %v1785
        %v2363 = vunpack.c.l.b16 %v1786
        %v2364 = vunpack.c.h.b16 %v1786
        %v2365 = vunpack.c.l.b16 %v1787
        %v2366 = vunpack.c.h.b16 %v1787
        %v2367 = vunpack.c.l.b16 %v1788
        %v2368 = vunpack.c.h.b16 %v1788
        %v2369 = vunpack.c.l.b16 %v1789
        %v2370 = vunpack.c.h.b16 %v1789
        %v2371 = vunpack.c.l.b16 %v1790
        %v2372 = vunpack.c.h.b16 %v1790
        %v2373 = vunpack.c.l.b16 %v1791
        %v2374 = vunpack.c.h.b16 %v1791
        %v2375 = vunpack.c.l.b16 %v1792
        %v2376 = vunpack.c.h.b16 %v1792
        %v2377 = vunpack.c.l.b16 %v1793
        %v2378 = vunpack.c.h.b16 %v1793
        %v2379 = vunpack.c.l.b16 %v1794
        %v2380 = vunpack.c.h.b16 %v1794
        %v2381 = vunpack.c.l.b16 %v1795
        %v2382 = vunpack.c.h.b16 %v1795
        %v2383 = vunpack.c.l.b16 %v1796
        %v2384 = vunpack.c.h.b16 %v1796
        %v2385 = vunpack.c.l.b16 %v1797
        %v2386 = vunpack.c.h.b16 %v1797
        %v2387 = vunpack.c.l.b16 %v1798
        %v2388 = vunpack.c.h.b16 %v1798
        %v2389 = vunpack.c.l.b16 %v1799
        %v2390 = vunpack.c.h.b16 %v1799
        %v2391 = vunpack.c.l.b16 %v1800
        %v2392 = vunpack.c.h.b16 %v1800
        %v2393 = vunpack.c.l.b16 %v1801
        %v2394 = vunpack.c.h.b16 %v1801
        %v2395 = vunpack.c.l.b16 %v1802
        %v2396 = vunpack.c.h.b16 %v1802
        %v2397 = vunpack.c.l.b16 %v1803
        %v2398 = vunpack.c.h.b16 %v1803
        %v2399 = vunpack.c.l.b16 %v1804
        %v2400 = vunpack.c.h.b16 %v1804
        %v2401 = vunpack.c.l.b16 %v1805
        %v2402 = vunpack.c.h.b16 %v1805
        %v2403 = vunpack.c.l.b16 %v1806
        %v2404 = vunpack.c.h.b16 %v1806
        %v2405 = vunpack.c.l.b16 %v1807
        %v2406 = vunpack.c.h.b16 %v1807
        %v2407 = vunpack.c.l.b16 %v1808
        %v2408 = vunpack.c.h.b16 %v1808
        %v2409 = vunpack.c.l.b16 %v1809
        %v2410 = vunpack.c.h.b16 %v1809
        %v2411 = vunpack.c.l.b16 %v1810
        %v2412 = vunpack.c.h.b16 %v1810
        %v2413 = vunpack.c.l.b16 %v1811
        %v2414 = vunpack.c.h.b16 %v1811
        %v2415 = vunpack.c.l.b16 %v1812
        %v2416 = vunpack.c.h.b16 %v1812
        %v2417 = vunpack.c.l.b16 %v1813
        %v2418 = vunpack.c.h.b16 %v1813
        %v2419 = vunpack.c.l.b16 %v1814
        %v2420 = vunpack.c.h.b16 %v1814
        %v2421 = vunpack.c.l.b16 %v1815
        %v2422 = vunpack.c.h.b16 %v1815
        %v2423 = vunpack.c.l.b16 %v1816
        %v2424 = vunpack.c.h.b16 %v1816
        %v2425 = vunpack.c.l.b16 %v1817
        %v2426 = vunpack.c.h.b16 %v1817
        %v2427 = vunpack.c.l.b16 %v1818
        %v2428 = vunpack.c.h.b16 %v1818
        %v2429 = vunpack.c.l.b16 %v1819
        %v2430 = vunpack.c.h.b16 %v1819
        %v2431 = vunpack.c.l.b16 %v1820
        %v2432 = vunpack.c.h.b16 %v1820
        %v2433 = vunpack.c.l.b16 %v1821
        %v2434 = vunpack.c.h.b16 %v1821
        %v2435 = vunpack.c.l.b16 %v1822
        %v2436 = vunpack.c.h.b16 %v1822
        %v2437 = vunpack.c.l.b16 %v1823
        %v2438 = vunpack.c.h.b16 %v1823
        %v2439 = vunpack.c.l.b16 %v1824
        %v2440 = vunpack.c.h.b16 %v1824
        %v2441 = vunpack.c.l.b16 %v1825
        %v2442 = vunpack.c.h.b16 %v1825
        %v2443 = vunpack.c.l.b16 %v1826
        %v2444 = vunpack.c.h.b16 %v1826
        %v2445 = vunpack.c.l.b16 %v1827
        %v2446 = vunpack.c.h.b16 %v1827
        %v2447 = vunpack.c.l.b16 %v1828
        %v2448 = vunpack.c.h.b16 %v1828
        %v2449 = vunpack.c.l.b16 %v1829
        %v2450 = vunpack.c.h.b16 %v1829
        %v2451 = vunpack.c.l.b16 %v1830
        %v2452 = vunpack.c.h.b16 %v1830
        %v2453 = vunpack.c.l.b16 %v1831
        %v2454 = vunpack.c.h.b16 %v1831
        %v2455 = vunpack.c.l.b16 %v1832
        %v2456 = vunpack.c.h.b16 %v1832
        %v2457 = vunpack.c.l.b16 %v1833
        %v2458 = vunpack.c.h.b16 %v1833
        %v2459 = vunpack.c.l.b16 %v1834
        %v2460 = vunpack.c.h.b16 %v1834
        %v2461 = vunpack.c.l.b16 %v1835
        %v2462 = vunpack.c.h.b16 %v1835
        %v2463 = vunpack.c.l.b16 %v1836
        %v2464 = vunpack.c.h.b16 %v1836
        %v2465 = vunpack.c.l.b16 %v1837
        %v2466 = vunpack.c.h.b16 %v1837
        %v2467 = vunpack.c.l.b16 %v1838
        %v2468 = vunpack.c.h.b16 %v1838
        %v2469 = vunpack.c.l.b16 %v1839
        %v2470 = vunpack.c.h.b16 %v1839
        %v2471 = vunpack.c.l.b16 %v1840
        %v2472 = vunpack.c.h.b16 %v1840
        %v2473 = vunpack.c.l.b16 %v1841
        %v2474 = vunpack.c.h.b16 %v1841
        %v2475 = vunpack.c.l.b16 %v1842
        %v2476 = vunpack.c.h.b16 %v1842
        %v2477 = vunpack.c.l.b16 %v1843
        %v2478 = vunpack.c.h.b16 %v1843
        %v2479 = vunpack.c.l.b16 %v1844
        %v2480 = vunpack.c.h.b16 %v1844
        %v2481 = vunpack.c.l.b16 %v1845
        %v2482 = vunpack.c.h.b16 %v1845
        %v2483 = vunpack.c.l.b16 %v1846
        %v2484 = vunpack.c.h.b16 %v1846
        %v2485 = vunpack.c.l.b16 %v1847
        %v2486 = vunpack.c.h.b16 %v1847
        %v2487 = vunpack.c.l.b16 %v1848
        %v2488 = vunpack.c.h.b16 %v1848
        %v2489 = vunpack.c.l.b16 %v1849
        %v2490 = vunpack.c.h.b16 %v1849
        %v2491 = vunpack.c.l.b16 %v1850
        %v2492 = vunpack.c.h.b16 %v1850
        %v2493 = vunpack.c.l.b16 %v1851
        %v2494 = vunpack.c.h.b16 %v1851
        %v2495 = vunpack.c.l.b16 %v1852
        %v2496 = vunpack.c.h.b16 %v1852
        %v2497 = vunpack.c.l.b16 %v1853
        %v2498 = vunpack.c.h.b16 %v1853
        %v2499 = vunpack.c.l.b16 %v1854
        %v2500 = vunpack.c.h.b16 %v1854
        %v2501 = vunpack.c.l.b16 %v1855
        %v2502 = vunpack.c.h.b16 %v1855
        %v2503 = vunpack.c.l.b16 %v1856
        %v2504 = vunpack.c.h.b16 %v1856
        %v2505 = vpack.c.b16 %v2253, %v2249
        %v2506 = vpack.c.b16 %v2254, %v2250
        %v2507 = vpack.c.b16 %v2255, %v2251
        %v2508 = vpack.c.b16 %v2256, %v2252
        %v2509 = vpack.c.b16 %v2261, %v2257
        %v2510 = vpack.c.b16 %v2262, %v2258
        %v2511 = vpack.c.b16 %v2263, %v2259
        %v2512 = vpack.c.b16 %v2264, %v2260
        %v2513 = vpack.c.b16 %v2269, %v2265
        %v2514 = vpack.c.b16 %v2270, %v2266
        %v2515 = vpack.c.b16 %v2271, %v2267
        %v2516 = vpack.c.b16 %v2272, %v2268
        %v2517 = vpack.c.b16 %v2277, %v2273
        %v2518 = vpack.c.b16 %v2278, %v2274
        %v2519 = vpack.c.b16 %v2279, %v2275
        %v2520 = vpack.c.b16 %v2280, %v2276
        %v2521 = vpack.c.b16 %v2285, %v2281
        %v2522 = vpack.c.b16 %v2286, %v2282
        %v2523 = vpack.c.b16 %v2287, %v2283
        %v2524 = vpack.c.b16 %v2288, %v2284
        %v2525 = vpack.c.b16 %v2293, %v2289
        %v2526 = vpack.c.b16 %v2294, %v2290
        %v2527 = vpack.c.b16 %v2295, %v2291
        %v2528 = vpack.c.b16 %v2296, %v2292
        %v2529 = vpack.c.b16 %v2301, %v2297
        %v2530 = vpack.c.b16 %v2302, %v2298
        %v2531 = vpack.c.b16 %v2303, %v2299
        %v2532 = vpack.c.b16 %v2304, %v2300
        %v2533 = vpack.c.b16 %v2309, %v2305
        %v2534 = vpack.c.b16 %v2310, %v2306
        %v2535 = vpack.c.b16 %v2311, %v2307
        %v2536 = vpack.c.b16 %v2312, %v2308
        %v2537 = vpack.c.b16 %v2317, %v2313
        %v2538 = vpack.c.b16 %v2318, %v2314
        %v2539 = vpack.c.b16 %v2319, %v2315
        %v2540 = vpack.c.b16 %v2320, %v2316
        %v2541 = vpack.c.b16 %v2325, %v2321
        %v2542 = vpack.c.b16 %v2326, %v2322
        %v2543 = vpack.c.b16 %v2327, %v2323
        %v2544 = vpack.c.b16 %v2328, %v2324
        %v2545 = vpack.c.b16 %v2333, %v2329
        %v2546 = vpack.c.b16 %v2334, %v2330
        %v2547 = vpack.c.b16 %v2335, %v2331
        %v2548 = vpack.c.b16 %v2336, %v2332
        %v2549 = vpack.c.b16 %v2341, %v2337
        %v2550 = vpack.c.b16 %v2342, %v2338
        %v2551 = vpack.c.b16 %v2343, %v2339
        %v2552 = vpack.c.b16 %v2344, %v2340
        %v2553 = vpack.c.b16 %v2349, %v2345
        %v2554 = vpack.c.b16 %v2350, %v2346
        %v2555 = vpack.c.b16 %v2351, %v2347
        %v2556 = vpack.c.b16 %v2352, %v2348
        %v2557 = vpack.c.b16 %v2357, %v2353
        %v2558 = vpack.c.b16 %v2358, %v2354
        %v2559 = vpack.c.b16 %v2359, %v2355
        %v2560 = vpack.c.b16 %v2360, %v2356
        %v2561 = vpack.c.b16 %v2365, %v2361
        %v2562 = vpack.c.b16 %v2366, %v2362
        %v2563 = vpack.c.b16 %v2367, %v2363
        %v2564 = vpack.c.b16 %v2368, %v2364
        %v2565 = vpack.c.b16 %v2373, %v2369
        %v2566 = vpack.c.b16 %v2374, %v2370
        %v2567 = vpack.c.b16 %v2375, %v2371
        %v2568 = vpack.c.b16 %v2376, %v2372
        %v2569 = vpack.c.b16 %v2381, %v2377
        %v2570 = vpack.c.b16 %v2382, %v2378
        %v2571 = vpack.c.b16 %v2383, %v2379
        %v2572 = vpack.c.b16 %v2384, %v2380
        %v2573 = vpack.c.b16 %v2389, %v2385
        %v2574 = vpack.c.b16 %v2390, %v2386
        %v2575 = vpack.c.b16 %v2391, %v2387
        %v2576 = vpack.c.b16 %v2392, %v2388
        %v2577 = vpack.c.b16 %v2397, %v2393
        %v2578 = vpack.c.b16 %v2398, %v2394
        %v2579 = vpack.c.b16 %v2399, %v2395
        %v2580 = vpack.c.b16 %v2400, %v2396
        %v2581 = vpack.c.b16 %v2405, %v2401
        %v2582 = vpack.c.b16 %v2406, %v2402
        %v2583 = vpack.c.b16 %v2407, %v2403
        %v2584 = vpack.c.b16 %v2408, %v2404
        %v2585 = vpack.c.b16 %v2413, %v2409
        %v2586 = vpack.c.b16 %v2414, %v2410
        %v2587 = vpack.c.b16 %v2415, %v2411
        %v2588 = vpack.c.b16 %v2416, %v2412
        %v2589 = vpack.c.b16 %v2421, %v2417
        %v2590 = vpack.c.b16 %v2422, %v2418
        %v2591 = vpack.c.b16 %v2423, %v2419
        %v2592 = vpack.c.b16 %v2424, %v2420
        %v2593 = vpack.c.b16 %v2429, %v2425
        %v2594 = vpack.c.b16 %v2430, %v2426
        %v2595 = vpack.c.b16 %v2431, %v2427
        %v2596 = vpack.c.b16 %v2432, %v2428
        %v2597 = vpack.c.b16 %v2437, %v2433
        %v2598 = vpack.c.b16 %v2438, %v2434
        %v2599 = vpack.c.b16 %v2439, %v2435
        %v2600 = vpack.c.b16 %v2440, %v2436
        %v2601 = vpack.c.b16 %v2445, %v2441
        %v2602 = vpack.c.b16 %v2446, %v2442
        %v2603 = vpack.c.b16 %v2447, %v2443
        %v2604 = vpack.c.b16 %v2448, %v2444
        %v2605 = vpack.c.b16 %v2453, %v2449
        %v2606 = vpack.c.b16 %v2454, %v2450
        %v2607 = vpack.c.b16 %v2455, %v2451
        %v2608 = vpack.c.b16 %v2456, %v2452
        %v2609 = vpack.c.b16 %v2461, %v2457
        %v2610 = vpack.c.b16 %v2462, %v2458
        %v2611 = vpack.c.b16 %v2463, %v2459
        %v2612 = vpack.c.b16 %v2464, %v2460
        %v2613 = vpack.c.b16 %v2469, %v2465
        %v2614 = vpack.c.b16 %v2470, %v2466
        %v2615 = vpack.c.b16 %v2471, %v2467
        %v2616 = vpack.c.b16 %v2472, %v2468
        %v2617 = vpack.c.b16 %v2477, %v2473
        %v2618 = vpack.c.b16 %v2478, %v2474
        %v2619 = vpack.c.b16 %v2479, %v2475
        %v2620 = vpack.c.b16 %v2480, %v2476
        %v2621 = vpack.c.b16 %v2485, %v2481
        %v2622 = vpack.c.b16 %v2486, %v2482
        %v2623 = vpack.c.b16 %v2487, %v2483
        %v2624 = vpack.c.b16 %v2488, %v2484
        %v2625 = vpack.c.b16 %v2493, %v2489
        %v2626 = vpack.c.b16 %v2494, %v2490
        %v2627 = vpack.c.b16 %v2495, %v2491
        %v2628 = vpack.c.b16 %v2496, %v2492
        %v2629 = vpack.c.b16 %v2501, %v2497
        %v2630 = vpack.c.b16 %v2502, %v2498
        %v2631 = vpack.c.b16 %v2503, %v2499
        %v2632 = vpack.c.b16 %v2504, %v2500
        %2761 = vmatpush.bf16.msra.mxu0 %v2533
        %2762 = vmatpush.bf16.msra.mxu0 %v2529
        %2763 = vmatpush.bf16.msra.mxu0 %v2525
        %2764 = vmatpush.bf16.msra.mxu0 %v2521
        %2765 = vmatpush.bf16.msra.mxu0 %v2517
        %2766 = vmatpush.bf16.msra.mxu0 %v2513
        %2767 = vmatpush.bf16.msra.mxu0 %v2509
        %2768 = vmatpush.bf16.msra.mxu0 %v2505
        %2769 = vmatmul.bf16.gmra.mxu0 %v2017
        %v2770 = vpop.f32.mrf.mxu0
        %v2771 = vadd.f32 %v1859, %v2770
        %v2772 = vpop.f32.mrf.mxu0
        %v2773 = vadd.f32 %v1859, %v2772
        %2774 = vmatmul.bf16.gmra.mxu0 %v2021
        %v2775 = vpop.f32.mrf.mxu0
        %v2776 = vadd.f32 %v1859, %v2775
        %v2777 = vpop.f32.mrf.mxu0
        %v2778 = vadd.f32 %v1859, %v2777
        %2779 = vmatmul.bf16.gmra.mxu0 %v2025
        %v2780 = vpop.f32.mrf.mxu0
        %v2781 = vadd.f32 %v1859, %v2780
        %v2782 = vpop.f32.mrf.mxu0
        %v2783 = vadd.f32 %v1859, %v2782
        %2784 = vmatmul.bf16.gmra.mxu0 %v2029
        %v2785 = vpop.f32.mrf.mxu0
        %v2786 = vadd.f32 %v1859, %v2785
        %v2787 = vpop.f32.mrf.mxu0
        %v2788 = vadd.f32 %v1859, %v2787
        %2789 = vmatmul.bf16.gmra.mxu0 %v2033
        %v2790 = vpop.f32.mrf.mxu0
        %v2791 = vadd.f32 %v1859, %v2790
        %v2792 = vpop.f32.mrf.mxu0
        %v2793 = vadd.f32 %v1859, %v2792
        %2794 = vmatmul.bf16.gmra.mxu0 %v2037
        %v2795 = vpop.f32.mrf.mxu0
        %v2796 = vadd.f32 %v1859, %v2795
        %v2797 = vpop.f32.mrf.mxu0
        %v2798 = vadd.f32 %v1859, %v2797
        %2799 = vmatmul.bf16.gmra.mxu0 %v2041
        %v2800 = vpop.f32.mrf.mxu0
        %v2801 = vadd.f32 %v1859, %v2800
        %v2802 = vpop.f32.mrf.mxu0
        %v2803 = vadd.f32 %v1859, %v2802
        %2804 = vmatmul.bf16.gmra.mxu0 %v2045
        %v2805 = vpop.f32.mrf.mxu0
        %v2806 = vadd.f32 %v1859, %v2805
        %v2807 = vpop.f32.mrf.mxu0
        %v2808 = vadd.f32 %v1859, %v2807
        %2809 = vmatmul.bf16.gmra.mxu0 %v2049
        %v2810 = vpop.f32.mrf.mxu0
        %v2811 = vadd.f32 %v1859, %v2810
        %v2812 = vpop.f32.mrf.mxu0
        %v2813 = vadd.f32 %v1859, %v2812
        %2814 = vmatmul.bf16.gmra.mxu0 %v2053
        %v2815 = vpop.f32.mrf.mxu0
        %v2816 = vadd.f32 %v1859, %v2815
        %v2817 = vpop.f32.mrf.mxu0
        %v2818 = vadd.f32 %v1859, %v2817
        %2819 = vmatmul.bf16.gmra.mxu0 %v2057
        %v2820 = vpop.f32.mrf.mxu0
        %v2821 = vadd.f32 %v1859, %v2820
        %v2822 = vpop.f32.mrf.mxu0
        %v2823 = vadd.f32 %v1859, %v2822
        %2824 = vmatmul.bf16.gmra.mxu0 %v2061
        %v2825 = vpop.f32.mrf.mxu0
        %v2826 = vadd.f32 %v1859, %v2825
        %v2827 = vpop.f32.mrf.mxu0
        %v2828 = vadd.f32 %v1859, %v2827
        %2829 = vmatmul.bf16.gmra.mxu0 %v2065
        %v2830 = vpop.f32.mrf.mxu0
        %v2831 = vadd.f32 %v1859, %v2830
        %v2832 = vpop.f32.mrf.mxu0
        %2833 = vdwg.mxu0
        %2834 = vmatpush.bf16.msra.mxu0 %v2565
        %2835 = vmatpush.bf16.msra.mxu0 %v2561
        %2836 = vmatpush.bf16.msra.mxu0 %v2557
        %2837 = vmatpush.bf16.msra.mxu0 %v2553
        %2838 = vmatpush.bf16.msra.mxu0 %v2549
        %2839 = vmatpush.bf16.msra.mxu0 %v2545
        %2840 = vmatpush.bf16.msra.mxu0 %v2541
        %2841 = vmatpush.bf16.msra.mxu0 %v2537
        %2842 = vmatmul.bf16.gmra.mxu0 %v2018
        %v2843 = vpop.f32.mrf.mxu0
        %v2844 = vadd.f32 %v2771, %v2843
        %v2845 = vpop.f32.mrf.mxu0
        %v2846 = vadd.f32 %v2773, %v2845
        %2847 = vmatmul.bf16.gmra.mxu0 %v2022
        %v2848 = vpop.f32.mrf.mxu0
        %v2849 = vadd.f32 %v2776, %v2848
        %v2850 = vpop.f32.mrf.mxu0
        %v2851 = vadd.f32 %v2778, %v2850
        %2852 = vmatmul.bf16.gmra.mxu0 %v2026
        %v2853 = vpop.f32.mrf.mxu0
        %v2854 = vadd.f32 %v2781, %v2853
        %v2855 = vpop.f32.mrf.mxu0
        %v2856 = vadd.f32 %v2783, %v2855
        %2857 = vmatmul.bf16.gmra.mxu0 %v2030
        %v2858 = vpop.f32.mrf.mxu0
        %v2859 = vadd.f32 %v2786, %v2858
        %v2860 = vpop.f32.mrf.mxu0
        %v2861 = vadd.f32 %v2788, %v2860
        %2862 = vmatmul.bf16.gmra.mxu0 %v2034
        %v2863 = vpop.f32.mrf.mxu0
        %v2864 = vadd.f32 %v2791, %v2863
        %v2865 = vpop.f32.mrf.mxu0
        %v2866 = vadd.f32 %v2793, %v2865
        %2867 = vmatmul.bf16.gmra.mxu0 %v2038
        %v2868 = vpop.f32.mrf.mxu0
        %v2869 = vadd.f32 %v2796, %v2868
        %v2870 = vpop.f32.mrf.mxu0
        %v2871 = vadd.f32 %v2798, %v2870
        %2872 = vmatmul.bf16.gmra.mxu0 %v2042
        %v2873 = vpop.f32.mrf.mxu0
        %v2874 = vadd.f32 %v2801, %v2873
        %v2875 = vpop.f32.mrf.mxu0
        %v2876 = vadd.f32 %v2803, %v2875
        %2877 = vmatmul.bf16.gmra.mxu0 %v2046
        %v2878 = vpop.f32.mrf.mxu0
        %v2879 = vadd.f32 %v2806, %v2878
        %v2880 = vpop.f32.mrf.mxu0
        %v2881 = vadd.f32 %v2808, %v2880
        %2882 = vmatmul.bf16.gmra.mxu0 %v2050
        %v2883 = vpop.f32.mrf.mxu0
        %v2884 = vadd.f32 %v2811, %v2883
        %v2885 = vpop.f32.mrf.mxu0
        %v2886 = vadd.f32 %v2813, %v2885
        %2887 = vmatmul.bf16.gmra.mxu0 %v2054
        %v2888 = vpop.f32.mrf.mxu0
        %v2889 = vadd.f32 %v2816, %v2888
        %v2890 = vpop.f32.mrf.mxu0
        %v2891 = vadd.f32 %v2818, %v2890
        %2892 = vmatmul.bf16.gmra.mxu0 %v2058
        %v2893 = vpop.f32.mrf.mxu0
        %v2894 = vadd.f32 %v2821, %v2893
        %v2895 = vpop.f32.mrf.mxu0
        %v2896 = vadd.f32 %v2823, %v2895
        %2897 = vmatmul.bf16.gmra.mxu0 %v2062
        %v2898 = vpop.f32.mrf.mxu0
        %v2899 = vadd.f32 %v2826, %v2898
        %v2900 = vpop.f32.mrf.mxu0
        %v2901 = vadd.f32 %v2828, %v2900
        %2902 = vmatmul.bf16.gmra.mxu0 %v2066
        %v2903 = vpop.f32.mrf.mxu0
        %v2904 = vadd.f32 %v2831, %v2903
        %v2905 = vpop.f32.mrf.mxu0
        %2906 = vdwg.mxu0
        %2907 = vmatpush.bf16.msra.mxu0 %v2597
        %2908 = vmatpush.bf16.msra.mxu0 %v2593
        %2909 = vmatpush.bf16.msra.mxu0 %v2589
        %2910 = vmatpush.bf16.msra.mxu0 %v2585
        %2911 = vmatpush.bf16.msra.mxu0 %v2581
        %2912 = vmatpush.bf16.msra.mxu0 %v2577
        %2913 = vmatpush.bf16.msra.mxu0 %v2573
        %2914 = vmatpush.bf16.msra.mxu0 %v2569
        %2915 = vmatmul.bf16.gmra.mxu0 %v2019
        %v2916 = vpop.f32.mrf.mxu0
        %v2917 = vadd.f32 %v2844, %v2916
        %v2918 = vpop.f32.mrf.mxu0
        %v2919 = vadd.f32 %v2846, %v2918
        %2920 = vmatmul.bf16.gmra.mxu0 %v2023
        %v2921 = vpop.f32.mrf.mxu0
        %v2922 = vadd.f32 %v2849, %v2921
        %v2923 = vpop.f32.mrf.mxu0
        %v2924 = vadd.f32 %v2851, %v2923
        %2925 = vmatmul.bf16.gmra.mxu0 %v2027
        %v2926 = vpop.f32.mrf.mxu0
        %v2927 = vadd.f32 %v2854, %v2926
        %v2928 = vpop.f32.mrf.mxu0
        %v2929 = vadd.f32 %v2856, %v2928
        %2930 = vmatmul.bf16.gmra.mxu0 %v2031
        %v2931 = vpop.f32.mrf.mxu0
        %v2932 = vadd.f32 %v2859, %v2931
        %v2933 = vpop.f32.mrf.mxu0
        %v2934 = vadd.f32 %v2861, %v2933
        %2935 = vmatmul.bf16.gmra.mxu0 %v2035
        %v2936 = vpop.f32.mrf.mxu0
        %v2937 = vadd.f32 %v2864, %v2936
        %v2938 = vpop.f32.mrf.mxu0
        %v2939 = vadd.f32 %v2866, %v2938
        %2940 = vmatmul.bf16.gmra.mxu0 %v2039
        %v2941 = vpop.f32.mrf.mxu0
        %v2942 = vadd.f32 %v2869, %v2941
        %v2943 = vpop.f32.mrf.mxu0
        %v2944 = vadd.f32 %v2871, %v2943
        %2945 = vmatmul.bf16.gmra.mxu0 %v2043
        %v2946 = vpop.f32.mrf.mxu0
        %v2947 = vadd.f32 %v2874, %v2946
        %v2948 = vpop.f32.mrf.mxu0
        %v2949 = vadd.f32 %v2876, %v2948
        %2950 = vmatmul.bf16.gmra.mxu0 %v2047
        %v2951 = vpop.f32.mrf.mxu0
        %v2952 = vadd.f32 %v2879, %v2951
        %v2953 = vpop.f32.mrf.mxu0
        %v2954 = vadd.f32 %v2881, %v2953
        %2955 = vmatmul.bf16.gmra.mxu0 %v2051
        %v2956 = vpop.f32.mrf.mxu0
        %v2957 = vadd.f32 %v2884, %v2956
        %v2958 = vpop.f32.mrf.mxu0
        %v2959 = vadd.f32 %v2886, %v2958
        %2960 = vmatmul.bf16.gmra.mxu0 %v2055
        %v2961 = vpop.f32.mrf.mxu0
        %v2962 = vadd.f32 %v2889, %v2961
        %v2963 = vpop.f32.mrf.mxu0
        %v2964 = vadd.f32 %v2891, %v2963
        %2965 = vmatmul.bf16.gmra.mxu0 %v2059
        %v2966 = vpop.f32.mrf.mxu0
        %v2967 = vadd.f32 %v2894, %v2966
        %v2968 = vpop.f32.mrf.mxu0
        %v2969 = vadd.f32 %v2896, %v2968
        %2970 = vmatmul.bf16.gmra.mxu0 %v2063
        %v2971 = vpop.f32.mrf.mxu0
        %v2972 = vadd.f32 %v2899, %v2971
        %v2973 = vpop.f32.mrf.mxu0
        %v2974 = vadd.f32 %v2901, %v2973
        %2975 = vmatmul.bf16.gmra.mxu0 %v2067
        %v2976 = vpop.f32.mrf.mxu0
        %v2977 = vadd.f32 %v2904, %v2976
        %v2978 = vpop.f32.mrf.mxu0
        %2979 = vdwg.mxu0
        %2980 = vmatpush.bf16.msra.mxu0 %v2629
        %2981 = vmatpush.bf16.msra.mxu0 %v2625
        %2982 = vmatpush.bf16.msra.mxu0 %v2621
        %2983 = vmatpush.bf16.msra.mxu0 %v2617
        %2984 = vmatpush.bf16.msra.mxu0 %v2613
        %2985 = vmatpush.bf16.msra.mxu0 %v2609
        %2986 = vmatpush.bf16.msra.mxu0 %v2605
        %2987 = vmatpush.bf16.msra.mxu0 %v2601
        %2988 = vmatmul.bf16.gmra.mxu0 %v2020
        %v2989 = vpop.f32.mrf.mxu0
        %v2990 = vadd.f32 %v2917, %v2989
        %v2991 = vpop.f32.mrf.mxu0
        %v2992 = vadd.f32 %v2919, %v2991
        %2993 = vmatmul.bf16.gmra.mxu0 %v2024
        %v2994 = vpop.f32.mrf.mxu0
        %v2995 = vadd.f32 %v2922, %v2994
        %v2996 = vpop.f32.mrf.mxu0
        %v2997 = vadd.f32 %v2924, %v2996
        %2998 = vmatmul.bf16.gmra.mxu0 %v2028
        %v2999 = vpop.f32.mrf.mxu0
        %v3000 = vadd.f32 %v2927, %v2999
        %v3001 = vpop.f32.mrf.mxu0
        %v3002 = vadd.f32 %v2929, %v3001
        %3003 = vmatmul.bf16.gmra.mxu0 %v2032
        %v3004 = vpop.f32.mrf.mxu0
        %v3005 = vadd.f32 %v2932, %v3004
        %v3006 = vpop.f32.mrf.mxu0
        %v3007 = vadd.f32 %v2934, %v3006
        %3008 = vmatmul.bf16.gmra.mxu0 %v2036
        %v3009 = vpop.f32.mrf.mxu0
        %v3010 = vadd.f32 %v2937, %v3009
        %v3011 = vpop.f32.mrf.mxu0
        %v3012 = vadd.f32 %v2939, %v3011
        %3013 = vmatmul.bf16.gmra.mxu0 %v2040
        %v3014 = vpop.f32.mrf.mxu0
        %v3015 = vadd.f32 %v2942, %v3014
        %v3016 = vpop.f32.mrf.mxu0
        %v3017 = vadd.f32 %v2944, %v3016
        %3018 = vmatmul.bf16.gmra.mxu0 %v2044
        %v3019 = vpop.f32.mrf.mxu0
        %v3020 = vadd.f32 %v2947, %v3019
        %v3021 = vpop.f32.mrf.mxu0
        %v3022 = vadd.f32 %v2949, %v3021
        %3023 = vmatmul.bf16.gmra.mxu0 %v2048
        %v3024 = vpop.f32.mrf.mxu0
        %v3025 = vadd.f32 %v2952, %v3024
        %v3026 = vpop.f32.mrf.mxu0
        %v3027 = vadd.f32 %v2954, %v3026
        %3028 = vmatmul.bf16.gmra.mxu0 %v2052
        %v3029 = vpop.f32.mrf.mxu0
        %v3030 = vadd.f32 %v2957, %v3029
        %v3031 = vpop.f32.mrf.mxu0
        %v3032 = vadd.f32 %v2959, %v3031
        %3033 = vmatmul.bf16.gmra.mxu0 %v2056
        %v3034 = vpop.f32.mrf.mxu0
        %v3035 = vadd.f32 %v2962, %v3034
        %v3036 = vpop.f32.mrf.mxu0
        %v3037 = vadd.f32 %v2964, %v3036
        %3038 = vmatmul.bf16.gmra.mxu0 %v2060
        %v3039 = vpop.f32.mrf.mxu0
        %v3040 = vadd.f32 %v2967, %v3039
        %v3041 = vpop.f32.mrf.mxu0
        %v3042 = vadd.f32 %v2969, %v3041
        %3043 = vmatmul.bf16.gmra.mxu0 %v2064
        %v3044 = vpop.f32.mrf.mxu0
        %v3045 = vadd.f32 %v2972, %v3044
        %v3046 = vpop.f32.mrf.mxu0
        %v3047 = vadd.f32 %v2974, %v3046
        %3048 = vmatmul.bf16.gmra.mxu0 %v2068
        %v3049 = vpop.f32.mrf.mxu0
        %v3050 = vadd.f32 %v2977, %v3049
        %v3051 = vpop.f32.mrf.mxu0
        %3052 = vdwg.mxu0
        %3053 = vmatpush.bf16.msra.mxu0 %v2534
        %3054 = vmatpush.bf16.msra.mxu0 %v2530
        %3055 = vmatpush.bf16.msra.mxu0 %v2526
        %3056 = vmatpush.bf16.msra.mxu0 %v2522
        %3057 = vmatpush.bf16.msra.mxu0 %v2518
        %3058 = vmatpush.bf16.msra.mxu0 %v2514
        %3059 = vmatpush.bf16.msra.mxu0 %v2510
        %3060 = vmatpush.bf16.msra.mxu0 %v2506
        %3061 = vmatmul.bf16.gmra.mxu0 %v2017
        %v3062 = vpop.f32.mrf.mxu0
        %v3063 = vadd.f32 %v1860, %v3062
        %v3064 = vpop.f32.mrf.mxu0
        %v3065 = vadd.f32 %v1860, %v3064
        %3066 = vmatmul.bf16.gmra.mxu0 %v2021
        %v3067 = vpop.f32.mrf.mxu0
        %v3068 = vadd.f32 %v1860, %v3067
        %v3069 = vpop.f32.mrf.mxu0
        %v3070 = vadd.f32 %v1860, %v3069
        %3071 = vmatmul.bf16.gmra.mxu0 %v2025
        %v3072 = vpop.f32.mrf.mxu0
        %v3073 = vadd.f32 %v1860, %v3072
        %v3074 = vpop.f32.mrf.mxu0
        %v3075 = vadd.f32 %v1860, %v3074
        %3076 = vmatmul.bf16.gmra.mxu0 %v2029
        %v3077 = vpop.f32.mrf.mxu0
        %v3078 = vadd.f32 %v1860, %v3077
        %v3079 = vpop.f32.mrf.mxu0
        %v3080 = vadd.f32 %v1860, %v3079
        %3081 = vmatmul.bf16.gmra.mxu0 %v2033
        %v3082 = vpop.f32.mrf.mxu0
        %v3083 = vadd.f32 %v1860, %v3082
        %v3084 = vpop.f32.mrf.mxu0
        %v3085 = vadd.f32 %v1860, %v3084
        %3086 = vmatmul.bf16.gmra.mxu0 %v2037
        %v3087 = vpop.f32.mrf.mxu0
        %v3088 = vadd.f32 %v1860, %v3087
        %v3089 = vpop.f32.mrf.mxu0
        %v3090 = vadd.f32 %v1860, %v3089
        %3091 = vmatmul.bf16.gmra.mxu0 %v2041
        %v3092 = vpop.f32.mrf.mxu0
        %v3093 = vadd.f32 %v1860, %v3092
        %v3094 = vpop.f32.mrf.mxu0
        %v3095 = vadd.f32 %v1860, %v3094
        %3096 = vmatmul.bf16.gmra.mxu0 %v2045
        %v3097 = vpop.f32.mrf.mxu0
        %v3098 = vadd.f32 %v1860, %v3097
        %v3099 = vpop.f32.mrf.mxu0
        %v3100 = vadd.f32 %v1860, %v3099
        %3101 = vmatmul.bf16.gmra.mxu0 %v2049
        %v3102 = vpop.f32.mrf.mxu0
        %v3103 = vadd.f32 %v1860, %v3102
        %v3104 = vpop.f32.mrf.mxu0
        %v3105 = vadd.f32 %v1860, %v3104
        %3106 = vmatmul.bf16.gmra.mxu0 %v2053
        %v3107 = vpop.f32.mrf.mxu0
        %v3108 = vadd.f32 %v1860, %v3107
        %v3109 = vpop.f32.mrf.mxu0
        %v3110 = vadd.f32 %v1860, %v3109
        %3111 = vmatmul.bf16.gmra.mxu0 %v2057
        %v3112 = vpop.f32.mrf.mxu0
        %v3113 = vadd.f32 %v1860, %v3112
        %v3114 = vpop.f32.mrf.mxu0
        %v3115 = vadd.f32 %v1860, %v3114
        %3116 = vmatmul.bf16.gmra.mxu0 %v2061
        %v3117 = vpop.f32.mrf.mxu0
        %v3118 = vadd.f32 %v1860, %v3117
        %v3119 = vpop.f32.mrf.mxu0
        %v3120 = vadd.f32 %v1860, %v3119
        %3121 = vmatmul.bf16.gmra.mxu0 %v2065
        %v3122 = vpop.f32.mrf.mxu0
        %v3123 = vadd.f32 %v1860, %v3122
        %v3124 = vpop.f32.mrf.mxu0
        %3125 = vdwg.mxu0
        %3126 = vmatpush.bf16.msra.mxu0 %v2566
        %3127 = vmatpush.bf16.msra.mxu0 %v2562
        %3128 = vmatpush.bf16.msra.mxu0 %v2558
        %3129 = vmatpush.bf16.msra.mxu0 %v2554
        %3130 = vmatpush.bf16.msra.mxu0 %v2550
        %3131 = vmatpush.bf16.msra.mxu0 %v2546
        %3132 = vmatpush.bf16.msra.mxu0 %v2542
        %3133 = vmatpush.bf16.msra.mxu0 %v2538
        %3134 = vmatmul.bf16.gmra.mxu0 %v2018
        %v3135 = vpop.f32.mrf.mxu0
        %v3136 = vadd.f32 %v3063, %v3135
        %v3137 = vpop.f32.mrf.mxu0
        %v3138 = vadd.f32 %v3065, %v3137
        %3139 = vmatmul.bf16.gmra.mxu0 %v2022
        %v3140 = vpop.f32.mrf.mxu0
        %v3141 = vadd.f32 %v3068, %v3140
        %v3142 = vpop.f32.mrf.mxu0
        %v3143 = vadd.f32 %v3070, %v3142
        %3144 = vmatmul.bf16.gmra.mxu0 %v2026
        %v3145 = vpop.f32.mrf.mxu0
        %v3146 = vadd.f32 %v3073, %v3145
        %v3147 = vpop.f32.mrf.mxu0
        %v3148 = vadd.f32 %v3075, %v3147
        %3149 = vmatmul.bf16.gmra.mxu0 %v2030
        %v3150 = vpop.f32.mrf.mxu0
        %v3151 = vadd.f32 %v3078, %v3150
        %v3152 = vpop.f32.mrf.mxu0
        %v3153 = vadd.f32 %v3080, %v3152
        %3154 = vmatmul.bf16.gmra.mxu0 %v2034
        %v3155 = vpop.f32.mrf.mxu0
        %v3156 = vadd.f32 %v3083, %v3155
        %v3157 = vpop.f32.mrf.mxu0
        %v3158 = vadd.f32 %v3085, %v3157
        %3159 = vmatmul.bf16.gmra.mxu0 %v2038
        %v3160 = vpop.f32.mrf.mxu0
        %v3161 = vadd.f32 %v3088, %v3160
        %v3162 = vpop.f32.mrf.mxu0
        %v3163 = vadd.f32 %v3090, %v3162
        %3164 = vmatmul.bf16.gmra.mxu0 %v2042
        %v3165 = vpop.f32.mrf.mxu0
        %v3166 = vadd.f32 %v3093, %v3165
        %v3167 = vpop.f32.mrf.mxu0
        %v3168 = vadd.f32 %v3095, %v3167
        %3169 = vmatmul.bf16.gmra.mxu0 %v2046
        %v3170 = vpop.f32.mrf.mxu0
        %v3171 = vadd.f32 %v3098, %v3170
        %v3172 = vpop.f32.mrf.mxu0
        %v3173 = vadd.f32 %v3100, %v3172
        %3174 = vmatmul.bf16.gmra.mxu0 %v2050
        %v3175 = vpop.f32.mrf.mxu0
        %v3176 = vadd.f32 %v3103, %v3175
        %v3177 = vpop.f32.mrf.mxu0
        %v3178 = vadd.f32 %v3105, %v3177
        %3179 = vmatmul.bf16.gmra.mxu0 %v2054
        %v3180 = vpop.f32.mrf.mxu0
        %v3181 = vadd.f32 %v3108, %v3180
        %v3182 = vpop.f32.mrf.mxu0
        %v3183 = vadd.f32 %v3110, %v3182
        %3184 = vmatmul.bf16.gmra.mxu0 %v2058
        %v3185 = vpop.f32.mrf.mxu0
        %v3186 = vadd.f32 %v3113, %v3185
        %v3187 = vpop.f32.mrf.mxu0
        %v3188 = vadd.f32 %v3115, %v3187
        %3189 = vmatmul.bf16.gmra.mxu0 %v2062
        %v3190 = vpop.f32.mrf.mxu0
        %v3191 = vadd.f32 %v3118, %v3190
        %v3192 = vpop.f32.mrf.mxu0
        %v3193 = vadd.f32 %v3120, %v3192
        %3194 = vmatmul.bf16.gmra.mxu0 %v2066
        %v3195 = vpop.f32.mrf.mxu0
        %v3196 = vadd.f32 %v3123, %v3195
        %v3197 = vpop.f32.mrf.mxu0
        %3198 = vdwg.mxu0
        %3199 = vmatpush.bf16.msra.mxu0 %v2598
        %3200 = vmatpush.bf16.msra.mxu0 %v2594
        %3201 = vmatpush.bf16.msra.mxu0 %v2590
        %3202 = vmatpush.bf16.msra.mxu0 %v2586
        %3203 = vmatpush.bf16.msra.mxu0 %v2582
        %3204 = vmatpush.bf16.msra.mxu0 %v2578
        %3205 = vmatpush.bf16.msra.mxu0 %v2574
        %3206 = vmatpush.bf16.msra.mxu0 %v2570
        %3207 = vmatmul.bf16.gmra.mxu0 %v2019
        %v3208 = vpop.f32.mrf.mxu0
        %v3209 = vadd.f32 %v3136, %v3208
        %v3210 = vpop.f32.mrf.mxu0
        %v3211 = vadd.f32 %v3138, %v3210
        %3212 = vmatmul.bf16.gmra.mxu0 %v2023
        %v3213 = vpop.f32.mrf.mxu0
        %v3214 = vadd.f32 %v3141, %v3213
        %v3215 = vpop.f32.mrf.mxu0
        %v3216 = vadd.f32 %v3143, %v3215
        %3217 = vmatmul.bf16.gmra.mxu0 %v2027
        %v3218 = vpop.f32.mrf.mxu0
        %v3219 = vadd.f32 %v3146, %v3218
        %v3220 = vpop.f32.mrf.mxu0
        %v3221 = vadd.f32 %v3148, %v3220
        %3222 = vmatmul.bf16.gmra.mxu0 %v2031
        %v3223 = vpop.f32.mrf.mxu0
        %v3224 = vadd.f32 %v3151, %v3223
        %v3225 = vpop.f32.mrf.mxu0
        %v3226 = vadd.f32 %v3153, %v3225
        %3227 = vmatmul.bf16.gmra.mxu0 %v2035
        %v3228 = vpop.f32.mrf.mxu0
        %v3229 = vadd.f32 %v3156, %v3228
        %v3230 = vpop.f32.mrf.mxu0
        %v3231 = vadd.f32 %v3158, %v3230
        %3232 = vmatmul.bf16.gmra.mxu0 %v2039
        %v3233 = vpop.f32.mrf.mxu0
        %v3234 = vadd.f32 %v3161, %v3233
        %v3235 = vpop.f32.mrf.mxu0
        %v3236 = vadd.f32 %v3163, %v3235
        %3237 = vmatmul.bf16.gmra.mxu0 %v2043
        %v3238 = vpop.f32.mrf.mxu0
        %v3239 = vadd.f32 %v3166, %v3238
        %v3240 = vpop.f32.mrf.mxu0
        %v3241 = vadd.f32 %v3168, %v3240
        %3242 = vmatmul.bf16.gmra.mxu0 %v2047
        %v3243 = vpop.f32.mrf.mxu0
        %v3244 = vadd.f32 %v3171, %v3243
        %v3245 = vpop.f32.mrf.mxu0
        %v3246 = vadd.f32 %v3173, %v3245
        %3247 = vmatmul.bf16.gmra.mxu0 %v2051
        %v3248 = vpop.f32.mrf.mxu0
        %v3249 = vadd.f32 %v3176, %v3248
        %v3250 = vpop.f32.mrf.mxu0
        %v3251 = vadd.f32 %v3178, %v3250
        %3252 = vmatmul.bf16.gmra.mxu0 %v2055
        %v3253 = vpop.f32.mrf.mxu0
        %v3254 = vadd.f32 %v3181, %v3253
        %v3255 = vpop.f32.mrf.mxu0
        %v3256 = vadd.f32 %v3183, %v3255
        %3257 = vmatmul.bf16.gmra.mxu0 %v2059
        %v3258 = vpop.f32.mrf.mxu0
        %v3259 = vadd.f32 %v3186, %v3258
        %v3260 = vpop.f32.mrf.mxu0
        %v3261 = vadd.f32 %v3188, %v3260
        %3262 = vmatmul.bf16.gmra.mxu0 %v2063
        %v3263 = vpop.f32.mrf.mxu0
        %v3264 = vadd.f32 %v3191, %v3263
        %v3265 = vpop.f32.mrf.mxu0
        %v3266 = vadd.f32 %v3193, %v3265
        %3267 = vmatmul.bf16.gmra.mxu0 %v2067
        %v3268 = vpop.f32.mrf.mxu0
        %v3269 = vadd.f32 %v3196, %v3268
        %v3270 = vpop.f32.mrf.mxu0
        %3271 = vdwg.mxu0
        %3272 = vmatpush.bf16.msra.mxu0 %v2630
        %3273 = vmatpush.bf16.msra.mxu0 %v2626
        %3274 = vmatpush.bf16.msra.mxu0 %v2622
        %3275 = vmatpush.bf16.msra.mxu0 %v2618
        %3276 = vmatpush.bf16.msra.mxu0 %v2614
        %3277 = vmatpush.bf16.msra.mxu0 %v2610
        %3278 = vmatpush.bf16.msra.mxu0 %v2606
        %3279 = vmatpush.bf16.msra.mxu0 %v2602
        %3280 = vmatmul.bf16.gmra.mxu0 %v2020
        %v3281 = vpop.f32.mrf.mxu0
        %v3282 = vadd.f32 %v3209, %v3281
        %v3283 = vpop.f32.mrf.mxu0
        %v3284 = vadd.f32 %v3211, %v3283
        %3285 = vmatmul.bf16.gmra.mxu0 %v2024
        %v3286 = vpop.f32.mrf.mxu0
        %v3287 = vadd.f32 %v3214, %v3286
        %v3288 = vpop.f32.mrf.mxu0
        %v3289 = vadd.f32 %v3216, %v3288
        %3290 = vmatmul.bf16.gmra.mxu0 %v2028
        %v3291 = vpop.f32.mrf.mxu0
        %v3292 = vadd.f32 %v3219, %v3291
        %v3293 = vpop.f32.mrf.mxu0
        %v3294 = vadd.f32 %v3221, %v3293
        %3295 = vmatmul.bf16.gmra.mxu0 %v2032
        %v3296 = vpop.f32.mrf.mxu0
        %v3297 = vadd.f32 %v3224, %v3296
        %v3298 = vpop.f32.mrf.mxu0
        %v3299 = vadd.f32 %v3226, %v3298
        %3300 = vmatmul.bf16.gmra.mxu0 %v2036
        %v3301 = vpop.f32.mrf.mxu0
        %v3302 = vadd.f32 %v3229, %v3301
        %v3303 = vpop.f32.mrf.mxu0
        %v3304 = vadd.f32 %v3231, %v3303
        %3305 = vmatmul.bf16.gmra.mxu0 %v2040
        %v3306 = vpop.f32.mrf.mxu0
        %v3307 = vadd.f32 %v3234, %v3306
        %v3308 = vpop.f32.mrf.mxu0
        %v3309 = vadd.f32 %v3236, %v3308
        %3310 = vmatmul.bf16.gmra.mxu0 %v2044
        %v3311 = vpop.f32.mrf.mxu0
        %v3312 = vadd.f32 %v3239, %v3311
        %v3313 = vpop.f32.mrf.mxu0
        %v3314 = vadd.f32 %v3241, %v3313
        %3315 = vmatmul.bf16.gmra.mxu0 %v2048
        %v3316 = vpop.f32.mrf.mxu0
        %v3317 = vadd.f32 %v3244, %v3316
        %v3318 = vpop.f32.mrf.mxu0
        %v3319 = vadd.f32 %v3246, %v3318
        %3320 = vmatmul.bf16.gmra.mxu0 %v2052
        %v3321 = vpop.f32.mrf.mxu0
        %v3322 = vadd.f32 %v3249, %v3321
        %v3323 = vpop.f32.mrf.mxu0
        %v3324 = vadd.f32 %v3251, %v3323
        %3325 = vmatmul.bf16.gmra.mxu0 %v2056
        %v3326 = vpop.f32.mrf.mxu0
        %v3327 = vadd.f32 %v3254, %v3326
        %v3328 = vpop.f32.mrf.mxu0
        %v3329 = vadd.f32 %v3256, %v3328
        %3330 = vmatmul.bf16.gmra.mxu0 %v2060
        %v3331 = vpop.f32.mrf.mxu0
        %v3332 = vadd.f32 %v3259, %v3331
        %v3333 = vpop.f32.mrf.mxu0
        %v3334 = vadd.f32 %v3261, %v3333
        %3335 = vmatmul.bf16.gmra.mxu0 %v2064
        %v3336 = vpop.f32.mrf.mxu0
        %v3337 = vadd.f32 %v3264, %v3336
        %v3338 = vpop.f32.mrf.mxu0
        %v3339 = vadd.f32 %v3266, %v3338
        %3340 = vmatmul.bf16.gmra.mxu0 %v2068
        %v3341 = vpop.f32.mrf.mxu0
        %v3342 = vadd.f32 %v3269, %v3341
        %v3343 = vpop.f32.mrf.mxu0
        %3344 = vdwg.mxu0
        %3345 = vmatpush.bf16.msra.mxu0 %v2535
        %3346 = vmatpush.bf16.msra.mxu0 %v2531
        %3347 = vmatpush.bf16.msra.mxu0 %v2527
        %3348 = vmatpush.bf16.msra.mxu0 %v2523
        %3349 = vmatpush.bf16.msra.mxu0 %v2519
        %3350 = vmatpush.bf16.msra.mxu0 %v2515
        %3351 = vmatpush.bf16.msra.mxu0 %v2511
        %3352 = vmatpush.bf16.msra.mxu0 %v2507
        %3353 = vmatmul.bf16.gmra.mxu0 %v2017
        %v3354 = vpop.f32.mrf.mxu0
        %v3355 = vadd.f32 %v1861, %v3354
        %v3356 = vpop.f32.mrf.mxu0
        %v3357 = vadd.f32 %v1861, %v3356
        %3358 = vmatmul.bf16.gmra.mxu0 %v2021
        %v3359 = vpop.f32.mrf.mxu0
        %v3360 = vadd.f32 %v1861, %v3359
        %v3361 = vpop.f32.mrf.mxu0
        %v3362 = vadd.f32 %v1861, %v3361
        %3363 = vmatmul.bf16.gmra.mxu0 %v2025
        %v3364 = vpop.f32.mrf.mxu0
        %v3365 = vadd.f32 %v1861, %v3364
        %v3366 = vpop.f32.mrf.mxu0
        %v3367 = vadd.f32 %v1861, %v3366
        %3368 = vmatmul.bf16.gmra.mxu0 %v2029
        %v3369 = vpop.f32.mrf.mxu0
        %v3370 = vadd.f32 %v1861, %v3369
        %v3371 = vpop.f32.mrf.mxu0
        %v3372 = vadd.f32 %v1861, %v3371
        %3373 = vmatmul.bf16.gmra.mxu0 %v2033
        %v3374 = vpop.f32.mrf.mxu0
        %v3375 = vadd.f32 %v1861, %v3374
        %v3376 = vpop.f32.mrf.mxu0
        %v3377 = vadd.f32 %v1861, %v3376
        %3378 = vmatmul.bf16.gmra.mxu0 %v2037
        %v3379 = vpop.f32.mrf.mxu0
        %v3380 = vadd.f32 %v1861, %v3379
        %v3381 = vpop.f32.mrf.mxu0
        %v3382 = vadd.f32 %v1861, %v3381
        %3383 = vmatmul.bf16.gmra.mxu0 %v2041
        %v3384 = vpop.f32.mrf.mxu0
        %v3385 = vadd.f32 %v1861, %v3384
        %v3386 = vpop.f32.mrf.mxu0
        %v3387 = vadd.f32 %v1861, %v3386
        %3388 = vmatmul.bf16.gmra.mxu0 %v2045
        %v3389 = vpop.f32.mrf.mxu0
        %v3390 = vadd.f32 %v1861, %v3389
        %v3391 = vpop.f32.mrf.mxu0
        %v3392 = vadd.f32 %v1861, %v3391
        %3393 = vmatmul.bf16.gmra.mxu0 %v2049
        %v3394 = vpop.f32.mrf.mxu0
        %v3395 = vadd.f32 %v1861, %v3394
        %v3396 = vpop.f32.mrf.mxu0
        %v3397 = vadd.f32 %v1861, %v3396
        %3398 = vmatmul.bf16.gmra.mxu0 %v2053
        %v3399 = vpop.f32.mrf.mxu0
        %v3400 = vadd.f32 %v1861, %v3399
        %v3401 = vpop.f32.mrf.mxu0
        %v3402 = vadd.f32 %v1861, %v3401
        %3403 = vmatmul.bf16.gmra.mxu0 %v2057
        %v3404 = vpop.f32.mrf.mxu0
        %v3405 = vadd.f32 %v1861, %v3404
        %v3406 = vpop.f32.mrf.mxu0
        %v3407 = vadd.f32 %v1861, %v3406
        %3408 = vmatmul.bf16.gmra.mxu0 %v2061
        %v3409 = vpop.f32.mrf.mxu0
        %v3410 = vadd.f32 %v1861, %v3409
        %v3411 = vpop.f32.mrf.mxu0
        %v3412 = vadd.f32 %v1861, %v3411
        %3413 = vmatmul.bf16.gmra.mxu0 %v2065
        %v3414 = vpop.f32.mrf.mxu0
        %v3415 = vadd.f32 %v1861, %v3414
        %v3416 = vpop.f32.mrf.mxu0
        %3417 = vdwg.mxu0
        %3418 = vmatpush.bf16.msra.mxu0 %v2567
        %3419 = vmatpush.bf16.msra.mxu0 %v2563
        %3420 = vmatpush.bf16.msra.mxu0 %v2559
        %3421 = vmatpush.bf16.msra.mxu0 %v2555
        %3422 = vmatpush.bf16.msra.mxu0 %v2551
        %3423 = vmatpush.bf16.msra.mxu0 %v2547
        %3424 = vmatpush.bf16.msra.mxu0 %v2543
        %3425 = vmatpush.bf16.msra.mxu0 %v2539
        %3426 = vmatmul.bf16.gmra.mxu0 %v2018
        %v3427 = vpop.f32.mrf.mxu0
        %v3428 = vadd.f32 %v3355, %v3427
        %v3429 = vpop.f32.mrf.mxu0
        %v3430 = vadd.f32 %v3357, %v3429
        %3431 = vmatmul.bf16.gmra.mxu0 %v2022
        %v3432 = vpop.f32.mrf.mxu0
        %v3433 = vadd.f32 %v3360, %v3432
        %v3434 = vpop.f32.mrf.mxu0
        %v3435 = vadd.f32 %v3362, %v3434
        %3436 = vmatmul.bf16.gmra.mxu0 %v2026
        %v3437 = vpop.f32.mrf.mxu0
        %v3438 = vadd.f32 %v3365, %v3437
        %v3439 = vpop.f32.mrf.mxu0
        %v3440 = vadd.f32 %v3367, %v3439
        %3441 = vmatmul.bf16.gmra.mxu0 %v2030
        %v3442 = vpop.f32.mrf.mxu0
        %v3443 = vadd.f32 %v3370, %v3442
        %v3444 = vpop.f32.mrf.mxu0
        %v3445 = vadd.f32 %v3372, %v3444
        %3446 = vmatmul.bf16.gmra.mxu0 %v2034
        %v3447 = vpop.f32.mrf.mxu0
        %v3448 = vadd.f32 %v3375, %v3447
        %v3449 = vpop.f32.mrf.mxu0
        %v3450 = vadd.f32 %v3377, %v3449
        %3451 = vmatmul.bf16.gmra.mxu0 %v2038
        %v3452 = vpop.f32.mrf.mxu0
        %v3453 = vadd.f32 %v3380, %v3452
        %v3454 = vpop.f32.mrf.mxu0
        %v3455 = vadd.f32 %v3382, %v3454
        %3456 = vmatmul.bf16.gmra.mxu0 %v2042
        %v3457 = vpop.f32.mrf.mxu0
        %v3458 = vadd.f32 %v3385, %v3457
        %v3459 = vpop.f32.mrf.mxu0
        %v3460 = vadd.f32 %v3387, %v3459
        %3461 = vmatmul.bf16.gmra.mxu0 %v2046
        %v3462 = vpop.f32.mrf.mxu0
        %v3463 = vadd.f32 %v3390, %v3462
        %v3464 = vpop.f32.mrf.mxu0
        %v3465 = vadd.f32 %v3392, %v3464
        %3466 = vmatmul.bf16.gmra.mxu0 %v2050
        %v3467 = vpop.f32.mrf.mxu0
        %v3468 = vadd.f32 %v3395, %v3467
        %v3469 = vpop.f32.mrf.mxu0
        %v3470 = vadd.f32 %v3397, %v3469
        %3471 = vmatmul.bf16.gmra.mxu0 %v2054
        %v3472 = vpop.f32.mrf.mxu0
        %v3473 = vadd.f32 %v3400, %v3472
        %v3474 = vpop.f32.mrf.mxu0
        %v3475 = vadd.f32 %v3402, %v3474
        %3476 = vmatmul.bf16.gmra.mxu0 %v2058
        %v3477 = vpop.f32.mrf.mxu0
        %v3478 = vadd.f32 %v3405, %v3477
        %v3479 = vpop.f32.mrf.mxu0
        %v3480 = vadd.f32 %v3407, %v3479
        %3481 = vmatmul.bf16.gmra.mxu0 %v2062
        %v3482 = vpop.f32.mrf.mxu0
        %v3483 = vadd.f32 %v3410, %v3482
        %v3484 = vpop.f32.mrf.mxu0
        %v3485 = vadd.f32 %v3412, %v3484
        %3486 = vmatmul.bf16.gmra.mxu0 %v2066
        %v3487 = vpop.f32.mrf.mxu0
        %v3488 = vadd.f32 %v3415, %v3487
        %v3489 = vpop.f32.mrf.mxu0
        %3490 = vdwg.mxu0
        %3491 = vmatpush.bf16.msra.mxu0 %v2599
        %3492 = vmatpush.bf16.msra.mxu0 %v2595
        %3493 = vmatpush.bf16.msra.mxu0 %v2591
        %3494 = vmatpush.bf16.msra.mxu0 %v2587
        %3495 = vmatpush.bf16.msra.mxu0 %v2583
        %3496 = vmatpush.bf16.msra.mxu0 %v2579
        %3497 = vmatpush.bf16.msra.mxu0 %v2575
        %3498 = vmatpush.bf16.msra.mxu0 %v2571
        %3499 = vmatmul.bf16.gmra.mxu0 %v2019
        %v3500 = vpop.f32.mrf.mxu0
        %v3501 = vadd.f32 %v3428, %v3500
        %v3502 = vpop.f32.mrf.mxu0
        %v3503 = vadd.f32 %v3430, %v3502
        %3504 = vmatmul.bf16.gmra.mxu0 %v2023
        %v3505 = vpop.f32.mrf.mxu0
        %v3506 = vadd.f32 %v3433, %v3505
        %v3507 = vpop.f32.mrf.mxu0
        %v3508 = vadd.f32 %v3435, %v3507
        %3509 = vmatmul.bf16.gmra.mxu0 %v2027
        %v3510 = vpop.f32.mrf.mxu0
        %v3511 = vadd.f32 %v3438, %v3510
        %v3512 = vpop.f32.mrf.mxu0
        %v3513 = vadd.f32 %v3440, %v3512
        %3514 = vmatmul.bf16.gmra.mxu0 %v2031
        %v3515 = vpop.f32.mrf.mxu0
        %v3516 = vadd.f32 %v3443, %v3515
        %v3517 = vpop.f32.mrf.mxu0
        %v3518 = vadd.f32 %v3445, %v3517
        %3519 = vmatmul.bf16.gmra.mxu0 %v2035
        %v3520 = vpop.f32.mrf.mxu0
        %v3521 = vadd.f32 %v3448, %v3520
        %v3522 = vpop.f32.mrf.mxu0
        %v3523 = vadd.f32 %v3450, %v3522
        %3524 = vmatmul.bf16.gmra.mxu0 %v2039
        %v3525 = vpop.f32.mrf.mxu0
        %v3526 = vadd.f32 %v3453, %v3525
        %v3527 = vpop.f32.mrf.mxu0
        %v3528 = vadd.f32 %v3455, %v3527
        %3529 = vmatmul.bf16.gmra.mxu0 %v2043
        %v3530 = vpop.f32.mrf.mxu0
        %v3531 = vadd.f32 %v3458, %v3530
        %v3532 = vpop.f32.mrf.mxu0
        %v3533 = vadd.f32 %v3460, %v3532
        %3534 = vmatmul.bf16.gmra.mxu0 %v2047
        %v3535 = vpop.f32.mrf.mxu0
        %v3536 = vadd.f32 %v3463, %v3535
        %v3537 = vpop.f32.mrf.mxu0
        %v3538 = vadd.f32 %v3465, %v3537
        %3539 = vmatmul.bf16.gmra.mxu0 %v2051
        %v3540 = vpop.f32.mrf.mxu0
        %v3541 = vadd.f32 %v3468, %v3540
        %v3542 = vpop.f32.mrf.mxu0
        %v3543 = vadd.f32 %v3470, %v3542
        %3544 = vmatmul.bf16.gmra.mxu0 %v2055
        %v3545 = vpop.f32.mrf.mxu0
        %v3546 = vadd.f32 %v3473, %v3545
        %v3547 = vpop.f32.mrf.mxu0
        %v3548 = vadd.f32 %v3475, %v3547
        %3549 = vmatmul.bf16.gmra.mxu0 %v2059
        %v3550 = vpop.f32.mrf.mxu0
        %v3551 = vadd.f32 %v3478, %v3550
        %v3552 = vpop.f32.mrf.mxu0
        %v3553 = vadd.f32 %v3480, %v3552
        %3554 = vmatmul.bf16.gmra.mxu0 %v2063
        %v3555 = vpop.f32.mrf.mxu0
        %v3556 = vadd.f32 %v3483, %v3555
        %v3557 = vpop.f32.mrf.mxu0
        %v3558 = vadd.f32 %v3485, %v3557
        %3559 = vmatmul.bf16.gmra.mxu0 %v2067
        %v3560 = vpop.f32.mrf.mxu0
        %v3561 = vadd.f32 %v3488, %v3560
        %v3562 = vpop.f32.mrf.mxu0
        %3563 = vdwg.mxu0
        %3564 = vmatpush.bf16.msra.mxu0 %v2631
        %3565 = vmatpush.bf16.msra.mxu0 %v2627
        %3566 = vmatpush.bf16.msra.mxu0 %v2623
        %3567 = vmatpush.bf16.msra.mxu0 %v2619
        %3568 = vmatpush.bf16.msra.mxu0 %v2615
        %3569 = vmatpush.bf16.msra.mxu0 %v2611
        %3570 = vmatpush.bf16.msra.mxu0 %v2607
        %3571 = vmatpush.bf16.msra.mxu0 %v2603
        %3572 = vmatmul.bf16.gmra.mxu0 %v2020
        %v3573 = vpop.f32.mrf.mxu0
        %v3574 = vadd.f32 %v3501, %v3573
        %v3575 = vpop.f32.mrf.mxu0
        %v3576 = vadd.f32 %v3503, %v3575
        %3577 = vmatmul.bf16.gmra.mxu0 %v2024
        %v3578 = vpop.f32.mrf.mxu0
        %v3579 = vadd.f32 %v3506, %v3578
        %v3580 = vpop.f32.mrf.mxu0
        %v3581 = vadd.f32 %v3508, %v3580
        %3582 = vmatmul.bf16.gmra.mxu0 %v2028
        %v3583 = vpop.f32.mrf.mxu0
        %v3584 = vadd.f32 %v3511, %v3583
        %v3585 = vpop.f32.mrf.mxu0
        %v3586 = vadd.f32 %v3513, %v3585
        %3587 = vmatmul.bf16.gmra.mxu0 %v2032
        %v3588 = vpop.f32.mrf.mxu0
        %v3589 = vadd.f32 %v3516, %v3588
        %v3590 = vpop.f32.mrf.mxu0
        %v3591 = vadd.f32 %v3518, %v3590
        %3592 = vmatmul.bf16.gmra.mxu0 %v2036
        %v3593 = vpop.f32.mrf.mxu0
        %v3594 = vadd.f32 %v3521, %v3593
        %v3595 = vpop.f32.mrf.mxu0
        %v3596 = vadd.f32 %v3523, %v3595
        %3597 = vmatmul.bf16.gmra.mxu0 %v2040
        %v3598 = vpop.f32.mrf.mxu0
        %v3599 = vadd.f32 %v3526, %v3598
        %v3600 = vpop.f32.mrf.mxu0
        %v3601 = vadd.f32 %v3528, %v3600
        %3602 = vmatmul.bf16.gmra.mxu0 %v2044
        %v3603 = vpop.f32.mrf.mxu0
        %v3604 = vadd.f32 %v3531, %v3603
        %v3605 = vpop.f32.mrf.mxu0
        %v3606 = vadd.f32 %v3533, %v3605
        %3607 = vmatmul.bf16.gmra.mxu0 %v2048
        %v3608 = vpop.f32.mrf.mxu0
        %v3609 = vadd.f32 %v3536, %v3608
        %v3610 = vpop.f32.mrf.mxu0
        %v3611 = vadd.f32 %v3538, %v3610
        %3612 = vmatmul.bf16.gmra.mxu0 %v2052
        %v3613 = vpop.f32.mrf.mxu0
        %v3614 = vadd.f32 %v3541, %v3613
        %v3615 = vpop.f32.mrf.mxu0
        %v3616 = vadd.f32 %v3543, %v3615
        %3617 = vmatmul.bf16.gmra.mxu0 %v2056
        %v3618 = vpop.f32.mrf.mxu0
        %v3619 = vadd.f32 %v3546, %v3618
        %v3620 = vpop.f32.mrf.mxu0
        %v3621 = vadd.f32 %v3548, %v3620
        %3622 = vmatmul.bf16.gmra.mxu0 %v2060
        %v3623 = vpop.f32.mrf.mxu0
        %v3624 = vadd.f32 %v3551, %v3623
        %v3625 = vpop.f32.mrf.mxu0
        %v3626 = vadd.f32 %v3553, %v3625
        %3627 = vmatmul.bf16.gmra.mxu0 %v2064
        %v3628 = vpop.f32.mrf.mxu0
        %v3629 = vadd.f32 %v3556, %v3628
        %v3630 = vpop.f32.mrf.mxu0
        %v3631 = vadd.f32 %v3558, %v3630
        %3632 = vmatmul.bf16.gmra.mxu0 %v2068
        %v3633 = vpop.f32.mrf.mxu0
        %v3634 = vadd.f32 %v3561, %v3633
        %v3635 = vpop.f32.mrf.mxu0
        %3636 = vdwg.mxu0
        %3637 = vmatpush.bf16.msra.mxu0 %v2536
        %3638 = vmatpush.bf16.msra.mxu0 %v2532
        %3639 = vmatpush.bf16.msra.mxu0 %v2528
        %3640 = vmatpush.bf16.msra.mxu0 %v2524
        %3641 = vmatpush.bf16.msra.mxu0 %v2520
        %3642 = vmatpush.bf16.msra.mxu0 %v2516
        %3643 = vmatpush.bf16.msra.mxu0 %v2512
        %3644 = vmatpush.bf16.msra.mxu0 %v2508
        %3645 = vmatmul.bf16.gmra.mxu0 %v2017
        %v3646 = vpop.f32.mrf.mxu0
        %v3647 = vadd.f32 %v1862, %v3646
        %v3648 = vpop.f32.mrf.mxu0
        %v3649 = vadd.f32 %v1862, %v3648
        %3650 = vmatmul.bf16.gmra.mxu0 %v2021
        %v3651 = vpop.f32.mrf.mxu0
        %v3652 = vadd.f32 %v1862, %v3651
        %v3653 = vpop.f32.mrf.mxu0
        %v3654 = vadd.f32 %v1862, %v3653
        %3655 = vmatmul.bf16.gmra.mxu0 %v2025
        %v3656 = vpop.f32.mrf.mxu0
        %v3657 = vadd.f32 %v1862, %v3656
        %v3658 = vpop.f32.mrf.mxu0
        %v3659 = vadd.f32 %v1862, %v3658
        %3660 = vmatmul.bf16.gmra.mxu0 %v2029
        %v3661 = vpop.f32.mrf.mxu0
        %v3662 = vadd.f32 %v1862, %v3661
        %v3663 = vpop.f32.mrf.mxu0
        %v3664 = vadd.f32 %v1862, %v3663
        %3665 = vmatmul.bf16.gmra.mxu0 %v2033
        %v3666 = vpop.f32.mrf.mxu0
        %v3667 = vadd.f32 %v1862, %v3666
        %v3668 = vpop.f32.mrf.mxu0
        %v3669 = vadd.f32 %v1862, %v3668
        %3670 = vmatmul.bf16.gmra.mxu0 %v2037
        %v3671 = vpop.f32.mrf.mxu0
        %v3672 = vadd.f32 %v1862, %v3671
        %v3673 = vpop.f32.mrf.mxu0
        %v3674 = vadd.f32 %v1862, %v3673
        %3675 = vmatmul.bf16.gmra.mxu0 %v2041
        %v3676 = vpop.f32.mrf.mxu0
        %v3677 = vadd.f32 %v1862, %v3676
        %v3678 = vpop.f32.mrf.mxu0
        %v3679 = vadd.f32 %v1862, %v3678
        %3680 = vmatmul.bf16.gmra.mxu0 %v2045
        %v3681 = vpop.f32.mrf.mxu0
        %v3682 = vadd.f32 %v1862, %v3681
        %v3683 = vpop.f32.mrf.mxu0
        %v3684 = vadd.f32 %v1862, %v3683
        %3685 = vmatmul.bf16.gmra.mxu0 %v2049
        %v3686 = vpop.f32.mrf.mxu0
        %v3687 = vadd.f32 %v1862, %v3686
        %v3688 = vpop.f32.mrf.mxu0
        %v3689 = vadd.f32 %v1862, %v3688
        %3690 = vmatmul.bf16.gmra.mxu0 %v2053
        %v3691 = vpop.f32.mrf.mxu0
        %v3692 = vadd.f32 %v1862, %v3691
        %v3693 = vpop.f32.mrf.mxu0
        %v3694 = vadd.f32 %v1862, %v3693
        %3695 = vmatmul.bf16.gmra.mxu0 %v2057
        %v3696 = vpop.f32.mrf.mxu0
        %v3697 = vadd.f32 %v1862, %v3696
        %v3698 = vpop.f32.mrf.mxu0
        %v3699 = vadd.f32 %v1862, %v3698
        %3700 = vmatmul.bf16.gmra.mxu0 %v2061
        %v3701 = vpop.f32.mrf.mxu0
        %v3702 = vadd.f32 %v1862, %v3701
        %v3703 = vpop.f32.mrf.mxu0
        %v3704 = vadd.f32 %v1862, %v3703
        %3705 = vmatmul.bf16.gmra.mxu0 %v2065
        %v3706 = vpop.f32.mrf.mxu0
        %v3707 = vadd.f32 %v1862, %v3706
        %v3708 = vpop.f32.mrf.mxu0
        %3709 = vdwg.mxu0
        %3710 = vmatpush.bf16.msra.mxu0 %v2568
        %3711 = vmatpush.bf16.msra.mxu0 %v2564
        %3712 = vmatpush.bf16.msra.mxu0 %v2560
        %3713 = vmatpush.bf16.msra.mxu0 %v2556
        %3714 = vmatpush.bf16.msra.mxu0 %v2552
        %3715 = vmatpush.bf16.msra.mxu0 %v2548
        %3716 = vmatpush.bf16.msra.mxu0 %v2544
        %3717 = vmatpush.bf16.msra.mxu0 %v2540
        %3718 = vmatmul.bf16.gmra.mxu0 %v2018
        %v3719 = vpop.f32.mrf.mxu0
        %v3720 = vadd.f32 %v3647, %v3719
        %v3721 = vpop.f32.mrf.mxu0
        %v3722 = vadd.f32 %v3649, %v3721
        %3723 = vmatmul.bf16.gmra.mxu0 %v2022
        %v3724 = vpop.f32.mrf.mxu0
        %v3725 = vadd.f32 %v3652, %v3724
        %v3726 = vpop.f32.mrf.mxu0
        %v3727 = vadd.f32 %v3654, %v3726
        %3728 = vmatmul.bf16.gmra.mxu0 %v2026
        %v3729 = vpop.f32.mrf.mxu0
        %v3730 = vadd.f32 %v3657, %v3729
        %v3731 = vpop.f32.mrf.mxu0
        %v3732 = vadd.f32 %v3659, %v3731
        %3733 = vmatmul.bf16.gmra.mxu0 %v2030
        %v3734 = vpop.f32.mrf.mxu0
        %v3735 = vadd.f32 %v3662, %v3734
        %v3736 = vpop.f32.mrf.mxu0
        %v3737 = vadd.f32 %v3664, %v3736
        %3738 = vmatmul.bf16.gmra.mxu0 %v2034
        %v3739 = vpop.f32.mrf.mxu0
        %v3740 = vadd.f32 %v3667, %v3739
        %v3741 = vpop.f32.mrf.mxu0
        %v3742 = vadd.f32 %v3669, %v3741
        %3743 = vmatmul.bf16.gmra.mxu0 %v2038
        %v3744 = vpop.f32.mrf.mxu0
        %v3745 = vadd.f32 %v3672, %v3744
        %v3746 = vpop.f32.mrf.mxu0
        %v3747 = vadd.f32 %v3674, %v3746
        %3748 = vmatmul.bf16.gmra.mxu0 %v2042
        %v3749 = vpop.f32.mrf.mxu0
        %v3750 = vadd.f32 %v3677, %v3749
        %v3751 = vpop.f32.mrf.mxu0
        %v3752 = vadd.f32 %v3679, %v3751
        %3753 = vmatmul.bf16.gmra.mxu0 %v2046
        %v3754 = vpop.f32.mrf.mxu0
        %v3755 = vadd.f32 %v3682, %v3754
        %v3756 = vpop.f32.mrf.mxu0
        %v3757 = vadd.f32 %v3684, %v3756
        %3758 = vmatmul.bf16.gmra.mxu0 %v2050
        %v3759 = vpop.f32.mrf.mxu0
        %v3760 = vadd.f32 %v3687, %v3759
        %v3761 = vpop.f32.mrf.mxu0
        %v3762 = vadd.f32 %v3689, %v3761
        %3763 = vmatmul.bf16.gmra.mxu0 %v2054
        %v3764 = vpop.f32.mrf.mxu0
        %v3765 = vadd.f32 %v3692, %v3764
        %v3766 = vpop.f32.mrf.mxu0
        %v3767 = vadd.f32 %v3694, %v3766
        %3768 = vmatmul.bf16.gmra.mxu0 %v2058
        %v3769 = vpop.f32.mrf.mxu0
        %v3770 = vadd.f32 %v3697, %v3769
        %v3771 = vpop.f32.mrf.mxu0
        %v3772 = vadd.f32 %v3699, %v3771
        %3773 = vmatmul.bf16.gmra.mxu0 %v2062
        %v3774 = vpop.f32.mrf.mxu0
        %v3775 = vadd.f32 %v3702, %v3774
        %v3776 = vpop.f32.mrf.mxu0
        %v3777 = vadd.f32 %v3704, %v3776
        %3778 = vmatmul.bf16.gmra.mxu0 %v2066
        %v3779 = vpop.f32.mrf.mxu0
        %v3780 = vadd.f32 %v3707, %v3779
        %v3781 = vpop.f32.mrf.mxu0
        %3782 = vdwg.mxu0
        %3783 = vmatpush.bf16.msra.mxu0 %v2600
        %3784 = vmatpush.bf16.msra.mxu0 %v2596
        %3785 = vmatpush.bf16.msra.mxu0 %v2592
        %3786 = vmatpush.bf16.msra.mxu0 %v2588
        %3787 = vmatpush.bf16.msra.mxu0 %v2584
        %3788 = vmatpush.bf16.msra.mxu0 %v2580
        %3789 = vmatpush.bf16.msra.mxu0 %v2576
        %3790 = vmatpush.bf16.msra.mxu0 %v2572
        %3791 = vmatmul.bf16.gmra.mxu0 %v2019
        %v3792 = vpop.f32.mrf.mxu0
        %v3793 = vadd.f32 %v3720, %v3792
        %v3794 = vpop.f32.mrf.mxu0
        %v3795 = vadd.f32 %v3722, %v3794
        %3796 = vmatmul.bf16.gmra.mxu0 %v2023
        %v3797 = vpop.f32.mrf.mxu0
        %v3798 = vadd.f32 %v3725, %v3797
        %v3799 = vpop.f32.mrf.mxu0
        %v3800 = vadd.f32 %v3727, %v3799
        %3801 = vmatmul.bf16.gmra.mxu0 %v2027
        %v3802 = vpop.f32.mrf.mxu0
        %v3803 = vadd.f32 %v3730, %v3802
        %v3804 = vpop.f32.mrf.mxu0
        %v3805 = vadd.f32 %v3732, %v3804
        %3806 = vmatmul.bf16.gmra.mxu0 %v2031
        %v3807 = vpop.f32.mrf.mxu0
        %v3808 = vadd.f32 %v3735, %v3807
        %v3809 = vpop.f32.mrf.mxu0
        %v3810 = vadd.f32 %v3737, %v3809
        %3811 = vmatmul.bf16.gmra.mxu0 %v2035
        %v3812 = vpop.f32.mrf.mxu0
        %v3813 = vadd.f32 %v3740, %v3812
        %v3814 = vpop.f32.mrf.mxu0
        %v3815 = vadd.f32 %v3742, %v3814
        %3816 = vmatmul.bf16.gmra.mxu0 %v2039
        %v3817 = vpop.f32.mrf.mxu0
        %v3818 = vadd.f32 %v3745, %v3817
        %v3819 = vpop.f32.mrf.mxu0
        %v3820 = vadd.f32 %v3747, %v3819
        %3821 = vmatmul.bf16.gmra.mxu0 %v2043
        %v3822 = vpop.f32.mrf.mxu0
        %v3823 = vadd.f32 %v3750, %v3822
        %v3824 = vpop.f32.mrf.mxu0
        %v3825 = vadd.f32 %v3752, %v3824
        %3826 = vmatmul.bf16.gmra.mxu0 %v2047
        %v3827 = vpop.f32.mrf.mxu0
        %v3828 = vadd.f32 %v3755, %v3827
        %v3829 = vpop.f32.mrf.mxu0
        %v3830 = vadd.f32 %v3757, %v3829
        %3831 = vmatmul.bf16.gmra.mxu0 %v2051
        %v3832 = vpop.f32.mrf.mxu0
        %v3833 = vadd.f32 %v3760, %v3832
        %v3834 = vpop.f32.mrf.mxu0
        %v3835 = vadd.f32 %v3762, %v3834
        %3836 = vmatmul.bf16.gmra.mxu0 %v2055
        %v3837 = vpop.f32.mrf.mxu0
        %v3838 = vadd.f32 %v3765, %v3837
        %v3839 = vpop.f32.mrf.mxu0
        %v3840 = vadd.f32 %v3767, %v3839
        %3841 = vmatmul.bf16.gmra.mxu0 %v2059
        %v3842 = vpop.f32.mrf.mxu0
        %v3843 = vadd.f32 %v3770, %v3842
        %v3844 = vpop.f32.mrf.mxu0
        %v3845 = vadd.f32 %v3772, %v3844
        %3846 = vmatmul.bf16.gmra.mxu0 %v2063
        %v3847 = vpop.f32.mrf.mxu0
        %v3848 = vadd.f32 %v3775, %v3847
        %v3849 = vpop.f32.mrf.mxu0
        %v3850 = vadd.f32 %v3777, %v3849
        %3851 = vmatmul.bf16.gmra.mxu0 %v2067
        %v3852 = vpop.f32.mrf.mxu0
        %v3853 = vadd.f32 %v3780, %v3852
        %v3854 = vpop.f32.mrf.mxu0
        %3855 = vdwg.mxu0
        %3856 = vmatpush.bf16.msra.mxu0 %v2632
        %3857 = vmatpush.bf16.msra.mxu0 %v2628
        %3858 = vmatpush.bf16.msra.mxu0 %v2624
        %3859 = vmatpush.bf16.msra.mxu0 %v2620
        %3860 = vmatpush.bf16.msra.mxu0 %v2616
        %3861 = vmatpush.bf16.msra.mxu0 %v2612
        %3862 = vmatpush.bf16.msra.mxu0 %v2608
        %3863 = vmatpush.bf16.msra.mxu0 %v2604
        %3864 = vmatmul.bf16.gmra.mxu0 %v2020
        %v3865 = vpop.f32.mrf.mxu0
        %v3866 = vadd.f32 %v3793, %v3865
        %v3867 = vpop.f32.mrf.mxu0
        %v3868 = vadd.f32 %v3795, %v3867
        %3869 = vmatmul.bf16.gmra.mxu0 %v2024
        %v3870 = vpop.f32.mrf.mxu0
        %v3871 = vadd.f32 %v3798, %v3870
        %v3872 = vpop.f32.mrf.mxu0
        %v3873 = vadd.f32 %v3800, %v3872
        %3874 = vmatmul.bf16.gmra.mxu0 %v2028
        %v3875 = vpop.f32.mrf.mxu0
        %v3876 = vadd.f32 %v3803, %v3875
        %v3877 = vpop.f32.mrf.mxu0
        %v3878 = vadd.f32 %v3805, %v3877
        %3879 = vmatmul.bf16.gmra.mxu0 %v2032
        %v3880 = vpop.f32.mrf.mxu0
        %v3881 = vadd.f32 %v3808, %v3880
        %v3882 = vpop.f32.mrf.mxu0
        %v3883 = vadd.f32 %v3810, %v3882
        %3884 = vmatmul.bf16.gmra.mxu0 %v2036
        %v3885 = vpop.f32.mrf.mxu0
        %v3886 = vadd.f32 %v3813, %v3885
        %v3887 = vpop.f32.mrf.mxu0
        %v3888 = vadd.f32 %v3815, %v3887
        %3889 = vmatmul.bf16.gmra.mxu0 %v2040
        %v3890 = vpop.f32.mrf.mxu0
        %v3891 = vadd.f32 %v3818, %v3890
        %v3892 = vpop.f32.mrf.mxu0
        %v3893 = vadd.f32 %v3820, %v3892
        %3894 = vmatmul.bf16.gmra.mxu0 %v2044
        %v3895 = vpop.f32.mrf.mxu0
        %v3896 = vadd.f32 %v3823, %v3895
        %v3897 = vpop.f32.mrf.mxu0
        %v3898 = vadd.f32 %v3825, %v3897
        %3899 = vmatmul.bf16.gmra.mxu0 %v2048
        %v3900 = vpop.f32.mrf.mxu0
        %v3901 = vadd.f32 %v3828, %v3900
        %v3902 = vpop.f32.mrf.mxu0
        %v3903 = vadd.f32 %v3830, %v3902
        %3904 = vmatmul.bf16.gmra.mxu0 %v2052
        %v3905 = vpop.f32.mrf.mxu0
        %v3906 = vadd.f32 %v3833, %v3905
        %v3907 = vpop.f32.mrf.mxu0
        %v3908 = vadd.f32 %v3835, %v3907
        %3909 = vmatmul.bf16.gmra.mxu0 %v2056
        %v3910 = vpop.f32.mrf.mxu0
        %v3911 = vadd.f32 %v3838, %v3910
        %v3912 = vpop.f32.mrf.mxu0
        %v3913 = vadd.f32 %v3840, %v3912
        %3914 = vmatmul.bf16.gmra.mxu0 %v2060
        %v3915 = vpop.f32.mrf.mxu0
        %v3916 = vadd.f32 %v3843, %v3915
        %v3917 = vpop.f32.mrf.mxu0
        %v3918 = vadd.f32 %v3845, %v3917
        %3919 = vmatmul.bf16.gmra.mxu0 %v2064
        %v3920 = vpop.f32.mrf.mxu0
        %v3921 = vadd.f32 %v3848, %v3920
        %v3922 = vpop.f32.mrf.mxu0
        %v3923 = vadd.f32 %v3850, %v3922
        %3924 = vmatmul.bf16.gmra.mxu0 %v2068
        %v3925 = vpop.f32.mrf.mxu0
        %v3926 = vadd.f32 %v3853, %v3925
        %v3927 = vpop.f32.mrf.mxu0
        %3928 = vdwg.mxu0
        %v3929 = vmul.f32 %v2990, 0.5
        %v3930 = vmul.f32 %v3282, 0.5
        %v3931 = vmul.f32 %v3574, 0.5
        %v3932 = vmul.f32 %v3866, 0.5
        %v3933 = vmul.f32 %v2992, 0.5
        %v3934 = vmul.f32 %v3284, 0.5
        %v3935 = vmul.f32 %v3576, 0.5
        %v3936 = vmul.f32 %v3868, 0.5
        %v3937 = vmul.f32 %v2995, 0.5
        %v3938 = vmul.f32 %v3287, 0.5
        %v3939 = vmul.f32 %v3579, 0.5
        %v3940 = vmul.f32 %v3871, 0.5
        %v3941 = vmul.f32 %v2997, 0.5
        %v3942 = vmul.f32 %v3289, 0.5
        %v3943 = vmul.f32 %v3581, 0.5
        %v3944 = vmul.f32 %v3873, 0.5
        %v3945 = vmul.f32 %v3000, 0.5
        %v3946 = vmul.f32 %v3292, 0.5
        %v3947 = vmul.f32 %v3584, 0.5
        %v3948 = vmul.f32 %v3876, 0.5
        %v3949 = vmul.f32 %v3002, 0.5
        %v3950 = vmul.f32 %v3294, 0.5
        %v3951 = vmul.f32 %v3586, 0.5
        %v3952 = vmul.f32 %v3878, 0.5
        %v3953 = vmul.f32 %v3005, 0.5
        %v3954 = vmul.f32 %v3297, 0.5
        %v3955 = vmul.f32 %v3589, 0.5
        %v3956 = vmul.f32 %v3881, 0.5
        %v3957 = vmul.f32 %v3007, 0.5
        %v3958 = vmul.f32 %v3299, 0.5
        %v3959 = vmul.f32 %v3591, 0.5
        %v3960 = vmul.f32 %v3883, 0.5
        %v3961 = vmul.f32 %v3010, 0.5
        %v3962 = vmul.f32 %v3302, 0.5
        %v3963 = vmul.f32 %v3594, 0.5
        %v3964 = vmul.f32 %v3886, 0.5
        %v3965 = vmul.f32 %v3012, 0.5
        %v3966 = vmul.f32 %v3304, 0.5
        %v3967 = vmul.f32 %v3596, 0.5
        %v3968 = vmul.f32 %v3888, 0.5
        %v3969 = vmul.f32 %v3015, 0.5
        %v3970 = vmul.f32 %v3307, 0.5
        %v3971 = vmul.f32 %v3599, 0.5
        %v3972 = vmul.f32 %v3891, 0.5
        %v3973 = vmul.f32 %v3017, 0.5
        %v3974 = vmul.f32 %v3309, 0.5
        %v3975 = vmul.f32 %v3601, 0.5
        %v3976 = vmul.f32 %v3893, 0.5
        %v3977 = vmul.f32 %v3020, 0.5
        %v3978 = vmul.f32 %v3312, 0.5
        %v3979 = vmul.f32 %v3604, 0.5
        %v3980 = vmul.f32 %v3896, 0.5
        %v3981 = vmul.f32 %v3022, 0.5
        %v3982 = vmul.f32 %v3314, 0.5
        %v3983 = vmul.f32 %v3606, 0.5
        %v3984 = vmul.f32 %v3898, 0.5
        %v3985 = vmul.f32 %v3025, 0.5
        %v3986 = vmul.f32 %v3317, 0.5
        %v3987 = vmul.f32 %v3609, 0.5
        %v3988 = vmul.f32 %v3901, 0.5
        %v3989 = vmul.f32 %v3027, 0.5
        %v3990 = vmul.f32 %v3319, 0.5
        %v3991 = vmul.f32 %v3611, 0.5
        %v3992 = vmul.f32 %v3903, 0.5
        %v3993 = vmul.f32 %v3030, 0.5
        %v3994 = vmul.f32 %v3322, 0.5
        %v3995 = vmul.f32 %v3614, 0.5
        %v3996 = vmul.f32 %v3906, 0.5
        %v3997 = vmul.f32 %v3032, 0.5
        %v3998 = vmul.f32 %v3324, 0.5
        %v3999 = vmul.f32 %v3616, 0.5
        %v4000 = vmul.f32 %v3908, 0.5
        %v4001 = vmul.f32 %v3035, 0.5
        %v4002 = vmul.f32 %v3327, 0.5
        %v4003 = vmul.f32 %v3619, 0.5
        %v4004 = vmul.f32 %v3911, 0.5
        %v4005 = vmul.f32 %v3037, 0.5
        %v4006 = vmul.f32 %v3329, 0.5
        %v4007 = vmul.f32 %v3621, 0.5
        %v4008 = vmul.f32 %v3913, 0.5
        %v4009 = vmul.f32 %v3040, 0.5
        %v4010 = vmul.f32 %v3332, 0.5
        %v4011 = vmul.f32 %v3624, 0.5
        %v4012 = vmul.f32 %v3916, 0.5
        %v4013 = vmul.f32 %v3042, 0.5
        %v4014 = vmul.f32 %v3334, 0.5
        %v4015 = vmul.f32 %v3626, 0.5
        %v4016 = vmul.f32 %v3918, 0.5
        %v4017 = vmul.f32 %v3045, 0.5
        %v4018 = vmul.f32 %v3337, 0.5
        %v4019 = vmul.f32 %v3629, 0.5
        %v4020 = vmul.f32 %v3921, 0.5
        %v4021 = vmul.f32 %v3047, 0.5
        %v4022 = vmul.f32 %v3339, 0.5
        %v4023 = vmul.f32 %v3631, 0.5
        %v4024 = vmul.f32 %v3923, 0.5
        %v4025 = vmul.f32 %v3050, 0.5
        %v4026 = vmul.f32 %v3342, 0.5
        %v4027 = vmul.f32 %v3634, 0.5
        %v4028 = vmul.f32 %v3926, 0.5
        %v4029 = vmul.f32 %v2990, 0.70710677
        %v4030 = vmul.f32 %v3282, 0.70710677
        %v4031 = vmul.f32 %v3574, 0.70710677
        %v4032 = vmul.f32 %v3866, 0.70710677
        %v4033 = vmul.f32 %v2992, 0.70710677
        %v4034 = vmul.f32 %v3284, 0.70710677
        %v4035 = vmul.f32 %v3576, 0.70710677
        %v4036 = vmul.f32 %v3868, 0.70710677
        %v4037 = vmul.f32 %v2995, 0.70710677
        %v4038 = vmul.f32 %v3287, 0.70710677
        %v4039 = vmul.f32 %v3579, 0.70710677
        %v4040 = vmul.f32 %v3871, 0.70710677
        %v4041 = vmul.f32 %v2997, 0.70710677
        %v4042 = vmul.f32 %v3289, 0.70710677
        %v4043 = vmul.f32 %v3581, 0.70710677
        %v4044 = vmul.f32 %v3873, 0.70710677
        %v4045 = vmul.f32 %v3000, 0.70710677
        %v4046 = vmul.f32 %v3292, 0.70710677
        %v4047 = vmul.f32 %v3584, 0.70710677
        %v4048 = vmul.f32 %v3876, 0.70710677
        %v4049 = vmul.f32 %v3002, 0.70710677
        %v4050 = vmul.f32 %v3294, 0.70710677
        %v4051 = vmul.f32 %v3586, 0.70710677
        %v4052 = vmul.f32 %v3878, 0.70710677
        %v4053 = vmul.f32 %v3005, 0.70710677
        %v4054 = vmul.f32 %v3297, 0.70710677
        %v4055 = vmul.f32 %v3589, 0.70710677
        %v4056 = vmul.f32 %v3881, 0.70710677
        %v4057 = vmul.f32 %v3007, 0.70710677
        %v4058 = vmul.f32 %v3299, 0.70710677
        %v4059 = vmul.f32 %v3591, 0.70710677
        %v4060 = vmul.f32 %v3883, 0.70710677
        %v4061 = vmul.f32 %v3010, 0.70710677
        %v4062 = vmul.f32 %v3302, 0.70710677
        %v4063 = vmul.f32 %v3594, 0.70710677
        %v4064 = vmul.f32 %v3886, 0.70710677
        %v4065 = vmul.f32 %v3012, 0.70710677
        %v4066 = vmul.f32 %v3304, 0.70710677
        %v4067 = vmul.f32 %v3596, 0.70710677
        %v4068 = vmul.f32 %v3888, 0.70710677
        %v4069 = vmul.f32 %v3015, 0.70710677
        %v4070 = vmul.f32 %v3307, 0.70710677
        %v4071 = vmul.f32 %v3599, 0.70710677
        %v4072 = vmul.f32 %v3891, 0.70710677
        %v4073 = vmul.f32 %v3017, 0.70710677
        %v4074 = vmul.f32 %v3309, 0.70710677
        %v4075 = vmul.f32 %v3601, 0.70710677
        %v4076 = vmul.f32 %v3893, 0.70710677
        %v4077 = vmul.f32 %v3020, 0.70710677
        %v4078 = vmul.f32 %v3312, 0.70710677
        %v4079 = vmul.f32 %v3604, 0.70710677
        %v4080 = vmul.f32 %v3896, 0.70710677
        %v4081 = vmul.f32 %v3022, 0.70710677
        %v4082 = vmul.f32 %v3314, 0.70710677
        %v4083 = vmul.f32 %v3606, 0.70710677
        %v4084 = vmul.f32 %v3898, 0.70710677
        %v4085 = vmul.f32 %v3025, 0.70710677
        %v4086 = vmul.f32 %v3317, 0.70710677
        %v4087 = vmul.f32 %v3609, 0.70710677
        %v4088 = vmul.f32 %v3901, 0.70710677
        %v4089 = vmul.f32 %v3027, 0.70710677
        %v4090 = vmul.f32 %v3319, 0.70710677
        %v4091 = vmul.f32 %v3611, 0.70710677
        %v4092 = vmul.f32 %v3903, 0.70710677
        %v4093 = vmul.f32 %v3030, 0.70710677
        %v4094 = vmul.f32 %v3322, 0.70710677
        %v4095 = vmul.f32 %v3614, 0.70710677
        %v4096 = vmul.f32 %v3906, 0.70710677
        %v4097 = vmul.f32 %v3032, 0.70710677
        %v4098 = vmul.f32 %v3324, 0.70710677
        %v4099 = vmul.f32 %v3616, 0.70710677
        %v4100 = vmul.f32 %v3908, 0.70710677
        %v4101 = vmul.f32 %v3035, 0.70710677
        %v4102 = vmul.f32 %v3327, 0.70710677
        %v4103 = vmul.f32 %v3619, 0.70710677
        %v4104 = vmul.f32 %v3911, 0.70710677
        %v4105 = vmul.f32 %v3037, 0.70710677
        %v4106 = vmul.f32 %v3329, 0.70710677
        %v4107 = vmul.f32 %v3621, 0.70710677
        %v4108 = vmul.f32 %v3913, 0.70710677
        %v4109 = vmul.f32 %v3040, 0.70710677
        %v4110 = vmul.f32 %v3332, 0.70710677
        %v4111 = vmul.f32 %v3624, 0.70710677
        %v4112 = vmul.f32 %v3916, 0.70710677
        %v4113 = vmul.f32 %v3042, 0.70710677
        %v4114 = vmul.f32 %v3334, 0.70710677
        %v4115 = vmul.f32 %v3626, 0.70710677
        %v4116 = vmul.f32 %v3918, 0.70710677
        %v4117 = vmul.f32 %v3045, 0.70710677
        %v4118 = vmul.f32 %v3337, 0.70710677
        %v4119 = vmul.f32 %v3629, 0.70710677
        %v4120 = vmul.f32 %v3921, 0.70710677
        %v4121 = vmul.f32 %v3047, 0.70710677
        %v4122 = vmul.f32 %v3339, 0.70710677
        %v4123 = vmul.f32 %v3631, 0.70710677
        %v4124 = vmul.f32 %v3923, 0.70710677
        %v4125 = vmul.f32 %v3050, 0.70710677
        %v4126 = vmul.f32 %v3342, 0.70710677
        %v4127 = vmul.f32 %v3634, 0.70710677
        %v4128 = vmul.f32 %v3926, 0.70710677
        %v4129 = vmul.f32 %v4029, %v4029
        %v4130 = vmin.f32 16.0, %v4129
        %v4131 = vmul.f32 %v4130, 2.1237322e-06
        %v4132 = vadd.f32 %v4131, 0.00028619796
        %v4133 = vmul.f32 %v4130, %v4132
        %v4134 = vadd.f32 %v4133, 0.0036580483
        %v4135 = vmul.f32 %v4130, %v4134
        %v4136 = vadd.f32 %v4135, 0.05243302
        %v4137 = vmul.f32 %v4130, %v4136
        %v4138 = vadd.f32 %v4137, 0.18741608
        %v4139 = vmul.f32 %v4130, %v4138
        %v4140 = vadd.f32 %v4139, 1.1283791
        %v4141 = vmul.f32 %v4029, %v4140
        %v4142 = vmul.f32 %v4130, 3.8918573e-05
        %v4143 = vadd.f32 %v4142, 0.001143296
        %v4144 = vmul.f32 %v4130, %v4143
        %v4145 = vadd.f32 %v4144, 0.014752088
        %v4146 = vmul.f32 %v4130, %v4145
        %v4147 = vadd.f32 %v4146, 0.112945676
        %v4148 = vmul.f32 %v4130, %v4147
        %v4149 = vadd.f32 %v4148, 0.4994258
        %v4150 = vmul.f32 %v4130, %v4149
        %v4151 = vadd.f32 %v4150, 1.0
        %v4152 = vrcp.pop %v4151
        %v4153 = vmul.f32 %v4151, %v4152
        %v4154 = vsub.f32 1.0, %v4153
        %v4155 = vmul.f32 %v4152, %v4154
        %v4156 = vadd.f32 %v4152, %v4155
        %vm4157 = vweird.f32 %v4151
        %vm4158 = vweird.f32 %v4152
        %vm4159 = vmor %vm4157, %vm4158
        %v4160 = vsel %vm4159, %v4152, %v4156
        %v4161 = vand.u32 2147483647, %v4151
        %vm4162 = vcmp.eq.f32.partialorder %v4161, 8.507059e+37
        %v4163 = vand.u32 %v4151, 2147483648
        %v4164 = vor.u32 1.1754944e-38, %v4163
        %v4165 = vsel %vm4162, %v4164, %v4160
        %v4166 = vmul.f32 %v4141, %v4165
        %v4167 = vmin.f32 %v4166, 1.0
        %v4168 = vmax.f32 %v4167, -1.0
        %v4169 = vmul.f32 %v4030, %v4030
        %v4170 = vmin.f32 16.0, %v4169
        %v4171 = vmul.f32 %v4170, 2.1237322e-06
        %v4172 = vadd.f32 %v4171, 0.00028619796
        %v4173 = vmul.f32 %v4170, %v4172
        %v4174 = vadd.f32 %v4173, 0.0036580483
        %v4175 = vmul.f32 %v4170, %v4174
        %v4176 = vadd.f32 %v4175, 0.05243302
        %v4177 = vmul.f32 %v4170, %v4176
        %v4178 = vadd.f32 %v4177, 0.18741608
        %v4179 = vmul.f32 %v4170, %v4178
        %v4180 = vadd.f32 %v4179, 1.1283791
        %v4181 = vmul.f32 %v4030, %v4180
        %v4182 = vmul.f32 %v4170, 3.8918573e-05
        %v4183 = vadd.f32 %v4182, 0.001143296
        %v4184 = vmul.f32 %v4170, %v4183
        %v4185 = vadd.f32 %v4184, 0.014752088
        %v4186 = vmul.f32 %v4170, %v4185
        %v4187 = vadd.f32 %v4186, 0.112945676
        %v4188 = vmul.f32 %v4170, %v4187
        %v4189 = vadd.f32 %v4188, 0.4994258
        %v4190 = vmul.f32 %v4170, %v4189
        %v4191 = vadd.f32 %v4190, 1.0
        %v4192 = vrcp.pop %v4191
        %v4193 = vmul.f32 %v4191, %v4192
        %v4194 = vsub.f32 1.0, %v4193
        %v4195 = vmul.f32 %v4192, %v4194
        %v4196 = vadd.f32 %v4192, %v4195
        %vm4197 = vweird.f32 %v4191
        %vm4198 = vweird.f32 %v4192
        %vm4199 = vmor %vm4197, %vm4198
        %v4200 = vsel %vm4199, %v4192, %v4196
        %v4201 = vand.u32 2147483647, %v4191
        %vm4202 = vcmp.eq.f32.partialorder %v4201, 8.507059e+37
        %v4203 = vand.u32 %v4191, 2147483648
        %v4204 = vor.u32 1.1754944e-38, %v4203
        %v4205 = vsel %vm4202, %v4204, %v4200
        %v4206 = vmul.f32 %v4181, %v4205
        %v4207 = vmin.f32 %v4206, 1.0
        %v4208 = vmax.f32 %v4207, -1.0
        %v4209 = vmul.f32 %v4031, %v4031
        %v4210 = vmin.f32 16.0, %v4209
        %v4211 = vmul.f32 %v4210, 2.1237322e-06
        %v4212 = vadd.f32 %v4211, 0.00028619796
        %v4213 = vmul.f32 %v4210, %v4212
        %v4214 = vadd.f32 %v4213, 0.0036580483
        %v4215 = vmul.f32 %v4210, %v4214
        %v4216 = vadd.f32 %v4215, 0.05243302
        %v4217 = vmul.f32 %v4210, %v4216
        %v4218 = vadd.f32 %v4217, 0.18741608
        %v4219 = vmul.f32 %v4210, %v4218
        %v4220 = vadd.f32 %v4219, 1.1283791
        %v4221 = vmul.f32 %v4031, %v4220
        %v4222 = vmul.f32 %v4210, 3.8918573e-05
        %v4223 = vadd.f32 %v4222, 0.001143296
        %v4224 = vmul.f32 %v4210, %v4223
        %v4225 = vadd.f32 %v4224, 0.014752088
        %v4226 = vmul.f32 %v4210, %v4225
        %v4227 = vadd.f32 %v4226, 0.112945676
        %v4228 = vmul.f32 %v4210, %v4227
        %v4229 = vadd.f32 %v4228, 0.4994258
        %v4230 = vmul.f32 %v4210, %v4229
        %v4231 = vadd.f32 %v4230, 1.0
        %v4232 = vrcp.pop %v4231
        %v4233 = vmul.f32 %v4231, %v4232
        %v4234 = vsub.f32 1.0, %v4233
        %v4235 = vmul.f32 %v4232, %v4234
        %v4236 = vadd.f32 %v4232, %v4235
        %vm4237 = vweird.f32 %v4231
        %vm4238 = vweird.f32 %v4232
        %vm4239 = vmor %vm4237, %vm4238
        %v4240 = vsel %vm4239, %v4232, %v4236
        %v4241 = vand.u32 2147483647, %v4231
        %vm4242 = vcmp.eq.f32.partialorder %v4241, 8.507059e+37
        %v4243 = vand.u32 %v4231, 2147483648
        %v4244 = vor.u32 1.1754944e-38, %v4243
        %v4245 = vsel %vm4242, %v4244, %v4240
        %v4246 = vmul.f32 %v4221, %v4245
        %v4247 = vmin.f32 %v4246, 1.0
        %v4248 = vmax.f32 %v4247, -1.0
        %v4249 = vmul.f32 %v4032, %v4032
        %v4250 = vmin.f32 16.0, %v4249
        %v4251 = vmul.f32 %v4250, 2.1237322e-06
        %v4252 = vadd.f32 %v4251, 0.00028619796
        %v4253 = vmul.f32 %v4250, %v4252
        %v4254 = vadd.f32 %v4253, 0.0036580483
        %v4255 = vmul.f32 %v4250, %v4254
        %v4256 = vadd.f32 %v4255, 0.05243302
        %v4257 = vmul.f32 %v4250, %v4256
        %v4258 = vadd.f32 %v4257, 0.18741608
        %v4259 = vmul.f32 %v4250, %v4258
        %v4260 = vadd.f32 %v4259, 1.1283791
        %v4261 = vmul.f32 %v4032, %v4260
        %v4262 = vmul.f32 %v4250, 3.8918573e-05
        %v4263 = vadd.f32 %v4262, 0.001143296
        %v4264 = vmul.f32 %v4250, %v4263
        %v4265 = vadd.f32 %v4264, 0.014752088
        %v4266 = vmul.f32 %v4250, %v4265
        %v4267 = vadd.f32 %v4266, 0.112945676
        %v4268 = vmul.f32 %v4250, %v4267
        %v4269 = vadd.f32 %v4268, 0.4994258
        %v4270 = vmul.f32 %v4250, %v4269
        %v4271 = vadd.f32 %v4270, 1.0
        %v4272 = vrcp.pop %v4271
        %v4273 = vmul.f32 %v4271, %v4272
        %v4274 = vsub.f32 1.0, %v4273
        %v4275 = vmul.f32 %v4272, %v4274
        %v4276 = vadd.f32 %v4272, %v4275
        %vm4277 = vweird.f32 %v4271
        %vm4278 = vweird.f32 %v4272
        %vm4279 = vmor %vm4277, %vm4278
        %v4280 = vsel %vm4279, %v4272, %v4276
        %v4281 = vand.u32 2147483647, %v4271
        %vm4282 = vcmp.eq.f32.partialorder %v4281, 8.507059e+37
        %v4283 = vand.u32 %v4271, 2147483648
        %v4284 = vor.u32 1.1754944e-38, %v4283
        %v4285 = vsel %vm4282, %v4284, %v4280
        %v4286 = vmul.f32 %v4261, %v4285
        %v4287 = vmin.f32 %v4286, 1.0
        %v4288 = vmax.f32 %v4287, -1.0
        %v4289 = vmul.f32 %v4033, %v4033
        %v4290 = vmin.f32 16.0, %v4289
        %v4291 = vmul.f32 %v4290, 2.1237322e-06
        %v4292 = vadd.f32 %v4291, 0.00028619796
        %v4293 = vmul.f32 %v4290, %v4292
        %v4294 = vadd.f32 %v4293, 0.0036580483
        %v4295 = vmul.f32 %v4290, %v4294
        %v4296 = vadd.f32 %v4295, 0.05243302
        %v4297 = vmul.f32 %v4290, %v4296
        %v4298 = vadd.f32 %v4297, 0.18741608
        %v4299 = vmul.f32 %v4290, %v4298
        %v4300 = vadd.f32 %v4299, 1.1283791
        %v4301 = vmul.f32 %v4033, %v4300
        %v4302 = vmul.f32 %v4290, 3.8918573e-05
        %v4303 = vadd.f32 %v4302, 0.001143296
        %v4304 = vmul.f32 %v4290, %v4303
        %v4305 = vadd.f32 %v4304, 0.014752088
        %v4306 = vmul.f32 %v4290, %v4305
        %v4307 = vadd.f32 %v4306, 0.112945676
        %v4308 = vmul.f32 %v4290, %v4307
        %v4309 = vadd.f32 %v4308, 0.4994258
        %v4310 = vmul.f32 %v4290, %v4309
        %v4311 = vadd.f32 %v4310, 1.0
        %v4312 = vrcp.pop %v4311
        %v4313 = vmul.f32 %v4311, %v4312
        %v4314 = vsub.f32 1.0, %v4313
        %v4315 = vmul.f32 %v4312, %v4314
        %v4316 = vadd.f32 %v4312, %v4315
        %vm4317 = vweird.f32 %v4311
        %vm4318 = vweird.f32 %v4312
        %vm4319 = vmor %vm4317, %vm4318
        %v4320 = vsel %vm4319, %v4312, %v4316
        %v4321 = vand.u32 2147483647, %v4311
        %vm4322 = vcmp.eq.f32.partialorder %v4321, 8.507059e+37
        %v4323 = vand.u32 %v4311, 2147483648
        %v4324 = vor.u32 1.1754944e-38, %v4323
        %v4325 = vsel %vm4322, %v4324, %v4320
        %v4326 = vmul.f32 %v4301, %v4325
        %v4327 = vmin.f32 %v4326, 1.0
        %v4328 = vmax.f32 %v4327, -1.0
        %v4329 = vmul.f32 %v4034, %v4034
        %v4330 = vmin.f32 16.0, %v4329
        %v4331 = vmul.f32 %v4330, 2.1237322e-06
        %v4332 = vadd.f32 %v4331, 0.00028619796
        %v4333 = vmul.f32 %v4330, %v4332
        %v4334 = vadd.f32 %v4333, 0.0036580483
        %v4335 = vmul.f32 %v4330, %v4334
        %v4336 = vadd.f32 %v4335, 0.05243302
        %v4337 = vmul.f32 %v4330, %v4336
        %v4338 = vadd.f32 %v4337, 0.18741608
        %v4339 = vmul.f32 %v4330, %v4338
        %v4340 = vadd.f32 %v4339, 1.1283791
        %v4341 = vmul.f32 %v4034, %v4340
        %v4342 = vmul.f32 %v4330, 3.8918573e-05
        %v4343 = vadd.f32 %v4342, 0.001143296
        %v4344 = vmul.f32 %v4330, %v4343
        %v4345 = vadd.f32 %v4344, 0.014752088
        %v4346 = vmul.f32 %v4330, %v4345
        %v4347 = vadd.f32 %v4346, 0.112945676
        %v4348 = vmul.f32 %v4330, %v4347
        %v4349 = vadd.f32 %v4348, 0.4994258
        %v4350 = vmul.f32 %v4330, %v4349
        %v4351 = vadd.f32 %v4350, 1.0
        %v4352 = vrcp.pop %v4351
        %v4353 = vmul.f32 %v4351, %v4352
        %v4354 = vsub.f32 1.0, %v4353
        %v4355 = vmul.f32 %v4352, %v4354
        %v4356 = vadd.f32 %v4352, %v4355
        %vm4357 = vweird.f32 %v4351
        %vm4358 = vweird.f32 %v4352
        %vm4359 = vmor %vm4357, %vm4358
        %v4360 = vsel %vm4359, %v4352, %v4356
        %v4361 = vand.u32 2147483647, %v4351
        %vm4362 = vcmp.eq.f32.partialorder %v4361, 8.507059e+37
        %v4363 = vand.u32 %v4351, 2147483648
        %v4364 = vor.u32 1.1754944e-38, %v4363
        %v4365 = vsel %vm4362, %v4364, %v4360
        %v4366 = vmul.f32 %v4341, %v4365
        %v4367 = vmin.f32 %v4366, 1.0
        %v4368 = vmax.f32 %v4367, -1.0
        %v4369 = vmul.f32 %v4035, %v4035
        %v4370 = vmin.f32 16.0, %v4369
        %v4371 = vmul.f32 %v4370, 2.1237322e-06
        %v4372 = vadd.f32 %v4371, 0.00028619796
        %v4373 = vmul.f32 %v4370, %v4372
        %v4374 = vadd.f32 %v4373, 0.0036580483
        %v4375 = vmul.f32 %v4370, %v4374
        %v4376 = vadd.f32 %v4375, 0.05243302
        %v4377 = vmul.f32 %v4370, %v4376
        %v4378 = vadd.f32 %v4377, 0.18741608
        %v4379 = vmul.f32 %v4370, %v4378
        %v4380 = vadd.f32 %v4379, 1.1283791
        %v4381 = vmul.f32 %v4035, %v4380
        %v4382 = vmul.f32 %v4370, 3.8918573e-05
        %v4383 = vadd.f32 %v4382, 0.001143296
        %v4384 = vmul.f32 %v4370, %v4383
        %v4385 = vadd.f32 %v4384, 0.014752088
        %v4386 = vmul.f32 %v4370, %v4385
        %v4387 = vadd.f32 %v4386, 0.112945676
        %v4388 = vmul.f32 %v4370, %v4387
        %v4389 = vadd.f32 %v4388, 0.4994258
        %v4390 = vmul.f32 %v4370, %v4389
        %v4391 = vadd.f32 %v4390, 1.0
        %v4392 = vrcp.pop %v4391
        %v4393 = vmul.f32 %v4391, %v4392
        %v4394 = vsub.f32 1.0, %v4393
        %v4395 = vmul.f32 %v4392, %v4394
        %v4396 = vadd.f32 %v4392, %v4395
        %vm4397 = vweird.f32 %v4391
        %vm4398 = vweird.f32 %v4392
        %vm4399 = vmor %vm4397, %vm4398
        %v4400 = vsel %vm4399, %v4392, %v4396
        %v4401 = vand.u32 2147483647, %v4391
        %vm4402 = vcmp.eq.f32.partialorder %v4401, 8.507059e+37
        %v4403 = vand.u32 %v4391, 2147483648
        %v4404 = vor.u32 1.1754944e-38, %v4403
        %v4405 = vsel %vm4402, %v4404, %v4400
        %v4406 = vmul.f32 %v4381, %v4405
        %v4407 = vmin.f32 %v4406, 1.0
        %v4408 = vmax.f32 %v4407, -1.0
        %v4409 = vmul.f32 %v4036, %v4036
        %v4410 = vmin.f32 16.0, %v4409
        %v4411 = vmul.f32 %v4410, 2.1237322e-06
        %v4412 = vadd.f32 %v4411, 0.00028619796
        %v4413 = vmul.f32 %v4410, %v4412
        %v4414 = vadd.f32 %v4413, 0.0036580483
        %v4415 = vmul.f32 %v4410, %v4414
        %v4416 = vadd.f32 %v4415, 0.05243302
        %v4417 = vmul.f32 %v4410, %v4416
        %v4418 = vadd.f32 %v4417, 0.18741608
        %v4419 = vmul.f32 %v4410, %v4418
        %v4420 = vadd.f32 %v4419, 1.1283791
        %v4421 = vmul.f32 %v4036, %v4420
        %v4422 = vmul.f32 %v4410, 3.8918573e-05
        %v4423 = vadd.f32 %v4422, 0.001143296
        %v4424 = vmul.f32 %v4410, %v4423
        %v4425 = vadd.f32 %v4424, 0.014752088
        %v4426 = vmul.f32 %v4410, %v4425
        %v4427 = vadd.f32 %v4426, 0.112945676
        %v4428 = vmul.f32 %v4410, %v4427
        %v4429 = vadd.f32 %v4428, 0.4994258
        %v4430 = vmul.f32 %v4410, %v4429
        %v4431 = vadd.f32 %v4430, 1.0
        %v4432 = vrcp.pop %v4431
        %v4433 = vmul.f32 %v4431, %v4432
        %v4434 = vsub.f32 1.0, %v4433
        %v4435 = vmul.f32 %v4432, %v4434
        %v4436 = vadd.f32 %v4432, %v4435
        %vm4437 = vweird.f32 %v4431
        %vm4438 = vweird.f32 %v4432
        %vm4439 = vmor %vm4437, %vm4438
        %v4440 = vsel %vm4439, %v4432, %v4436
        %v4441 = vand.u32 2147483647, %v4431
        %vm4442 = vcmp.eq.f32.partialorder %v4441, 8.507059e+37
        %v4443 = vand.u32 %v4431, 2147483648
        %v4444 = vor.u32 1.1754944e-38, %v4443
        %v4445 = vsel %vm4442, %v4444, %v4440
        %v4446 = vmul.f32 %v4421, %v4445
        %v4447 = vmin.f32 %v4446, 1.0
        %v4448 = vmax.f32 %v4447, -1.0
        %v4449 = vmul.f32 %v4037, %v4037
        %v4450 = vmin.f32 16.0, %v4449
        %v4451 = vmul.f32 %v4450, 2.1237322e-06
        %v4452 = vadd.f32 %v4451, 0.00028619796
        %v4453 = vmul.f32 %v4450, %v4452
        %v4454 = vadd.f32 %v4453, 0.0036580483
        %v4455 = vmul.f32 %v4450, %v4454
        %v4456 = vadd.f32 %v4455, 0.05243302
        %v4457 = vmul.f32 %v4450, %v4456
        %v4458 = vadd.f32 %v4457, 0.18741608
        %v4459 = vmul.f32 %v4450, %v4458
        %v4460 = vadd.f32 %v4459, 1.1283791
        %v4461 = vmul.f32 %v4037, %v4460
        %v4462 = vmul.f32 %v4450, 3.8918573e-05
        %v4463 = vadd.f32 %v4462, 0.001143296
        %v4464 = vmul.f32 %v4450, %v4463
        %v4465 = vadd.f32 %v4464, 0.014752088
        %v4466 = vmul.f32 %v4450, %v4465
        %v4467 = vadd.f32 %v4466, 0.112945676
        %v4468 = vmul.f32 %v4450, %v4467
        %v4469 = vadd.f32 %v4468, 0.4994258
        %v4470 = vmul.f32 %v4450, %v4469
        %v4471 = vadd.f32 %v4470, 1.0
        %v4472 = vrcp.pop %v4471
        %v4473 = vmul.f32 %v4471, %v4472
        %v4474 = vsub.f32 1.0, %v4473
        %v4475 = vmul.f32 %v4472, %v4474
        %v4476 = vadd.f32 %v4472, %v4475
        %vm4477 = vweird.f32 %v4471
        %vm4478 = vweird.f32 %v4472
        %vm4479 = vmor %vm4477, %vm4478
        %v4480 = vsel %vm4479, %v4472, %v4476
        %v4481 = vand.u32 2147483647, %v4471
        %vm4482 = vcmp.eq.f32.partialorder %v4481, 8.507059e+37
        %v4483 = vand.u32 %v4471, 2147483648
        %v4484 = vor.u32 1.1754944e-38, %v4483
        %v4485 = vsel %vm4482, %v4484, %v4480
        %v4486 = vmul.f32 %v4461, %v4485
        %v4487 = vmin.f32 %v4486, 1.0
        %v4488 = vmax.f32 %v4487, -1.0
        %v4489 = vmul.f32 %v4038, %v4038
        %v4490 = vmin.f32 16.0, %v4489
        %v4491 = vmul.f32 %v4490, 2.1237322e-06
        %v4492 = vadd.f32 %v4491, 0.00028619796
        %v4493 = vmul.f32 %v4490, %v4492
        %v4494 = vadd.f32 %v4493, 0.0036580483
        %v4495 = vmul.f32 %v4490, %v4494
        %v4496 = vadd.f32 %v4495, 0.05243302
        %v4497 = vmul.f32 %v4490, %v4496
        %v4498 = vadd.f32 %v4497, 0.18741608
        %v4499 = vmul.f32 %v4490, %v4498
        %v4500 = vadd.f32 %v4499, 1.1283791
        %v4501 = vmul.f32 %v4038, %v4500
        %v4502 = vmul.f32 %v4490, 3.8918573e-05
        %v4503 = vadd.f32 %v4502, 0.001143296
        %v4504 = vmul.f32 %v4490, %v4503
        %v4505 = vadd.f32 %v4504, 0.014752088
        %v4506 = vmul.f32 %v4490, %v4505
        %v4507 = vadd.f32 %v4506, 0.112945676
        %v4508 = vmul.f32 %v4490, %v4507
        %v4509 = vadd.f32 %v4508, 0.4994258
        %v4510 = vmul.f32 %v4490, %v4509
        %v4511 = vadd.f32 %v4510, 1.0
        %v4512 = vrcp.pop %v4511
        %v4513 = vmul.f32 %v4511, %v4512
        %v4514 = vsub.f32 1.0, %v4513
        %v4515 = vmul.f32 %v4512, %v4514
        %v4516 = vadd.f32 %v4512, %v4515
        %vm4517 = vweird.f32 %v4511
        %vm4518 = vweird.f32 %v4512
        %vm4519 = vmor %vm4517, %vm4518
        %v4520 = vsel %vm4519, %v4512, %v4516
        %v4521 = vand.u32 2147483647, %v4511
        %vm4522 = vcmp.eq.f32.partialorder %v4521, 8.507059e+37
        %v4523 = vand.u32 %v4511, 2147483648
        %v4524 = vor.u32 1.1754944e-38, %v4523
        %v4525 = vsel %vm4522, %v4524, %v4520
        %v4526 = vmul.f32 %v4501, %v4525
        %v4527 = vmin.f32 %v4526, 1.0
        %v4528 = vmax.f32 %v4527, -1.0
        %v4529 = vmul.f32 %v4039, %v4039
        %v4530 = vmin.f32 16.0, %v4529
        %v4531 = vmul.f32 %v4530, 2.1237322e-06
        %v4532 = vadd.f32 %v4531, 0.00028619796
        %v4533 = vmul.f32 %v4530, %v4532
        %v4534 = vadd.f32 %v4533, 0.0036580483
        %v4535 = vmul.f32 %v4530, %v4534
        %v4536 = vadd.f32 %v4535, 0.05243302
        %v4537 = vmul.f32 %v4530, %v4536
        %v4538 = vadd.f32 %v4537, 0.18741608
        %v4539 = vmul.f32 %v4530, %v4538
        %v4540 = vadd.f32 %v4539, 1.1283791
        %v4541 = vmul.f32 %v4039, %v4540
        %v4542 = vmul.f32 %v4530, 3.8918573e-05
        %v4543 = vadd.f32 %v4542, 0.001143296
        %v4544 = vmul.f32 %v4530, %v4543
        %v4545 = vadd.f32 %v4544, 0.014752088
        %v4546 = vmul.f32 %v4530, %v4545
        %v4547 = vadd.f32 %v4546, 0.112945676
        %v4548 = vmul.f32 %v4530, %v4547
        %v4549 = vadd.f32 %v4548, 0.4994258
        %v4550 = vmul.f32 %v4530, %v4549
        %v4551 = vadd.f32 %v4550, 1.0
        %v4552 = vrcp.pop %v4551
        %v4553 = vmul.f32 %v4551, %v4552
        %v4554 = vsub.f32 1.0, %v4553
        %v4555 = vmul.f32 %v4552, %v4554
        %v4556 = vadd.f32 %v4552, %v4555
        %vm4557 = vweird.f32 %v4551
        %vm4558 = vweird.f32 %v4552
        %vm4559 = vmor %vm4557, %vm4558
        %v4560 = vsel %vm4559, %v4552, %v4556
        %v4561 = vand.u32 2147483647, %v4551
        %vm4562 = vcmp.eq.f32.partialorder %v4561, 8.507059e+37
        %v4563 = vand.u32 %v4551, 2147483648
        %v4564 = vor.u32 1.1754944e-38, %v4563
        %v4565 = vsel %vm4562, %v4564, %v4560
        %v4566 = vmul.f32 %v4541, %v4565
        %v4567 = vmin.f32 %v4566, 1.0
        %v4568 = vmax.f32 %v4567, -1.0
        %v4569 = vmul.f32 %v4040, %v4040
        %v4570 = vmin.f32 16.0, %v4569
        %v4571 = vmul.f32 %v4570, 2.1237322e-06
        %v4572 = vadd.f32 %v4571, 0.00028619796
        %v4573 = vmul.f32 %v4570, %v4572
        %v4574 = vadd.f32 %v4573, 0.0036580483
        %v4575 = vmul.f32 %v4570, %v4574
        %v4576 = vadd.f32 %v4575, 0.05243302
        %v4577 = vmul.f32 %v4570, %v4576
        %v4578 = vadd.f32 %v4577, 0.18741608
        %v4579 = vmul.f32 %v4570, %v4578
        %v4580 = vadd.f32 %v4579, 1.1283791
        %v4581 = vmul.f32 %v4040, %v4580
        %v4582 = vmul.f32 %v4570, 3.8918573e-05
        %v4583 = vadd.f32 %v4582, 0.001143296
        %v4584 = vmul.f32 %v4570, %v4583
        %v4585 = vadd.f32 %v4584, 0.014752088
        %v4586 = vmul.f32 %v4570, %v4585
        %v4587 = vadd.f32 %v4586, 0.112945676
        %v4588 = vmul.f32 %v4570, %v4587
        %v4589 = vadd.f32 %v4588, 0.4994258
        %v4590 = vmul.f32 %v4570, %v4589
        %v4591 = vadd.f32 %v4590, 1.0
        %v4592 = vrcp.pop %v4591
        %v4593 = vmul.f32 %v4591, %v4592
        %v4594 = vsub.f32 1.0, %v4593
        %v4595 = vmul.f32 %v4592, %v4594
        %v4596 = vadd.f32 %v4592, %v4595
        %vm4597 = vweird.f32 %v4591
        %vm4598 = vweird.f32 %v4592
        %vm4599 = vmor %vm4597, %vm4598
        %v4600 = vsel %vm4599, %v4592, %v4596
        %v4601 = vand.u32 2147483647, %v4591
        %vm4602 = vcmp.eq.f32.partialorder %v4601, 8.507059e+37
        %v4603 = vand.u32 %v4591, 2147483648
        %v4604 = vor.u32 1.1754944e-38, %v4603
        %v4605 = vsel %vm4602, %v4604, %v4600
        %v4606 = vmul.f32 %v4581, %v4605
        %v4607 = vmin.f32 %v4606, 1.0
        %v4608 = vmax.f32 %v4607, -1.0
        %v4609 = vmul.f32 %v4041, %v4041
        %v4610 = vmin.f32 16.0, %v4609
        %v4611 = vmul.f32 %v4610, 2.1237322e-06
        %v4612 = vadd.f32 %v4611, 0.00028619796
        %v4613 = vmul.f32 %v4610, %v4612
        %v4614 = vadd.f32 %v4613, 0.0036580483
        %v4615 = vmul.f32 %v4610, %v4614
        %v4616 = vadd.f32 %v4615, 0.05243302
        %v4617 = vmul.f32 %v4610, %v4616
        %v4618 = vadd.f32 %v4617, 0.18741608
        %v4619 = vmul.f32 %v4610, %v4618
        %v4620 = vadd.f32 %v4619, 1.1283791
        %v4621 = vmul.f32 %v4041, %v4620
        %v4622 = vmul.f32 %v4610, 3.8918573e-05
        %v4623 = vadd.f32 %v4622, 0.001143296
        %v4624 = vmul.f32 %v4610, %v4623
        %v4625 = vadd.f32 %v4624, 0.014752088
        %v4626 = vmul.f32 %v4610, %v4625
        %v4627 = vadd.f32 %v4626, 0.112945676
        %v4628 = vmul.f32 %v4610, %v4627
        %v4629 = vadd.f32 %v4628, 0.4994258
        %v4630 = vmul.f32 %v4610, %v4629
        %v4631 = vadd.f32 %v4630, 1.0
        %v4632 = vrcp.pop %v4631
        %v4633 = vmul.f32 %v4631, %v4632
        %v4634 = vsub.f32 1.0, %v4633
        %v4635 = vmul.f32 %v4632, %v4634
        %v4636 = vadd.f32 %v4632, %v4635
        %vm4637 = vweird.f32 %v4631
        %vm4638 = vweird.f32 %v4632
        %vm4639 = vmor %vm4637, %vm4638
        %v4640 = vsel %vm4639, %v4632, %v4636
        %v4641 = vand.u32 2147483647, %v4631
        %vm4642 = vcmp.eq.f32.partialorder %v4641, 8.507059e+37
        %v4643 = vand.u32 %v4631, 2147483648
        %v4644 = vor.u32 1.1754944e-38, %v4643
        %v4645 = vsel %vm4642, %v4644, %v4640
        %v4646 = vmul.f32 %v4621, %v4645
        %v4647 = vmin.f32 %v4646, 1.0
        %v4648 = vmax.f32 %v4647, -1.0
        %v4649 = vmul.f32 %v4042, %v4042
        %v4650 = vmin.f32 16.0, %v4649
        %v4651 = vmul.f32 %v4650, 2.1237322e-06
        %v4652 = vadd.f32 %v4651, 0.00028619796
        %v4653 = vmul.f32 %v4650, %v4652
        %v4654 = vadd.f32 %v4653, 0.0036580483
        %v4655 = vmul.f32 %v4650, %v4654
        %v4656 = vadd.f32 %v4655, 0.05243302
        %v4657 = vmul.f32 %v4650, %v4656
        %v4658 = vadd.f32 %v4657, 0.18741608
        %v4659 = vmul.f32 %v4650, %v4658
        %v4660 = vadd.f32 %v4659, 1.1283791
        %v4661 = vmul.f32 %v4042, %v4660
        %v4662 = vmul.f32 %v4650, 3.8918573e-05
        %v4663 = vadd.f32 %v4662, 0.001143296
        %v4664 = vmul.f32 %v4650, %v4663
        %v4665 = vadd.f32 %v4664, 0.014752088
        %v4666 = vmul.f32 %v4650, %v4665
        %v4667 = vadd.f32 %v4666, 0.112945676
        %v4668 = vmul.f32 %v4650, %v4667
        %v4669 = vadd.f32 %v4668, 0.4994258
        %v4670 = vmul.f32 %v4650, %v4669
        %v4671 = vadd.f32 %v4670, 1.0
        %v4672 = vrcp.pop %v4671
        %v4673 = vmul.f32 %v4671, %v4672
        %v4674 = vsub.f32 1.0, %v4673
        %v4675 = vmul.f32 %v4672, %v4674
        %v4676 = vadd.f32 %v4672, %v4675
        %vm4677 = vweird.f32 %v4671
        %vm4678 = vweird.f32 %v4672
        %vm4679 = vmor %vm4677, %vm4678
        %v4680 = vsel %vm4679, %v4672, %v4676
        %v4681 = vand.u32 2147483647, %v4671
        %vm4682 = vcmp.eq.f32.partialorder %v4681, 8.507059e+37
        %v4683 = vand.u32 %v4671, 2147483648
        %v4684 = vor.u32 1.1754944e-38, %v4683
        %v4685 = vsel %vm4682, %v4684, %v4680
        %v4686 = vmul.f32 %v4661, %v4685
        %v4687 = vmin.f32 %v4686, 1.0
        %v4688 = vmax.f32 %v4687, -1.0
        %v4689 = vmul.f32 %v4043, %v4043
        %v4690 = vmin.f32 16.0, %v4689
        %v4691 = vmul.f32 %v4690, 2.1237322e-06
        %v4692 = vadd.f32 %v4691, 0.00028619796
        %v4693 = vmul.f32 %v4690, %v4692
        %v4694 = vadd.f32 %v4693, 0.0036580483
        %v4695 = vmul.f32 %v4690, %v4694
        %v4696 = vadd.f32 %v4695, 0.05243302
        %v4697 = vmul.f32 %v4690, %v4696
        %v4698 = vadd.f32 %v4697, 0.18741608
        %v4699 = vmul.f32 %v4690, %v4698
        %v4700 = vadd.f32 %v4699, 1.1283791
        %v4701 = vmul.f32 %v4043, %v4700
        %v4702 = vmul.f32 %v4690, 3.8918573e-05
        %v4703 = vadd.f32 %v4702, 0.001143296
        %v4704 = vmul.f32 %v4690, %v4703
        %v4705 = vadd.f32 %v4704, 0.014752088
        %v4706 = vmul.f32 %v4690, %v4705
        %v4707 = vadd.f32 %v4706, 0.112945676
        %v4708 = vmul.f32 %v4690, %v4707
        %v4709 = vadd.f32 %v4708, 0.4994258
        %v4710 = vmul.f32 %v4690, %v4709
        %v4711 = vadd.f32 %v4710, 1.0
        %v4712 = vrcp.pop %v4711
        %v4713 = vmul.f32 %v4711, %v4712
        %v4714 = vsub.f32 1.0, %v4713
        %v4715 = vmul.f32 %v4712, %v4714
        %v4716 = vadd.f32 %v4712, %v4715
        %vm4717 = vweird.f32 %v4711
        %vm4718 = vweird.f32 %v4712
        %vm4719 = vmor %vm4717, %vm4718
        %v4720 = vsel %vm4719, %v4712, %v4716
        %v4721 = vand.u32 2147483647, %v4711
        %vm4722 = vcmp.eq.f32.partialorder %v4721, 8.507059e+37
        %v4723 = vand.u32 %v4711, 2147483648
        %v4724 = vor.u32 1.1754944e-38, %v4723
        %v4725 = vsel %vm4722, %v4724, %v4720
        %v4726 = vmul.f32 %v4701, %v4725
        %v4727 = vmin.f32 %v4726, 1.0
        %v4728 = vmax.f32 %v4727, -1.0
        %v4729 = vmul.f32 %v4044, %v4044
        %v4730 = vmin.f32 16.0, %v4729
        %v4731 = vmul.f32 %v4730, 2.1237322e-06
        %v4732 = vadd.f32 %v4731, 0.00028619796
        %v4733 = vmul.f32 %v4730, %v4732
        %v4734 = vadd.f32 %v4733, 0.0036580483
        %v4735 = vmul.f32 %v4730, %v4734
        %v4736 = vadd.f32 %v4735, 0.05243302
        %v4737 = vmul.f32 %v4730, %v4736
        %v4738 = vadd.f32 %v4737, 0.18741608
        %v4739 = vmul.f32 %v4730, %v4738
        %v4740 = vadd.f32 %v4739, 1.1283791
        %v4741 = vmul.f32 %v4044, %v4740
        %v4742 = vmul.f32 %v4730, 3.8918573e-05
        %v4743 = vadd.f32 %v4742, 0.001143296
        %v4744 = vmul.f32 %v4730, %v4743
        %v4745 = vadd.f32 %v4744, 0.014752088
        %v4746 = vmul.f32 %v4730, %v4745
        %v4747 = vadd.f32 %v4746, 0.112945676
        %v4748 = vmul.f32 %v4730, %v4747
        %v4749 = vadd.f32 %v4748, 0.4994258
        %v4750 = vmul.f32 %v4730, %v4749
        %v4751 = vadd.f32 %v4750, 1.0
        %v4752 = vrcp.pop %v4751
        %v4753 = vmul.f32 %v4751, %v4752
        %v4754 = vsub.f32 1.0, %v4753
        %v4755 = vmul.f32 %v4752, %v4754
        %v4756 = vadd.f32 %v4752, %v4755
        %vm4757 = vweird.f32 %v4751
        %vm4758 = vweird.f32 %v4752
        %vm4759 = vmor %vm4757, %vm4758
        %v4760 = vsel %vm4759, %v4752, %v4756
        %v4761 = vand.u32 2147483647, %v4751
        %vm4762 = vcmp.eq.f32.partialorder %v4761, 8.507059e+37
        %v4763 = vand.u32 %v4751, 2147483648
        %v4764 = vor.u32 1.1754944e-38, %v4763
        %v4765 = vsel %vm4762, %v4764, %v4760
        %v4766 = vmul.f32 %v4741, %v4765
        %v4767 = vmin.f32 %v4766, 1.0
        %v4768 = vmax.f32 %v4767, -1.0
        %v4769 = vmul.f32 %v4045, %v4045
        %v4770 = vmin.f32 16.0, %v4769
        %v4771 = vmul.f32 %v4770, 2.1237322e-06
        %v4772 = vadd.f32 %v4771, 0.00028619796
        %v4773 = vmul.f32 %v4770, %v4772
        %v4774 = vadd.f32 %v4773, 0.0036580483
        %v4775 = vmul.f32 %v4770, %v4774
        %v4776 = vadd.f32 %v4775, 0.05243302
        %v4777 = vmul.f32 %v4770, %v4776
        %v4778 = vadd.f32 %v4777, 0.18741608
        %v4779 = vmul.f32 %v4770, %v4778
        %v4780 = vadd.f32 %v4779, 1.1283791
        %v4781 = vmul.f32 %v4045, %v4780
        %v4782 = vmul.f32 %v4770, 3.8918573e-05
        %v4783 = vadd.f32 %v4782, 0.001143296
        %v4784 = vmul.f32 %v4770, %v4783
        %v4785 = vadd.f32 %v4784, 0.014752088
        %v4786 = vmul.f32 %v4770, %v4785
        %v4787 = vadd.f32 %v4786, 0.112945676
        %v4788 = vmul.f32 %v4770, %v4787
        %v4789 = vadd.f32 %v4788, 0.4994258
        %v4790 = vmul.f32 %v4770, %v4789
        %v4791 = vadd.f32 %v4790, 1.0
        %v4792 = vrcp.pop %v4791
        %v4793 = vmul.f32 %v4791, %v4792
        %v4794 = vsub.f32 1.0, %v4793
        %v4795 = vmul.f32 %v4792, %v4794
        %v4796 = vadd.f32 %v4792, %v4795
        %vm4797 = vweird.f32 %v4791
        %vm4798 = vweird.f32 %v4792
        %vm4799 = vmor %vm4797, %vm4798
        %v4800 = vsel %vm4799, %v4792, %v4796
        %v4801 = vand.u32 2147483647, %v4791
        %vm4802 = vcmp.eq.f32.partialorder %v4801, 8.507059e+37
        %v4803 = vand.u32 %v4791, 2147483648
        %v4804 = vor.u32 1.1754944e-38, %v4803
        %v4805 = vsel %vm4802, %v4804, %v4800
        %v4806 = vmul.f32 %v4781, %v4805
        %v4807 = vmin.f32 %v4806, 1.0
        %v4808 = vmax.f32 %v4807, -1.0
        %v4809 = vmul.f32 %v4046, %v4046
        %v4810 = vmin.f32 16.0, %v4809
        %v4811 = vmul.f32 %v4810, 2.1237322e-06
        %v4812 = vadd.f32 %v4811, 0.00028619796
        %v4813 = vmul.f32 %v4810, %v4812
        %v4814 = vadd.f32 %v4813, 0.0036580483
        %v4815 = vmul.f32 %v4810, %v4814
        %v4816 = vadd.f32 %v4815, 0.05243302
        %v4817 = vmul.f32 %v4810, %v4816
        %v4818 = vadd.f32 %v4817, 0.18741608
        %v4819 = vmul.f32 %v4810, %v4818
        %v4820 = vadd.f32 %v4819, 1.1283791
        %v4821 = vmul.f32 %v4046, %v4820
        %v4822 = vmul.f32 %v4810, 3.8918573e-05
        %v4823 = vadd.f32 %v4822, 0.001143296
        %v4824 = vmul.f32 %v4810, %v4823
        %v4825 = vadd.f32 %v4824, 0.014752088
        %v4826 = vmul.f32 %v4810, %v4825
        %v4827 = vadd.f32 %v4826, 0.112945676
        %v4828 = vmul.f32 %v4810, %v4827
        %v4829 = vadd.f32 %v4828, 0.4994258
        %v4830 = vmul.f32 %v4810, %v4829
        %v4831 = vadd.f32 %v4830, 1.0
        %v4832 = vrcp.pop %v4831
        %v4833 = vmul.f32 %v4831, %v4832
        %v4834 = vsub.f32 1.0, %v4833
        %v4835 = vmul.f32 %v4832, %v4834
        %v4836 = vadd.f32 %v4832, %v4835
        %vm4837 = vweird.f32 %v4831
        %vm4838 = vweird.f32 %v4832
        %vm4839 = vmor %vm4837, %vm4838
        %v4840 = vsel %vm4839, %v4832, %v4836
        %v4841 = vand.u32 2147483647, %v4831
        %vm4842 = vcmp.eq.f32.partialorder %v4841, 8.507059e+37
        %v4843 = vand.u32 %v4831, 2147483648
        %v4844 = vor.u32 1.1754944e-38, %v4843
        %v4845 = vsel %vm4842, %v4844, %v4840
        %v4846 = vmul.f32 %v4821, %v4845
        %v4847 = vmin.f32 %v4846, 1.0
        %v4848 = vmax.f32 %v4847, -1.0
        %v4849 = vmul.f32 %v4047, %v4047
        %v4850 = vmin.f32 16.0, %v4849
        %v4851 = vmul.f32 %v4850, 2.1237322e-06
        %v4852 = vadd.f32 %v4851, 0.00028619796
        %v4853 = vmul.f32 %v4850, %v4852
        %v4854 = vadd.f32 %v4853, 0.0036580483
        %v4855 = vmul.f32 %v4850, %v4854
        %v4856 = vadd.f32 %v4855, 0.05243302
        %v4857 = vmul.f32 %v4850, %v4856
        %v4858 = vadd.f32 %v4857, 0.18741608
        %v4859 = vmul.f32 %v4850, %v4858
        %v4860 = vadd.f32 %v4859, 1.1283791
        %v4861 = vmul.f32 %v4047, %v4860
        %v4862 = vmul.f32 %v4850, 3.8918573e-05
        %v4863 = vadd.f32 %v4862, 0.001143296
        %v4864 = vmul.f32 %v4850, %v4863
        %v4865 = vadd.f32 %v4864, 0.014752088
        %v4866 = vmul.f32 %v4850, %v4865
        %v4867 = vadd.f32 %v4866, 0.112945676
        %v4868 = vmul.f32 %v4850, %v4867
        %v4869 = vadd.f32 %v4868, 0.4994258
        %v4870 = vmul.f32 %v4850, %v4869
        %v4871 = vadd.f32 %v4870, 1.0
        %v4872 = vrcp.pop %v4871
        %v4873 = vmul.f32 %v4871, %v4872
        %v4874 = vsub.f32 1.0, %v4873
        %v4875 = vmul.f32 %v4872, %v4874
        %v4876 = vadd.f32 %v4872, %v4875
        %vm4877 = vweird.f32 %v4871
        %vm4878 = vweird.f32 %v4872
        %vm4879 = vmor %vm4877, %vm4878
        %v4880 = vsel %vm4879, %v4872, %v4876
        %v4881 = vand.u32 2147483647, %v4871
        %vm4882 = vcmp.eq.f32.partialorder %v4881, 8.507059e+37
        %v4883 = vand.u32 %v4871, 2147483648
        %v4884 = vor.u32 1.1754944e-38, %v4883
        %v4885 = vsel %vm4882, %v4884, %v4880
        %v4886 = vmul.f32 %v4861, %v4885
        %v4887 = vmin.f32 %v4886, 1.0
        %v4888 = vmax.f32 %v4887, -1.0
        %v4889 = vmul.f32 %v4048, %v4048
        %v4890 = vmin.f32 16.0, %v4889
        %v4891 = vmul.f32 %v4890, 2.1237322e-06
        %v4892 = vadd.f32 %v4891, 0.00028619796
        %v4893 = vmul.f32 %v4890, %v4892
        %v4894 = vadd.f32 %v4893, 0.0036580483
        %v4895 = vmul.f32 %v4890, %v4894
        %v4896 = vadd.f32 %v4895, 0.05243302
        %v4897 = vmul.f32 %v4890, %v4896
        %v4898 = vadd.f32 %v4897, 0.18741608
        %v4899 = vmul.f32 %v4890, %v4898
        %v4900 = vadd.f32 %v4899, 1.1283791
        %v4901 = vmul.f32 %v4048, %v4900
        %v4902 = vmul.f32 %v4890, 3.8918573e-05
        %v4903 = vadd.f32 %v4902, 0.001143296
        %v4904 = vmul.f32 %v4890, %v4903
        %v4905 = vadd.f32 %v4904, 0.014752088
        %v4906 = vmul.f32 %v4890, %v4905
        %v4907 = vadd.f32 %v4906, 0.112945676
        %v4908 = vmul.f32 %v4890, %v4907
        %v4909 = vadd.f32 %v4908, 0.4994258
        %v4910 = vmul.f32 %v4890, %v4909
        %v4911 = vadd.f32 %v4910, 1.0
        %v4912 = vrcp.pop %v4911
        %v4913 = vmul.f32 %v4911, %v4912
        %v4914 = vsub.f32 1.0, %v4913
        %v4915 = vmul.f32 %v4912, %v4914
        %v4916 = vadd.f32 %v4912, %v4915
        %vm4917 = vweird.f32 %v4911
        %vm4918 = vweird.f32 %v4912
        %vm4919 = vmor %vm4917, %vm4918
        %v4920 = vsel %vm4919, %v4912, %v4916
        %v4921 = vand.u32 2147483647, %v4911
        %vm4922 = vcmp.eq.f32.partialorder %v4921, 8.507059e+37
        %v4923 = vand.u32 %v4911, 2147483648
        %v4924 = vor.u32 1.1754944e-38, %v4923
        %v4925 = vsel %vm4922, %v4924, %v4920
        %v4926 = vmul.f32 %v4901, %v4925
        %v4927 = vmin.f32 %v4926, 1.0
        %v4928 = vmax.f32 %v4927, -1.0
        %v4929 = vmul.f32 %v4049, %v4049
        %v4930 = vmin.f32 16.0, %v4929
        %v4931 = vmul.f32 %v4930, 2.1237322e-06
        %v4932 = vadd.f32 %v4931, 0.00028619796
        %v4933 = vmul.f32 %v4930, %v4932
        %v4934 = vadd.f32 %v4933, 0.0036580483
        %v4935 = vmul.f32 %v4930, %v4934
        %v4936 = vadd.f32 %v4935, 0.05243302
        %v4937 = vmul.f32 %v4930, %v4936
        %v4938 = vadd.f32 %v4937, 0.18741608
        %v4939 = vmul.f32 %v4930, %v4938
        %v4940 = vadd.f32 %v4939, 1.1283791
        %v4941 = vmul.f32 %v4049, %v4940
        %v4942 = vmul.f32 %v4930, 3.8918573e-05
        %v4943 = vadd.f32 %v4942, 0.001143296
        %v4944 = vmul.f32 %v4930, %v4943
        %v4945 = vadd.f32 %v4944, 0.014752088
        %v4946 = vmul.f32 %v4930, %v4945
        %v4947 = vadd.f32 %v4946, 0.112945676
        %v4948 = vmul.f32 %v4930, %v4947
        %v4949 = vadd.f32 %v4948, 0.4994258
        %v4950 = vmul.f32 %v4930, %v4949
        %v4951 = vadd.f32 %v4950, 1.0
        %v4952 = vrcp.pop %v4951
        %v4953 = vmul.f32 %v4951, %v4952
        %v4954 = vsub.f32 1.0, %v4953
        %v4955 = vmul.f32 %v4952, %v4954
        %v4956 = vadd.f32 %v4952, %v4955
        %vm4957 = vweird.f32 %v4951
        %vm4958 = vweird.f32 %v4952
        %vm4959 = vmor %vm4957, %vm4958
        %v4960 = vsel %vm4959, %v4952, %v4956
        %v4961 = vand.u32 2147483647, %v4951
        %vm4962 = vcmp.eq.f32.partialorder %v4961, 8.507059e+37
        %v4963 = vand.u32 %v4951, 2147483648
        %v4964 = vor.u32 1.1754944e-38, %v4963
        %v4965 = vsel %vm4962, %v4964, %v4960
        %v4966 = vmul.f32 %v4941, %v4965
        %v4967 = vmin.f32 %v4966, 1.0
        %v4968 = vmax.f32 %v4967, -1.0
        %v4969 = vmul.f32 %v4050, %v4050
        %v4970 = vmin.f32 16.0, %v4969
        %v4971 = vmul.f32 %v4970, 2.1237322e-06
        %v4972 = vadd.f32 %v4971, 0.00028619796
        %v4973 = vmul.f32 %v4970, %v4972
        %v4974 = vadd.f32 %v4973, 0.0036580483
        %v4975 = vmul.f32 %v4970, %v4974
        %v4976 = vadd.f32 %v4975, 0.05243302
        %v4977 = vmul.f32 %v4970, %v4976
        %v4978 = vadd.f32 %v4977, 0.18741608
        %v4979 = vmul.f32 %v4970, %v4978
        %v4980 = vadd.f32 %v4979, 1.1283791
        %v4981 = vmul.f32 %v4050, %v4980
        %v4982 = vmul.f32 %v4970, 3.8918573e-05
        %v4983 = vadd.f32 %v4982, 0.001143296
        %v4984 = vmul.f32 %v4970, %v4983
        %v4985 = vadd.f32 %v4984, 0.014752088
        %v4986 = vmul.f32 %v4970, %v4985
        %v4987 = vadd.f32 %v4986, 0.112945676
        %v4988 = vmul.f32 %v4970, %v4987
        %v4989 = vadd.f32 %v4988, 0.4994258
        %v4990 = vmul.f32 %v4970, %v4989
        %v4991 = vadd.f32 %v4990, 1.0
        %v4992 = vrcp.pop %v4991
        %v4993 = vmul.f32 %v4991, %v4992
        %v4994 = vsub.f32 1.0, %v4993
        %v4995 = vmul.f32 %v4992, %v4994
        %v4996 = vadd.f32 %v4992, %v4995
        %vm4997 = vweird.f32 %v4991
        %vm4998 = vweird.f32 %v4992
        %vm4999 = vmor %vm4997, %vm4998
        %v5000 = vsel %vm4999, %v4992, %v4996
        %v5001 = vand.u32 2147483647, %v4991
        %vm5002 = vcmp.eq.f32.partialorder %v5001, 8.507059e+37
        %v5003 = vand.u32 %v4991, 2147483648
        %v5004 = vor.u32 1.1754944e-38, %v5003
        %v5005 = vsel %vm5002, %v5004, %v5000
        %v5006 = vmul.f32 %v4981, %v5005
        %v5007 = vmin.f32 %v5006, 1.0
        %v5008 = vmax.f32 %v5007, -1.0
        %v5009 = vmul.f32 %v4051, %v4051
        %v5010 = vmin.f32 16.0, %v5009
        %v5011 = vmul.f32 %v5010, 2.1237322e-06
        %v5012 = vadd.f32 %v5011, 0.00028619796
        %v5013 = vmul.f32 %v5010, %v5012
        %v5014 = vadd.f32 %v5013, 0.0036580483
        %v5015 = vmul.f32 %v5010, %v5014
        %v5016 = vadd.f32 %v5015, 0.05243302
        %v5017 = vmul.f32 %v5010, %v5016
        %v5018 = vadd.f32 %v5017, 0.18741608
        %v5019 = vmul.f32 %v5010, %v5018
        %v5020 = vadd.f32 %v5019, 1.1283791
        %v5021 = vmul.f32 %v4051, %v5020
        %v5022 = vmul.f32 %v5010, 3.8918573e-05
        %v5023 = vadd.f32 %v5022, 0.001143296
        %v5024 = vmul.f32 %v5010, %v5023
        %v5025 = vadd.f32 %v5024, 0.014752088
        %v5026 = vmul.f32 %v5010, %v5025
        %v5027 = vadd.f32 %v5026, 0.112945676
        %v5028 = vmul.f32 %v5010, %v5027
        %v5029 = vadd.f32 %v5028, 0.4994258
        %v5030 = vmul.f32 %v5010, %v5029
        %v5031 = vadd.f32 %v5030, 1.0
        %v5032 = vrcp.pop %v5031
        %v5033 = vmul.f32 %v5031, %v5032
        %v5034 = vsub.f32 1.0, %v5033
        %v5035 = vmul.f32 %v5032, %v5034
        %v5036 = vadd.f32 %v5032, %v5035
        %vm5037 = vweird.f32 %v5031
        %vm5038 = vweird.f32 %v5032
        %vm5039 = vmor %vm5037, %vm5038
        %v5040 = vsel %vm5039, %v5032, %v5036
        %v5041 = vand.u32 2147483647, %v5031
        %vm5042 = vcmp.eq.f32.partialorder %v5041, 8.507059e+37
        %v5043 = vand.u32 %v5031, 2147483648
        %v5044 = vor.u32 1.1754944e-38, %v5043
        %v5045 = vsel %vm5042, %v5044, %v5040
        %v5046 = vmul.f32 %v5021, %v5045
        %v5047 = vmin.f32 %v5046, 1.0
        %v5048 = vmax.f32 %v5047, -1.0
        %v5049 = vmul.f32 %v4052, %v4052
        %v5050 = vmin.f32 16.0, %v5049
        %v5051 = vmul.f32 %v5050, 2.1237322e-06
        %v5052 = vadd.f32 %v5051, 0.00028619796
        %v5053 = vmul.f32 %v5050, %v5052
        %v5054 = vadd.f32 %v5053, 0.0036580483
        %v5055 = vmul.f32 %v5050, %v5054
        %v5056 = vadd.f32 %v5055, 0.05243302
        %v5057 = vmul.f32 %v5050, %v5056
        %v5058 = vadd.f32 %v5057, 0.18741608
        %v5059 = vmul.f32 %v5050, %v5058
        %v5060 = vadd.f32 %v5059, 1.1283791
        %v5061 = vmul.f32 %v4052, %v5060
        %v5062 = vmul.f32 %v5050, 3.8918573e-05
        %v5063 = vadd.f32 %v5062, 0.001143296
        %v5064 = vmul.f32 %v5050, %v5063
        %v5065 = vadd.f32 %v5064, 0.014752088
        %v5066 = vmul.f32 %v5050, %v5065
        %v5067 = vadd.f32 %v5066, 0.112945676
        %v5068 = vmul.f32 %v5050, %v5067
        %v5069 = vadd.f32 %v5068, 0.4994258
        %v5070 = vmul.f32 %v5050, %v5069
        %v5071 = vadd.f32 %v5070, 1.0
        %v5072 = vrcp.pop %v5071
        %v5073 = vmul.f32 %v5071, %v5072
        %v5074 = vsub.f32 1.0, %v5073
        %v5075 = vmul.f32 %v5072, %v5074
        %v5076 = vadd.f32 %v5072, %v5075
        %vm5077 = vweird.f32 %v5071
        %vm5078 = vweird.f32 %v5072
        %vm5079 = vmor %vm5077, %vm5078
        %v5080 = vsel %vm5079, %v5072, %v5076
        %v5081 = vand.u32 2147483647, %v5071
        %vm5082 = vcmp.eq.f32.partialorder %v5081, 8.507059e+37
        %v5083 = vand.u32 %v5071, 2147483648
        %v5084 = vor.u32 1.1754944e-38, %v5083
        %v5085 = vsel %vm5082, %v5084, %v5080
        %v5086 = vmul.f32 %v5061, %v5085
        %v5087 = vmin.f32 %v5086, 1.0
        %v5088 = vmax.f32 %v5087, -1.0
        %v5089 = vmul.f32 %v4053, %v4053
        %v5090 = vmin.f32 16.0, %v5089
        %v5091 = vmul.f32 %v5090, 2.1237322e-06
        %v5092 = vadd.f32 %v5091, 0.00028619796
        %v5093 = vmul.f32 %v5090, %v5092
        %v5094 = vadd.f32 %v5093, 0.0036580483
        %v5095 = vmul.f32 %v5090, %v5094
        %v5096 = vadd.f32 %v5095, 0.05243302
        %v5097 = vmul.f32 %v5090, %v5096
        %v5098 = vadd.f32 %v5097, 0.18741608
        %v5099 = vmul.f32 %v5090, %v5098
        %v5100 = vadd.f32 %v5099, 1.1283791
        %v5101 = vmul.f32 %v4053, %v5100
        %v5102 = vmul.f32 %v5090, 3.8918573e-05
        %v5103 = vadd.f32 %v5102, 0.001143296
        %v5104 = vmul.f32 %v5090, %v5103
        %v5105 = vadd.f32 %v5104, 0.014752088
        %v5106 = vmul.f32 %v5090, %v5105
        %v5107 = vadd.f32 %v5106, 0.112945676
        %v5108 = vmul.f32 %v5090, %v5107
        %v5109 = vadd.f32 %v5108, 0.4994258
        %v5110 = vmul.f32 %v5090, %v5109
        %v5111 = vadd.f32 %v5110, 1.0
        %v5112 = vrcp.pop %v5111
        %v5113 = vmul.f32 %v5111, %v5112
        %v5114 = vsub.f32 1.0, %v5113
        %v5115 = vmul.f32 %v5112, %v5114
        %v5116 = vadd.f32 %v5112, %v5115
        %vm5117 = vweird.f32 %v5111
        %vm5118 = vweird.f32 %v5112
        %vm5119 = vmor %vm5117, %vm5118
        %v5120 = vsel %vm5119, %v5112, %v5116
        %v5121 = vand.u32 2147483647, %v5111
        %vm5122 = vcmp.eq.f32.partialorder %v5121, 8.507059e+37
        %v5123 = vand.u32 %v5111, 2147483648
        %v5124 = vor.u32 1.1754944e-38, %v5123
        %v5125 = vsel %vm5122, %v5124, %v5120
        %v5126 = vmul.f32 %v5101, %v5125
        %v5127 = vmin.f32 %v5126, 1.0
        %v5128 = vmax.f32 %v5127, -1.0
        %v5129 = vmul.f32 %v4054, %v4054
        %v5130 = vmin.f32 16.0, %v5129
        %v5131 = vmul.f32 %v5130, 2.1237322e-06
        %v5132 = vadd.f32 %v5131, 0.00028619796
        %v5133 = vmul.f32 %v5130, %v5132
        %v5134 = vadd.f32 %v5133, 0.0036580483
        %v5135 = vmul.f32 %v5130, %v5134
        %v5136 = vadd.f32 %v5135, 0.05243302
        %v5137 = vmul.f32 %v5130, %v5136
        %v5138 = vadd.f32 %v5137, 0.18741608
        %v5139 = vmul.f32 %v5130, %v5138
        %v5140 = vadd.f32 %v5139, 1.1283791
        %v5141 = vmul.f32 %v4054, %v5140
        %v5142 = vmul.f32 %v5130, 3.8918573e-05
        %v5143 = vadd.f32 %v5142, 0.001143296
        %v5144 = vmul.f32 %v5130, %v5143
        %v5145 = vadd.f32 %v5144, 0.014752088
        %v5146 = vmul.f32 %v5130, %v5145
        %v5147 = vadd.f32 %v5146, 0.112945676
        %v5148 = vmul.f32 %v5130, %v5147
        %v5149 = vadd.f32 %v5148, 0.4994258
        %v5150 = vmul.f32 %v5130, %v5149
        %v5151 = vadd.f32 %v5150, 1.0
        %v5152 = vrcp.pop %v5151
        %v5153 = vmul.f32 %v5151, %v5152
        %v5154 = vsub.f32 1.0, %v5153
        %v5155 = vmul.f32 %v5152, %v5154
        %v5156 = vadd.f32 %v5152, %v5155
        %vm5157 = vweird.f32 %v5151
        %vm5158 = vweird.f32 %v5152
        %vm5159 = vmor %vm5157, %vm5158
        %v5160 = vsel %vm5159, %v5152, %v5156
        %v5161 = vand.u32 2147483647, %v5151
        %vm5162 = vcmp.eq.f32.partialorder %v5161, 8.507059e+37
        %v5163 = vand.u32 %v5151, 2147483648
        %v5164 = vor.u32 1.1754944e-38, %v5163
        %v5165 = vsel %vm5162, %v5164, %v5160
        %v5166 = vmul.f32 %v5141, %v5165
        %v5167 = vmin.f32 %v5166, 1.0
        %v5168 = vmax.f32 %v5167, -1.0
        %v5169 = vmul.f32 %v4055, %v4055
        %v5170 = vmin.f32 16.0, %v5169
        %v5171 = vmul.f32 %v5170, 2.1237322e-06
        %v5172 = vadd.f32 %v5171, 0.00028619796
        %v5173 = vmul.f32 %v5170, %v5172
        %v5174 = vadd.f32 %v5173, 0.0036580483
        %v5175 = vmul.f32 %v5170, %v5174
        %v5176 = vadd.f32 %v5175, 0.05243302
        %v5177 = vmul.f32 %v5170, %v5176
        %v5178 = vadd.f32 %v5177, 0.18741608
        %v5179 = vmul.f32 %v5170, %v5178
        %v5180 = vadd.f32 %v5179, 1.1283791
        %v5181 = vmul.f32 %v4055, %v5180
        %v5182 = vmul.f32 %v5170, 3.8918573e-05
        %v5183 = vadd.f32 %v5182, 0.001143296
        %v5184 = vmul.f32 %v5170, %v5183
        %v5185 = vadd.f32 %v5184, 0.014752088
        %v5186 = vmul.f32 %v5170, %v5185
        %v5187 = vadd.f32 %v5186, 0.112945676
        %v5188 = vmul.f32 %v5170, %v5187
        %v5189 = vadd.f32 %v5188, 0.4994258
        %v5190 = vmul.f32 %v5170, %v5189
        %v5191 = vadd.f32 %v5190, 1.0
        %v5192 = vrcp.pop %v5191
        %v5193 = vmul.f32 %v5191, %v5192
        %v5194 = vsub.f32 1.0, %v5193
        %v5195 = vmul.f32 %v5192, %v5194
        %v5196 = vadd.f32 %v5192, %v5195
        %vm5197 = vweird.f32 %v5191
        %vm5198 = vweird.f32 %v5192
        %vm5199 = vmor %vm5197, %vm5198
        %v5200 = vsel %vm5199, %v5192, %v5196
        %v5201 = vand.u32 2147483647, %v5191
        %vm5202 = vcmp.eq.f32.partialorder %v5201, 8.507059e+37
        %v5203 = vand.u32 %v5191, 2147483648
        %v5204 = vor.u32 1.1754944e-38, %v5203
        %v5205 = vsel %vm5202, %v5204, %v5200
        %v5206 = vmul.f32 %v5181, %v5205
        %v5207 = vmin.f32 %v5206, 1.0
        %v5208 = vmax.f32 %v5207, -1.0
        %v5209 = vmul.f32 %v4056, %v4056
        %v5210 = vmin.f32 16.0, %v5209
        %v5211 = vmul.f32 %v5210, 2.1237322e-06
        %v5212 = vadd.f32 %v5211, 0.00028619796
        %v5213 = vmul.f32 %v5210, %v5212
        %v5214 = vadd.f32 %v5213, 0.0036580483
        %v5215 = vmul.f32 %v5210, %v5214
        %v5216 = vadd.f32 %v5215, 0.05243302
        %v5217 = vmul.f32 %v5210, %v5216
        %v5218 = vadd.f32 %v5217, 0.18741608
        %v5219 = vmul.f32 %v5210, %v5218
        %v5220 = vadd.f32 %v5219, 1.1283791
        %v5221 = vmul.f32 %v4056, %v5220
        %v5222 = vmul.f32 %v5210, 3.8918573e-05
        %v5223 = vadd.f32 %v5222, 0.001143296
        %v5224 = vmul.f32 %v5210, %v5223
        %v5225 = vadd.f32 %v5224, 0.014752088
        %v5226 = vmul.f32 %v5210, %v5225
        %v5227 = vadd.f32 %v5226, 0.112945676
        %v5228 = vmul.f32 %v5210, %v5227
        %v5229 = vadd.f32 %v5228, 0.4994258
        %v5230 = vmul.f32 %v5210, %v5229
        %v5231 = vadd.f32 %v5230, 1.0
        %v5232 = vrcp.pop %v5231
        %v5233 = vmul.f32 %v5231, %v5232
        %v5234 = vsub.f32 1.0, %v5233
        %v5235 = vmul.f32 %v5232, %v5234
        %v5236 = vadd.f32 %v5232, %v5235
        %vm5237 = vweird.f32 %v5231
        %vm5238 = vweird.f32 %v5232
        %vm5239 = vmor %vm5237, %vm5238
        %v5240 = vsel %vm5239, %v5232, %v5236
        %v5241 = vand.u32 2147483647, %v5231
        %vm5242 = vcmp.eq.f32.partialorder %v5241, 8.507059e+37
        %v5243 = vand.u32 %v5231, 2147483648
        %v5244 = vor.u32 1.1754944e-38, %v5243
        %v5245 = vsel %vm5242, %v5244, %v5240
        %v5246 = vmul.f32 %v5221, %v5245
        %v5247 = vmin.f32 %v5246, 1.0
        %v5248 = vmax.f32 %v5247, -1.0
        %v5249 = vmul.f32 %v4057, %v4057
        %v5250 = vmin.f32 16.0, %v5249
        %v5251 = vmul.f32 %v5250, 2.1237322e-06
        %v5252 = vadd.f32 %v5251, 0.00028619796
        %v5253 = vmul.f32 %v5250, %v5252
        %v5254 = vadd.f32 %v5253, 0.0036580483
        %v5255 = vmul.f32 %v5250, %v5254
        %v5256 = vadd.f32 %v5255, 0.05243302
        %v5257 = vmul.f32 %v5250, %v5256
        %v5258 = vadd.f32 %v5257, 0.18741608
        %v5259 = vmul.f32 %v5250, %v5258
        %v5260 = vadd.f32 %v5259, 1.1283791
        %v5261 = vmul.f32 %v4057, %v5260
        %v5262 = vmul.f32 %v5250, 3.8918573e-05
        %v5263 = vadd.f32 %v5262, 0.001143296
        %v5264 = vmul.f32 %v5250, %v5263
        %v5265 = vadd.f32 %v5264, 0.014752088
        %v5266 = vmul.f32 %v5250, %v5265
        %v5267 = vadd.f32 %v5266, 0.112945676
        %v5268 = vmul.f32 %v5250, %v5267
        %v5269 = vadd.f32 %v5268, 0.4994258
        %v5270 = vmul.f32 %v5250, %v5269
        %v5271 = vadd.f32 %v5270, 1.0
        %v5272 = vrcp.pop %v5271
        %v5273 = vmul.f32 %v5271, %v5272
        %v5274 = vsub.f32 1.0, %v5273
        %v5275 = vmul.f32 %v5272, %v5274
        %v5276 = vadd.f32 %v5272, %v5275
        %vm5277 = vweird.f32 %v5271
        %vm5278 = vweird.f32 %v5272
        %vm5279 = vmor %vm5277, %vm5278
        %v5280 = vsel %vm5279, %v5272, %v5276
        %v5281 = vand.u32 2147483647, %v5271
        %vm5282 = vcmp.eq.f32.partialorder %v5281, 8.507059e+37
        %v5283 = vand.u32 %v5271, 2147483648
        %v5284 = vor.u32 1.1754944e-38, %v5283
        %v5285 = vsel %vm5282, %v5284, %v5280
        %v5286 = vmul.f32 %v5261, %v5285
        %v5287 = vmin.f32 %v5286, 1.0
        %v5288 = vmax.f32 %v5287, -1.0
        %v5289 = vmul.f32 %v4058, %v4058
        %v5290 = vmin.f32 16.0, %v5289
        %v5291 = vmul.f32 %v5290, 2.1237322e-06
        %v5292 = vadd.f32 %v5291, 0.00028619796
        %v5293 = vmul.f32 %v5290, %v5292
        %v5294 = vadd.f32 %v5293, 0.0036580483
        %v5295 = vmul.f32 %v5290, %v5294
        %v5296 = vadd.f32 %v5295, 0.05243302
        %v5297 = vmul.f32 %v5290, %v5296
        %v5298 = vadd.f32 %v5297, 0.18741608
        %v5299 = vmul.f32 %v5290, %v5298
        %v5300 = vadd.f32 %v5299, 1.1283791
        %v5301 = vmul.f32 %v4058, %v5300
        %v5302 = vmul.f32 %v5290, 3.8918573e-05
        %v5303 = vadd.f32 %v5302, 0.001143296
        %v5304 = vmul.f32 %v5290, %v5303
        %v5305 = vadd.f32 %v5304, 0.014752088
        %v5306 = vmul.f32 %v5290, %v5305
        %v5307 = vadd.f32 %v5306, 0.112945676
        %v5308 = vmul.f32 %v5290, %v5307
        %v5309 = vadd.f32 %v5308, 0.4994258
        %v5310 = vmul.f32 %v5290, %v5309
        %v5311 = vadd.f32 %v5310, 1.0
        %v5312 = vrcp.pop %v5311
        %v5313 = vmul.f32 %v5311, %v5312
        %v5314 = vsub.f32 1.0, %v5313
        %v5315 = vmul.f32 %v5312, %v5314
        %v5316 = vadd.f32 %v5312, %v5315
        %vm5317 = vweird.f32 %v5311
        %vm5318 = vweird.f32 %v5312
        %vm5319 = vmor %vm5317, %vm5318
        %v5320 = vsel %vm5319, %v5312, %v5316
        %v5321 = vand.u32 2147483647, %v5311
        %vm5322 = vcmp.eq.f32.partialorder %v5321, 8.507059e+37
        %v5323 = vand.u32 %v5311, 2147483648
        %v5324 = vor.u32 1.1754944e-38, %v5323
        %v5325 = vsel %vm5322, %v5324, %v5320
        %v5326 = vmul.f32 %v5301, %v5325
        %v5327 = vmin.f32 %v5326, 1.0
        %v5328 = vmax.f32 %v5327, -1.0
        %v5329 = vmul.f32 %v4059, %v4059
        %v5330 = vmin.f32 16.0, %v5329
        %v5331 = vmul.f32 %v5330, 2.1237322e-06
        %v5332 = vadd.f32 %v5331, 0.00028619796
        %v5333 = vmul.f32 %v5330, %v5332
        %v5334 = vadd.f32 %v5333, 0.0036580483
        %v5335 = vmul.f32 %v5330, %v5334
        %v5336 = vadd.f32 %v5335, 0.05243302
        %v5337 = vmul.f32 %v5330, %v5336
        %v5338 = vadd.f32 %v5337, 0.18741608
        %v5339 = vmul.f32 %v5330, %v5338
        %v5340 = vadd.f32 %v5339, 1.1283791
        %v5341 = vmul.f32 %v4059, %v5340
        %v5342 = vmul.f32 %v5330, 3.8918573e-05
        %v5343 = vadd.f32 %v5342, 0.001143296
        %v5344 = vmul.f32 %v5330, %v5343
        %v5345 = vadd.f32 %v5344, 0.014752088
        %v5346 = vmul.f32 %v5330, %v5345
        %v5347 = vadd.f32 %v5346, 0.112945676
        %v5348 = vmul.f32 %v5330, %v5347
        %v5349 = vadd.f32 %v5348, 0.4994258
        %v5350 = vmul.f32 %v5330, %v5349
        %v5351 = vadd.f32 %v5350, 1.0
        %v5352 = vrcp.pop %v5351
        %v5353 = vmul.f32 %v5351, %v5352
        %v5354 = vsub.f32 1.0, %v5353
        %v5355 = vmul.f32 %v5352, %v5354
        %v5356 = vadd.f32 %v5352, %v5355
        %vm5357 = vweird.f32 %v5351
        %vm5358 = vweird.f32 %v5352
        %vm5359 = vmor %vm5357, %vm5358
        %v5360 = vsel %vm5359, %v5352, %v5356
        %v5361 = vand.u32 2147483647, %v5351
        %vm5362 = vcmp.eq.f32.partialorder %v5361, 8.507059e+37
        %v5363 = vand.u32 %v5351, 2147483648
        %v5364 = vor.u32 1.1754944e-38, %v5363
        %v5365 = vsel %vm5362, %v5364, %v5360
        %v5366 = vmul.f32 %v5341, %v5365
        %v5367 = vmin.f32 %v5366, 1.0
        %v5368 = vmax.f32 %v5367, -1.0
        %v5369 = vmul.f32 %v4060, %v4060
        %v5370 = vmin.f32 16.0, %v5369
        %v5371 = vmul.f32 %v5370, 2.1237322e-06
        %v5372 = vadd.f32 %v5371, 0.00028619796
        %v5373 = vmul.f32 %v5370, %v5372
        %v5374 = vadd.f32 %v5373, 0.0036580483
        %v5375 = vmul.f32 %v5370, %v5374
        %v5376 = vadd.f32 %v5375, 0.05243302
        %v5377 = vmul.f32 %v5370, %v5376
        %v5378 = vadd.f32 %v5377, 0.18741608
        %v5379 = vmul.f32 %v5370, %v5378
        %v5380 = vadd.f32 %v5379, 1.1283791
        %v5381 = vmul.f32 %v4060, %v5380
        %v5382 = vmul.f32 %v5370, 3.8918573e-05
        %v5383 = vadd.f32 %v5382, 0.001143296
        %v5384 = vmul.f32 %v5370, %v5383
        %v5385 = vadd.f32 %v5384, 0.014752088
        %v5386 = vmul.f32 %v5370, %v5385
        %v5387 = vadd.f32 %v5386, 0.112945676
        %v5388 = vmul.f32 %v5370, %v5387
        %v5389 = vadd.f32 %v5388, 0.4994258
        %v5390 = vmul.f32 %v5370, %v5389
        %v5391 = vadd.f32 %v5390, 1.0
        %v5392 = vrcp.pop %v5391
        %v5393 = vmul.f32 %v5391, %v5392
        %v5394 = vsub.f32 1.0, %v5393
        %v5395 = vmul.f32 %v5392, %v5394
        %v5396 = vadd.f32 %v5392, %v5395
        %vm5397 = vweird.f32 %v5391
        %vm5398 = vweird.f32 %v5392
        %vm5399 = vmor %vm5397, %vm5398
        %v5400 = vsel %vm5399, %v5392, %v5396
        %v5401 = vand.u32 2147483647, %v5391
        %vm5402 = vcmp.eq.f32.partialorder %v5401, 8.507059e+37
        %v5403 = vand.u32 %v5391, 2147483648
        %v5404 = vor.u32 1.1754944e-38, %v5403
        %v5405 = vsel %vm5402, %v5404, %v5400
        %v5406 = vmul.f32 %v5381, %v5405
        %v5407 = vmin.f32 %v5406, 1.0
        %v5408 = vmax.f32 %v5407, -1.0
        %v5409 = vmul.f32 %v4061, %v4061
        %v5410 = vmin.f32 16.0, %v5409
        %v5411 = vmul.f32 %v5410, 2.1237322e-06
        %v5412 = vadd.f32 %v5411, 0.00028619796
        %v5413 = vmul.f32 %v5410, %v5412
        %v5414 = vadd.f32 %v5413, 0.0036580483
        %v5415 = vmul.f32 %v5410, %v5414
        %v5416 = vadd.f32 %v5415, 0.05243302
        %v5417 = vmul.f32 %v5410, %v5416
        %v5418 = vadd.f32 %v5417, 0.18741608
        %v5419 = vmul.f32 %v5410, %v5418
        %v5420 = vadd.f32 %v5419, 1.1283791
        %v5421 = vmul.f32 %v4061, %v5420
        %v5422 = vmul.f32 %v5410, 3.8918573e-05
        %v5423 = vadd.f32 %v5422, 0.001143296
        %v5424 = vmul.f32 %v5410, %v5423
        %v5425 = vadd.f32 %v5424, 0.014752088
        %v5426 = vmul.f32 %v5410, %v5425
        %v5427 = vadd.f32 %v5426, 0.112945676
        %v5428 = vmul.f32 %v5410, %v5427
        %v5429 = vadd.f32 %v5428, 0.4994258
        %v5430 = vmul.f32 %v5410, %v5429
        %v5431 = vadd.f32 %v5430, 1.0
        %v5432 = vrcp.pop %v5431
        %v5433 = vmul.f32 %v5431, %v5432
        %v5434 = vsub.f32 1.0, %v5433
        %v5435 = vmul.f32 %v5432, %v5434
        %v5436 = vadd.f32 %v5432, %v5435
        %vm5437 = vweird.f32 %v5431
        %vm5438 = vweird.f32 %v5432
        %vm5439 = vmor %vm5437, %vm5438
        %v5440 = vsel %vm5439, %v5432, %v5436
        %v5441 = vand.u32 2147483647, %v5431
        %vm5442 = vcmp.eq.f32.partialorder %v5441, 8.507059e+37
        %v5443 = vand.u32 %v5431, 2147483648
        %v5444 = vor.u32 1.1754944e-38, %v5443
        %v5445 = vsel %vm5442, %v5444, %v5440
        %v5446 = vmul.f32 %v5421, %v5445
        %v5447 = vmin.f32 %v5446, 1.0
        %v5448 = vmax.f32 %v5447, -1.0
        %v5449 = vmul.f32 %v4062, %v4062
        %v5450 = vmin.f32 16.0, %v5449
        %v5451 = vmul.f32 %v5450, 2.1237322e-06
        %v5452 = vadd.f32 %v5451, 0.00028619796
        %v5453 = vmul.f32 %v5450, %v5452
        %v5454 = vadd.f32 %v5453, 0.0036580483
        %v5455 = vmul.f32 %v5450, %v5454
        %v5456 = vadd.f32 %v5455, 0.05243302
        %v5457 = vmul.f32 %v5450, %v5456
        %v5458 = vadd.f32 %v5457, 0.18741608
        %v5459 = vmul.f32 %v5450, %v5458
        %v5460 = vadd.f32 %v5459, 1.1283791
        %v5461 = vmul.f32 %v4062, %v5460
        %v5462 = vmul.f32 %v5450, 3.8918573e-05
        %v5463 = vadd.f32 %v5462, 0.001143296
        %v5464 = vmul.f32 %v5450, %v5463
        %v5465 = vadd.f32 %v5464, 0.014752088
        %v5466 = vmul.f32 %v5450, %v5465
        %v5467 = vadd.f32 %v5466, 0.112945676
        %v5468 = vmul.f32 %v5450, %v5467
        %v5469 = vadd.f32 %v5468, 0.4994258
        %v5470 = vmul.f32 %v5450, %v5469
        %v5471 = vadd.f32 %v5470, 1.0
        %v5472 = vrcp.pop %v5471
        %v5473 = vmul.f32 %v5471, %v5472
        %v5474 = vsub.f32 1.0, %v5473
        %v5475 = vmul.f32 %v5472, %v5474
        %v5476 = vadd.f32 %v5472, %v5475
        %vm5477 = vweird.f32 %v5471
        %vm5478 = vweird.f32 %v5472
        %vm5479 = vmor %vm5477, %vm5478
        %v5480 = vsel %vm5479, %v5472, %v5476
        %v5481 = vand.u32 2147483647, %v5471
        %vm5482 = vcmp.eq.f32.partialorder %v5481, 8.507059e+37
        %v5483 = vand.u32 %v5471, 2147483648
        %v5484 = vor.u32 1.1754944e-38, %v5483
        %v5485 = vsel %vm5482, %v5484, %v5480
        %v5486 = vmul.f32 %v5461, %v5485
        %v5487 = vmin.f32 %v5486, 1.0
        %v5488 = vmax.f32 %v5487, -1.0
        %v5489 = vmul.f32 %v4063, %v4063
        %v5490 = vmin.f32 16.0, %v5489
        %v5491 = vmul.f32 %v5490, 2.1237322e-06
        %v5492 = vadd.f32 %v5491, 0.00028619796
        %v5493 = vmul.f32 %v5490, %v5492
        %v5494 = vadd.f32 %v5493, 0.0036580483
        %v5495 = vmul.f32 %v5490, %v5494
        %v5496 = vadd.f32 %v5495, 0.05243302
        %v5497 = vmul.f32 %v5490, %v5496
        %v5498 = vadd.f32 %v5497, 0.18741608
        %v5499 = vmul.f32 %v5490, %v5498
        %v5500 = vadd.f32 %v5499, 1.1283791
        %v5501 = vmul.f32 %v4063, %v5500
        %v5502 = vmul.f32 %v5490, 3.8918573e-05
        %v5503 = vadd.f32 %v5502, 0.001143296
        %v5504 = vmul.f32 %v5490, %v5503
        %v5505 = vadd.f32 %v5504, 0.014752088
        %v5506 = vmul.f32 %v5490, %v5505
        %v5507 = vadd.f32 %v5506, 0.112945676
        %v5508 = vmul.f32 %v5490, %v5507
        %v5509 = vadd.f32 %v5508, 0.4994258
        %v5510 = vmul.f32 %v5490, %v5509
        %v5511 = vadd.f32 %v5510, 1.0
        %v5512 = vrcp.pop %v5511
        %v5513 = vmul.f32 %v5511, %v5512
        %v5514 = vsub.f32 1.0, %v5513
        %v5515 = vmul.f32 %v5512, %v5514
        %v5516 = vadd.f32 %v5512, %v5515
        %vm5517 = vweird.f32 %v5511
        %vm5518 = vweird.f32 %v5512
        %vm5519 = vmor %vm5517, %vm5518
        %v5520 = vsel %vm5519, %v5512, %v5516
        %v5521 = vand.u32 2147483647, %v5511
        %vm5522 = vcmp.eq.f32.partialorder %v5521, 8.507059e+37
        %v5523 = vand.u32 %v5511, 2147483648
        %v5524 = vor.u32 1.1754944e-38, %v5523
        %v5525 = vsel %vm5522, %v5524, %v5520
        %v5526 = vmul.f32 %v5501, %v5525
        %v5527 = vmin.f32 %v5526, 1.0
        %v5528 = vmax.f32 %v5527, -1.0
        %v5529 = vmul.f32 %v4064, %v4064
        %v5530 = vmin.f32 16.0, %v5529
        %v5531 = vmul.f32 %v5530, 2.1237322e-06
        %v5532 = vadd.f32 %v5531, 0.00028619796
        %v5533 = vmul.f32 %v5530, %v5532
        %v5534 = vadd.f32 %v5533, 0.0036580483
        %v5535 = vmul.f32 %v5530, %v5534
        %v5536 = vadd.f32 %v5535, 0.05243302
        %v5537 = vmul.f32 %v5530, %v5536
        %v5538 = vadd.f32 %v5537, 0.18741608
        %v5539 = vmul.f32 %v5530, %v5538
        %v5540 = vadd.f32 %v5539, 1.1283791
        %v5541 = vmul.f32 %v4064, %v5540
        %v5542 = vmul.f32 %v5530, 3.8918573e-05
        %v5543 = vadd.f32 %v5542, 0.001143296
        %v5544 = vmul.f32 %v5530, %v5543
        %v5545 = vadd.f32 %v5544, 0.014752088
        %v5546 = vmul.f32 %v5530, %v5545
        %v5547 = vadd.f32 %v5546, 0.112945676
        %v5548 = vmul.f32 %v5530, %v5547
        %v5549 = vadd.f32 %v5548, 0.4994258
        %v5550 = vmul.f32 %v5530, %v5549
        %v5551 = vadd.f32 %v5550, 1.0
        %v5552 = vrcp.pop %v5551
        %v5553 = vmul.f32 %v5551, %v5552
        %v5554 = vsub.f32 1.0, %v5553
        %v5555 = vmul.f32 %v5552, %v5554
        %v5556 = vadd.f32 %v5552, %v5555
        %vm5557 = vweird.f32 %v5551
        %vm5558 = vweird.f32 %v5552
        %vm5559 = vmor %vm5557, %vm5558
        %v5560 = vsel %vm5559, %v5552, %v5556
        %v5561 = vand.u32 2147483647, %v5551
        %vm5562 = vcmp.eq.f32.partialorder %v5561, 8.507059e+37
        %v5563 = vand.u32 %v5551, 2147483648
        %v5564 = vor.u32 1.1754944e-38, %v5563
        %v5565 = vsel %vm5562, %v5564, %v5560
        %v5566 = vmul.f32 %v5541, %v5565
        %v5567 = vmin.f32 %v5566, 1.0
        %v5568 = vmax.f32 %v5567, -1.0
        %v5569 = vmul.f32 %v4065, %v4065
        %v5570 = vmin.f32 16.0, %v5569
        %v5571 = vmul.f32 %v5570, 2.1237322e-06
        %v5572 = vadd.f32 %v5571, 0.00028619796
        %v5573 = vmul.f32 %v5570, %v5572
        %v5574 = vadd.f32 %v5573, 0.0036580483
        %v5575 = vmul.f32 %v5570, %v5574
        %v5576 = vadd.f32 %v5575, 0.05243302
        %v5577 = vmul.f32 %v5570, %v5576
        %v5578 = vadd.f32 %v5577, 0.18741608
        %v5579 = vmul.f32 %v5570, %v5578
        %v5580 = vadd.f32 %v5579, 1.1283791
        %v5581 = vmul.f32 %v4065, %v5580
        %v5582 = vmul.f32 %v5570, 3.8918573e-05
        %v5583 = vadd.f32 %v5582, 0.001143296
        %v5584 = vmul.f32 %v5570, %v5583
        %v5585 = vadd.f32 %v5584, 0.014752088
        %v5586 = vmul.f32 %v5570, %v5585
        %v5587 = vadd.f32 %v5586, 0.112945676
        %v5588 = vmul.f32 %v5570, %v5587
        %v5589 = vadd.f32 %v5588, 0.4994258
        %v5590 = vmul.f32 %v5570, %v5589
        %v5591 = vadd.f32 %v5590, 1.0
        %v5592 = vrcp.pop %v5591
        %v5593 = vmul.f32 %v5591, %v5592
        %v5594 = vsub.f32 1.0, %v5593
        %v5595 = vmul.f32 %v5592, %v5594
        %v5596 = vadd.f32 %v5592, %v5595
        %vm5597 = vweird.f32 %v5591
        %vm5598 = vweird.f32 %v5592
        %vm5599 = vmor %vm5597, %vm5598
        %v5600 = vsel %vm5599, %v5592, %v5596
        %v5601 = vand.u32 2147483647, %v5591
        %vm5602 = vcmp.eq.f32.partialorder %v5601, 8.507059e+37
        %v5603 = vand.u32 %v5591, 2147483648
        %v5604 = vor.u32 1.1754944e-38, %v5603
        %v5605 = vsel %vm5602, %v5604, %v5600
        %v5606 = vmul.f32 %v5581, %v5605
        %v5607 = vmin.f32 %v5606, 1.0
        %v5608 = vmax.f32 %v5607, -1.0
        %v5609 = vmul.f32 %v4066, %v4066
        %v5610 = vmin.f32 16.0, %v5609
        %v5611 = vmul.f32 %v5610, 2.1237322e-06
        %v5612 = vadd.f32 %v5611, 0.00028619796
        %v5613 = vmul.f32 %v5610, %v5612
        %v5614 = vadd.f32 %v5613, 0.0036580483
        %v5615 = vmul.f32 %v5610, %v5614
        %v5616 = vadd.f32 %v5615, 0.05243302
        %v5617 = vmul.f32 %v5610, %v5616
        %v5618 = vadd.f32 %v5617, 0.18741608
        %v5619 = vmul.f32 %v5610, %v5618
        %v5620 = vadd.f32 %v5619, 1.1283791
        %v5621 = vmul.f32 %v4066, %v5620
        %v5622 = vmul.f32 %v5610, 3.8918573e-05
        %v5623 = vadd.f32 %v5622, 0.001143296
        %v5624 = vmul.f32 %v5610, %v5623
        %v5625 = vadd.f32 %v5624, 0.014752088
        %v5626 = vmul.f32 %v5610, %v5625
        %v5627 = vadd.f32 %v5626, 0.112945676
        %v5628 = vmul.f32 %v5610, %v5627
        %v5629 = vadd.f32 %v5628, 0.4994258
        %v5630 = vmul.f32 %v5610, %v5629
        %v5631 = vadd.f32 %v5630, 1.0
        %v5632 = vrcp.pop %v5631
        %v5633 = vmul.f32 %v5631, %v5632
        %v5634 = vsub.f32 1.0, %v5633
        %v5635 = vmul.f32 %v5632, %v5634
        %v5636 = vadd.f32 %v5632, %v5635
        %vm5637 = vweird.f32 %v5631
        %vm5638 = vweird.f32 %v5632
        %vm5639 = vmor %vm5637, %vm5638
        %v5640 = vsel %vm5639, %v5632, %v5636
        %v5641 = vand.u32 2147483647, %v5631
        %vm5642 = vcmp.eq.f32.partialorder %v5641, 8.507059e+37
        %v5643 = vand.u32 %v5631, 2147483648
        %v5644 = vor.u32 1.1754944e-38, %v5643
        %v5645 = vsel %vm5642, %v5644, %v5640
        %v5646 = vmul.f32 %v5621, %v5645
        %v5647 = vmin.f32 %v5646, 1.0
        %v5648 = vmax.f32 %v5647, -1.0
        %v5649 = vmul.f32 %v4067, %v4067
        %v5650 = vmin.f32 16.0, %v5649
        %v5651 = vmul.f32 %v5650, 2.1237322e-06
        %v5652 = vadd.f32 %v5651, 0.00028619796
        %v5653 = vmul.f32 %v5650, %v5652
        %v5654 = vadd.f32 %v5653, 0.0036580483
        %v5655 = vmul.f32 %v5650, %v5654
        %v5656 = vadd.f32 %v5655, 0.05243302
        %v5657 = vmul.f32 %v5650, %v5656
        %v5658 = vadd.f32 %v5657, 0.18741608
        %v5659 = vmul.f32 %v5650, %v5658
        %v5660 = vadd.f32 %v5659, 1.1283791
        %v5661 = vmul.f32 %v4067, %v5660
        %v5662 = vmul.f32 %v5650, 3.8918573e-05
        %v5663 = vadd.f32 %v5662, 0.001143296
        %v5664 = vmul.f32 %v5650, %v5663
        %v5665 = vadd.f32 %v5664, 0.014752088
        %v5666 = vmul.f32 %v5650, %v5665
        %v5667 = vadd.f32 %v5666, 0.112945676
        %v5668 = vmul.f32 %v5650, %v5667
        %v5669 = vadd.f32 %v5668, 0.4994258
        %v5670 = vmul.f32 %v5650, %v5669
        %v5671 = vadd.f32 %v5670, 1.0
        %v5672 = vrcp.pop %v5671
        %v5673 = vmul.f32 %v5671, %v5672
        %v5674 = vsub.f32 1.0, %v5673
        %v5675 = vmul.f32 %v5672, %v5674
        %v5676 = vadd.f32 %v5672, %v5675
        %vm5677 = vweird.f32 %v5671
        %vm5678 = vweird.f32 %v5672
        %vm5679 = vmor %vm5677, %vm5678
        %v5680 = vsel %vm5679, %v5672, %v5676
        %v5681 = vand.u32 2147483647, %v5671
        %vm5682 = vcmp.eq.f32.partialorder %v5681, 8.507059e+37
        %v5683 = vand.u32 %v5671, 2147483648
        %v5684 = vor.u32 1.1754944e-38, %v5683
        %v5685 = vsel %vm5682, %v5684, %v5680
        %v5686 = vmul.f32 %v5661, %v5685
        %v5687 = vmin.f32 %v5686, 1.0
        %v5688 = vmax.f32 %v5687, -1.0
        %v5689 = vmul.f32 %v4068, %v4068
        %v5690 = vmin.f32 16.0, %v5689
        %v5691 = vmul.f32 %v5690, 2.1237322e-06
        %v5692 = vadd.f32 %v5691, 0.00028619796
        %v5693 = vmul.f32 %v5690, %v5692
        %v5694 = vadd.f32 %v5693, 0.0036580483
        %v5695 = vmul.f32 %v5690, %v5694
        %v5696 = vadd.f32 %v5695, 0.05243302
        %v5697 = vmul.f32 %v5690, %v5696
        %v5698 = vadd.f32 %v5697, 0.18741608
        %v5699 = vmul.f32 %v5690, %v5698
        %v5700 = vadd.f32 %v5699, 1.1283791
        %v5701 = vmul.f32 %v4068, %v5700
        %v5702 = vmul.f32 %v5690, 3.8918573e-05
        %v5703 = vadd.f32 %v5702, 0.001143296
        %v5704 = vmul.f32 %v5690, %v5703
        %v5705 = vadd.f32 %v5704, 0.014752088
        %v5706 = vmul.f32 %v5690, %v5705
        %v5707 = vadd.f32 %v5706, 0.112945676
        %v5708 = vmul.f32 %v5690, %v5707
        %v5709 = vadd.f32 %v5708, 0.4994258
        %v5710 = vmul.f32 %v5690, %v5709
        %v5711 = vadd.f32 %v5710, 1.0
        %v5712 = vrcp.pop %v5711
        %v5713 = vmul.f32 %v5711, %v5712
        %v5714 = vsub.f32 1.0, %v5713
        %v5715 = vmul.f32 %v5712, %v5714
        %v5716 = vadd.f32 %v5712, %v5715
        %vm5717 = vweird.f32 %v5711
        %vm5718 = vweird.f32 %v5712
        %vm5719 = vmor %vm5717, %vm5718
        %v5720 = vsel %vm5719, %v5712, %v5716
        %v5721 = vand.u32 2147483647, %v5711
        %vm5722 = vcmp.eq.f32.partialorder %v5721, 8.507059e+37
        %v5723 = vand.u32 %v5711, 2147483648
        %v5724 = vor.u32 1.1754944e-38, %v5723
        %v5725 = vsel %vm5722, %v5724, %v5720
        %v5726 = vmul.f32 %v5701, %v5725
        %v5727 = vmin.f32 %v5726, 1.0
        %v5728 = vmax.f32 %v5727, -1.0
        %v5729 = vmul.f32 %v4069, %v4069
        %v5730 = vmin.f32 16.0, %v5729
        %v5731 = vmul.f32 %v5730, 2.1237322e-06
        %v5732 = vadd.f32 %v5731, 0.00028619796
        %v5733 = vmul.f32 %v5730, %v5732
        %v5734 = vadd.f32 %v5733, 0.0036580483
        %v5735 = vmul.f32 %v5730, %v5734
        %v5736 = vadd.f32 %v5735, 0.05243302
        %v5737 = vmul.f32 %v5730, %v5736
        %v5738 = vadd.f32 %v5737, 0.18741608
        %v5739 = vmul.f32 %v5730, %v5738
        %v5740 = vadd.f32 %v5739, 1.1283791
        %v5741 = vmul.f32 %v4069, %v5740
        %v5742 = vmul.f32 %v5730, 3.8918573e-05
        %v5743 = vadd.f32 %v5742, 0.001143296
        %v5744 = vmul.f32 %v5730, %v5743
        %v5745 = vadd.f32 %v5744, 0.014752088
        %v5746 = vmul.f32 %v5730, %v5745
        %v5747 = vadd.f32 %v5746, 0.112945676
        %v5748 = vmul.f32 %v5730, %v5747
        %v5749 = vadd.f32 %v5748, 0.4994258
        %v5750 = vmul.f32 %v5730, %v5749
        %v5751 = vadd.f32 %v5750, 1.0
        %v5752 = vrcp.pop %v5751
        %v5753 = vmul.f32 %v5751, %v5752
        %v5754 = vsub.f32 1.0, %v5753
        %v5755 = vmul.f32 %v5752, %v5754
        %v5756 = vadd.f32 %v5752, %v5755
        %vm5757 = vweird.f32 %v5751
        %vm5758 = vweird.f32 %v5752
        %vm5759 = vmor %vm5757, %vm5758
        %v5760 = vsel %vm5759, %v5752, %v5756
        %v5761 = vand.u32 2147483647, %v5751
        %vm5762 = vcmp.eq.f32.partialorder %v5761, 8.507059e+37
        %v5763 = vand.u32 %v5751, 2147483648
        %v5764 = vor.u32 1.1754944e-38, %v5763
        %v5765 = vsel %vm5762, %v5764, %v5760
        %v5766 = vmul.f32 %v5741, %v5765
        %v5767 = vmin.f32 %v5766, 1.0
        %v5768 = vmax.f32 %v5767, -1.0
        %v5769 = vmul.f32 %v4070, %v4070
        %v5770 = vmin.f32 16.0, %v5769
        %v5771 = vmul.f32 %v5770, 2.1237322e-06
        %v5772 = vadd.f32 %v5771, 0.00028619796
        %v5773 = vmul.f32 %v5770, %v5772
        %v5774 = vadd.f32 %v5773, 0.0036580483
        %v5775 = vmul.f32 %v5770, %v5774
        %v5776 = vadd.f32 %v5775, 0.05243302
        %v5777 = vmul.f32 %v5770, %v5776
        %v5778 = vadd.f32 %v5777, 0.18741608
        %v5779 = vmul.f32 %v5770, %v5778
        %v5780 = vadd.f32 %v5779, 1.1283791
        %v5781 = vmul.f32 %v4070, %v5780
        %v5782 = vmul.f32 %v5770, 3.8918573e-05
        %v5783 = vadd.f32 %v5782, 0.001143296
        %v5784 = vmul.f32 %v5770, %v5783
        %v5785 = vadd.f32 %v5784, 0.014752088
        %v5786 = vmul.f32 %v5770, %v5785
        %v5787 = vadd.f32 %v5786, 0.112945676
        %v5788 = vmul.f32 %v5770, %v5787
        %v5789 = vadd.f32 %v5788, 0.4994258
        %v5790 = vmul.f32 %v5770, %v5789
        %v5791 = vadd.f32 %v5790, 1.0
        %v5792 = vrcp.pop %v5791
        %v5793 = vmul.f32 %v5791, %v5792
        %v5794 = vsub.f32 1.0, %v5793
        %v5795 = vmul.f32 %v5792, %v5794
        %v5796 = vadd.f32 %v5792, %v5795
        %vm5797 = vweird.f32 %v5791
        %vm5798 = vweird.f32 %v5792
        %vm5799 = vmor %vm5797, %vm5798
        %v5800 = vsel %vm5799, %v5792, %v5796
        %v5801 = vand.u32 2147483647, %v5791
        %vm5802 = vcmp.eq.f32.partialorder %v5801, 8.507059e+37
        %v5803 = vand.u32 %v5791, 2147483648
        %v5804 = vor.u32 1.1754944e-38, %v5803
        %v5805 = vsel %vm5802, %v5804, %v5800
        %v5806 = vmul.f32 %v5781, %v5805
        %v5807 = vmin.f32 %v5806, 1.0
        %v5808 = vmax.f32 %v5807, -1.0
        %v5809 = vmul.f32 %v4071, %v4071
        %v5810 = vmin.f32 16.0, %v5809
        %v5811 = vmul.f32 %v5810, 2.1237322e-06
        %v5812 = vadd.f32 %v5811, 0.00028619796
        %v5813 = vmul.f32 %v5810, %v5812
        %v5814 = vadd.f32 %v5813, 0.0036580483
        %v5815 = vmul.f32 %v5810, %v5814
        %v5816 = vadd.f32 %v5815, 0.05243302
        %v5817 = vmul.f32 %v5810, %v5816
        %v5818 = vadd.f32 %v5817, 0.18741608
        %v5819 = vmul.f32 %v5810, %v5818
        %v5820 = vadd.f32 %v5819, 1.1283791
        %v5821 = vmul.f32 %v4071, %v5820
        %v5822 = vmul.f32 %v5810, 3.8918573e-05
        %v5823 = vadd.f32 %v5822, 0.001143296
        %v5824 = vmul.f32 %v5810, %v5823
        %v5825 = vadd.f32 %v5824, 0.014752088
        %v5826 = vmul.f32 %v5810, %v5825
        %v5827 = vadd.f32 %v5826, 0.112945676
        %v5828 = vmul.f32 %v5810, %v5827
        %v5829 = vadd.f32 %v5828, 0.4994258
        %v5830 = vmul.f32 %v5810, %v5829
        %v5831 = vadd.f32 %v5830, 1.0
        %v5832 = vrcp.pop %v5831
        %v5833 = vmul.f32 %v5831, %v5832
        %v5834 = vsub.f32 1.0, %v5833
        %v5835 = vmul.f32 %v5832, %v5834
        %v5836 = vadd.f32 %v5832, %v5835
        %vm5837 = vweird.f32 %v5831
        %vm5838 = vweird.f32 %v5832
        %vm5839 = vmor %vm5837, %vm5838
        %v5840 = vsel %vm5839, %v5832, %v5836
        %v5841 = vand.u32 2147483647, %v5831
        %vm5842 = vcmp.eq.f32.partialorder %v5841, 8.507059e+37
        %v5843 = vand.u32 %v5831, 2147483648
        %v5844 = vor.u32 1.1754944e-38, %v5843
        %v5845 = vsel %vm5842, %v5844, %v5840
        %v5846 = vmul.f32 %v5821, %v5845
        %v5847 = vmin.f32 %v5846, 1.0
        %v5848 = vmax.f32 %v5847, -1.0
        %v5849 = vmul.f32 %v4072, %v4072
        %v5850 = vmin.f32 16.0, %v5849
        %v5851 = vmul.f32 %v5850, 2.1237322e-06
        %v5852 = vadd.f32 %v5851, 0.00028619796
        %v5853 = vmul.f32 %v5850, %v5852
        %v5854 = vadd.f32 %v5853, 0.0036580483
        %v5855 = vmul.f32 %v5850, %v5854
        %v5856 = vadd.f32 %v5855, 0.05243302
        %v5857 = vmul.f32 %v5850, %v5856
        %v5858 = vadd.f32 %v5857, 0.18741608
        %v5859 = vmul.f32 %v5850, %v5858
        %v5860 = vadd.f32 %v5859, 1.1283791
        %v5861 = vmul.f32 %v4072, %v5860
        %v5862 = vmul.f32 %v5850, 3.8918573e-05
        %v5863 = vadd.f32 %v5862, 0.001143296
        %v5864 = vmul.f32 %v5850, %v5863
        %v5865 = vadd.f32 %v5864, 0.014752088
        %v5866 = vmul.f32 %v5850, %v5865
        %v5867 = vadd.f32 %v5866, 0.112945676
        %v5868 = vmul.f32 %v5850, %v5867
        %v5869 = vadd.f32 %v5868, 0.4994258
        %v5870 = vmul.f32 %v5850, %v5869
        %v5871 = vadd.f32 %v5870, 1.0
        %v5872 = vrcp.pop %v5871
        %v5873 = vmul.f32 %v5871, %v5872
        %v5874 = vsub.f32 1.0, %v5873
        %v5875 = vmul.f32 %v5872, %v5874
        %v5876 = vadd.f32 %v5872, %v5875
        %vm5877 = vweird.f32 %v5871
        %vm5878 = vweird.f32 %v5872
        %vm5879 = vmor %vm5877, %vm5878
        %v5880 = vsel %vm5879, %v5872, %v5876
        %v5881 = vand.u32 2147483647, %v5871
        %vm5882 = vcmp.eq.f32.partialorder %v5881, 8.507059e+37
        %v5883 = vand.u32 %v5871, 2147483648
        %v5884 = vor.u32 1.1754944e-38, %v5883
        %v5885 = vsel %vm5882, %v5884, %v5880
        %v5886 = vmul.f32 %v5861, %v5885
        %v5887 = vmin.f32 %v5886, 1.0
        %v5888 = vmax.f32 %v5887, -1.0
        %v5889 = vmul.f32 %v4073, %v4073
        %v5890 = vmin.f32 16.0, %v5889
        %v5891 = vmul.f32 %v5890, 2.1237322e-06
        %v5892 = vadd.f32 %v5891, 0.00028619796
        %v5893 = vmul.f32 %v5890, %v5892
        %v5894 = vadd.f32 %v5893, 0.0036580483
        %v5895 = vmul.f32 %v5890, %v5894
        %v5896 = vadd.f32 %v5895, 0.05243302
        %v5897 = vmul.f32 %v5890, %v5896
        %v5898 = vadd.f32 %v5897, 0.18741608
        %v5899 = vmul.f32 %v5890, %v5898
        %v5900 = vadd.f32 %v5899, 1.1283791
        %v5901 = vmul.f32 %v4073, %v5900
        %v5902 = vmul.f32 %v5890, 3.8918573e-05
        %v5903 = vadd.f32 %v5902, 0.001143296
        %v5904 = vmul.f32 %v5890, %v5903
        %v5905 = vadd.f32 %v5904, 0.014752088
        %v5906 = vmul.f32 %v5890, %v5905
        %v5907 = vadd.f32 %v5906, 0.112945676
        %v5908 = vmul.f32 %v5890, %v5907
        %v5909 = vadd.f32 %v5908, 0.4994258
        %v5910 = vmul.f32 %v5890, %v5909
        %v5911 = vadd.f32 %v5910, 1.0
        %v5912 = vrcp.pop %v5911
        %v5913 = vmul.f32 %v5911, %v5912
        %v5914 = vsub.f32 1.0, %v5913
        %v5915 = vmul.f32 %v5912, %v5914
        %v5916 = vadd.f32 %v5912, %v5915
        %vm5917 = vweird.f32 %v5911
        %vm5918 = vweird.f32 %v5912
        %vm5919 = vmor %vm5917, %vm5918
        %v5920 = vsel %vm5919, %v5912, %v5916
        %v5921 = vand.u32 2147483647, %v5911
        %vm5922 = vcmp.eq.f32.partialorder %v5921, 8.507059e+37
        %v5923 = vand.u32 %v5911, 2147483648
        %v5924 = vor.u32 1.1754944e-38, %v5923
        %v5925 = vsel %vm5922, %v5924, %v5920
        %v5926 = vmul.f32 %v5901, %v5925
        %v5927 = vmin.f32 %v5926, 1.0
        %v5928 = vmax.f32 %v5927, -1.0
        %v5929 = vmul.f32 %v4074, %v4074
        %v5930 = vmin.f32 16.0, %v5929
        %v5931 = vmul.f32 %v5930, 2.1237322e-06
        %v5932 = vadd.f32 %v5931, 0.00028619796
        %v5933 = vmul.f32 %v5930, %v5932
        %v5934 = vadd.f32 %v5933, 0.0036580483
        %v5935 = vmul.f32 %v5930, %v5934
        %v5936 = vadd.f32 %v5935, 0.05243302
        %v5937 = vmul.f32 %v5930, %v5936
        %v5938 = vadd.f32 %v5937, 0.18741608
        %v5939 = vmul.f32 %v5930, %v5938
        %v5940 = vadd.f32 %v5939, 1.1283791
        %v5941 = vmul.f32 %v4074, %v5940
        %v5942 = vmul.f32 %v5930, 3.8918573e-05
        %v5943 = vadd.f32 %v5942, 0.001143296
        %v5944 = vmul.f32 %v5930, %v5943
        %v5945 = vadd.f32 %v5944, 0.014752088
        %v5946 = vmul.f32 %v5930, %v5945
        %v5947 = vadd.f32 %v5946, 0.112945676
        %v5948 = vmul.f32 %v5930, %v5947
        %v5949 = vadd.f32 %v5948, 0.4994258
        %v5950 = vmul.f32 %v5930, %v5949
        %v5951 = vadd.f32 %v5950, 1.0
        %v5952 = vrcp.pop %v5951
        %v5953 = vmul.f32 %v5951, %v5952
        %v5954 = vsub.f32 1.0, %v5953
        %v5955 = vmul.f32 %v5952, %v5954
        %v5956 = vadd.f32 %v5952, %v5955
        %vm5957 = vweird.f32 %v5951
        %vm5958 = vweird.f32 %v5952
        %vm5959 = vmor %vm5957, %vm5958
        %v5960 = vsel %vm5959, %v5952, %v5956
        %v5961 = vand.u32 2147483647, %v5951
        %vm5962 = vcmp.eq.f32.partialorder %v5961, 8.507059e+37
        %v5963 = vand.u32 %v5951, 2147483648
        %v5964 = vor.u32 1.1754944e-38, %v5963
        %v5965 = vsel %vm5962, %v5964, %v5960
        %v5966 = vmul.f32 %v5941, %v5965
        %v5967 = vmin.f32 %v5966, 1.0
        %v5968 = vmax.f32 %v5967, -1.0
        %v5969 = vmul.f32 %v4075, %v4075
        %v5970 = vmin.f32 16.0, %v5969
        %v5971 = vmul.f32 %v5970, 2.1237322e-06
        %v5972 = vadd.f32 %v5971, 0.00028619796
        %v5973 = vmul.f32 %v5970, %v5972
        %v5974 = vadd.f32 %v5973, 0.0036580483
        %v5975 = vmul.f32 %v5970, %v5974
        %v5976 = vadd.f32 %v5975, 0.05243302
        %v5977 = vmul.f32 %v5970, %v5976
        %v5978 = vadd.f32 %v5977, 0.18741608
        %v5979 = vmul.f32 %v5970, %v5978
        %v5980 = vadd.f32 %v5979, 1.1283791
        %v5981 = vmul.f32 %v4075, %v5980
        %v5982 = vmul.f32 %v5970, 3.8918573e-05
        %v5983 = vadd.f32 %v5982, 0.001143296
        %v5984 = vmul.f32 %v5970, %v5983
        %v5985 = vadd.f32 %v5984, 0.014752088
        %v5986 = vmul.f32 %v5970, %v5985
        %v5987 = vadd.f32 %v5986, 0.112945676
        %v5988 = vmul.f32 %v5970, %v5987
        %v5989 = vadd.f32 %v5988, 0.4994258
        %v5990 = vmul.f32 %v5970, %v5989
        %v5991 = vadd.f32 %v5990, 1.0
        %v5992 = vrcp.pop %v5991
        %v5993 = vmul.f32 %v5991, %v5992
        %v5994 = vsub.f32 1.0, %v5993
        %v5995 = vmul.f32 %v5992, %v5994
        %v5996 = vadd.f32 %v5992, %v5995
        %vm5997 = vweird.f32 %v5991
        %vm5998 = vweird.f32 %v5992
        %vm5999 = vmor %vm5997, %vm5998
        %v6000 = vsel %vm5999, %v5992, %v5996
        %v6001 = vand.u32 2147483647, %v5991
        %vm6002 = vcmp.eq.f32.partialorder %v6001, 8.507059e+37
        %v6003 = vand.u32 %v5991, 2147483648
        %v6004 = vor.u32 1.1754944e-38, %v6003
        %v6005 = vsel %vm6002, %v6004, %v6000
        %v6006 = vmul.f32 %v5981, %v6005
        %v6007 = vmin.f32 %v6006, 1.0
        %v6008 = vmax.f32 %v6007, -1.0
        %v6009 = vmul.f32 %v4076, %v4076
        %v6010 = vmin.f32 16.0, %v6009
        %v6011 = vmul.f32 %v6010, 2.1237322e-06
        %v6012 = vadd.f32 %v6011, 0.00028619796
        %v6013 = vmul.f32 %v6010, %v6012
        %v6014 = vadd.f32 %v6013, 0.0036580483
        %v6015 = vmul.f32 %v6010, %v6014
        %v6016 = vadd.f32 %v6015, 0.05243302
        %v6017 = vmul.f32 %v6010, %v6016
        %v6018 = vadd.f32 %v6017, 0.18741608
        %v6019 = vmul.f32 %v6010, %v6018
        %v6020 = vadd.f32 %v6019, 1.1283791
        %v6021 = vmul.f32 %v4076, %v6020
        %v6022 = vmul.f32 %v6010, 3.8918573e-05
        %v6023 = vadd.f32 %v6022, 0.001143296
        %v6024 = vmul.f32 %v6010, %v6023
        %v6025 = vadd.f32 %v6024, 0.014752088
        %v6026 = vmul.f32 %v6010, %v6025
        %v6027 = vadd.f32 %v6026, 0.112945676
        %v6028 = vmul.f32 %v6010, %v6027
        %v6029 = vadd.f32 %v6028, 0.4994258
        %v6030 = vmul.f32 %v6010, %v6029
        %v6031 = vadd.f32 %v6030, 1.0
        %v6032 = vrcp.pop %v6031
        %v6033 = vmul.f32 %v6031, %v6032
        %v6034 = vsub.f32 1.0, %v6033
        %v6035 = vmul.f32 %v6032, %v6034
        %v6036 = vadd.f32 %v6032, %v6035
        %vm6037 = vweird.f32 %v6031
        %vm6038 = vweird.f32 %v6032
        %vm6039 = vmor %vm6037, %vm6038
        %v6040 = vsel %vm6039, %v6032, %v6036
        %v6041 = vand.u32 2147483647, %v6031
        %vm6042 = vcmp.eq.f32.partialorder %v6041, 8.507059e+37
        %v6043 = vand.u32 %v6031, 2147483648
        %v6044 = vor.u32 1.1754944e-38, %v6043
        %v6045 = vsel %vm6042, %v6044, %v6040
        %v6046 = vmul.f32 %v6021, %v6045
        %v6047 = vmin.f32 %v6046, 1.0
        %v6048 = vmax.f32 %v6047, -1.0
        %v6049 = vmul.f32 %v4077, %v4077
        %v6050 = vmin.f32 16.0, %v6049
        %v6051 = vmul.f32 %v6050, 2.1237322e-06
        %v6052 = vadd.f32 %v6051, 0.00028619796
        %v6053 = vmul.f32 %v6050, %v6052
        %v6054 = vadd.f32 %v6053, 0.0036580483
        %v6055 = vmul.f32 %v6050, %v6054
        %v6056 = vadd.f32 %v6055, 0.05243302
        %v6057 = vmul.f32 %v6050, %v6056
        %v6058 = vadd.f32 %v6057, 0.18741608
        %v6059 = vmul.f32 %v6050, %v6058
        %v6060 = vadd.f32 %v6059, 1.1283791
        %v6061 = vmul.f32 %v4077, %v6060
        %v6062 = vmul.f32 %v6050, 3.8918573e-05
        %v6063 = vadd.f32 %v6062, 0.001143296
        %v6064 = vmul.f32 %v6050, %v6063
        %v6065 = vadd.f32 %v6064, 0.014752088
        %v6066 = vmul.f32 %v6050, %v6065
        %v6067 = vadd.f32 %v6066, 0.112945676
        %v6068 = vmul.f32 %v6050, %v6067
        %v6069 = vadd.f32 %v6068, 0.4994258
        %v6070 = vmul.f32 %v6050, %v6069
        %v6071 = vadd.f32 %v6070, 1.0
        %v6072 = vrcp.pop %v6071
        %v6073 = vmul.f32 %v6071, %v6072
        %v6074 = vsub.f32 1.0, %v6073
        %v6075 = vmul.f32 %v6072, %v6074
        %v6076 = vadd.f32 %v6072, %v6075
        %vm6077 = vweird.f32 %v6071
        %vm6078 = vweird.f32 %v6072
        %vm6079 = vmor %vm6077, %vm6078
        %v6080 = vsel %vm6079, %v6072, %v6076
        %v6081 = vand.u32 2147483647, %v6071
        %vm6082 = vcmp.eq.f32.partialorder %v6081, 8.507059e+37
        %v6083 = vand.u32 %v6071, 2147483648
        %v6084 = vor.u32 1.1754944e-38, %v6083
        %v6085 = vsel %vm6082, %v6084, %v6080
        %v6086 = vmul.f32 %v6061, %v6085
        %v6087 = vmin.f32 %v6086, 1.0
        %v6088 = vmax.f32 %v6087, -1.0
        %v6089 = vmul.f32 %v4078, %v4078
        %v6090 = vmin.f32 16.0, %v6089
        %v6091 = vmul.f32 %v6090, 2.1237322e-06
        %v6092 = vadd.f32 %v6091, 0.00028619796
        %v6093 = vmul.f32 %v6090, %v6092
        %v6094 = vadd.f32 %v6093, 0.0036580483
        %v6095 = vmul.f32 %v6090, %v6094
        %v6096 = vadd.f32 %v6095, 0.05243302
        %v6097 = vmul.f32 %v6090, %v6096
        %v6098 = vadd.f32 %v6097, 0.18741608
        %v6099 = vmul.f32 %v6090, %v6098
        %v6100 = vadd.f32 %v6099, 1.1283791
        %v6101 = vmul.f32 %v4078, %v6100
        %v6102 = vmul.f32 %v6090, 3.8918573e-05
        %v6103 = vadd.f32 %v6102, 0.001143296
        %v6104 = vmul.f32 %v6090, %v6103
        %v6105 = vadd.f32 %v6104, 0.014752088
        %v6106 = vmul.f32 %v6090, %v6105
        %v6107 = vadd.f32 %v6106, 0.112945676
        %v6108 = vmul.f32 %v6090, %v6107
        %v6109 = vadd.f32 %v6108, 0.4994258
        %v6110 = vmul.f32 %v6090, %v6109
        %v6111 = vadd.f32 %v6110, 1.0
        %v6112 = vrcp.pop %v6111
        %v6113 = vmul.f32 %v6111, %v6112
        %v6114 = vsub.f32 1.0, %v6113
        %v6115 = vmul.f32 %v6112, %v6114
        %v6116 = vadd.f32 %v6112, %v6115
        %vm6117 = vweird.f32 %v6111
        %vm6118 = vweird.f32 %v6112
        %vm6119 = vmor %vm6117, %vm6118
        %v6120 = vsel %vm6119, %v6112, %v6116
        %v6121 = vand.u32 2147483647, %v6111
        %vm6122 = vcmp.eq.f32.partialorder %v6121, 8.507059e+37
        %v6123 = vand.u32 %v6111, 2147483648
        %v6124 = vor.u32 1.1754944e-38, %v6123
        %v6125 = vsel %vm6122, %v6124, %v6120
        %v6126 = vmul.f32 %v6101, %v6125
        %v6127 = vmin.f32 %v6126, 1.0
        %v6128 = vmax.f32 %v6127, -1.0
        %v6129 = vmul.f32 %v4079, %v4079
        %v6130 = vmin.f32 16.0, %v6129
        %v6131 = vmul.f32 %v6130, 2.1237322e-06
        %v6132 = vadd.f32 %v6131, 0.00028619796
        %v6133 = vmul.f32 %v6130, %v6132
        %v6134 = vadd.f32 %v6133, 0.0036580483
        %v6135 = vmul.f32 %v6130, %v6134
        %v6136 = vadd.f32 %v6135, 0.05243302
        %v6137 = vmul.f32 %v6130, %v6136
        %v6138 = vadd.f32 %v6137, 0.18741608
        %v6139 = vmul.f32 %v6130, %v6138
        %v6140 = vadd.f32 %v6139, 1.1283791
        %v6141 = vmul.f32 %v4079, %v6140
        %v6142 = vmul.f32 %v6130, 3.8918573e-05
        %v6143 = vadd.f32 %v6142, 0.001143296
        %v6144 = vmul.f32 %v6130, %v6143
        %v6145 = vadd.f32 %v6144, 0.014752088
        %v6146 = vmul.f32 %v6130, %v6145
        %v6147 = vadd.f32 %v6146, 0.112945676
        %v6148 = vmul.f32 %v6130, %v6147
        %v6149 = vadd.f32 %v6148, 0.4994258
        %v6150 = vmul.f32 %v6130, %v6149
        %v6151 = vadd.f32 %v6150, 1.0
        %v6152 = vrcp.pop %v6151
        %v6153 = vmul.f32 %v6151, %v6152
        %v6154 = vsub.f32 1.0, %v6153
        %v6155 = vmul.f32 %v6152, %v6154
        %v6156 = vadd.f32 %v6152, %v6155
        %vm6157 = vweird.f32 %v6151
        %vm6158 = vweird.f32 %v6152
        %vm6159 = vmor %vm6157, %vm6158
        %v6160 = vsel %vm6159, %v6152, %v6156
        %v6161 = vand.u32 2147483647, %v6151
        %vm6162 = vcmp.eq.f32.partialorder %v6161, 8.507059e+37
        %v6163 = vand.u32 %v6151, 2147483648
        %v6164 = vor.u32 1.1754944e-38, %v6163
        %v6165 = vsel %vm6162, %v6164, %v6160
        %v6166 = vmul.f32 %v6141, %v6165
        %v6167 = vmin.f32 %v6166, 1.0
        %v6168 = vmax.f32 %v6167, -1.0
        %v6169 = vmul.f32 %v4080, %v4080
        %v6170 = vmin.f32 16.0, %v6169
        %v6171 = vmul.f32 %v6170, 2.1237322e-06
        %v6172 = vadd.f32 %v6171, 0.00028619796
        %v6173 = vmul.f32 %v6170, %v6172
        %v6174 = vadd.f32 %v6173, 0.0036580483
        %v6175 = vmul.f32 %v6170, %v6174
        %v6176 = vadd.f32 %v6175, 0.05243302
        %v6177 = vmul.f32 %v6170, %v6176
        %v6178 = vadd.f32 %v6177, 0.18741608
        %v6179 = vmul.f32 %v6170, %v6178
        %v6180 = vadd.f32 %v6179, 1.1283791
        %v6181 = vmul.f32 %v4080, %v6180
        %v6182 = vmul.f32 %v6170, 3.8918573e-05
        %v6183 = vadd.f32 %v6182, 0.001143296
        %v6184 = vmul.f32 %v6170, %v6183
        %v6185 = vadd.f32 %v6184, 0.014752088
        %v6186 = vmul.f32 %v6170, %v6185
        %v6187 = vadd.f32 %v6186, 0.112945676
        %v6188 = vmul.f32 %v6170, %v6187
        %v6189 = vadd.f32 %v6188, 0.4994258
        %v6190 = vmul.f32 %v6170, %v6189
        %v6191 = vadd.f32 %v6190, 1.0
        %v6192 = vrcp.pop %v6191
        %v6193 = vmul.f32 %v6191, %v6192
        %v6194 = vsub.f32 1.0, %v6193
        %v6195 = vmul.f32 %v6192, %v6194
        %v6196 = vadd.f32 %v6192, %v6195
        %vm6197 = vweird.f32 %v6191
        %vm6198 = vweird.f32 %v6192
        %vm6199 = vmor %vm6197, %vm6198
        %v6200 = vsel %vm6199, %v6192, %v6196
        %v6201 = vand.u32 2147483647, %v6191
        %vm6202 = vcmp.eq.f32.partialorder %v6201, 8.507059e+37
        %v6203 = vand.u32 %v6191, 2147483648
        %v6204 = vor.u32 1.1754944e-38, %v6203
        %v6205 = vsel %vm6202, %v6204, %v6200
        %v6206 = vmul.f32 %v6181, %v6205
        %v6207 = vmin.f32 %v6206, 1.0
        %v6208 = vmax.f32 %v6207, -1.0
        %v6209 = vmul.f32 %v4081, %v4081
        %v6210 = vmin.f32 16.0, %v6209
        %v6211 = vmul.f32 %v6210, 2.1237322e-06
        %v6212 = vadd.f32 %v6211, 0.00028619796
        %v6213 = vmul.f32 %v6210, %v6212
        %v6214 = vadd.f32 %v6213, 0.0036580483
        %v6215 = vmul.f32 %v6210, %v6214
        %v6216 = vadd.f32 %v6215, 0.05243302
        %v6217 = vmul.f32 %v6210, %v6216
        %v6218 = vadd.f32 %v6217, 0.18741608
        %v6219 = vmul.f32 %v6210, %v6218
        %v6220 = vadd.f32 %v6219, 1.1283791
        %v6221 = vmul.f32 %v4081, %v6220
        %v6222 = vmul.f32 %v6210, 3.8918573e-05
        %v6223 = vadd.f32 %v6222, 0.001143296
        %v6224 = vmul.f32 %v6210, %v6223
        %v6225 = vadd.f32 %v6224, 0.014752088
        %v6226 = vmul.f32 %v6210, %v6225
        %v6227 = vadd.f32 %v6226, 0.112945676
        %v6228 = vmul.f32 %v6210, %v6227
        %v6229 = vadd.f32 %v6228, 0.4994258
        %v6230 = vmul.f32 %v6210, %v6229
        %v6231 = vadd.f32 %v6230, 1.0
        %v6232 = vrcp.pop %v6231
        %v6233 = vmul.f32 %v6231, %v6232
        %v6234 = vsub.f32 1.0, %v6233
        %v6235 = vmul.f32 %v6232, %v6234
        %v6236 = vadd.f32 %v6232, %v6235
        %vm6237 = vweird.f32 %v6231
        %vm6238 = vweird.f32 %v6232
        %vm6239 = vmor %vm6237, %vm6238
        %v6240 = vsel %vm6239, %v6232, %v6236
        %v6241 = vand.u32 2147483647, %v6231
        %vm6242 = vcmp.eq.f32.partialorder %v6241, 8.507059e+37
        %v6243 = vand.u32 %v6231, 2147483648
        %v6244 = vor.u32 1.1754944e-38, %v6243
        %v6245 = vsel %vm6242, %v6244, %v6240
        %v6246 = vmul.f32 %v6221, %v6245
        %v6247 = vmin.f32 %v6246, 1.0
        %v6248 = vmax.f32 %v6247, -1.0
        %v6249 = vmul.f32 %v4082, %v4082
        %v6250 = vmin.f32 16.0, %v6249
        %v6251 = vmul.f32 %v6250, 2.1237322e-06
        %v6252 = vadd.f32 %v6251, 0.00028619796
        %v6253 = vmul.f32 %v6250, %v6252
        %v6254 = vadd.f32 %v6253, 0.0036580483
        %v6255 = vmul.f32 %v6250, %v6254
        %v6256 = vadd.f32 %v6255, 0.05243302
        %v6257 = vmul.f32 %v6250, %v6256
        %v6258 = vadd.f32 %v6257, 0.18741608
        %v6259 = vmul.f32 %v6250, %v6258
        %v6260 = vadd.f32 %v6259, 1.1283791
        %v6261 = vmul.f32 %v4082, %v6260
        %v6262 = vmul.f32 %v6250, 3.8918573e-05
        %v6263 = vadd.f32 %v6262, 0.001143296
        %v6264 = vmul.f32 %v6250, %v6263
        %v6265 = vadd.f32 %v6264, 0.014752088
        %v6266 = vmul.f32 %v6250, %v6265
        %v6267 = vadd.f32 %v6266, 0.112945676
        %v6268 = vmul.f32 %v6250, %v6267
        %v6269 = vadd.f32 %v6268, 0.4994258
        %v6270 = vmul.f32 %v6250, %v6269
        %v6271 = vadd.f32 %v6270, 1.0
        %v6272 = vrcp.pop %v6271
        %v6273 = vmul.f32 %v6271, %v6272
        %v6274 = vsub.f32 1.0, %v6273
        %v6275 = vmul.f32 %v6272, %v6274
        %v6276 = vadd.f32 %v6272, %v6275
        %vm6277 = vweird.f32 %v6271
        %vm6278 = vweird.f32 %v6272
        %vm6279 = vmor %vm6277, %vm6278
        %v6280 = vsel %vm6279, %v6272, %v6276
        %v6281 = vand.u32 2147483647, %v6271
        %vm6282 = vcmp.eq.f32.partialorder %v6281, 8.507059e+37
        %v6283 = vand.u32 %v6271, 2147483648
        %v6284 = vor.u32 1.1754944e-38, %v6283
        %v6285 = vsel %vm6282, %v6284, %v6280
        %v6286 = vmul.f32 %v6261, %v6285
        %v6287 = vmin.f32 %v6286, 1.0
        %v6288 = vmax.f32 %v6287, -1.0
        %v6289 = vmul.f32 %v4083, %v4083
        %v6290 = vmin.f32 16.0, %v6289
        %v6291 = vmul.f32 %v6290, 2.1237322e-06
        %v6292 = vadd.f32 %v6291, 0.00028619796
        %v6293 = vmul.f32 %v6290, %v6292
        %v6294 = vadd.f32 %v6293, 0.0036580483
        %v6295 = vmul.f32 %v6290, %v6294
        %v6296 = vadd.f32 %v6295, 0.05243302
        %v6297 = vmul.f32 %v6290, %v6296
        %v6298 = vadd.f32 %v6297, 0.18741608
        %v6299 = vmul.f32 %v6290, %v6298
        %v6300 = vadd.f32 %v6299, 1.1283791
        %v6301 = vmul.f32 %v4083, %v6300
        %v6302 = vmul.f32 %v6290, 3.8918573e-05
        %v6303 = vadd.f32 %v6302, 0.001143296
        %v6304 = vmul.f32 %v6290, %v6303
        %v6305 = vadd.f32 %v6304, 0.014752088
        %v6306 = vmul.f32 %v6290, %v6305
        %v6307 = vadd.f32 %v6306, 0.112945676
        %v6308 = vmul.f32 %v6290, %v6307
        %v6309 = vadd.f32 %v6308, 0.4994258
        %v6310 = vmul.f32 %v6290, %v6309
        %v6311 = vadd.f32 %v6310, 1.0
        %v6312 = vrcp.pop %v6311
        %v6313 = vmul.f32 %v6311, %v6312
        %v6314 = vsub.f32 1.0, %v6313
        %v6315 = vmul.f32 %v6312, %v6314
        %v6316 = vadd.f32 %v6312, %v6315
        %vm6317 = vweird.f32 %v6311
        %vm6318 = vweird.f32 %v6312
        %vm6319 = vmor %vm6317, %vm6318
        %v6320 = vsel %vm6319, %v6312, %v6316
        %v6321 = vand.u32 2147483647, %v6311
        %vm6322 = vcmp.eq.f32.partialorder %v6321, 8.507059e+37
        %v6323 = vand.u32 %v6311, 2147483648
        %v6324 = vor.u32 1.1754944e-38, %v6323
        %v6325 = vsel %vm6322, %v6324, %v6320
        %v6326 = vmul.f32 %v6301, %v6325
        %v6327 = vmin.f32 %v6326, 1.0
        %v6328 = vmax.f32 %v6327, -1.0
        %v6329 = vmul.f32 %v4084, %v4084
        %v6330 = vmin.f32 16.0, %v6329
        %v6331 = vmul.f32 %v6330, 2.1237322e-06
        %v6332 = vadd.f32 %v6331, 0.00028619796
        %v6333 = vmul.f32 %v6330, %v6332
        %v6334 = vadd.f32 %v6333, 0.0036580483
        %v6335 = vmul.f32 %v6330, %v6334
        %v6336 = vadd.f32 %v6335, 0.05243302
        %v6337 = vmul.f32 %v6330, %v6336
        %v6338 = vadd.f32 %v6337, 0.18741608
        %v6339 = vmul.f32 %v6330, %v6338
        %v6340 = vadd.f32 %v6339, 1.1283791
        %v6341 = vmul.f32 %v4084, %v6340
        %v6342 = vmul.f32 %v6330, 3.8918573e-05
        %v6343 = vadd.f32 %v6342, 0.001143296
        %v6344 = vmul.f32 %v6330, %v6343
        %v6345 = vadd.f32 %v6344, 0.014752088
        %v6346 = vmul.f32 %v6330, %v6345
        %v6347 = vadd.f32 %v6346, 0.112945676
        %v6348 = vmul.f32 %v6330, %v6347
        %v6349 = vadd.f32 %v6348, 0.4994258
        %v6350 = vmul.f32 %v6330, %v6349
        %v6351 = vadd.f32 %v6350, 1.0
        %v6352 = vrcp.pop %v6351
        %v6353 = vmul.f32 %v6351, %v6352
        %v6354 = vsub.f32 1.0, %v6353
        %v6355 = vmul.f32 %v6352, %v6354
        %v6356 = vadd.f32 %v6352, %v6355
        %vm6357 = vweird.f32 %v6351
        %vm6358 = vweird.f32 %v6352
        %vm6359 = vmor %vm6357, %vm6358
        %v6360 = vsel %vm6359, %v6352, %v6356
        %v6361 = vand.u32 2147483647, %v6351
        %vm6362 = vcmp.eq.f32.partialorder %v6361, 8.507059e+37
        %v6363 = vand.u32 %v6351, 2147483648
        %v6364 = vor.u32 1.1754944e-38, %v6363
        %v6365 = vsel %vm6362, %v6364, %v6360
        %v6366 = vmul.f32 %v6341, %v6365
        %v6367 = vmin.f32 %v6366, 1.0
        %v6368 = vmax.f32 %v6367, -1.0
        %v6369 = vmul.f32 %v4085, %v4085
        %v6370 = vmin.f32 16.0, %v6369
        %v6371 = vmul.f32 %v6370, 2.1237322e-06
        %v6372 = vadd.f32 %v6371, 0.00028619796
        %v6373 = vmul.f32 %v6370, %v6372
        %v6374 = vadd.f32 %v6373, 0.0036580483
        %v6375 = vmul.f32 %v6370, %v6374
        %v6376 = vadd.f32 %v6375, 0.05243302
        %v6377 = vmul.f32 %v6370, %v6376
        %v6378 = vadd.f32 %v6377, 0.18741608
        %v6379 = vmul.f32 %v6370, %v6378
        %v6380 = vadd.f32 %v6379, 1.1283791
        %v6381 = vmul.f32 %v4085, %v6380
        %v6382 = vmul.f32 %v6370, 3.8918573e-05
        %v6383 = vadd.f32 %v6382, 0.001143296
        %v6384 = vmul.f32 %v6370, %v6383
        %v6385 = vadd.f32 %v6384, 0.014752088
        %v6386 = vmul.f32 %v6370, %v6385
        %v6387 = vadd.f32 %v6386, 0.112945676
        %v6388 = vmul.f32 %v6370, %v6387
        %v6389 = vadd.f32 %v6388, 0.4994258
        %v6390 = vmul.f32 %v6370, %v6389
        %v6391 = vadd.f32 %v6390, 1.0
        %v6392 = vrcp.pop %v6391
        %v6393 = vmul.f32 %v6391, %v6392
        %v6394 = vsub.f32 1.0, %v6393
        %v6395 = vmul.f32 %v6392, %v6394
        %v6396 = vadd.f32 %v6392, %v6395
        %vm6397 = vweird.f32 %v6391
        %vm6398 = vweird.f32 %v6392
        %vm6399 = vmor %vm6397, %vm6398
        %v6400 = vsel %vm6399, %v6392, %v6396
        %v6401 = vand.u32 2147483647, %v6391
        %vm6402 = vcmp.eq.f32.partialorder %v6401, 8.507059e+37
        %v6403 = vand.u32 %v6391, 2147483648
        %v6404 = vor.u32 1.1754944e-38, %v6403
        %v6405 = vsel %vm6402, %v6404, %v6400
        %v6406 = vmul.f32 %v6381, %v6405
        %v6407 = vmin.f32 %v6406, 1.0
        %v6408 = vmax.f32 %v6407, -1.0
        %v6409 = vmul.f32 %v4086, %v4086
        %v6410 = vmin.f32 16.0, %v6409
        %v6411 = vmul.f32 %v6410, 2.1237322e-06
        %v6412 = vadd.f32 %v6411, 0.00028619796
        %v6413 = vmul.f32 %v6410, %v6412
        %v6414 = vadd.f32 %v6413, 0.0036580483
        %v6415 = vmul.f32 %v6410, %v6414
        %v6416 = vadd.f32 %v6415, 0.05243302
        %v6417 = vmul.f32 %v6410, %v6416
        %v6418 = vadd.f32 %v6417, 0.18741608
        %v6419 = vmul.f32 %v6410, %v6418
        %v6420 = vadd.f32 %v6419, 1.1283791
        %v6421 = vmul.f32 %v4086, %v6420
        %v6422 = vmul.f32 %v6410, 3.8918573e-05
        %v6423 = vadd.f32 %v6422, 0.001143296
        %v6424 = vmul.f32 %v6410, %v6423
        %v6425 = vadd.f32 %v6424, 0.014752088
        %v6426 = vmul.f32 %v6410, %v6425
        %v6427 = vadd.f32 %v6426, 0.112945676
        %v6428 = vmul.f32 %v6410, %v6427
        %v6429 = vadd.f32 %v6428, 0.4994258
        %v6430 = vmul.f32 %v6410, %v6429
        %v6431 = vadd.f32 %v6430, 1.0
        %v6432 = vrcp.pop %v6431
        %v6433 = vmul.f32 %v6431, %v6432
        %v6434 = vsub.f32 1.0, %v6433
        %v6435 = vmul.f32 %v6432, %v6434
        %v6436 = vadd.f32 %v6432, %v6435
        %vm6437 = vweird.f32 %v6431
        %vm6438 = vweird.f32 %v6432
        %vm6439 = vmor %vm6437, %vm6438
        %v6440 = vsel %vm6439, %v6432, %v6436
        %v6441 = vand.u32 2147483647, %v6431
        %vm6442 = vcmp.eq.f32.partialorder %v6441, 8.507059e+37
        %v6443 = vand.u32 %v6431, 2147483648
        %v6444 = vor.u32 1.1754944e-38, %v6443
        %v6445 = vsel %vm6442, %v6444, %v6440
        %v6446 = vmul.f32 %v6421, %v6445
        %v6447 = vmin.f32 %v6446, 1.0
        %v6448 = vmax.f32 %v6447, -1.0
        %v6449 = vmul.f32 %v4087, %v4087
        %v6450 = vmin.f32 16.0, %v6449
        %v6451 = vmul.f32 %v6450, 2.1237322e-06
        %v6452 = vadd.f32 %v6451, 0.00028619796
        %v6453 = vmul.f32 %v6450, %v6452
        %v6454 = vadd.f32 %v6453, 0.0036580483
        %v6455 = vmul.f32 %v6450, %v6454
        %v6456 = vadd.f32 %v6455, 0.05243302
        %v6457 = vmul.f32 %v6450, %v6456
        %v6458 = vadd.f32 %v6457, 0.18741608
        %v6459 = vmul.f32 %v6450, %v6458
        %v6460 = vadd.f32 %v6459, 1.1283791
        %v6461 = vmul.f32 %v4087, %v6460
        %v6462 = vmul.f32 %v6450, 3.8918573e-05
        %v6463 = vadd.f32 %v6462, 0.001143296
        %v6464 = vmul.f32 %v6450, %v6463
        %v6465 = vadd.f32 %v6464, 0.014752088
        %v6466 = vmul.f32 %v6450, %v6465
        %v6467 = vadd.f32 %v6466, 0.112945676
        %v6468 = vmul.f32 %v6450, %v6467
        %v6469 = vadd.f32 %v6468, 0.4994258
        %v6470 = vmul.f32 %v6450, %v6469
        %v6471 = vadd.f32 %v6470, 1.0
        %v6472 = vrcp.pop %v6471
        %v6473 = vmul.f32 %v6471, %v6472
        %v6474 = vsub.f32 1.0, %v6473
        %v6475 = vmul.f32 %v6472, %v6474
        %v6476 = vadd.f32 %v6472, %v6475
        %vm6477 = vweird.f32 %v6471
        %vm6478 = vweird.f32 %v6472
        %vm6479 = vmor %vm6477, %vm6478
        %v6480 = vsel %vm6479, %v6472, %v6476
        %v6481 = vand.u32 2147483647, %v6471
        %vm6482 = vcmp.eq.f32.partialorder %v6481, 8.507059e+37
        %v6483 = vand.u32 %v6471, 2147483648
        %v6484 = vor.u32 1.1754944e-38, %v6483
        %v6485 = vsel %vm6482, %v6484, %v6480
        %v6486 = vmul.f32 %v6461, %v6485
        %v6487 = vmin.f32 %v6486, 1.0
        %v6488 = vmax.f32 %v6487, -1.0
        %v6489 = vmul.f32 %v4088, %v4088
        %v6490 = vmin.f32 16.0, %v6489
        %v6491 = vmul.f32 %v6490, 2.1237322e-06
        %v6492 = vadd.f32 %v6491, 0.00028619796
        %v6493 = vmul.f32 %v6490, %v6492
        %v6494 = vadd.f32 %v6493, 0.0036580483
        %v6495 = vmul.f32 %v6490, %v6494
        %v6496 = vadd.f32 %v6495, 0.05243302
        %v6497 = vmul.f32 %v6490, %v6496
        %v6498 = vadd.f32 %v6497, 0.18741608
        %v6499 = vmul.f32 %v6490, %v6498
        %v6500 = vadd.f32 %v6499, 1.1283791
        %v6501 = vmul.f32 %v4088, %v6500
        %v6502 = vmul.f32 %v6490, 3.8918573e-05
        %v6503 = vadd.f32 %v6502, 0.001143296
        %v6504 = vmul.f32 %v6490, %v6503
        %v6505 = vadd.f32 %v6504, 0.014752088
        %v6506 = vmul.f32 %v6490, %v6505
        %v6507 = vadd.f32 %v6506, 0.112945676
        %v6508 = vmul.f32 %v6490, %v6507
        %v6509 = vadd.f32 %v6508, 0.4994258
        %v6510 = vmul.f32 %v6490, %v6509
        %v6511 = vadd.f32 %v6510, 1.0
        %v6512 = vrcp.pop %v6511
        %v6513 = vmul.f32 %v6511, %v6512
        %v6514 = vsub.f32 1.0, %v6513
        %v6515 = vmul.f32 %v6512, %v6514
        %v6516 = vadd.f32 %v6512, %v6515
        %vm6517 = vweird.f32 %v6511
        %vm6518 = vweird.f32 %v6512
        %vm6519 = vmor %vm6517, %vm6518
        %v6520 = vsel %vm6519, %v6512, %v6516
        %v6521 = vand.u32 2147483647, %v6511
        %vm6522 = vcmp.eq.f32.partialorder %v6521, 8.507059e+37
        %v6523 = vand.u32 %v6511, 2147483648
        %v6524 = vor.u32 1.1754944e-38, %v6523
        %v6525 = vsel %vm6522, %v6524, %v6520
        %v6526 = vmul.f32 %v6501, %v6525
        %v6527 = vmin.f32 %v6526, 1.0
        %v6528 = vmax.f32 %v6527, -1.0
        %v6529 = vmul.f32 %v4089, %v4089
        %v6530 = vmin.f32 16.0, %v6529
        %v6531 = vmul.f32 %v6530, 2.1237322e-06
        %v6532 = vadd.f32 %v6531, 0.00028619796
        %v6533 = vmul.f32 %v6530, %v6532
        %v6534 = vadd.f32 %v6533, 0.0036580483
        %v6535 = vmul.f32 %v6530, %v6534
        %v6536 = vadd.f32 %v6535, 0.05243302
        %v6537 = vmul.f32 %v6530, %v6536
        %v6538 = vadd.f32 %v6537, 0.18741608
        %v6539 = vmul.f32 %v6530, %v6538
        %v6540 = vadd.f32 %v6539, 1.1283791
        %v6541 = vmul.f32 %v4089, %v6540
        %v6542 = vmul.f32 %v6530, 3.8918573e-05
        %v6543 = vadd.f32 %v6542, 0.001143296
        %v6544 = vmul.f32 %v6530, %v6543
        %v6545 = vadd.f32 %v6544, 0.014752088
        %v6546 = vmul.f32 %v6530, %v6545
        %v6547 = vadd.f32 %v6546, 0.112945676
        %v6548 = vmul.f32 %v6530, %v6547
        %v6549 = vadd.f32 %v6548, 0.4994258
        %v6550 = vmul.f32 %v6530, %v6549
        %v6551 = vadd.f32 %v6550, 1.0
        %v6552 = vrcp.pop %v6551
        %v6553 = vmul.f32 %v6551, %v6552
        %v6554 = vsub.f32 1.0, %v6553
        %v6555 = vmul.f32 %v6552, %v6554
        %v6556 = vadd.f32 %v6552, %v6555
        %vm6557 = vweird.f32 %v6551
        %vm6558 = vweird.f32 %v6552
        %vm6559 = vmor %vm6557, %vm6558
        %v6560 = vsel %vm6559, %v6552, %v6556
        %v6561 = vand.u32 2147483647, %v6551
        %vm6562 = vcmp.eq.f32.partialorder %v6561, 8.507059e+37
        %v6563 = vand.u32 %v6551, 2147483648
        %v6564 = vor.u32 1.1754944e-38, %v6563
        %v6565 = vsel %vm6562, %v6564, %v6560
        %v6566 = vmul.f32 %v6541, %v6565
        %v6567 = vmin.f32 %v6566, 1.0
        %v6568 = vmax.f32 %v6567, -1.0
        %v6569 = vmul.f32 %v4090, %v4090
        %v6570 = vmin.f32 16.0, %v6569
        %v6571 = vmul.f32 %v6570, 2.1237322e-06
        %v6572 = vadd.f32 %v6571, 0.00028619796
        %v6573 = vmul.f32 %v6570, %v6572
        %v6574 = vadd.f32 %v6573, 0.0036580483
        %v6575 = vmul.f32 %v6570, %v6574
        %v6576 = vadd.f32 %v6575, 0.05243302
        %v6577 = vmul.f32 %v6570, %v6576
        %v6578 = vadd.f32 %v6577, 0.18741608
        %v6579 = vmul.f32 %v6570, %v6578
        %v6580 = vadd.f32 %v6579, 1.1283791
        %v6581 = vmul.f32 %v4090, %v6580
        %v6582 = vmul.f32 %v6570, 3.8918573e-05
        %v6583 = vadd.f32 %v6582, 0.001143296
        %v6584 = vmul.f32 %v6570, %v6583
        %v6585 = vadd.f32 %v6584, 0.014752088
        %v6586 = vmul.f32 %v6570, %v6585
        %v6587 = vadd.f32 %v6586, 0.112945676
        %v6588 = vmul.f32 %v6570, %v6587
        %v6589 = vadd.f32 %v6588, 0.4994258
        %v6590 = vmul.f32 %v6570, %v6589
        %v6591 = vadd.f32 %v6590, 1.0
        %v6592 = vrcp.pop %v6591
        %v6593 = vmul.f32 %v6591, %v6592
        %v6594 = vsub.f32 1.0, %v6593
        %v6595 = vmul.f32 %v6592, %v6594
        %v6596 = vadd.f32 %v6592, %v6595
        %vm6597 = vweird.f32 %v6591
        %vm6598 = vweird.f32 %v6592
        %vm6599 = vmor %vm6597, %vm6598
        %v6600 = vsel %vm6599, %v6592, %v6596
        %v6601 = vand.u32 2147483647, %v6591
        %vm6602 = vcmp.eq.f32.partialorder %v6601, 8.507059e+37
        %v6603 = vand.u32 %v6591, 2147483648
        %v6604 = vor.u32 1.1754944e-38, %v6603
        %v6605 = vsel %vm6602, %v6604, %v6600
        %v6606 = vmul.f32 %v6581, %v6605
        %v6607 = vmin.f32 %v6606, 1.0
        %v6608 = vmax.f32 %v6607, -1.0
        %v6609 = vmul.f32 %v4091, %v4091
        %v6610 = vmin.f32 16.0, %v6609
        %v6611 = vmul.f32 %v6610, 2.1237322e-06
        %v6612 = vadd.f32 %v6611, 0.00028619796
        %v6613 = vmul.f32 %v6610, %v6612
        %v6614 = vadd.f32 %v6613, 0.0036580483
        %v6615 = vmul.f32 %v6610, %v6614
        %v6616 = vadd.f32 %v6615, 0.05243302
        %v6617 = vmul.f32 %v6610, %v6616
        %v6618 = vadd.f32 %v6617, 0.18741608
        %v6619 = vmul.f32 %v6610, %v6618
        %v6620 = vadd.f32 %v6619, 1.1283791
        %v6621 = vmul.f32 %v4091, %v6620
        %v6622 = vmul.f32 %v6610, 3.8918573e-05
        %v6623 = vadd.f32 %v6622, 0.001143296
        %v6624 = vmul.f32 %v6610, %v6623
        %v6625 = vadd.f32 %v6624, 0.014752088
        %v6626 = vmul.f32 %v6610, %v6625
        %v6627 = vadd.f32 %v6626, 0.112945676
        %v6628 = vmul.f32 %v6610, %v6627
        %v6629 = vadd.f32 %v6628, 0.4994258
        %v6630 = vmul.f32 %v6610, %v6629
        %v6631 = vadd.f32 %v6630, 1.0
        %v6632 = vrcp.pop %v6631
        %v6633 = vmul.f32 %v6631, %v6632
        %v6634 = vsub.f32 1.0, %v6633
        %v6635 = vmul.f32 %v6632, %v6634
        %v6636 = vadd.f32 %v6632, %v6635
        %vm6637 = vweird.f32 %v6631
        %vm6638 = vweird.f32 %v6632
        %vm6639 = vmor %vm6637, %vm6638
        %v6640 = vsel %vm6639, %v6632, %v6636
        %v6641 = vand.u32 2147483647, %v6631
        %vm6642 = vcmp.eq.f32.partialorder %v6641, 8.507059e+37
        %v6643 = vand.u32 %v6631, 2147483648
        %v6644 = vor.u32 1.1754944e-38, %v6643
        %v6645 = vsel %vm6642, %v6644, %v6640
        %v6646 = vmul.f32 %v6621, %v6645
        %v6647 = vmin.f32 %v6646, 1.0
        %v6648 = vmax.f32 %v6647, -1.0
        %v6649 = vmul.f32 %v4092, %v4092
        %v6650 = vmin.f32 16.0, %v6649
        %v6651 = vmul.f32 %v6650, 2.1237322e-06
        %v6652 = vadd.f32 %v6651, 0.00028619796
        %v6653 = vmul.f32 %v6650, %v6652
        %v6654 = vadd.f32 %v6653, 0.0036580483
        %v6655 = vmul.f32 %v6650, %v6654
        %v6656 = vadd.f32 %v6655, 0.05243302
        %v6657 = vmul.f32 %v6650, %v6656
        %v6658 = vadd.f32 %v6657, 0.18741608
        %v6659 = vmul.f32 %v6650, %v6658
        %v6660 = vadd.f32 %v6659, 1.1283791
        %v6661 = vmul.f32 %v4092, %v6660
        %v6662 = vmul.f32 %v6650, 3.8918573e-05
        %v6663 = vadd.f32 %v6662, 0.001143296
        %v6664 = vmul.f32 %v6650, %v6663
        %v6665 = vadd.f32 %v6664, 0.014752088
        %v6666 = vmul.f32 %v6650, %v6665
        %v6667 = vadd.f32 %v6666, 0.112945676
        %v6668 = vmul.f32 %v6650, %v6667
        %v6669 = vadd.f32 %v6668, 0.4994258
        %v6670 = vmul.f32 %v6650, %v6669
        %v6671 = vadd.f32 %v6670, 1.0
        %v6672 = vrcp.pop %v6671
        %v6673 = vmul.f32 %v6671, %v6672
        %v6674 = vsub.f32 1.0, %v6673
        %v6675 = vmul.f32 %v6672, %v6674
        %v6676 = vadd.f32 %v6672, %v6675
        %vm6677 = vweird.f32 %v6671
        %vm6678 = vweird.f32 %v6672
        %vm6679 = vmor %vm6677, %vm6678
        %v6680 = vsel %vm6679, %v6672, %v6676
        %v6681 = vand.u32 2147483647, %v6671
        %vm6682 = vcmp.eq.f32.partialorder %v6681, 8.507059e+37
        %v6683 = vand.u32 %v6671, 2147483648
        %v6684 = vor.u32 1.1754944e-38, %v6683
        %v6685 = vsel %vm6682, %v6684, %v6680
        %v6686 = vmul.f32 %v6661, %v6685
        %v6687 = vmin.f32 %v6686, 1.0
        %v6688 = vmax.f32 %v6687, -1.0
        %v6689 = vmul.f32 %v4093, %v4093
        %v6690 = vmin.f32 16.0, %v6689
        %v6691 = vmul.f32 %v6690, 2.1237322e-06
        %v6692 = vadd.f32 %v6691, 0.00028619796
        %v6693 = vmul.f32 %v6690, %v6692
        %v6694 = vadd.f32 %v6693, 0.0036580483
        %v6695 = vmul.f32 %v6690, %v6694
        %v6696 = vadd.f32 %v6695, 0.05243302
        %v6697 = vmul.f32 %v6690, %v6696
        %v6698 = vadd.f32 %v6697, 0.18741608
        %v6699 = vmul.f32 %v6690, %v6698
        %v6700 = vadd.f32 %v6699, 1.1283791
        %v6701 = vmul.f32 %v4093, %v6700
        %v6702 = vmul.f32 %v6690, 3.8918573e-05
        %v6703 = vadd.f32 %v6702, 0.001143296
        %v6704 = vmul.f32 %v6690, %v6703
        %v6705 = vadd.f32 %v6704, 0.014752088
        %v6706 = vmul.f32 %v6690, %v6705
        %v6707 = vadd.f32 %v6706, 0.112945676
        %v6708 = vmul.f32 %v6690, %v6707
        %v6709 = vadd.f32 %v6708, 0.4994258
        %v6710 = vmul.f32 %v6690, %v6709
        %v6711 = vadd.f32 %v6710, 1.0
        %v6712 = vrcp.pop %v6711
        %v6713 = vmul.f32 %v6711, %v6712
        %v6714 = vsub.f32 1.0, %v6713
        %v6715 = vmul.f32 %v6712, %v6714
        %v6716 = vadd.f32 %v6712, %v6715
        %vm6717 = vweird.f32 %v6711
        %vm6718 = vweird.f32 %v6712
        %vm6719 = vmor %vm6717, %vm6718
        %v6720 = vsel %vm6719, %v6712, %v6716
        %v6721 = vand.u32 2147483647, %v6711
        %vm6722 = vcmp.eq.f32.partialorder %v6721, 8.507059e+37
        %v6723 = vand.u32 %v6711, 2147483648
        %v6724 = vor.u32 1.1754944e-38, %v6723
        %v6725 = vsel %vm6722, %v6724, %v6720
        %v6726 = vmul.f32 %v6701, %v6725
        %v6727 = vmin.f32 %v6726, 1.0
        %v6728 = vmax.f32 %v6727, -1.0
        %v6729 = vmul.f32 %v4094, %v4094
        %v6730 = vmin.f32 16.0, %v6729
        %v6731 = vmul.f32 %v6730, 2.1237322e-06
        %v6732 = vadd.f32 %v6731, 0.00028619796
        %v6733 = vmul.f32 %v6730, %v6732
        %v6734 = vadd.f32 %v6733, 0.0036580483
        %v6735 = vmul.f32 %v6730, %v6734
        %v6736 = vadd.f32 %v6735, 0.05243302
        %v6737 = vmul.f32 %v6730, %v6736
        %v6738 = vadd.f32 %v6737, 0.18741608
        %v6739 = vmul.f32 %v6730, %v6738
        %v6740 = vadd.f32 %v6739, 1.1283791
        %v6741 = vmul.f32 %v4094, %v6740
        %v6742 = vmul.f32 %v6730, 3.8918573e-05
        %v6743 = vadd.f32 %v6742, 0.001143296
        %v6744 = vmul.f32 %v6730, %v6743
        %v6745 = vadd.f32 %v6744, 0.014752088
        %v6746 = vmul.f32 %v6730, %v6745
        %v6747 = vadd.f32 %v6746, 0.112945676
        %v6748 = vmul.f32 %v6730, %v6747
        %v6749 = vadd.f32 %v6748, 0.4994258
        %v6750 = vmul.f32 %v6730, %v6749
        %v6751 = vadd.f32 %v6750, 1.0
        %v6752 = vrcp.pop %v6751
        %v6753 = vmul.f32 %v6751, %v6752
        %v6754 = vsub.f32 1.0, %v6753
        %v6755 = vmul.f32 %v6752, %v6754
        %v6756 = vadd.f32 %v6752, %v6755
        %vm6757 = vweird.f32 %v6751
        %vm6758 = vweird.f32 %v6752
        %vm6759 = vmor %vm6757, %vm6758
        %v6760 = vsel %vm6759, %v6752, %v6756
        %v6761 = vand.u32 2147483647, %v6751
        %vm6762 = vcmp.eq.f32.partialorder %v6761, 8.507059e+37
        %v6763 = vand.u32 %v6751, 2147483648
        %v6764 = vor.u32 1.1754944e-38, %v6763
        %v6765 = vsel %vm6762, %v6764, %v6760
        %v6766 = vmul.f32 %v6741, %v6765
        %v6767 = vmin.f32 %v6766, 1.0
        %v6768 = vmax.f32 %v6767, -1.0
        %v6769 = vmul.f32 %v4095, %v4095
        %v6770 = vmin.f32 16.0, %v6769
        %v6771 = vmul.f32 %v6770, 2.1237322e-06
        %v6772 = vadd.f32 %v6771, 0.00028619796
        %v6773 = vmul.f32 %v6770, %v6772
        %v6774 = vadd.f32 %v6773, 0.0036580483
        %v6775 = vmul.f32 %v6770, %v6774
        %v6776 = vadd.f32 %v6775, 0.05243302
        %v6777 = vmul.f32 %v6770, %v6776
        %v6778 = vadd.f32 %v6777, 0.18741608
        %v6779 = vmul.f32 %v6770, %v6778
        %v6780 = vadd.f32 %v6779, 1.1283791
        %v6781 = vmul.f32 %v4095, %v6780
        %v6782 = vmul.f32 %v6770, 3.8918573e-05
        %v6783 = vadd.f32 %v6782, 0.001143296
        %v6784 = vmul.f32 %v6770, %v6783
        %v6785 = vadd.f32 %v6784, 0.014752088
        %v6786 = vmul.f32 %v6770, %v6785
        %v6787 = vadd.f32 %v6786, 0.112945676
        %v6788 = vmul.f32 %v6770, %v6787
        %v6789 = vadd.f32 %v6788, 0.4994258
        %v6790 = vmul.f32 %v6770, %v6789
        %v6791 = vadd.f32 %v6790, 1.0
        %v6792 = vrcp.pop %v6791
        %v6793 = vmul.f32 %v6791, %v6792
        %v6794 = vsub.f32 1.0, %v6793
        %v6795 = vmul.f32 %v6792, %v6794
        %v6796 = vadd.f32 %v6792, %v6795
        %vm6797 = vweird.f32 %v6791
        %vm6798 = vweird.f32 %v6792
        %vm6799 = vmor %vm6797, %vm6798
        %v6800 = vsel %vm6799, %v6792, %v6796
        %v6801 = vand.u32 2147483647, %v6791
        %vm6802 = vcmp.eq.f32.partialorder %v6801, 8.507059e+37
        %v6803 = vand.u32 %v6791, 2147483648
        %v6804 = vor.u32 1.1754944e-38, %v6803
        %v6805 = vsel %vm6802, %v6804, %v6800
        %v6806 = vmul.f32 %v6781, %v6805
        %v6807 = vmin.f32 %v6806, 1.0
        %v6808 = vmax.f32 %v6807, -1.0
        %v6809 = vmul.f32 %v4096, %v4096
        %v6810 = vmin.f32 16.0, %v6809
        %v6811 = vmul.f32 %v6810, 2.1237322e-06
        %v6812 = vadd.f32 %v6811, 0.00028619796
        %v6813 = vmul.f32 %v6810, %v6812
        %v6814 = vadd.f32 %v6813, 0.0036580483
        %v6815 = vmul.f32 %v6810, %v6814
        %v6816 = vadd.f32 %v6815, 0.05243302
        %v6817 = vmul.f32 %v6810, %v6816
        %v6818 = vadd.f32 %v6817, 0.18741608
        %v6819 = vmul.f32 %v6810, %v6818
        %v6820 = vadd.f32 %v6819, 1.1283791
        %v6821 = vmul.f32 %v4096, %v6820
        %v6822 = vmul.f32 %v6810, 3.8918573e-05
        %v6823 = vadd.f32 %v6822, 0.001143296
        %v6824 = vmul.f32 %v6810, %v6823
        %v6825 = vadd.f32 %v6824, 0.014752088
        %v6826 = vmul.f32 %v6810, %v6825
        %v6827 = vadd.f32 %v6826, 0.112945676
        %v6828 = vmul.f32 %v6810, %v6827
        %v6829 = vadd.f32 %v6828, 0.4994258
        %v6830 = vmul.f32 %v6810, %v6829
        %v6831 = vadd.f32 %v6830, 1.0
        %v6832 = vrcp.pop %v6831
        %v6833 = vmul.f32 %v6831, %v6832
        %v6834 = vsub.f32 1.0, %v6833
        %v6835 = vmul.f32 %v6832, %v6834
        %v6836 = vadd.f32 %v6832, %v6835
        %vm6837 = vweird.f32 %v6831
        %vm6838 = vweird.f32 %v6832
        %vm6839 = vmor %vm6837, %vm6838
        %v6840 = vsel %vm6839, %v6832, %v6836
        %v6841 = vand.u32 2147483647, %v6831
        %vm6842 = vcmp.eq.f32.partialorder %v6841, 8.507059e+37
        %v6843 = vand.u32 %v6831, 2147483648
        %v6844 = vor.u32 1.1754944e-38, %v6843
        %v6845 = vsel %vm6842, %v6844, %v6840
        %v6846 = vmul.f32 %v6821, %v6845
        %v6847 = vmin.f32 %v6846, 1.0
        %v6848 = vmax.f32 %v6847, -1.0
        %v6849 = vmul.f32 %v4097, %v4097
        %v6850 = vmin.f32 16.0, %v6849
        %v6851 = vmul.f32 %v6850, 2.1237322e-06
        %v6852 = vadd.f32 %v6851, 0.00028619796
        %v6853 = vmul.f32 %v6850, %v6852
        %v6854 = vadd.f32 %v6853, 0.0036580483
        %v6855 = vmul.f32 %v6850, %v6854
        %v6856 = vadd.f32 %v6855, 0.05243302
        %v6857 = vmul.f32 %v6850, %v6856
        %v6858 = vadd.f32 %v6857, 0.18741608
        %v6859 = vmul.f32 %v6850, %v6858
        %v6860 = vadd.f32 %v6859, 1.1283791
        %v6861 = vmul.f32 %v4097, %v6860
        %v6862 = vmul.f32 %v6850, 3.8918573e-05
        %v6863 = vadd.f32 %v6862, 0.001143296
        %v6864 = vmul.f32 %v6850, %v6863
        %v6865 = vadd.f32 %v6864, 0.014752088
        %v6866 = vmul.f32 %v6850, %v6865
        %v6867 = vadd.f32 %v6866, 0.112945676
        %v6868 = vmul.f32 %v6850, %v6867
        %v6869 = vadd.f32 %v6868, 0.4994258
        %v6870 = vmul.f32 %v6850, %v6869
        %v6871 = vadd.f32 %v6870, 1.0
        %v6872 = vrcp.pop %v6871
        %v6873 = vmul.f32 %v6871, %v6872
        %v6874 = vsub.f32 1.0, %v6873
        %v6875 = vmul.f32 %v6872, %v6874
        %v6876 = vadd.f32 %v6872, %v6875
        %vm6877 = vweird.f32 %v6871
        %vm6878 = vweird.f32 %v6872
        %vm6879 = vmor %vm6877, %vm6878
        %v6880 = vsel %vm6879, %v6872, %v6876
        %v6881 = vand.u32 2147483647, %v6871
        %vm6882 = vcmp.eq.f32.partialorder %v6881, 8.507059e+37
        %v6883 = vand.u32 %v6871, 2147483648
        %v6884 = vor.u32 1.1754944e-38, %v6883
        %v6885 = vsel %vm6882, %v6884, %v6880
        %v6886 = vmul.f32 %v6861, %v6885
        %v6887 = vmin.f32 %v6886, 1.0
        %v6888 = vmax.f32 %v6887, -1.0
        %v6889 = vmul.f32 %v4098, %v4098
        %v6890 = vmin.f32 16.0, %v6889
        %v6891 = vmul.f32 %v6890, 2.1237322e-06
        %v6892 = vadd.f32 %v6891, 0.00028619796
        %v6893 = vmul.f32 %v6890, %v6892
        %v6894 = vadd.f32 %v6893, 0.0036580483
        %v6895 = vmul.f32 %v6890, %v6894
        %v6896 = vadd.f32 %v6895, 0.05243302
        %v6897 = vmul.f32 %v6890, %v6896
        %v6898 = vadd.f32 %v6897, 0.18741608
        %v6899 = vmul.f32 %v6890, %v6898
        %v6900 = vadd.f32 %v6899, 1.1283791
        %v6901 = vmul.f32 %v4098, %v6900
        %v6902 = vmul.f32 %v6890, 3.8918573e-05
        %v6903 = vadd.f32 %v6902, 0.001143296
        %v6904 = vmul.f32 %v6890, %v6903
        %v6905 = vadd.f32 %v6904, 0.014752088
        %v6906 = vmul.f32 %v6890, %v6905
        %v6907 = vadd.f32 %v6906, 0.112945676
        %v6908 = vmul.f32 %v6890, %v6907
        %v6909 = vadd.f32 %v6908, 0.4994258
        %v6910 = vmul.f32 %v6890, %v6909
        %v6911 = vadd.f32 %v6910, 1.0
        %v6912 = vrcp.pop %v6911
        %v6913 = vmul.f32 %v6911, %v6912
        %v6914 = vsub.f32 1.0, %v6913
        %v6915 = vmul.f32 %v6912, %v6914
        %v6916 = vadd.f32 %v6912, %v6915
        %vm6917 = vweird.f32 %v6911
        %vm6918 = vweird.f32 %v6912
        %vm6919 = vmor %vm6917, %vm6918
        %v6920 = vsel %vm6919, %v6912, %v6916
        %v6921 = vand.u32 2147483647, %v6911
        %vm6922 = vcmp.eq.f32.partialorder %v6921, 8.507059e+37
        %v6923 = vand.u32 %v6911, 2147483648
        %v6924 = vor.u32 1.1754944e-38, %v6923
        %v6925 = vsel %vm6922, %v6924, %v6920
        %v6926 = vmul.f32 %v6901, %v6925
        %v6927 = vmin.f32 %v6926, 1.0
        %v6928 = vmax.f32 %v6927, -1.0
        %v6929 = vmul.f32 %v4099, %v4099
        %v6930 = vmin.f32 16.0, %v6929
        %v6931 = vmul.f32 %v6930, 2.1237322e-06
        %v6932 = vadd.f32 %v6931, 0.00028619796
        %v6933 = vmul.f32 %v6930, %v6932
        %v6934 = vadd.f32 %v6933, 0.0036580483
        %v6935 = vmul.f32 %v6930, %v6934
        %v6936 = vadd.f32 %v6935, 0.05243302
        %v6937 = vmul.f32 %v6930, %v6936
        %v6938 = vadd.f32 %v6937, 0.18741608
        %v6939 = vmul.f32 %v6930, %v6938
        %v6940 = vadd.f32 %v6939, 1.1283791
        %v6941 = vmul.f32 %v4099, %v6940
        %v6942 = vmul.f32 %v6930, 3.8918573e-05
        %v6943 = vadd.f32 %v6942, 0.001143296
        %v6944 = vmul.f32 %v6930, %v6943
        %v6945 = vadd.f32 %v6944, 0.014752088
        %v6946 = vmul.f32 %v6930, %v6945
        %v6947 = vadd.f32 %v6946, 0.112945676
        %v6948 = vmul.f32 %v6930, %v6947
        %v6949 = vadd.f32 %v6948, 0.4994258
        %v6950 = vmul.f32 %v6930, %v6949
        %v6951 = vadd.f32 %v6950, 1.0
        %v6952 = vrcp.pop %v6951
        %v6953 = vmul.f32 %v6951, %v6952
        %v6954 = vsub.f32 1.0, %v6953
        %v6955 = vmul.f32 %v6952, %v6954
        %v6956 = vadd.f32 %v6952, %v6955
        %vm6957 = vweird.f32 %v6951
        %vm6958 = vweird.f32 %v6952
        %vm6959 = vmor %vm6957, %vm6958
        %v6960 = vsel %vm6959, %v6952, %v6956
        %v6961 = vand.u32 2147483647, %v6951
        %vm6962 = vcmp.eq.f32.partialorder %v6961, 8.507059e+37
        %v6963 = vand.u32 %v6951, 2147483648
        %v6964 = vor.u32 1.1754944e-38, %v6963
        %v6965 = vsel %vm6962, %v6964, %v6960
        %v6966 = vmul.f32 %v6941, %v6965
        %v6967 = vmin.f32 %v6966, 1.0
        %v6968 = vmax.f32 %v6967, -1.0
        %v6969 = vmul.f32 %v4100, %v4100
        %v6970 = vmin.f32 16.0, %v6969
        %v6971 = vmul.f32 %v6970, 2.1237322e-06
        %v6972 = vadd.f32 %v6971, 0.00028619796
        %v6973 = vmul.f32 %v6970, %v6972
        %v6974 = vadd.f32 %v6973, 0.0036580483
        %v6975 = vmul.f32 %v6970, %v6974
        %v6976 = vadd.f32 %v6975, 0.05243302
        %v6977 = vmul.f32 %v6970, %v6976
        %v6978 = vadd.f32 %v6977, 0.18741608
        %v6979 = vmul.f32 %v6970, %v6978
        %v6980 = vadd.f32 %v6979, 1.1283791
        %v6981 = vmul.f32 %v4100, %v6980
        %v6982 = vmul.f32 %v6970, 3.8918573e-05
        %v6983 = vadd.f32 %v6982, 0.001143296
        %v6984 = vmul.f32 %v6970, %v6983
        %v6985 = vadd.f32 %v6984, 0.014752088
        %v6986 = vmul.f32 %v6970, %v6985
        %v6987 = vadd.f32 %v6986, 0.112945676
        %v6988 = vmul.f32 %v6970, %v6987
        %v6989 = vadd.f32 %v6988, 0.4994258
        %v6990 = vmul.f32 %v6970, %v6989
        %v6991 = vadd.f32 %v6990, 1.0
        %v6992 = vrcp.pop %v6991
        %v6993 = vmul.f32 %v6991, %v6992
        %v6994 = vsub.f32 1.0, %v6993
        %v6995 = vmul.f32 %v6992, %v6994
        %v6996 = vadd.f32 %v6992, %v6995
        %vm6997 = vweird.f32 %v6991
        %vm6998 = vweird.f32 %v6992
        %vm6999 = vmor %vm6997, %vm6998
        %v7000 = vsel %vm6999, %v6992, %v6996
        %v7001 = vand.u32 2147483647, %v6991
        %vm7002 = vcmp.eq.f32.partialorder %v7001, 8.507059e+37
        %v7003 = vand.u32 %v6991, 2147483648
        %v7004 = vor.u32 1.1754944e-38, %v7003
        %v7005 = vsel %vm7002, %v7004, %v7000
        %v7006 = vmul.f32 %v6981, %v7005
        %v7007 = vmin.f32 %v7006, 1.0
        %v7008 = vmax.f32 %v7007, -1.0
        %v7009 = vmul.f32 %v4101, %v4101
        %v7010 = vmin.f32 16.0, %v7009
        %v7011 = vmul.f32 %v7010, 2.1237322e-06
        %v7012 = vadd.f32 %v7011, 0.00028619796
        %v7013 = vmul.f32 %v7010, %v7012
        %v7014 = vadd.f32 %v7013, 0.0036580483
        %v7015 = vmul.f32 %v7010, %v7014
        %v7016 = vadd.f32 %v7015, 0.05243302
        %v7017 = vmul.f32 %v7010, %v7016
        %v7018 = vadd.f32 %v7017, 0.18741608
        %v7019 = vmul.f32 %v7010, %v7018
        %v7020 = vadd.f32 %v7019, 1.1283791
        %v7021 = vmul.f32 %v4101, %v7020
        %v7022 = vmul.f32 %v7010, 3.8918573e-05
        %v7023 = vadd.f32 %v7022, 0.001143296
        %v7024 = vmul.f32 %v7010, %v7023
        %v7025 = vadd.f32 %v7024, 0.014752088
        %v7026 = vmul.f32 %v7010, %v7025
        %v7027 = vadd.f32 %v7026, 0.112945676
        %v7028 = vmul.f32 %v7010, %v7027
        %v7029 = vadd.f32 %v7028, 0.4994258
        %v7030 = vmul.f32 %v7010, %v7029
        %v7031 = vadd.f32 %v7030, 1.0
        %v7032 = vrcp.pop %v7031
        %v7033 = vmul.f32 %v7031, %v7032
        %v7034 = vsub.f32 1.0, %v7033
        %v7035 = vmul.f32 %v7032, %v7034
        %v7036 = vadd.f32 %v7032, %v7035
        %vm7037 = vweird.f32 %v7031
        %vm7038 = vweird.f32 %v7032
        %vm7039 = vmor %vm7037, %vm7038
        %v7040 = vsel %vm7039, %v7032, %v7036
        %v7041 = vand.u32 2147483647, %v7031
        %vm7042 = vcmp.eq.f32.partialorder %v7041, 8.507059e+37
        %v7043 = vand.u32 %v7031, 2147483648
        %v7044 = vor.u32 1.1754944e-38, %v7043
        %v7045 = vsel %vm7042, %v7044, %v7040
        %v7046 = vmul.f32 %v7021, %v7045
        %v7047 = vmin.f32 %v7046, 1.0
        %v7048 = vmax.f32 %v7047, -1.0
        %v7049 = vmul.f32 %v4102, %v4102
        %v7050 = vmin.f32 16.0, %v7049
        %v7051 = vmul.f32 %v7050, 2.1237322e-06
        %v7052 = vadd.f32 %v7051, 0.00028619796
        %v7053 = vmul.f32 %v7050, %v7052
        %v7054 = vadd.f32 %v7053, 0.0036580483
        %v7055 = vmul.f32 %v7050, %v7054
        %v7056 = vadd.f32 %v7055, 0.05243302
        %v7057 = vmul.f32 %v7050, %v7056
        %v7058 = vadd.f32 %v7057, 0.18741608
        %v7059 = vmul.f32 %v7050, %v7058
        %v7060 = vadd.f32 %v7059, 1.1283791
        %v7061 = vmul.f32 %v4102, %v7060
        %v7062 = vmul.f32 %v7050, 3.8918573e-05
        %v7063 = vadd.f32 %v7062, 0.001143296
        %v7064 = vmul.f32 %v7050, %v7063
        %v7065 = vadd.f32 %v7064, 0.014752088
        %v7066 = vmul.f32 %v7050, %v7065
        %v7067 = vadd.f32 %v7066, 0.112945676
        %v7068 = vmul.f32 %v7050, %v7067
        %v7069 = vadd.f32 %v7068, 0.4994258
        %v7070 = vmul.f32 %v7050, %v7069
        %v7071 = vadd.f32 %v7070, 1.0
        %v7072 = vrcp.pop %v7071
        %v7073 = vmul.f32 %v7071, %v7072
        %v7074 = vsub.f32 1.0, %v7073
        %v7075 = vmul.f32 %v7072, %v7074
        %v7076 = vadd.f32 %v7072, %v7075
        %vm7077 = vweird.f32 %v7071
        %vm7078 = vweird.f32 %v7072
        %vm7079 = vmor %vm7077, %vm7078
        %v7080 = vsel %vm7079, %v7072, %v7076
        %v7081 = vand.u32 2147483647, %v7071
        %vm7082 = vcmp.eq.f32.partialorder %v7081, 8.507059e+37
        %v7083 = vand.u32 %v7071, 2147483648
        %v7084 = vor.u32 1.1754944e-38, %v7083
        %v7085 = vsel %vm7082, %v7084, %v7080
        %v7086 = vmul.f32 %v7061, %v7085
        %v7087 = vmin.f32 %v7086, 1.0
        %v7088 = vmax.f32 %v7087, -1.0
        %v7089 = vmul.f32 %v4103, %v4103
        %v7090 = vmin.f32 16.0, %v7089
        %v7091 = vmul.f32 %v7090, 2.1237322e-06
        %v7092 = vadd.f32 %v7091, 0.00028619796
        %v7093 = vmul.f32 %v7090, %v7092
        %v7094 = vadd.f32 %v7093, 0.0036580483
        %v7095 = vmul.f32 %v7090, %v7094
        %v7096 = vadd.f32 %v7095, 0.05243302
        %v7097 = vmul.f32 %v7090, %v7096
        %v7098 = vadd.f32 %v7097, 0.18741608
        %v7099 = vmul.f32 %v7090, %v7098
        %v7100 = vadd.f32 %v7099, 1.1283791
        %v7101 = vmul.f32 %v4103, %v7100
        %v7102 = vmul.f32 %v7090, 3.8918573e-05
        %v7103 = vadd.f32 %v7102, 0.001143296
        %v7104 = vmul.f32 %v7090, %v7103
        %v7105 = vadd.f32 %v7104, 0.014752088
        %v7106 = vmul.f32 %v7090, %v7105
        %v7107 = vadd.f32 %v7106, 0.112945676
        %v7108 = vmul.f32 %v7090, %v7107
        %v7109 = vadd.f32 %v7108, 0.4994258
        %v7110 = vmul.f32 %v7090, %v7109
        %v7111 = vadd.f32 %v7110, 1.0
        %v7112 = vrcp.pop %v7111
        %v7113 = vmul.f32 %v7111, %v7112
        %v7114 = vsub.f32 1.0, %v7113
        %v7115 = vmul.f32 %v7112, %v7114
        %v7116 = vadd.f32 %v7112, %v7115
        %vm7117 = vweird.f32 %v7111
        %vm7118 = vweird.f32 %v7112
        %vm7119 = vmor %vm7117, %vm7118
        %v7120 = vsel %vm7119, %v7112, %v7116
        %v7121 = vand.u32 2147483647, %v7111
        %vm7122 = vcmp.eq.f32.partialorder %v7121, 8.507059e+37
        %v7123 = vand.u32 %v7111, 2147483648
        %v7124 = vor.u32 1.1754944e-38, %v7123
        %v7125 = vsel %vm7122, %v7124, %v7120
        %v7126 = vmul.f32 %v7101, %v7125
        %v7127 = vmin.f32 %v7126, 1.0
        %v7128 = vmax.f32 %v7127, -1.0
        %v7129 = vmul.f32 %v4104, %v4104
        %v7130 = vmin.f32 16.0, %v7129
        %v7131 = vmul.f32 %v7130, 2.1237322e-06
        %v7132 = vadd.f32 %v7131, 0.00028619796
        %v7133 = vmul.f32 %v7130, %v7132
        %v7134 = vadd.f32 %v7133, 0.0036580483
        %v7135 = vmul.f32 %v7130, %v7134
        %v7136 = vadd.f32 %v7135, 0.05243302
        %v7137 = vmul.f32 %v7130, %v7136
        %v7138 = vadd.f32 %v7137, 0.18741608
        %v7139 = vmul.f32 %v7130, %v7138
        %v7140 = vadd.f32 %v7139, 1.1283791
        %v7141 = vmul.f32 %v4104, %v7140
        %v7142 = vmul.f32 %v7130, 3.8918573e-05
        %v7143 = vadd.f32 %v7142, 0.001143296
        %v7144 = vmul.f32 %v7130, %v7143
        %v7145 = vadd.f32 %v7144, 0.014752088
        %v7146 = vmul.f32 %v7130, %v7145
        %v7147 = vadd.f32 %v7146, 0.112945676
        %v7148 = vmul.f32 %v7130, %v7147
        %v7149 = vadd.f32 %v7148, 0.4994258
        %v7150 = vmul.f32 %v7130, %v7149
        %v7151 = vadd.f32 %v7150, 1.0
        %v7152 = vrcp.pop %v7151
        %v7153 = vmul.f32 %v7151, %v7152
        %v7154 = vsub.f32 1.0, %v7153
        %v7155 = vmul.f32 %v7152, %v7154
        %v7156 = vadd.f32 %v7152, %v7155
        %vm7157 = vweird.f32 %v7151
        %vm7158 = vweird.f32 %v7152
        %vm7159 = vmor %vm7157, %vm7158
        %v7160 = vsel %vm7159, %v7152, %v7156
        %v7161 = vand.u32 2147483647, %v7151
        %vm7162 = vcmp.eq.f32.partialorder %v7161, 8.507059e+37
        %v7163 = vand.u32 %v7151, 2147483648
        %v7164 = vor.u32 1.1754944e-38, %v7163
        %v7165 = vsel %vm7162, %v7164, %v7160
        %v7166 = vmul.f32 %v7141, %v7165
        %v7167 = vmin.f32 %v7166, 1.0
        %v7168 = vmax.f32 %v7167, -1.0
        %v7169 = vmul.f32 %v4105, %v4105
        %v7170 = vmin.f32 16.0, %v7169
        %v7171 = vmul.f32 %v7170, 2.1237322e-06
        %v7172 = vadd.f32 %v7171, 0.00028619796
        %v7173 = vmul.f32 %v7170, %v7172
        %v7174 = vadd.f32 %v7173, 0.0036580483
        %v7175 = vmul.f32 %v7170, %v7174
        %v7176 = vadd.f32 %v7175, 0.05243302
        %v7177 = vmul.f32 %v7170, %v7176
        %v7178 = vadd.f32 %v7177, 0.18741608
        %v7179 = vmul.f32 %v7170, %v7178
        %v7180 = vadd.f32 %v7179, 1.1283791
        %v7181 = vmul.f32 %v4105, %v7180
        %v7182 = vmul.f32 %v7170, 3.8918573e-05
        %v7183 = vadd.f32 %v7182, 0.001143296
        %v7184 = vmul.f32 %v7170, %v7183
        %v7185 = vadd.f32 %v7184, 0.014752088
        %v7186 = vmul.f32 %v7170, %v7185
        %v7187 = vadd.f32 %v7186, 0.112945676
        %v7188 = vmul.f32 %v7170, %v7187
        %v7189 = vadd.f32 %v7188, 0.4994258
        %v7190 = vmul.f32 %v7170, %v7189
        %v7191 = vadd.f32 %v7190, 1.0
        %v7192 = vrcp.pop %v7191
        %v7193 = vmul.f32 %v7191, %v7192
        %v7194 = vsub.f32 1.0, %v7193
        %v7195 = vmul.f32 %v7192, %v7194
        %v7196 = vadd.f32 %v7192, %v7195
        %vm7197 = vweird.f32 %v7191
        %vm7198 = vweird.f32 %v7192
        %vm7199 = vmor %vm7197, %vm7198
        %v7200 = vsel %vm7199, %v7192, %v7196
        %v7201 = vand.u32 2147483647, %v7191
        %vm7202 = vcmp.eq.f32.partialorder %v7201, 8.507059e+37
        %v7203 = vand.u32 %v7191, 2147483648
        %v7204 = vor.u32 1.1754944e-38, %v7203
        %v7205 = vsel %vm7202, %v7204, %v7200
        %v7206 = vmul.f32 %v7181, %v7205
        %v7207 = vmin.f32 %v7206, 1.0
        %v7208 = vmax.f32 %v7207, -1.0
        %v7209 = vmul.f32 %v4106, %v4106
        %v7210 = vmin.f32 16.0, %v7209
        %v7211 = vmul.f32 %v7210, 2.1237322e-06
        %v7212 = vadd.f32 %v7211, 0.00028619796
        %v7213 = vmul.f32 %v7210, %v7212
        %v7214 = vadd.f32 %v7213, 0.0036580483
        %v7215 = vmul.f32 %v7210, %v7214
        %v7216 = vadd.f32 %v7215, 0.05243302
        %v7217 = vmul.f32 %v7210, %v7216
        %v7218 = vadd.f32 %v7217, 0.18741608
        %v7219 = vmul.f32 %v7210, %v7218
        %v7220 = vadd.f32 %v7219, 1.1283791
        %v7221 = vmul.f32 %v4106, %v7220
        %v7222 = vmul.f32 %v7210, 3.8918573e-05
        %v7223 = vadd.f32 %v7222, 0.001143296
        %v7224 = vmul.f32 %v7210, %v7223
        %v7225 = vadd.f32 %v7224, 0.014752088
        %v7226 = vmul.f32 %v7210, %v7225
        %v7227 = vadd.f32 %v7226, 0.112945676
        %v7228 = vmul.f32 %v7210, %v7227
        %v7229 = vadd.f32 %v7228, 0.4994258
        %v7230 = vmul.f32 %v7210, %v7229
        %v7231 = vadd.f32 %v7230, 1.0
        %v7232 = vrcp.pop %v7231
        %v7233 = vmul.f32 %v7231, %v7232
        %v7234 = vsub.f32 1.0, %v7233
        %v7235 = vmul.f32 %v7232, %v7234
        %v7236 = vadd.f32 %v7232, %v7235
        %vm7237 = vweird.f32 %v7231
        %vm7238 = vweird.f32 %v7232
        %vm7239 = vmor %vm7237, %vm7238
        %v7240 = vsel %vm7239, %v7232, %v7236
        %v7241 = vand.u32 2147483647, %v7231
        %vm7242 = vcmp.eq.f32.partialorder %v7241, 8.507059e+37
        %v7243 = vand.u32 %v7231, 2147483648
        %v7244 = vor.u32 1.1754944e-38, %v7243
        %v7245 = vsel %vm7242, %v7244, %v7240
        %v7246 = vmul.f32 %v7221, %v7245
        %v7247 = vmin.f32 %v7246, 1.0
        %v7248 = vmax.f32 %v7247, -1.0
        %v7249 = vmul.f32 %v4107, %v4107
        %v7250 = vmin.f32 16.0, %v7249
        %v7251 = vmul.f32 %v7250, 2.1237322e-06
        %v7252 = vadd.f32 %v7251, 0.00028619796
        %v7253 = vmul.f32 %v7250, %v7252
        %v7254 = vadd.f32 %v7253, 0.0036580483
        %v7255 = vmul.f32 %v7250, %v7254
        %v7256 = vadd.f32 %v7255, 0.05243302
        %v7257 = vmul.f32 %v7250, %v7256
        %v7258 = vadd.f32 %v7257, 0.18741608
        %v7259 = vmul.f32 %v7250, %v7258
        %v7260 = vadd.f32 %v7259, 1.1283791
        %v7261 = vmul.f32 %v4107, %v7260
        %v7262 = vmul.f32 %v7250, 3.8918573e-05
        %v7263 = vadd.f32 %v7262, 0.001143296
        %v7264 = vmul.f32 %v7250, %v7263
        %v7265 = vadd.f32 %v7264, 0.014752088
        %v7266 = vmul.f32 %v7250, %v7265
        %v7267 = vadd.f32 %v7266, 0.112945676
        %v7268 = vmul.f32 %v7250, %v7267
        %v7269 = vadd.f32 %v7268, 0.4994258
        %v7270 = vmul.f32 %v7250, %v7269
        %v7271 = vadd.f32 %v7270, 1.0
        %v7272 = vrcp.pop %v7271
        %v7273 = vmul.f32 %v7271, %v7272
        %v7274 = vsub.f32 1.0, %v7273
        %v7275 = vmul.f32 %v7272, %v7274
        %v7276 = vadd.f32 %v7272, %v7275
        %vm7277 = vweird.f32 %v7271
        %vm7278 = vweird.f32 %v7272
        %vm7279 = vmor %vm7277, %vm7278
        %v7280 = vsel %vm7279, %v7272, %v7276
        %v7281 = vand.u32 2147483647, %v7271
        %vm7282 = vcmp.eq.f32.partialorder %v7281, 8.507059e+37
        %v7283 = vand.u32 %v7271, 2147483648
        %v7284 = vor.u32 1.1754944e-38, %v7283
        %v7285 = vsel %vm7282, %v7284, %v7280
        %v7286 = vmul.f32 %v7261, %v7285
        %v7287 = vmin.f32 %v7286, 1.0
        %v7288 = vmax.f32 %v7287, -1.0
        %v7289 = vmul.f32 %v4108, %v4108
        %v7290 = vmin.f32 16.0, %v7289
        %v7291 = vmul.f32 %v7290, 2.1237322e-06
        %v7292 = vadd.f32 %v7291, 0.00028619796
        %v7293 = vmul.f32 %v7290, %v7292
        %v7294 = vadd.f32 %v7293, 0.0036580483
        %v7295 = vmul.f32 %v7290, %v7294
        %v7296 = vadd.f32 %v7295, 0.05243302
        %v7297 = vmul.f32 %v7290, %v7296
        %v7298 = vadd.f32 %v7297, 0.18741608
        %v7299 = vmul.f32 %v7290, %v7298
        %v7300 = vadd.f32 %v7299, 1.1283791
        %v7301 = vmul.f32 %v4108, %v7300
        %v7302 = vmul.f32 %v7290, 3.8918573e-05
        %v7303 = vadd.f32 %v7302, 0.001143296
        %v7304 = vmul.f32 %v7290, %v7303
        %v7305 = vadd.f32 %v7304, 0.014752088
        %v7306 = vmul.f32 %v7290, %v7305
        %v7307 = vadd.f32 %v7306, 0.112945676
        %v7308 = vmul.f32 %v7290, %v7307
        %v7309 = vadd.f32 %v7308, 0.4994258
        %v7310 = vmul.f32 %v7290, %v7309
        %v7311 = vadd.f32 %v7310, 1.0
        %v7312 = vrcp.pop %v7311
        %v7313 = vmul.f32 %v7311, %v7312
        %v7314 = vsub.f32 1.0, %v7313
        %v7315 = vmul.f32 %v7312, %v7314
        %v7316 = vadd.f32 %v7312, %v7315
        %vm7317 = vweird.f32 %v7311
        %vm7318 = vweird.f32 %v7312
        %vm7319 = vmor %vm7317, %vm7318
        %v7320 = vsel %vm7319, %v7312, %v7316
        %v7321 = vand.u32 2147483647, %v7311
        %vm7322 = vcmp.eq.f32.partialorder %v7321, 8.507059e+37
        %v7323 = vand.u32 %v7311, 2147483648
        %v7324 = vor.u32 1.1754944e-38, %v7323
        %v7325 = vsel %vm7322, %v7324, %v7320
        %v7326 = vmul.f32 %v7301, %v7325
        %v7327 = vmin.f32 %v7326, 1.0
        %v7328 = vmax.f32 %v7327, -1.0
        %v7329 = vmul.f32 %v4109, %v4109
        %v7330 = vmin.f32 16.0, %v7329
        %v7331 = vmul.f32 %v7330, 2.1237322e-06
        %v7332 = vadd.f32 %v7331, 0.00028619796
        %v7333 = vmul.f32 %v7330, %v7332
        %v7334 = vadd.f32 %v7333, 0.0036580483
        %v7335 = vmul.f32 %v7330, %v7334
        %v7336 = vadd.f32 %v7335, 0.05243302
        %v7337 = vmul.f32 %v7330, %v7336
        %v7338 = vadd.f32 %v7337, 0.18741608
        %v7339 = vmul.f32 %v7330, %v7338
        %v7340 = vadd.f32 %v7339, 1.1283791
        %v7341 = vmul.f32 %v4109, %v7340
        %v7342 = vmul.f32 %v7330, 3.8918573e-05
        %v7343 = vadd.f32 %v7342, 0.001143296
        %v7344 = vmul.f32 %v7330, %v7343
        %v7345 = vadd.f32 %v7344, 0.014752088
        %v7346 = vmul.f32 %v7330, %v7345
        %v7347 = vadd.f32 %v7346, 0.112945676
        %v7348 = vmul.f32 %v7330, %v7347
        %v7349 = vadd.f32 %v7348, 0.4994258
        %v7350 = vmul.f32 %v7330, %v7349
        %v7351 = vadd.f32 %v7350, 1.0
        %v7352 = vrcp.pop %v7351
        %v7353 = vmul.f32 %v7351, %v7352
        %v7354 = vsub.f32 1.0, %v7353
        %v7355 = vmul.f32 %v7352, %v7354
        %v7356 = vadd.f32 %v7352, %v7355
        %vm7357 = vweird.f32 %v7351
        %vm7358 = vweird.f32 %v7352
        %vm7359 = vmor %vm7357, %vm7358
        %v7360 = vsel %vm7359, %v7352, %v7356
        %v7361 = vand.u32 2147483647, %v7351
        %vm7362 = vcmp.eq.f32.partialorder %v7361, 8.507059e+37
        %v7363 = vand.u32 %v7351, 2147483648
        %v7364 = vor.u32 1.1754944e-38, %v7363
        %v7365 = vsel %vm7362, %v7364, %v7360
        %v7366 = vmul.f32 %v7341, %v7365
        %v7367 = vmin.f32 %v7366, 1.0
        %v7368 = vmax.f32 %v7367, -1.0
        %v7369 = vmul.f32 %v4110, %v4110
        %v7370 = vmin.f32 16.0, %v7369
        %v7371 = vmul.f32 %v7370, 2.1237322e-06
        %v7372 = vadd.f32 %v7371, 0.00028619796
        %v7373 = vmul.f32 %v7370, %v7372
        %v7374 = vadd.f32 %v7373, 0.0036580483
        %v7375 = vmul.f32 %v7370, %v7374
        %v7376 = vadd.f32 %v7375, 0.05243302
        %v7377 = vmul.f32 %v7370, %v7376
        %v7378 = vadd.f32 %v7377, 0.18741608
        %v7379 = vmul.f32 %v7370, %v7378
        %v7380 = vadd.f32 %v7379, 1.1283791
        %v7381 = vmul.f32 %v4110, %v7380
        %v7382 = vmul.f32 %v7370, 3.8918573e-05
        %v7383 = vadd.f32 %v7382, 0.001143296
        %v7384 = vmul.f32 %v7370, %v7383
        %v7385 = vadd.f32 %v7384, 0.014752088
        %v7386 = vmul.f32 %v7370, %v7385
        %v7387 = vadd.f32 %v7386, 0.112945676
        %v7388 = vmul.f32 %v7370, %v7387
        %v7389 = vadd.f32 %v7388, 0.4994258
        %v7390 = vmul.f32 %v7370, %v7389
        %v7391 = vadd.f32 %v7390, 1.0
        %v7392 = vrcp.pop %v7391
        %v7393 = vmul.f32 %v7391, %v7392
        %v7394 = vsub.f32 1.0, %v7393
        %v7395 = vmul.f32 %v7392, %v7394
        %v7396 = vadd.f32 %v7392, %v7395
        %vm7397 = vweird.f32 %v7391
        %vm7398 = vweird.f32 %v7392
        %vm7399 = vmor %vm7397, %vm7398
        %v7400 = vsel %vm7399, %v7392, %v7396
        %v7401 = vand.u32 2147483647, %v7391
        %vm7402 = vcmp.eq.f32.partialorder %v7401, 8.507059e+37
        %v7403 = vand.u32 %v7391, 2147483648
        %v7404 = vor.u32 1.1754944e-38, %v7403
        %v7405 = vsel %vm7402, %v7404, %v7400
        %v7406 = vmul.f32 %v7381, %v7405
        %v7407 = vmin.f32 %v7406, 1.0
        %v7408 = vmax.f32 %v7407, -1.0
        %v7409 = vmul.f32 %v4111, %v4111
        %v7410 = vmin.f32 16.0, %v7409
        %v7411 = vmul.f32 %v7410, 2.1237322e-06
        %v7412 = vadd.f32 %v7411, 0.00028619796
        %v7413 = vmul.f32 %v7410, %v7412
        %v7414 = vadd.f32 %v7413, 0.0036580483
        %v7415 = vmul.f32 %v7410, %v7414
        %v7416 = vadd.f32 %v7415, 0.05243302
        %v7417 = vmul.f32 %v7410, %v7416
        %v7418 = vadd.f32 %v7417, 0.18741608
        %v7419 = vmul.f32 %v7410, %v7418
        %v7420 = vadd.f32 %v7419, 1.1283791
        %v7421 = vmul.f32 %v4111, %v7420
        %v7422 = vmul.f32 %v7410, 3.8918573e-05
        %v7423 = vadd.f32 %v7422, 0.001143296
        %v7424 = vmul.f32 %v7410, %v7423
        %v7425 = vadd.f32 %v7424, 0.014752088
        %v7426 = vmul.f32 %v7410, %v7425
        %v7427 = vadd.f32 %v7426, 0.112945676
        %v7428 = vmul.f32 %v7410, %v7427
        %v7429 = vadd.f32 %v7428, 0.4994258
        %v7430 = vmul.f32 %v7410, %v7429
        %v7431 = vadd.f32 %v7430, 1.0
        %v7432 = vrcp.pop %v7431
        %v7433 = vmul.f32 %v7431, %v7432
        %v7434 = vsub.f32 1.0, %v7433
        %v7435 = vmul.f32 %v7432, %v7434
        %v7436 = vadd.f32 %v7432, %v7435
        %vm7437 = vweird.f32 %v7431
        %vm7438 = vweird.f32 %v7432
        %vm7439 = vmor %vm7437, %vm7438
        %v7440 = vsel %vm7439, %v7432, %v7436
        %v7441 = vand.u32 2147483647, %v7431
        %vm7442 = vcmp.eq.f32.partialorder %v7441, 8.507059e+37
        %v7443 = vand.u32 %v7431, 2147483648
        %v7444 = vor.u32 1.1754944e-38, %v7443
        %v7445 = vsel %vm7442, %v7444, %v7440
        %v7446 = vmul.f32 %v7421, %v7445
        %v7447 = vmin.f32 %v7446, 1.0
        %v7448 = vmax.f32 %v7447, -1.0
        %v7449 = vmul.f32 %v4112, %v4112
        %v7450 = vmin.f32 16.0, %v7449
        %v7451 = vmul.f32 %v7450, 2.1237322e-06
        %v7452 = vadd.f32 %v7451, 0.00028619796
        %v7453 = vmul.f32 %v7450, %v7452
        %v7454 = vadd.f32 %v7453, 0.0036580483
        %v7455 = vmul.f32 %v7450, %v7454
        %v7456 = vadd.f32 %v7455, 0.05243302
        %v7457 = vmul.f32 %v7450, %v7456
        %v7458 = vadd.f32 %v7457, 0.18741608
        %v7459 = vmul.f32 %v7450, %v7458
        %v7460 = vadd.f32 %v7459, 1.1283791
        %v7461 = vmul.f32 %v4112, %v7460
        %v7462 = vmul.f32 %v7450, 3.8918573e-05
        %v7463 = vadd.f32 %v7462, 0.001143296
        %v7464 = vmul.f32 %v7450, %v7463
        %v7465 = vadd.f32 %v7464, 0.014752088
        %v7466 = vmul.f32 %v7450, %v7465
        %v7467 = vadd.f32 %v7466, 0.112945676
        %v7468 = vmul.f32 %v7450, %v7467
        %v7469 = vadd.f32 %v7468, 0.4994258
        %v7470 = vmul.f32 %v7450, %v7469
        %v7471 = vadd.f32 %v7470, 1.0
        %v7472 = vrcp.pop %v7471
        %v7473 = vmul.f32 %v7471, %v7472
        %v7474 = vsub.f32 1.0, %v7473
        %v7475 = vmul.f32 %v7472, %v7474
        %v7476 = vadd.f32 %v7472, %v7475
        %vm7477 = vweird.f32 %v7471
        %vm7478 = vweird.f32 %v7472
        %vm7479 = vmor %vm7477, %vm7478
        %v7480 = vsel %vm7479, %v7472, %v7476
        %v7481 = vand.u32 2147483647, %v7471
        %vm7482 = vcmp.eq.f32.partialorder %v7481, 8.507059e+37
        %v7483 = vand.u32 %v7471, 2147483648
        %v7484 = vor.u32 1.1754944e-38, %v7483
        %v7485 = vsel %vm7482, %v7484, %v7480
        %v7486 = vmul.f32 %v7461, %v7485
        %v7487 = vmin.f32 %v7486, 1.0
        %v7488 = vmax.f32 %v7487, -1.0
        %v7489 = vmul.f32 %v4113, %v4113
        %v7490 = vmin.f32 16.0, %v7489
        %v7491 = vmul.f32 %v7490, 2.1237322e-06
        %v7492 = vadd.f32 %v7491, 0.00028619796
        %v7493 = vmul.f32 %v7490, %v7492
        %v7494 = vadd.f32 %v7493, 0.0036580483
        %v7495 = vmul.f32 %v7490, %v7494
        %v7496 = vadd.f32 %v7495, 0.05243302
        %v7497 = vmul.f32 %v7490, %v7496
        %v7498 = vadd.f32 %v7497, 0.18741608
        %v7499 = vmul.f32 %v7490, %v7498
        %v7500 = vadd.f32 %v7499, 1.1283791
        %v7501 = vmul.f32 %v4113, %v7500
        %v7502 = vmul.f32 %v7490, 3.8918573e-05
        %v7503 = vadd.f32 %v7502, 0.001143296
        %v7504 = vmul.f32 %v7490, %v7503
        %v7505 = vadd.f32 %v7504, 0.014752088
        %v7506 = vmul.f32 %v7490, %v7505
        %v7507 = vadd.f32 %v7506, 0.112945676
        %v7508 = vmul.f32 %v7490, %v7507
        %v7509 = vadd.f32 %v7508, 0.4994258
        %v7510 = vmul.f32 %v7490, %v7509
        %v7511 = vadd.f32 %v7510, 1.0
        %v7512 = vrcp.pop %v7511
        %v7513 = vmul.f32 %v7511, %v7512
        %v7514 = vsub.f32 1.0, %v7513
        %v7515 = vmul.f32 %v7512, %v7514
        %v7516 = vadd.f32 %v7512, %v7515
        %vm7517 = vweird.f32 %v7511
        %vm7518 = vweird.f32 %v7512
        %vm7519 = vmor %vm7517, %vm7518
        %v7520 = vsel %vm7519, %v7512, %v7516
        %v7521 = vand.u32 2147483647, %v7511
        %vm7522 = vcmp.eq.f32.partialorder %v7521, 8.507059e+37
        %v7523 = vand.u32 %v7511, 2147483648
        %v7524 = vor.u32 1.1754944e-38, %v7523
        %v7525 = vsel %vm7522, %v7524, %v7520
        %v7526 = vmul.f32 %v7501, %v7525
        %v7527 = vmin.f32 %v7526, 1.0
        %v7528 = vmax.f32 %v7527, -1.0
        %v7529 = vmul.f32 %v4114, %v4114
        %v7530 = vmin.f32 16.0, %v7529
        %v7531 = vmul.f32 %v7530, 2.1237322e-06
        %v7532 = vadd.f32 %v7531, 0.00028619796
        %v7533 = vmul.f32 %v7530, %v7532
        %v7534 = vadd.f32 %v7533, 0.0036580483
        %v7535 = vmul.f32 %v7530, %v7534
        %v7536 = vadd.f32 %v7535, 0.05243302
        %v7537 = vmul.f32 %v7530, %v7536
        %v7538 = vadd.f32 %v7537, 0.18741608
        %v7539 = vmul.f32 %v7530, %v7538
        %v7540 = vadd.f32 %v7539, 1.1283791
        %v7541 = vmul.f32 %v4114, %v7540
        %v7542 = vmul.f32 %v7530, 3.8918573e-05
        %v7543 = vadd.f32 %v7542, 0.001143296
        %v7544 = vmul.f32 %v7530, %v7543
        %v7545 = vadd.f32 %v7544, 0.014752088
        %v7546 = vmul.f32 %v7530, %v7545
        %v7547 = vadd.f32 %v7546, 0.112945676
        %v7548 = vmul.f32 %v7530, %v7547
        %v7549 = vadd.f32 %v7548, 0.4994258
        %v7550 = vmul.f32 %v7530, %v7549
        %v7551 = vadd.f32 %v7550, 1.0
        %v7552 = vrcp.pop %v7551
        %v7553 = vmul.f32 %v7551, %v7552
        %v7554 = vsub.f32 1.0, %v7553
        %v7555 = vmul.f32 %v7552, %v7554
        %v7556 = vadd.f32 %v7552, %v7555
        %vm7557 = vweird.f32 %v7551
        %vm7558 = vweird.f32 %v7552
        %vm7559 = vmor %vm7557, %vm7558
        %v7560 = vsel %vm7559, %v7552, %v7556
        %v7561 = vand.u32 2147483647, %v7551
        %vm7562 = vcmp.eq.f32.partialorder %v7561, 8.507059e+37
        %v7563 = vand.u32 %v7551, 2147483648
        %v7564 = vor.u32 1.1754944e-38, %v7563
        %v7565 = vsel %vm7562, %v7564, %v7560
        %v7566 = vmul.f32 %v7541, %v7565
        %v7567 = vmin.f32 %v7566, 1.0
        %v7568 = vmax.f32 %v7567, -1.0
        %v7569 = vmul.f32 %v4115, %v4115
        %v7570 = vmin.f32 16.0, %v7569
        %v7571 = vmul.f32 %v7570, 2.1237322e-06
        %v7572 = vadd.f32 %v7571, 0.00028619796
        %v7573 = vmul.f32 %v7570, %v7572
        %v7574 = vadd.f32 %v7573, 0.0036580483
        %v7575 = vmul.f32 %v7570, %v7574
        %v7576 = vadd.f32 %v7575, 0.05243302
        %v7577 = vmul.f32 %v7570, %v7576
        %v7578 = vadd.f32 %v7577, 0.18741608
        %v7579 = vmul.f32 %v7570, %v7578
        %v7580 = vadd.f32 %v7579, 1.1283791
        %v7581 = vmul.f32 %v4115, %v7580
        %v7582 = vmul.f32 %v7570, 3.8918573e-05
        %v7583 = vadd.f32 %v7582, 0.001143296
        %v7584 = vmul.f32 %v7570, %v7583
        %v7585 = vadd.f32 %v7584, 0.014752088
        %v7586 = vmul.f32 %v7570, %v7585
        %v7587 = vadd.f32 %v7586, 0.112945676
        %v7588 = vmul.f32 %v7570, %v7587
        %v7589 = vadd.f32 %v7588, 0.4994258
        %v7590 = vmul.f32 %v7570, %v7589
        %v7591 = vadd.f32 %v7590, 1.0
        %v7592 = vrcp.pop %v7591
        %v7593 = vmul.f32 %v7591, %v7592
        %v7594 = vsub.f32 1.0, %v7593
        %v7595 = vmul.f32 %v7592, %v7594
        %v7596 = vadd.f32 %v7592, %v7595
        %vm7597 = vweird.f32 %v7591
        %vm7598 = vweird.f32 %v7592
        %vm7599 = vmor %vm7597, %vm7598
        %v7600 = vsel %vm7599, %v7592, %v7596
        %v7601 = vand.u32 2147483647, %v7591
        %vm7602 = vcmp.eq.f32.partialorder %v7601, 8.507059e+37
        %v7603 = vand.u32 %v7591, 2147483648
        %v7604 = vor.u32 1.1754944e-38, %v7603
        %v7605 = vsel %vm7602, %v7604, %v7600
        %v7606 = vmul.f32 %v7581, %v7605
        %v7607 = vmin.f32 %v7606, 1.0
        %v7608 = vmax.f32 %v7607, -1.0
        %v7609 = vmul.f32 %v4116, %v4116
        %v7610 = vmin.f32 16.0, %v7609
        %v7611 = vmul.f32 %v7610, 2.1237322e-06
        %v7612 = vadd.f32 %v7611, 0.00028619796
        %v7613 = vmul.f32 %v7610, %v7612
        %v7614 = vadd.f32 %v7613, 0.0036580483
        %v7615 = vmul.f32 %v7610, %v7614
        %v7616 = vadd.f32 %v7615, 0.05243302
        %v7617 = vmul.f32 %v7610, %v7616
        %v7618 = vadd.f32 %v7617, 0.18741608
        %v7619 = vmul.f32 %v7610, %v7618
        %v7620 = vadd.f32 %v7619, 1.1283791
        %v7621 = vmul.f32 %v4116, %v7620
        %v7622 = vmul.f32 %v7610, 3.8918573e-05
        %v7623 = vadd.f32 %v7622, 0.001143296
        %v7624 = vmul.f32 %v7610, %v7623
        %v7625 = vadd.f32 %v7624, 0.014752088
        %v7626 = vmul.f32 %v7610, %v7625
        %v7627 = vadd.f32 %v7626, 0.112945676
        %v7628 = vmul.f32 %v7610, %v7627
        %v7629 = vadd.f32 %v7628, 0.4994258
        %v7630 = vmul.f32 %v7610, %v7629
        %v7631 = vadd.f32 %v7630, 1.0
        %v7632 = vrcp.pop %v7631
        %v7633 = vmul.f32 %v7631, %v7632
        %v7634 = vsub.f32 1.0, %v7633
        %v7635 = vmul.f32 %v7632, %v7634
        %v7636 = vadd.f32 %v7632, %v7635
        %vm7637 = vweird.f32 %v7631
        %vm7638 = vweird.f32 %v7632
        %vm7639 = vmor %vm7637, %vm7638
        %v7640 = vsel %vm7639, %v7632, %v7636
        %v7641 = vand.u32 2147483647, %v7631
        %vm7642 = vcmp.eq.f32.partialorder %v7641, 8.507059e+37
        %v7643 = vand.u32 %v7631, 2147483648
        %v7644 = vor.u32 1.1754944e-38, %v7643
        %v7645 = vsel %vm7642, %v7644, %v7640
        %v7646 = vmul.f32 %v7621, %v7645
        %v7647 = vmin.f32 %v7646, 1.0
        %v7648 = vmax.f32 %v7647, -1.0
        %v7649 = vmul.f32 %v4117, %v4117
        %v7650 = vmin.f32 16.0, %v7649
        %v7651 = vmul.f32 %v7650, 2.1237322e-06
        %v7652 = vadd.f32 %v7651, 0.00028619796
        %v7653 = vmul.f32 %v7650, %v7652
        %v7654 = vadd.f32 %v7653, 0.0036580483
        %v7655 = vmul.f32 %v7650, %v7654
        %v7656 = vadd.f32 %v7655, 0.05243302
        %v7657 = vmul.f32 %v7650, %v7656
        %v7658 = vadd.f32 %v7657, 0.18741608
        %v7659 = vmul.f32 %v7650, %v7658
        %v7660 = vadd.f32 %v7659, 1.1283791
        %v7661 = vmul.f32 %v4117, %v7660
        %v7662 = vmul.f32 %v7650, 3.8918573e-05
        %v7663 = vadd.f32 %v7662, 0.001143296
        %v7664 = vmul.f32 %v7650, %v7663
        %v7665 = vadd.f32 %v7664, 0.014752088
        %v7666 = vmul.f32 %v7650, %v7665
        %v7667 = vadd.f32 %v7666, 0.112945676
        %v7668 = vmul.f32 %v7650, %v7667
        %v7669 = vadd.f32 %v7668, 0.4994258
        %v7670 = vmul.f32 %v7650, %v7669
        %v7671 = vadd.f32 %v7670, 1.0
        %v7672 = vrcp.pop %v7671
        %v7673 = vmul.f32 %v7671, %v7672
        %v7674 = vsub.f32 1.0, %v7673
        %v7675 = vmul.f32 %v7672, %v7674
        %v7676 = vadd.f32 %v7672, %v7675
        %vm7677 = vweird.f32 %v7671
        %vm7678 = vweird.f32 %v7672
        %vm7679 = vmor %vm7677, %vm7678
        %v7680 = vsel %vm7679, %v7672, %v7676
        %v7681 = vand.u32 2147483647, %v7671
        %vm7682 = vcmp.eq.f32.partialorder %v7681, 8.507059e+37
        %v7683 = vand.u32 %v7671, 2147483648
        %v7684 = vor.u32 1.1754944e-38, %v7683
        %v7685 = vsel %vm7682, %v7684, %v7680
        %v7686 = vmul.f32 %v7661, %v7685
        %v7687 = vmin.f32 %v7686, 1.0
        %v7688 = vmax.f32 %v7687, -1.0
        %v7689 = vmul.f32 %v4118, %v4118
        %v7690 = vmin.f32 16.0, %v7689
        %v7691 = vmul.f32 %v7690, 2.1237322e-06
        %v7692 = vadd.f32 %v7691, 0.00028619796
        %v7693 = vmul.f32 %v7690, %v7692
        %v7694 = vadd.f32 %v7693, 0.0036580483
        %v7695 = vmul.f32 %v7690, %v7694
        %v7696 = vadd.f32 %v7695, 0.05243302
        %v7697 = vmul.f32 %v7690, %v7696
        %v7698 = vadd.f32 %v7697, 0.18741608
        %v7699 = vmul.f32 %v7690, %v7698
        %v7700 = vadd.f32 %v7699, 1.1283791
        %v7701 = vmul.f32 %v4118, %v7700
        %v7702 = vmul.f32 %v7690, 3.8918573e-05
        %v7703 = vadd.f32 %v7702, 0.001143296
        %v7704 = vmul.f32 %v7690, %v7703
        %v7705 = vadd.f32 %v7704, 0.014752088
        %v7706 = vmul.f32 %v7690, %v7705
        %v7707 = vadd.f32 %v7706, 0.112945676
        %v7708 = vmul.f32 %v7690, %v7707
        %v7709 = vadd.f32 %v7708, 0.4994258
        %v7710 = vmul.f32 %v7690, %v7709
        %v7711 = vadd.f32 %v7710, 1.0
        %v7712 = vrcp.pop %v7711
        %v7713 = vmul.f32 %v7711, %v7712
        %v7714 = vsub.f32 1.0, %v7713
        %v7715 = vmul.f32 %v7712, %v7714
        %v7716 = vadd.f32 %v7712, %v7715
        %vm7717 = vweird.f32 %v7711
        %vm7718 = vweird.f32 %v7712
        %vm7719 = vmor %vm7717, %vm7718
        %v7720 = vsel %vm7719, %v7712, %v7716
        %v7721 = vand.u32 2147483647, %v7711
        %vm7722 = vcmp.eq.f32.partialorder %v7721, 8.507059e+37
        %v7723 = vand.u32 %v7711, 2147483648
        %v7724 = vor.u32 1.1754944e-38, %v7723
        %v7725 = vsel %vm7722, %v7724, %v7720
        %v7726 = vmul.f32 %v7701, %v7725
        %v7727 = vmin.f32 %v7726, 1.0
        %v7728 = vmax.f32 %v7727, -1.0
        %v7729 = vmul.f32 %v4119, %v4119
        %v7730 = vmin.f32 16.0, %v7729
        %v7731 = vmul.f32 %v7730, 2.1237322e-06
        %v7732 = vadd.f32 %v7731, 0.00028619796
        %v7733 = vmul.f32 %v7730, %v7732
        %v7734 = vadd.f32 %v7733, 0.0036580483
        %v7735 = vmul.f32 %v7730, %v7734
        %v7736 = vadd.f32 %v7735, 0.05243302
        %v7737 = vmul.f32 %v7730, %v7736
        %v7738 = vadd.f32 %v7737, 0.18741608
        %v7739 = vmul.f32 %v7730, %v7738
        %v7740 = vadd.f32 %v7739, 1.1283791
        %v7741 = vmul.f32 %v4119, %v7740
        %v7742 = vmul.f32 %v7730, 3.8918573e-05
        %v7743 = vadd.f32 %v7742, 0.001143296
        %v7744 = vmul.f32 %v7730, %v7743
        %v7745 = vadd.f32 %v7744, 0.014752088
        %v7746 = vmul.f32 %v7730, %v7745
        %v7747 = vadd.f32 %v7746, 0.112945676
        %v7748 = vmul.f32 %v7730, %v7747
        %v7749 = vadd.f32 %v7748, 0.4994258
        %v7750 = vmul.f32 %v7730, %v7749
        %v7751 = vadd.f32 %v7750, 1.0
        %v7752 = vrcp.pop %v7751
        %v7753 = vmul.f32 %v7751, %v7752
        %v7754 = vsub.f32 1.0, %v7753
        %v7755 = vmul.f32 %v7752, %v7754
        %v7756 = vadd.f32 %v7752, %v7755
        %vm7757 = vweird.f32 %v7751
        %vm7758 = vweird.f32 %v7752
        %vm7759 = vmor %vm7757, %vm7758
        %v7760 = vsel %vm7759, %v7752, %v7756
        %v7761 = vand.u32 2147483647, %v7751
        %vm7762 = vcmp.eq.f32.partialorder %v7761, 8.507059e+37
        %v7763 = vand.u32 %v7751, 2147483648
        %v7764 = vor.u32 1.1754944e-38, %v7763
        %v7765 = vsel %vm7762, %v7764, %v7760
        %v7766 = vmul.f32 %v7741, %v7765
        %v7767 = vmin.f32 %v7766, 1.0
        %v7768 = vmax.f32 %v7767, -1.0
        %v7769 = vmul.f32 %v4120, %v4120
        %v7770 = vmin.f32 16.0, %v7769
        %v7771 = vmul.f32 %v7770, 2.1237322e-06
        %v7772 = vadd.f32 %v7771, 0.00028619796
        %v7773 = vmul.f32 %v7770, %v7772
        %v7774 = vadd.f32 %v7773, 0.0036580483
        %v7775 = vmul.f32 %v7770, %v7774
        %v7776 = vadd.f32 %v7775, 0.05243302
        %v7777 = vmul.f32 %v7770, %v7776
        %v7778 = vadd.f32 %v7777, 0.18741608
        %v7779 = vmul.f32 %v7770, %v7778
        %v7780 = vadd.f32 %v7779, 1.1283791
        %v7781 = vmul.f32 %v4120, %v7780
        %v7782 = vmul.f32 %v7770, 3.8918573e-05
        %v7783 = vadd.f32 %v7782, 0.001143296
        %v7784 = vmul.f32 %v7770, %v7783
        %v7785 = vadd.f32 %v7784, 0.014752088
        %v7786 = vmul.f32 %v7770, %v7785
        %v7787 = vadd.f32 %v7786, 0.112945676
        %v7788 = vmul.f32 %v7770, %v7787
        %v7789 = vadd.f32 %v7788, 0.4994258
        %v7790 = vmul.f32 %v7770, %v7789
        %v7791 = vadd.f32 %v7790, 1.0
        %v7792 = vrcp.pop %v7791
        %v7793 = vmul.f32 %v7791, %v7792
        %v7794 = vsub.f32 1.0, %v7793
        %v7795 = vmul.f32 %v7792, %v7794
        %v7796 = vadd.f32 %v7792, %v7795
        %vm7797 = vweird.f32 %v7791
        %vm7798 = vweird.f32 %v7792
        %vm7799 = vmor %vm7797, %vm7798
        %v7800 = vsel %vm7799, %v7792, %v7796
        %v7801 = vand.u32 2147483647, %v7791
        %vm7802 = vcmp.eq.f32.partialorder %v7801, 8.507059e+37
        %v7803 = vand.u32 %v7791, 2147483648
        %v7804 = vor.u32 1.1754944e-38, %v7803
        %v7805 = vsel %vm7802, %v7804, %v7800
        %v7806 = vmul.f32 %v7781, %v7805
        %v7807 = vmin.f32 %v7806, 1.0
        %v7808 = vmax.f32 %v7807, -1.0
        %v7809 = vmul.f32 %v4121, %v4121
        %v7810 = vmin.f32 16.0, %v7809
        %v7811 = vmul.f32 %v7810, 2.1237322e-06
        %v7812 = vadd.f32 %v7811, 0.00028619796
        %v7813 = vmul.f32 %v7810, %v7812
        %v7814 = vadd.f32 %v7813, 0.0036580483
        %v7815 = vmul.f32 %v7810, %v7814
        %v7816 = vadd.f32 %v7815, 0.05243302
        %v7817 = vmul.f32 %v7810, %v7816
        %v7818 = vadd.f32 %v7817, 0.18741608
        %v7819 = vmul.f32 %v7810, %v7818
        %v7820 = vadd.f32 %v7819, 1.1283791
        %v7821 = vmul.f32 %v4121, %v7820
        %v7822 = vmul.f32 %v7810, 3.8918573e-05
        %v7823 = vadd.f32 %v7822, 0.001143296
        %v7824 = vmul.f32 %v7810, %v7823
        %v7825 = vadd.f32 %v7824, 0.014752088
        %v7826 = vmul.f32 %v7810, %v7825
        %v7827 = vadd.f32 %v7826, 0.112945676
        %v7828 = vmul.f32 %v7810, %v7827
        %v7829 = vadd.f32 %v7828, 0.4994258
        %v7830 = vmul.f32 %v7810, %v7829
        %v7831 = vadd.f32 %v7830, 1.0
        %v7832 = vrcp.pop %v7831
        %v7833 = vmul.f32 %v7831, %v7832
        %v7834 = vsub.f32 1.0, %v7833
        %v7835 = vmul.f32 %v7832, %v7834
        %v7836 = vadd.f32 %v7832, %v7835
        %vm7837 = vweird.f32 %v7831
        %vm7838 = vweird.f32 %v7832
        %vm7839 = vmor %vm7837, %vm7838
        %v7840 = vsel %vm7839, %v7832, %v7836
        %v7841 = vand.u32 2147483647, %v7831
        %vm7842 = vcmp.eq.f32.partialorder %v7841, 8.507059e+37
        %v7843 = vand.u32 %v7831, 2147483648
        %v7844 = vor.u32 1.1754944e-38, %v7843
        %v7845 = vsel %vm7842, %v7844, %v7840
        %v7846 = vmul.f32 %v7821, %v7845
        %v7847 = vmin.f32 %v7846, 1.0
        %v7848 = vmax.f32 %v7847, -1.0
        %v7849 = vmul.f32 %v4122, %v4122
        %v7850 = vmin.f32 16.0, %v7849
        %v7851 = vmul.f32 %v7850, 2.1237322e-06
        %v7852 = vadd.f32 %v7851, 0.00028619796
        %v7853 = vmul.f32 %v7850, %v7852
        %v7854 = vadd.f32 %v7853, 0.0036580483
        %v7855 = vmul.f32 %v7850, %v7854
        %v7856 = vadd.f32 %v7855, 0.05243302
        %v7857 = vmul.f32 %v7850, %v7856
        %v7858 = vadd.f32 %v7857, 0.18741608
        %v7859 = vmul.f32 %v7850, %v7858
        %v7860 = vadd.f32 %v7859, 1.1283791
        %v7861 = vmul.f32 %v4122, %v7860
        %v7862 = vmul.f32 %v7850, 3.8918573e-05
        %v7863 = vadd.f32 %v7862, 0.001143296
        %v7864 = vmul.f32 %v7850, %v7863
        %v7865 = vadd.f32 %v7864, 0.014752088
        %v7866 = vmul.f32 %v7850, %v7865
        %v7867 = vadd.f32 %v7866, 0.112945676
        %v7868 = vmul.f32 %v7850, %v7867
        %v7869 = vadd.f32 %v7868, 0.4994258
        %v7870 = vmul.f32 %v7850, %v7869
        %v7871 = vadd.f32 %v7870, 1.0
        %v7872 = vrcp.pop %v7871
        %v7873 = vmul.f32 %v7871, %v7872
        %v7874 = vsub.f32 1.0, %v7873
        %v7875 = vmul.f32 %v7872, %v7874
        %v7876 = vadd.f32 %v7872, %v7875
        %vm7877 = vweird.f32 %v7871
        %vm7878 = vweird.f32 %v7872
        %vm7879 = vmor %vm7877, %vm7878
        %v7880 = vsel %vm7879, %v7872, %v7876
        %v7881 = vand.u32 2147483647, %v7871
        %vm7882 = vcmp.eq.f32.partialorder %v7881, 8.507059e+37
        %v7883 = vand.u32 %v7871, 2147483648
        %v7884 = vor.u32 1.1754944e-38, %v7883
        %v7885 = vsel %vm7882, %v7884, %v7880
        %v7886 = vmul.f32 %v7861, %v7885
        %v7887 = vmin.f32 %v7886, 1.0
        %v7888 = vmax.f32 %v7887, -1.0
        %v7889 = vmul.f32 %v4123, %v4123
        %v7890 = vmin.f32 16.0, %v7889
        %v7891 = vmul.f32 %v7890, 2.1237322e-06
        %v7892 = vadd.f32 %v7891, 0.00028619796
        %v7893 = vmul.f32 %v7890, %v7892
        %v7894 = vadd.f32 %v7893, 0.0036580483
        %v7895 = vmul.f32 %v7890, %v7894
        %v7896 = vadd.f32 %v7895, 0.05243302
        %v7897 = vmul.f32 %v7890, %v7896
        %v7898 = vadd.f32 %v7897, 0.18741608
        %v7899 = vmul.f32 %v7890, %v7898
        %v7900 = vadd.f32 %v7899, 1.1283791
        %v7901 = vmul.f32 %v4123, %v7900
        %v7902 = vmul.f32 %v7890, 3.8918573e-05
        %v7903 = vadd.f32 %v7902, 0.001143296
        %v7904 = vmul.f32 %v7890, %v7903
        %v7905 = vadd.f32 %v7904, 0.014752088
        %v7906 = vmul.f32 %v7890, %v7905
        %v7907 = vadd.f32 %v7906, 0.112945676
        %v7908 = vmul.f32 %v7890, %v7907
        %v7909 = vadd.f32 %v7908, 0.4994258
        %v7910 = vmul.f32 %v7890, %v7909
        %v7911 = vadd.f32 %v7910, 1.0
        %v7912 = vrcp.pop %v7911
        %v7913 = vmul.f32 %v7911, %v7912
        %v7914 = vsub.f32 1.0, %v7913
        %v7915 = vmul.f32 %v7912, %v7914
        %v7916 = vadd.f32 %v7912, %v7915
        %vm7917 = vweird.f32 %v7911
        %vm7918 = vweird.f32 %v7912
        %vm7919 = vmor %vm7917, %vm7918
        %v7920 = vsel %vm7919, %v7912, %v7916
        %v7921 = vand.u32 2147483647, %v7911
        %vm7922 = vcmp.eq.f32.partialorder %v7921, 8.507059e+37
        %v7923 = vand.u32 %v7911, 2147483648
        %v7924 = vor.u32 1.1754944e-38, %v7923
        %v7925 = vsel %vm7922, %v7924, %v7920
        %v7926 = vmul.f32 %v7901, %v7925
        %v7927 = vmin.f32 %v7926, 1.0
        %v7928 = vmax.f32 %v7927, -1.0
        %v7929 = vmul.f32 %v4124, %v4124
        %v7930 = vmin.f32 16.0, %v7929
        %v7931 = vmul.f32 %v7930, 2.1237322e-06
        %v7932 = vadd.f32 %v7931, 0.00028619796
        %v7933 = vmul.f32 %v7930, %v7932
        %v7934 = vadd.f32 %v7933, 0.0036580483
        %v7935 = vmul.f32 %v7930, %v7934
        %v7936 = vadd.f32 %v7935, 0.05243302
        %v7937 = vmul.f32 %v7930, %v7936
        %v7938 = vadd.f32 %v7937, 0.18741608
        %v7939 = vmul.f32 %v7930, %v7938
        %v7940 = vadd.f32 %v7939, 1.1283791
        %v7941 = vmul.f32 %v4124, %v7940
        %v7942 = vmul.f32 %v7930, 3.8918573e-05
        %v7943 = vadd.f32 %v7942, 0.001143296
        %v7944 = vmul.f32 %v7930, %v7943
        %v7945 = vadd.f32 %v7944, 0.014752088
        %v7946 = vmul.f32 %v7930, %v7945
        %v7947 = vadd.f32 %v7946, 0.112945676
        %v7948 = vmul.f32 %v7930, %v7947
        %v7949 = vadd.f32 %v7948, 0.4994258
        %v7950 = vmul.f32 %v7930, %v7949
        %v7951 = vadd.f32 %v7950, 1.0
        %v7952 = vrcp.pop %v7951
        %v7953 = vmul.f32 %v7951, %v7952
        %v7954 = vsub.f32 1.0, %v7953
        %v7955 = vmul.f32 %v7952, %v7954
        %v7956 = vadd.f32 %v7952, %v7955
        %vm7957 = vweird.f32 %v7951
        %vm7958 = vweird.f32 %v7952
        %vm7959 = vmor %vm7957, %vm7958
        %v7960 = vsel %vm7959, %v7952, %v7956
        %v7961 = vand.u32 2147483647, %v7951
        %vm7962 = vcmp.eq.f32.partialorder %v7961, 8.507059e+37
        %v7963 = vand.u32 %v7951, 2147483648
        %v7964 = vor.u32 1.1754944e-38, %v7963
        %v7965 = vsel %vm7962, %v7964, %v7960
        %v7966 = vmul.f32 %v7941, %v7965
        %v7967 = vmin.f32 %v7966, 1.0
        %v7968 = vmax.f32 %v7967, -1.0
        %v7969 = vmul.f32 %v4125, %v4125
        %v7970 = vmin.f32 16.0, %v7969
        %v7971 = vmul.f32 %v7970, 2.1237322e-06
        %v7972 = vadd.f32 %v7971, 0.00028619796
        %v7973 = vmul.f32 %v7970, %v7972
        %v7974 = vadd.f32 %v7973, 0.0036580483
        %v7975 = vmul.f32 %v7970, %v7974
        %v7976 = vadd.f32 %v7975, 0.05243302
        %v7977 = vmul.f32 %v7970, %v7976
        %v7978 = vadd.f32 %v7977, 0.18741608
        %v7979 = vmul.f32 %v7970, %v7978
        %v7980 = vadd.f32 %v7979, 1.1283791
        %v7981 = vmul.f32 %v4125, %v7980
        %v7982 = vmul.f32 %v7970, 3.8918573e-05
        %v7983 = vadd.f32 %v7982, 0.001143296
        %v7984 = vmul.f32 %v7970, %v7983
        %v7985 = vadd.f32 %v7984, 0.014752088
        %v7986 = vmul.f32 %v7970, %v7985
        %v7987 = vadd.f32 %v7986, 0.112945676
        %v7988 = vmul.f32 %v7970, %v7987
        %v7989 = vadd.f32 %v7988, 0.4994258
        %v7990 = vmul.f32 %v7970, %v7989
        %v7991 = vadd.f32 %v7990, 1.0
        %v7992 = vrcp.pop %v7991
        %v7993 = vmul.f32 %v7991, %v7992
        %v7994 = vsub.f32 1.0, %v7993
        %v7995 = vmul.f32 %v7992, %v7994
        %v7996 = vadd.f32 %v7992, %v7995
        %vm7997 = vweird.f32 %v7991
        %vm7998 = vweird.f32 %v7992
        %vm7999 = vmor %vm7997, %vm7998
        %v8000 = vsel %vm7999, %v7992, %v7996
        %v8001 = vand.u32 2147483647, %v7991
        %vm8002 = vcmp.eq.f32.partialorder %v8001, 8.507059e+37
        %v8003 = vand.u32 %v7991, 2147483648
        %v8004 = vor.u32 1.1754944e-38, %v8003
        %v8005 = vsel %vm8002, %v8004, %v8000
        %v8006 = vmul.f32 %v7981, %v8005
        %v8007 = vmin.f32 %v8006, 1.0
        %v8008 = vmax.f32 %v8007, -1.0
        %v8009 = vmul.f32 %v4126, %v4126
        %v8010 = vmin.f32 16.0, %v8009
        %v8011 = vmul.f32 %v8010, 2.1237322e-06
        %v8012 = vadd.f32 %v8011, 0.00028619796
        %v8013 = vmul.f32 %v8010, %v8012
        %v8014 = vadd.f32 %v8013, 0.0036580483
        %v8015 = vmul.f32 %v8010, %v8014
        %v8016 = vadd.f32 %v8015, 0.05243302
        %v8017 = vmul.f32 %v8010, %v8016
        %v8018 = vadd.f32 %v8017, 0.18741608
        %v8019 = vmul.f32 %v8010, %v8018
        %v8020 = vadd.f32 %v8019, 1.1283791
        %v8021 = vmul.f32 %v4126, %v8020
        %v8022 = vmul.f32 %v8010, 3.8918573e-05
        %v8023 = vadd.f32 %v8022, 0.001143296
        %v8024 = vmul.f32 %v8010, %v8023
        %v8025 = vadd.f32 %v8024, 0.014752088
        %v8026 = vmul.f32 %v8010, %v8025
        %v8027 = vadd.f32 %v8026, 0.112945676
        %v8028 = vmul.f32 %v8010, %v8027
        %v8029 = vadd.f32 %v8028, 0.4994258
        %v8030 = vmul.f32 %v8010, %v8029
        %v8031 = vadd.f32 %v8030, 1.0
        %v8032 = vrcp.pop %v8031
        %v8033 = vmul.f32 %v8031, %v8032
        %v8034 = vsub.f32 1.0, %v8033
        %v8035 = vmul.f32 %v8032, %v8034
        %v8036 = vadd.f32 %v8032, %v8035
        %vm8037 = vweird.f32 %v8031
        %vm8038 = vweird.f32 %v8032
        %vm8039 = vmor %vm8037, %vm8038
        %v8040 = vsel %vm8039, %v8032, %v8036
        %v8041 = vand.u32 2147483647, %v8031
        %vm8042 = vcmp.eq.f32.partialorder %v8041, 8.507059e+37
        %v8043 = vand.u32 %v8031, 2147483648
        %v8044 = vor.u32 1.1754944e-38, %v8043
        %v8045 = vsel %vm8042, %v8044, %v8040
        %v8046 = vmul.f32 %v8021, %v8045
        %v8047 = vmin.f32 %v8046, 1.0
        %v8048 = vmax.f32 %v8047, -1.0
        %v8049 = vmul.f32 %v4127, %v4127
        %v8050 = vmin.f32 16.0, %v8049
        %v8051 = vmul.f32 %v8050, 2.1237322e-06
        %v8052 = vadd.f32 %v8051, 0.00028619796
        %v8053 = vmul.f32 %v8050, %v8052
        %v8054 = vadd.f32 %v8053, 0.0036580483
        %v8055 = vmul.f32 %v8050, %v8054
        %v8056 = vadd.f32 %v8055, 0.05243302
        %v8057 = vmul.f32 %v8050, %v8056
        %v8058 = vadd.f32 %v8057, 0.18741608
        %v8059 = vmul.f32 %v8050, %v8058
        %v8060 = vadd.f32 %v8059, 1.1283791
        %v8061 = vmul.f32 %v4127, %v8060
        %v8062 = vmul.f32 %v8050, 3.8918573e-05
        %v8063 = vadd.f32 %v8062, 0.001143296
        %v8064 = vmul.f32 %v8050, %v8063
        %v8065 = vadd.f32 %v8064, 0.014752088
        %v8066 = vmul.f32 %v8050, %v8065
        %v8067 = vadd.f32 %v8066, 0.112945676
        %v8068 = vmul.f32 %v8050, %v8067
        %v8069 = vadd.f32 %v8068, 0.4994258
        %v8070 = vmul.f32 %v8050, %v8069
        %v8071 = vadd.f32 %v8070, 1.0
        %v8072 = vrcp.pop %v8071
        %v8073 = vmul.f32 %v8071, %v8072
        %v8074 = vsub.f32 1.0, %v8073
        %v8075 = vmul.f32 %v8072, %v8074
        %v8076 = vadd.f32 %v8072, %v8075
        %vm8077 = vweird.f32 %v8071
        %vm8078 = vweird.f32 %v8072
        %vm8079 = vmor %vm8077, %vm8078
        %v8080 = vsel %vm8079, %v8072, %v8076
        %v8081 = vand.u32 2147483647, %v8071
        %vm8082 = vcmp.eq.f32.partialorder %v8081, 8.507059e+37
        %v8083 = vand.u32 %v8071, 2147483648
        %v8084 = vor.u32 1.1754944e-38, %v8083
        %v8085 = vsel %vm8082, %v8084, %v8080
        %v8086 = vmul.f32 %v8061, %v8085
        %v8087 = vmin.f32 %v8086, 1.0
        %v8088 = vmax.f32 %v8087, -1.0
        %v8089 = vmul.f32 %v4128, %v4128
        %v8090 = vmin.f32 16.0, %v8089
        %v8091 = vmul.f32 %v8090, 2.1237322e-06
        %v8092 = vadd.f32 %v8091, 0.00028619796
        %v8093 = vmul.f32 %v8090, %v8092
        %v8094 = vadd.f32 %v8093, 0.0036580483
        %v8095 = vmul.f32 %v8090, %v8094
        %v8096 = vadd.f32 %v8095, 0.05243302
        %v8097 = vmul.f32 %v8090, %v8096
        %v8098 = vadd.f32 %v8097, 0.18741608
        %v8099 = vmul.f32 %v8090, %v8098
        %v8100 = vadd.f32 %v8099, 1.1283791
        %v8101 = vmul.f32 %v4128, %v8100
        %v8102 = vmul.f32 %v8090, 3.8918573e-05
        %v8103 = vadd.f32 %v8102, 0.001143296
        %v8104 = vmul.f32 %v8090, %v8103
        %v8105 = vadd.f32 %v8104, 0.014752088
        %v8106 = vmul.f32 %v8090, %v8105
        %v8107 = vadd.f32 %v8106, 0.112945676
        %v8108 = vmul.f32 %v8090, %v8107
        %v8109 = vadd.f32 %v8108, 0.4994258
        %v8110 = vmul.f32 %v8090, %v8109
        %v8111 = vadd.f32 %v8110, 1.0
        %v8112 = vrcp.pop %v8111
        %v8113 = vmul.f32 %v8111, %v8112
        %v8114 = vsub.f32 1.0, %v8113
        %v8115 = vmul.f32 %v8112, %v8114
        %v8116 = vadd.f32 %v8112, %v8115
        %vm8117 = vweird.f32 %v8111
        %vm8118 = vweird.f32 %v8112
        %vm8119 = vmor %vm8117, %vm8118
        %v8120 = vsel %vm8119, %v8112, %v8116
        %v8121 = vand.u32 2147483647, %v8111
        %vm8122 = vcmp.eq.f32.partialorder %v8121, 8.507059e+37
        %v8123 = vand.u32 %v8111, 2147483648
        %v8124 = vor.u32 1.1754944e-38, %v8123
        %v8125 = vsel %vm8122, %v8124, %v8120
        %v8126 = vmul.f32 %v8101, %v8125
        %v8127 = vmin.f32 %v8126, 1.0
        %v8128 = vmax.f32 %v8127, -1.0
        %v8129 = vadd.f32 %v4168, 1.0
        %v8130 = vadd.f32 %v4208, 1.0
        %v8131 = vadd.f32 %v4248, 1.0
        %v8132 = vadd.f32 %v4288, 1.0
        %v8133 = vadd.f32 %v4328, 1.0
        %v8134 = vadd.f32 %v4368, 1.0
        %v8135 = vadd.f32 %v4408, 1.0
        %v8136 = vadd.f32 %v4448, 1.0
        %v8137 = vadd.f32 %v4488, 1.0
        %v8138 = vadd.f32 %v4528, 1.0
        %v8139 = vadd.f32 %v4568, 1.0
        %v8140 = vadd.f32 %v4608, 1.0
        %v8141 = vadd.f32 %v4648, 1.0
        %v8142 = vadd.f32 %v4688, 1.0
        %v8143 = vadd.f32 %v4728, 1.0
        %v8144 = vadd.f32 %v4768, 1.0
        %v8145 = vadd.f32 %v4808, 1.0
        %v8146 = vadd.f32 %v4848, 1.0
        %v8147 = vadd.f32 %v4888, 1.0
        %v8148 = vadd.f32 %v4928, 1.0
        %v8149 = vadd.f32 %v4968, 1.0
        %v8150 = vadd.f32 %v5008, 1.0
        %v8151 = vadd.f32 %v5048, 1.0
        %v8152 = vadd.f32 %v5088, 1.0
        %v8153 = vadd.f32 %v5128, 1.0
        %v8154 = vadd.f32 %v5168, 1.0
        %v8155 = vadd.f32 %v5208, 1.0
        %v8156 = vadd.f32 %v5248, 1.0
        %v8157 = vadd.f32 %v5288, 1.0
        %v8158 = vadd.f32 %v5328, 1.0
        %v8159 = vadd.f32 %v5368, 1.0
        %v8160 = vadd.f32 %v5408, 1.0
        %v8161 = vadd.f32 %v5448, 1.0
        %v8162 = vadd.f32 %v5488, 1.0
        %v8163 = vadd.f32 %v5528, 1.0
        %v8164 = vadd.f32 %v5568, 1.0
        %v8165 = vadd.f32 %v5608, 1.0
        %v8166 = vadd.f32 %v5648, 1.0
        %v8167 = vadd.f32 %v5688, 1.0
        %v8168 = vadd.f32 %v5728, 1.0
        %v8169 = vadd.f32 %v5768, 1.0
        %v8170 = vadd.f32 %v5808, 1.0
        %v8171 = vadd.f32 %v5848, 1.0
        %v8172 = vadd.f32 %v5888, 1.0
        %v8173 = vadd.f32 %v5928, 1.0
        %v8174 = vadd.f32 %v5968, 1.0
        %v8175 = vadd.f32 %v6008, 1.0
        %v8176 = vadd.f32 %v6048, 1.0
        %v8177 = vadd.f32 %v6088, 1.0
        %v8178 = vadd.f32 %v6128, 1.0
        %v8179 = vadd.f32 %v6168, 1.0
        %v8180 = vadd.f32 %v6208, 1.0
        %v8181 = vadd.f32 %v6248, 1.0
        %v8182 = vadd.f32 %v6288, 1.0
        %v8183 = vadd.f32 %v6328, 1.0
        %v8184 = vadd.f32 %v6368, 1.0
        %v8185 = vadd.f32 %v6408, 1.0
        %v8186 = vadd.f32 %v6448, 1.0
        %v8187 = vadd.f32 %v6488, 1.0
        %v8188 = vadd.f32 %v6528, 1.0
        %v8189 = vadd.f32 %v6568, 1.0
        %v8190 = vadd.f32 %v6608, 1.0
        %v8191 = vadd.f32 %v6648, 1.0
        %v8192 = vadd.f32 %v6688, 1.0
        %v8193 = vadd.f32 %v6728, 1.0
        %v8194 = vadd.f32 %v6768, 1.0
        %v8195 = vadd.f32 %v6808, 1.0
        %v8196 = vadd.f32 %v6848, 1.0
        %v8197 = vadd.f32 %v6888, 1.0
        %v8198 = vadd.f32 %v6928, 1.0
        %v8199 = vadd.f32 %v6968, 1.0
        %v8200 = vadd.f32 %v7008, 1.0
        %v8201 = vadd.f32 %v7048, 1.0
        %v8202 = vadd.f32 %v7088, 1.0
        %v8203 = vadd.f32 %v7128, 1.0
        %v8204 = vadd.f32 %v7168, 1.0
        %v8205 = vadd.f32 %v7208, 1.0
        %v8206 = vadd.f32 %v7248, 1.0
        %v8207 = vadd.f32 %v7288, 1.0
        %v8208 = vadd.f32 %v7328, 1.0
        %v8209 = vadd.f32 %v7368, 1.0
        %v8210 = vadd.f32 %v7408, 1.0
        %v8211 = vadd.f32 %v7448, 1.0
        %v8212 = vadd.f32 %v7488, 1.0
        %v8213 = vadd.f32 %v7528, 1.0
        %v8214 = vadd.f32 %v7568, 1.0
        %v8215 = vadd.f32 %v7608, 1.0
        %v8216 = vadd.f32 %v7648, 1.0
        %v8217 = vadd.f32 %v7688, 1.0
        %v8218 = vadd.f32 %v7728, 1.0
        %v8219 = vadd.f32 %v7768, 1.0
        %v8220 = vadd.f32 %v7808, 1.0
        %v8221 = vadd.f32 %v7848, 1.0
        %v8222 = vadd.f32 %v7888, 1.0
        %v8223 = vadd.f32 %v7928, 1.0
        %v8224 = vadd.f32 %v7968, 1.0
        %v8225 = vadd.f32 %v8008, 1.0
        %v8226 = vadd.f32 %v8048, 1.0
        %v8227 = vadd.f32 %v8088, 1.0
        %v8228 = vadd.f32 %v8128, 1.0
        %v8229 = vmul.f32 %v3929, %v8129
        %v8230 = vmul.f32 %v3930, %v8130
        %v8231 = vmul.f32 %v3931, %v8131
        %v8232 = vmul.f32 %v3932, %v8132
        %v8233 = vmul.f32 %v3933, %v8133
        %v8234 = vmul.f32 %v3934, %v8134
        %v8235 = vmul.f32 %v3935, %v8135
        %v8236 = vmul.f32 %v3936, %v8136
        %v8237 = vmul.f32 %v3937, %v8137
        %v8238 = vmul.f32 %v3938, %v8138
        %v8239 = vmul.f32 %v3939, %v8139
        %v8240 = vmul.f32 %v3940, %v8140
        %v8241 = vmul.f32 %v3941, %v8141
        %v8242 = vmul.f32 %v3942, %v8142
        %v8243 = vmul.f32 %v3943, %v8143
        %v8244 = vmul.f32 %v3944, %v8144
        %v8245 = vmul.f32 %v3945, %v8145
        %v8246 = vmul.f32 %v3946, %v8146
        %v8247 = vmul.f32 %v3947, %v8147
        %v8248 = vmul.f32 %v3948, %v8148
        %v8249 = vmul.f32 %v3949, %v8149
        %v8250 = vmul.f32 %v3950, %v8150
        %v8251 = vmul.f32 %v3951, %v8151
        %v8252 = vmul.f32 %v3952, %v8152
        %v8253 = vmul.f32 %v3953, %v8153
        %v8254 = vmul.f32 %v3954, %v8154
        %v8255 = vmul.f32 %v3955, %v8155
        %v8256 = vmul.f32 %v3956, %v8156
        %v8257 = vmul.f32 %v3957, %v8157
        %v8258 = vmul.f32 %v3958, %v8158
        %v8259 = vmul.f32 %v3959, %v8159
        %v8260 = vmul.f32 %v3960, %v8160
        %v8261 = vmul.f32 %v3961, %v8161
        %v8262 = vmul.f32 %v3962, %v8162
        %v8263 = vmul.f32 %v3963, %v8163
        %v8264 = vmul.f32 %v3964, %v8164
        %v8265 = vmul.f32 %v3965, %v8165
        %v8266 = vmul.f32 %v3966, %v8166
        %v8267 = vmul.f32 %v3967, %v8167
        %v8268 = vmul.f32 %v3968, %v8168
        %v8269 = vmul.f32 %v3969, %v8169
        %v8270 = vmul.f32 %v3970, %v8170
        %v8271 = vmul.f32 %v3971, %v8171
        %v8272 = vmul.f32 %v3972, %v8172
        %v8273 = vmul.f32 %v3973, %v8173
        %v8274 = vmul.f32 %v3974, %v8174
        %v8275 = vmul.f32 %v3975, %v8175
        %v8276 = vmul.f32 %v3976, %v8176
        %v8277 = vmul.f32 %v3977, %v8177
        %v8278 = vmul.f32 %v3978, %v8178
        %v8279 = vmul.f32 %v3979, %v8179
        %v8280 = vmul.f32 %v3980, %v8180
        %v8281 = vmul.f32 %v3981, %v8181
        %v8282 = vmul.f32 %v3982, %v8182
        %v8283 = vmul.f32 %v3983, %v8183
        %v8284 = vmul.f32 %v3984, %v8184
        %v8285 = vmul.f32 %v3985, %v8185
        %v8286 = vmul.f32 %v3986, %v8186
        %v8287 = vmul.f32 %v3987, %v8187
        %v8288 = vmul.f32 %v3988, %v8188
        %v8289 = vmul.f32 %v3989, %v8189
        %v8290 = vmul.f32 %v3990, %v8190
        %v8291 = vmul.f32 %v3991, %v8191
        %v8292 = vmul.f32 %v3992, %v8192
        %v8293 = vmul.f32 %v3993, %v8193
        %v8294 = vmul.f32 %v3994, %v8194
        %v8295 = vmul.f32 %v3995, %v8195
        %v8296 = vmul.f32 %v3996, %v8196
        %v8297 = vmul.f32 %v3997, %v8197
        %v8298 = vmul.f32 %v3998, %v8198
        %v8299 = vmul.f32 %v3999, %v8199
        %v8300 = vmul.f32 %v4000, %v8200
        %v8301 = vmul.f32 %v4001, %v8201
        %v8302 = vmul.f32 %v4002, %v8202
        %v8303 = vmul.f32 %v4003, %v8203
        %v8304 = vmul.f32 %v4004, %v8204
        %v8305 = vmul.f32 %v4005, %v8205
        %v8306 = vmul.f32 %v4006, %v8206
        %v8307 = vmul.f32 %v4007, %v8207
        %v8308 = vmul.f32 %v4008, %v8208
        %v8309 = vmul.f32 %v4009, %v8209
        %v8310 = vmul.f32 %v4010, %v8210
        %v8311 = vmul.f32 %v4011, %v8211
        %v8312 = vmul.f32 %v4012, %v8212
        %v8313 = vmul.f32 %v4013, %v8213
        %v8314 = vmul.f32 %v4014, %v8214
        %v8315 = vmul.f32 %v4015, %v8215
        %v8316 = vmul.f32 %v4016, %v8216
        %v8317 = vmul.f32 %v4017, %v8217
        %v8318 = vmul.f32 %v4018, %v8218
        %v8319 = vmul.f32 %v4019, %v8219
        %v8320 = vmul.f32 %v4020, %v8220
        %v8321 = vmul.f32 %v4021, %v8221
        %v8322 = vmul.f32 %v4022, %v8222
        %v8323 = vmul.f32 %v4023, %v8223
        %v8324 = vmul.f32 %v4024, %v8224
        %v8325 = vmul.f32 %v4025, %v8225
        %v8326 = vmul.f32 %v4026, %v8226
        %v8327 = vmul.f32 %v4027, %v8227
        %v8328 = vmul.f32 %v4028, %v8228
        %8329 = vst [vmem:[%s354] sm:$0xff] %v8229
        %8330 = vst [vmem:[%s354 + $0x8] sm:$0xff] %v8230
        %8331 = vst [vmem:[%s354 + $0x10] sm:$0xff] %v8231
        %8332 = vst [vmem:[%s354 + $0x18] sm:$0xff] %v8232
        %8333 = vst [vmem:[%s354 + $0x20] sm:$0xff] %v8233
        %8334 = vst [vmem:[%s354 + $0x28] sm:$0xff] %v8234
        %8335 = vst [vmem:[%s354 + $0x30] sm:$0xff] %v8235
        %8336 = vst [vmem:[%s354 + $0x38] sm:$0xff] %v8236
        %8337 = vst [vmem:[%s354 + $0x40] sm:$0xff] %v8237
        %8338 = vst [vmem:[%s354 + $0x48] sm:$0xff] %v8238
        %8339 = vst [vmem:[%s354 + $0x50] sm:$0xff] %v8239
        %8340 = vst [vmem:[%s354 + $0x58] sm:$0xff] %v8240
        %8341 = vst [vmem:[%s354 + $0x60] sm:$0xff] %v8241
        %8342 = vst [vmem:[%s354 + $0x68] sm:$0xff] %v8242
        %8343 = vst [vmem:[%s354 + $0x70] sm:$0xff] %v8243
        %8344 = vst [vmem:[%s354 + $0x78] sm:$0xff] %v8244
        %8345 = vst [vmem:[%s354 + $0x80] sm:$0xff] %v8245
        %8346 = vst [vmem:[%s354 + $0x88] sm:$0xff] %v8246
        %8347 = vst [vmem:[%s354 + $0x90] sm:$0xff] %v8247
        %8348 = vst [vmem:[%s354 + $0x98] sm:$0xff] %v8248
        %8349 = vst [vmem:[%s354 + $0xa0] sm:$0xff] %v8249
        %8350 = vst [vmem:[%s354 + $0xa8] sm:$0xff] %v8250
        %8351 = vst [vmem:[%s354 + $0xb0] sm:$0xff] %v8251
        %8352 = vst [vmem:[%s354 + $0xb8] sm:$0xff] %v8252
        %8353 = vst [vmem:[%s354 + $0xc0] sm:$0xff] %v8253
        %8354 = vst [vmem:[%s354 + $0xc8] sm:$0xff] %v8254
        %8355 = vst [vmem:[%s354 + $0xd0] sm:$0xff] %v8255
        %8356 = vst [vmem:[%s354 + $0xd8] sm:$0xff] %v8256
        %8357 = vst [vmem:[%s354 + $0xe0] sm:$0xff] %v8257
        %8358 = vst [vmem:[%s354 + $0xe8] sm:$0xff] %v8258
        %8359 = vst [vmem:[%s354 + $0xf0] sm:$0xff] %v8259
        %8360 = vst [vmem:[%s354 + $0xf8] sm:$0xff] %v8260
        %8361 = vst [vmem:[%s354 + $0x100] sm:$0xff] %v8261
        %8362 = vst [vmem:[%s354 + $0x108] sm:$0xff] %v8262
        %8363 = vst [vmem:[%s354 + $0x110] sm:$0xff] %v8263
        %8364 = vst [vmem:[%s354 + $0x118] sm:$0xff] %v8264
        %8365 = vst [vmem:[%s354 + $0x120] sm:$0xff] %v8265
        %8366 = vst [vmem:[%s354 + $0x128] sm:$0xff] %v8266
        %8367 = vst [vmem:[%s354 + $0x130] sm:$0xff] %v8267
        %8368 = vst [vmem:[%s354 + $0x138] sm:$0xff] %v8268
        %8369 = vst [vmem:[%s354 + $0x140] sm:$0xff] %v8269
        %8370 = vst [vmem:[%s354 + $0x148] sm:$0xff] %v8270
        %8371 = vst [vmem:[%s354 + $0x150] sm:$0xff] %v8271
        %8372 = vst [vmem:[%s354 + $0x158] sm:$0xff] %v8272
        %8373 = vst [vmem:[%s354 + $0x160] sm:$0xff] %v8273
        %8374 = vst [vmem:[%s354 + $0x168] sm:$0xff] %v8274
        %8375 = vst [vmem:[%s354 + $0x170] sm:$0xff] %v8275
        %8376 = vst [vmem:[%s354 + $0x178] sm:$0xff] %v8276
        %8377 = vst [vmem:[%s354 + $0x180] sm:$0xff] %v8277
        %8378 = vst [vmem:[%s354 + $0x188] sm:$0xff] %v8278
        %8379 = vst [vmem:[%s354 + $0x190] sm:$0xff] %v8279
        %8380 = vst [vmem:[%s354 + $0x198] sm:$0xff] %v8280
        %8381 = vst [vmem:[%s354 + $0x1a0] sm:$0xff] %v8281
        %8382 = vst [vmem:[%s354 + $0x1a8] sm:$0xff] %v8282
        %8383 = vst [vmem:[%s354 + $0x1b0] sm:$0xff] %v8283
        %8384 = vst [vmem:[%s354 + $0x1b8] sm:$0xff] %v8284
        %8385 = vst [vmem:[%s354 + $0x1c0] sm:$0xff] %v8285
        %8386 = vst [vmem:[%s354 + $0x1c8] sm:$0xff] %v8286
        %8387 = vst [vmem:[%s354 + $0x1d0] sm:$0xff] %v8287
        %8388 = vst [vmem:[%s354 + $0x1d8] sm:$0xff] %v8288
        %8389 = vst [vmem:[%s354 + $0x1e0] sm:$0xff] %v8289
        %8390 = vst [vmem:[%s354 + $0x1e8] sm:$0xff] %v8290
        %8391 = vst [vmem:[%s354 + $0x1f0] sm:$0xff] %v8291
        %8392 = vst [vmem:[%s354 + $0x1f8] sm:$0xff] %v8292
        %8393 = vst [vmem:[%s354 + $0x200] sm:$0xff] %v8293
        %8394 = vst [vmem:[%s354 + $0x208] sm:$0xff] %v8294
        %8395 = vst [vmem:[%s354 + $0x210] sm:$0xff] %v8295
        %8396 = vst [vmem:[%s354 + $0x218] sm:$0xff] %v8296
        %8397 = vst [vmem:[%s354 + $0x220] sm:$0xff] %v8297
        %8398 = vst [vmem:[%s354 + $0x228] sm:$0xff] %v8298
        %8399 = vst [vmem:[%s354 + $0x230] sm:$0xff] %v8299
        %8400 = vst [vmem:[%s354 + $0x238] sm:$0xff] %v8300
        %8401 = vst [vmem:[%s354 + $0x240] sm:$0xff] %v8301
        %8402 = vst [vmem:[%s354 + $0x248] sm:$0xff] %v8302
        %8403 = vst [vmem:[%s354 + $0x250] sm:$0xff] %v8303
        %8404 = vst [vmem:[%s354 + $0x258] sm:$0xff] %v8304
        %8405 = vst [vmem:[%s354 + $0x260] sm:$0xff] %v8305
        %8406 = vst [vmem:[%s354 + $0x268] sm:$0xff] %v8306
        %8407 = vst [vmem:[%s354 + $0x270] sm:$0xff] %v8307
        %8408 = vst [vmem:[%s354 + $0x278] sm:$0xff] %v8308
        %8409 = vst [vmem:[%s354 + $0x280] sm:$0xff] %v8309
        %8410 = vst [vmem:[%s354 + $0x288] sm:$0xff] %v8310
        %8411 = vst [vmem:[%s354 + $0x290] sm:$0xff] %v8311
        %8412 = vst [vmem:[%s354 + $0x298] sm:$0xff] %v8312
        %8413 = vst [vmem:[%s354 + $0x2a0] sm:$0xff] %v8313
        %8414 = vst [vmem:[%s354 + $0x2a8] sm:$0xff] %v8314
        %8415 = vst [vmem:[%s354 + $0x2b0] sm:$0xff] %v8315
        %8416 = vst [vmem:[%s354 + $0x2b8] sm:$0xff] %v8316
        %8417 = vst [vmem:[%s354 + $0x2c0] sm:$0xff] %v8317
        %8418 = vst [vmem:[%s354 + $0x2c8] sm:$0xff] %v8318
        %8419 = vst [vmem:[%s354 + $0x2d0] sm:$0xff] %v8319
        %8420 = vst [vmem:[%s354 + $0x2d8] sm:$0xff] %v8320
        %8421 = vst [vmem:[%s354 + $0x2e0] sm:$0xff] %v8321
        %8422 = vst [vmem:[%s354 + $0x2e8] sm:$0xff] %v8322
        %8423 = vst [vmem:[%s354 + $0x2f0] sm:$0xff] %v8323
        %8424 = vst [vmem:[%s354 + $0x2f8] sm:$0xff] %v8324
        %8425 = vst [vmem:[%s354 + $0x300] sm:$0xf] %v8325
        %8426 = vst [vmem:[%s354 + $0x308] sm:$0xf] %v8326
        %8427 = vst [vmem:[%s354 + $0x310] sm:$0xf] %v8327
        %8428 = vst [vmem:[%s354 + $0x318] sm:$0xf] %v8328
        %s8429 = sand.u32 %s171, 1
        %s8430 = scalar_lea.sflag [#allocation5], %s8429
        %s8431 = sand.u32 %s171, 1
        %s8432 = smul.addr %s8431, 800
        %s8433 = scalar_lea.vmem [#allocation12], %s8432
        // Predicated region
        $region65: #{tpu_custom_call.1} parent=39 // pred_check
          %p8434 = pneg %p181
        $region66: #{tpu_custom_call.1} parent=39 // pred_check_branch
          %8436 = sbr.rel (%p8434) target = $region68
        $region67: #{tpu_custom_call.1} parent=39 // pred_region
          %s8437 = smul.u32 %s28, 2
          %s8438 = sadd.s32 %s8437, %s29
          %s8439 = smul.u32 4, %s8438
          %8441 = vsyncadd %s8430, 0
          %s8442 = smul.addr %s8439, 8
          %s8443 = scalar_lea.hbm %s5, %s8442
          %s8444 = sshll.u32 %s8433, 4
          %s8445 = int_to_ptr.vmem [resolvable:$true] %s8444
          %s8446 = sshll.u32 %s8443, 4
          %s8447 = int_to_ptr.hbm [resolvable:$true] %s8446
          %8452 = dma.vmem_to_hbm [thread:$0]  %s8445, 12800, %s8447, %s8430, 512, 2048, 32
        $region68: #{tpu_custom_call.1} parent=39 // pred_fallthru
          _
      $region40: #{tpu_custom_call.1} parent=5 // pred_fallthru
        _
      %p8453 = scmp.le.s32.totalorder 2, %s19
      // Predicated region
      $region69: #{tpu_custom_call.1} parent=5 // pred_check
        %p8454 = pneg %p8453
      $region70: #{tpu_custom_call.1} parent=5 // pred_check_branch
        %8456 = sbr.rel (%p8454) target = $region72
      $region71: #{tpu_custom_call.1} parent=5 // pred_region
        %s8457 = ssub.s32 %s19, 2
        // Predicated region
        $region73: #{tpu_custom_call.1} parent=71 // pred_check
          %p8458 = pneg %p187
        $region74: #{tpu_custom_call.1} parent=71 // pred_check_branch
          %8460 = sbr.rel (%p8458) target = $region76
        $region75: #{tpu_custom_call.1} parent=71 // pred_region
          %s8461 = sand.u32 %s172, 1
          %s8462 = scalar_lea.sflag [#allocation5], %s8461
          %s8463 = sand.u32 %s172, 1
          %s8464 = smul.addr %s8463, 800
          %s8465 = scalar_lea.vmem [#allocation12], %s8464
          %8467 = dma.done %s8462, 12800
        $region76: #{tpu_custom_call.1} parent=71 // pred_fallthru
          _
      $region72: #{tpu_custom_call.1} parent=5 // pred_fallthru
        _
    $region6: #{tpu_custom_call.1} parent=1 // loop_footer
      %s23 = sadd.s32 1, %s19
    $region7: #{tpu_custom_call.1} parent=1 // loop_footer_branch
      %18 = sbr.rel target = $region3
    $region8: #{tpu_custom_call.1} parent=1 // loop_exit
      _
    %8468 = vsyncpa [#allocation4], 1
    %s8469 = scalar_lea.sflag [#allocation4], 1
    %8470 = vsyncpa %s8469, 1
    %8471 = vsyncpa [#allocation7], 1
    %8472 = vsyncpa [#allocation10], 1
    %s8473 = scalar_lea.sflag [#allocation10], 1
    %8474 = vsyncpa %s8473, 1
    %8475 = vsyncpa [#allocation5], 1
    %s8476 = scalar_lea.sflag [#allocation5], 1
    %8477 = vsyncpa %s8476, 1

</llo_original>
